<compile_context>
chip_gen: v5e
topology: v5e:2x2
jax: 0.10.0
libtpu: 0.0.40
codegen_flags: <defaults>
</compile_context>

<pallas_src>
import functools

import jax
import jax.numpy as jnp
from jax.experimental import pallas as pl
from jax.experimental.pallas import tpu as pltpu

CAPACITY = 64
LATENT_DIMS = 2
C2 = 2 * CAPACITY            # 128 : conv2 in-channels
C1 = CAPACITY                # 64  : conv2 out / conv1 in channels
TAPS = [(dh, dw) for dh in (-1, 0, 1) for dw in (-1, 0, 1)]   # 3x3 tap offsets


# ----------------------------------------------------------------------------
# The fused decoder kernel (one batch tile of `tb` samples per grid step).
# Per-sample spatial grid is 8x8 (rows/cols 7 are zero padding); row s = i*8+j.
# ----------------------------------------------------------------------------
def _decoder_kernel(z_ref, wfc_ref, bfc_ref, w2_ref, b2_ref, w1_ref, b1_ref,
                    mask_ref, o_ref, xdup_ref, ydup_ref):
    tb = z_ref.shape[0]          # samples in this grid step
    m = tb * 64                  # flattened spatial rows for the tile

    # ---- fc: Linear(2 -> 128*7*7) as VPU FMAs (a K=2 matmul would waste MXU)
    bfc = bfc_ref[...]                                     # (64, 128)
    for t in range(tb):
        xt = bfc
        for k in range(z_ref.shape[1]):
            xt = xt + z_ref[t:t + 1, k:k + 1] * wfc_ref[k]  # (1,1)*(64,128)
        # store twice (doubled buffer) so every shifted tap is a plain window read
        xdup_ref[t * 64:(t + 1) * 64, :] = xt
        xdup_ref[m + t * 64:m + (t + 1) * 64, :] = xt

    # ---- conv2: ConvTranspose2d(128->64,4,2,1)+ReLU as 9 shifted bf16 matmuls
    # ---- with 4x phase-packed output channels (depth-to-space form).
    acc2 = jnp.zeros((m, 4 * C1), jnp.float32)
    for ti, (dh, dw) in enumerate(TAPS):
        s0 = (dh * 8 + dw) % m
        lhs = xdup_ref[pl.ds(s0, m), :].astype(jnp.bfloat16)
        acc2 = acc2 + jnp.dot(lhs, w2_ref[ti],
                              preferred_element_type=jnp.float32)
    y2 = jnp.maximum(acc2 + b2_ref[...], 0.0) * mask_ref[...]  # zero pad rows
    ydup_ref[0:m, :] = y2
    ydup_ref[m:2 * m, :] = y2

    # ---- conv1: ConvTranspose2d(64->1,4,2,1)+sigmoid; its 16 output columns
    # ---- are the mod-4 output phases, so Cout=1 never becomes an (M,1) GEMM.
    acc1 = jnp.zeros((m, 16), jnp.float32)
    for ti, (dh, dw) in enumerate(TAPS):
        s0 = (dh * 8 + dw) % m
        lhs = ydup_ref[pl.ds(s0, m), :].astype(jnp.bfloat16)
        acc1 = acc1 + jnp.dot(lhs, w1_ref[ti],
                              preferred_element_type=jnp.float32)
    o_ref[...] = jax.nn.sigmoid(acc1 + b1_ref[...]).astype(o_ref.dtype)


# ----------------------------------------------------------------------------
# Weight packing (pure XLA, tiny tensors).
# ----------------------------------------------------------------------------
def _pack_fc(w_fc, b_fc):
    # fc output flat index is c*49 + i*7 + j (PyTorch .view(B, 128, 7, 7)).
    # Re-order to [spatial s=i*8+j, channel c] with zero rows for i==7 / j==7.
    w = w_fc.reshape(LATENT_DIMS, C2, 7, 7).transpose(0, 2, 3, 1)
    w = jnp.pad(w, ((0, 0), (0, 1), (0, 1), (0, 0))).reshape(LATENT_DIMS, 64, C2)
    b = b_fc.reshape(C2, 7, 7).transpose(1, 2, 0)
    b = jnp.pad(b, ((0, 1), (0, 1), (0, 0))).reshape(64, C2)
    return w.astype(jnp.float32), b.astype(jnp.float32)


def _pack_conv2(w2, b2):
    # ConvTranspose2d(stride 2): output (2i+a, 2j+b) <- input (i+dh, j+dw) with
    # kernel tap kh = 1 + a - 2*dh, kw = 1 + b - 2*dw (when in [0,4)).
    # Pack as 9 taps of (Cin, 4*Cout), output column = (a*2+b)*Cout + co.
    cin, cout = w2.shape[0], w2.shape[1]
    taps = []
    for dh, dw in TAPS:
        cols = []
        for a in (0, 1):
            for b in (0, 1):
                kh, kw = 1 + a - 2 * dh, 1 + b - 2 * dw
                if 0 <= kh < 4 and 0 <= kw < 4:
                    cols.append(w2[:, :, kh, kw])
                else:
                    cols.append(jnp.zeros((cin, cout), w2.dtype))
        taps.append(jnp.concatenate(cols, axis=1))
    W2 = jnp.stack(taps, axis=0).astype(jnp.bfloat16)      # (9, 128, 256)
    b2r = jnp.tile(b2, 4).reshape(1, 4 * cout).astype(jnp.float32)
    return W2, b2r


def _pack_conv1(w1, b1):
    # Second stride-2 layer on top of conv2's phase grid: output (4I+ph, 4J+pw)
    # reads conv2 phase (a2,b2) at (I+di, J+dj) with kh = ph - 4*di - 2*a2 + 1.
    # Pack as 9 taps of (4*Cin, 16); K rows = (a2*2+b2)*Cin + c, cols = ph*4+pw.
    cin = w1.shape[0]
    taps = []
    for di, dj in TAPS:
        blocks = []
        for a2 in (0, 1):
            for b2 in (0, 1):
                cols = []
                for ph in range(4):
                    for pw in range(4):
                        kh = ph - 4 * di - 2 * a2 + 1
                        kw = pw - 4 * dj - 2 * b2 + 1
                        if 0 <= kh < 4 and 0 <= kw < 4:
                            cols.append(w1[:, 0, kh, kw])
                        else:
                            cols.append(jnp.zeros((cin,), w1.dtype))
                blocks.append(jnp.stack(cols, axis=1))      # (64, 16)
        taps.append(jnp.concatenate(blocks, axis=0))        # (256, 16)
    W1 = jnp.stack(taps, axis=0).astype(jnp.bfloat16)       # (9, 256, 16)
    b1r = b1.reshape(1, 1).astype(jnp.float32)
    return W1, b1r


def _valid_mask(tb):
    s = jnp.arange(64)
    ok = ((s // 8) < 7) & ((s % 8) < 7)
    return jnp.tile(ok.astype(jnp.float32), tb).reshape(tb * 64, 1)


# ----------------------------------------------------------------------------
# Decoder forward (single fused pallas_call + tiny depth-to-space epilogue).
# ----------------------------------------------------------------------------
@jax.jit
def decoder_forward(params, z):
    B = z.shape[0]
    TB = 8 if B % 8 == 0 else B          # batch tile per grid step
    G = B // TB
    M = TB * 64

    wfc, bfc = _pack_fc(params["w_fc"], params["b_fc"])
    W2, b2r = _pack_conv2(params["w_conv2"], params["b_conv2"])
    W1, b1r = _pack_conv1(params["w_conv1"], params["b_conv1"])
    mask = _valid_mask(TB)

    out_ps = pl.pallas_call(
        _decoder_kernel,
        out_shape=jax.ShapeDtypeStruct((B * 64, 16), jnp.float32),
        grid=(G,),
        in_specs=[
            pl.BlockSpec((TB, LATENT_DIMS), lambda g: (g, 0)),       # z
            pl.BlockSpec((LATENT_DIMS, 64, C2), lambda g: (0, 0, 0)),  # wfc
            pl.BlockSpec((64, C2), lambda g: (0, 0)),                # bfc
            pl.BlockSpec((9, C2, 4 * C1), lambda g: (0, 0, 0)),      # W2
            pl.BlockSpec((1, 4 * C1), lambda g: (0, 0)),             # b2
            pl.BlockSpec((9, 4 * C1, 16), lambda g: (0, 0, 0)),      # W1
            pl.BlockSpec((1, 1), lambda g: (0, 0)),                  # b1
            pl.BlockSpec((M, 1), lambda g: (0, 0)),                  # mask
        ],
        out_specs=pl.BlockSpec((M, 16), lambda g: (g, 0)),
        scratch_shapes=[
            pltpu.VMEM((2 * M, C2), jnp.float32),       # doubled fc/conv2 input
            pltpu.VMEM((2 * M, 4 * C1), jnp.float32),   # doubled conv2 output
        ],
        compiler_params=pltpu.CompilerParams(
            dimension_semantics=("parallel",),
            vmem_limit_bytes=32 * 1024 * 1024),
    )(z.astype(jnp.float32), wfc, bfc, W2, b2r, W1, b1r, mask)

    # depth-to-space + crop: row s=I*8+J, col=ph_h*4+ph_w -> pixel (4I+ph_h, 4J+ph_w)
    out = out_ps.reshape(B, 8, 8, 4, 4).transpose(0, 1, 3, 2, 4).reshape(B, 32, 32)
    return out[:, :28, :28].reshape(B, 1, 28, 28)


# ----------------------------------------------------------------------------
# Parameters (PyTorch-style init) and a pure-JAX reference for validation.
# ----------------------------------------------------------------------------
def init_params(key):
    c = CAPACITY
    keys = jax.random.split(key, 6)

    def unif(k, shape, fan_in):
        bound = 1.0 / jnp.sqrt(jnp.float32(fan_in))
        return jax.random.uniform(k, shape, jnp.float32, -bound, bound)

    return {
        # fc: Linear(2 -> 2c*7*7), stored as (in, out)
        "w_fc": unif(keys[0], (LATENT_DIMS, c * 2 * 7 * 7), LATENT_DIMS),
        "b_fc": unif(keys[1], (c * 2 * 7 * 7,), LATENT_DIMS),
        # conv2: ConvTranspose2d(2c -> c, 4, 2, 1); weight (Cin, Cout, kH, kW)
        "w_conv2": unif(keys[2], (c * 2, c, 4, 4), c * 4 * 4),
        "b_conv2": unif(keys[3], (c,), c * 4 * 4),
        # conv1: ConvTranspose2d(c -> 1, 4, 2, 1)
        "w_conv1": unif(keys[4], (c, 1, 4, 4), 1 * 4 * 4),
        "b_conv1": unif(keys[5], (1,), 1 * 4 * 4),
    }


def _conv_transpose2d_ref(x, w, b, stride=2, padding=1):
    # Explicit scatter-form ConvTranspose2d matching PyTorch semantics.
    B, Cin, H, W = x.shape
    _, Cout, kH, kW = w.shape
    Hf = (H - 1) * stride + kH
    Wf = (W - 1) * stride + kW
    out = jnp.zeros((B, Cout, Hf, Wf), jnp.float32)
    for kh in range(kH):
        for kw in range(kW):
            contrib = jnp.einsum("bchw,cd->bdhw", x, w[:, :, kh, kw])
            out = out.at[:, :, kh:kh + stride * (H - 1) + 1:stride,
                               kw:kw + stride * (W - 1) + 1:stride].add(contrib)
    Hout = (H - 1) * stride - 2 * padding + kH
    Wout = (W - 1) * stride - 2 * padding + kW
    out = out[:, :, padding:padding + Hout, padding:padding + Wout]
    return out + b.reshape(1, -1, 1, 1)


def decoder_reference(params, z):
    B = z.shape[0]
    x = z @ params["w_fc"] + params["b_fc"]
    x = x.reshape(B, CAPACITY * 2, 7, 7)
    x = jax.nn.relu(_conv_transpose2d_ref(x, params["w_conv2"], params["b_conv2"]))
    x = jax.nn.sigmoid(_conv_transpose2d_ref(x, params["w_conv1"], params["b_conv1"]))
    return x


if __name__ == "__main__":
    key = jax.random.PRNGKey(0)
    pkey, zkey = jax.random.split(key)
    params = init_params(pkey)

    batch = 2
    z = jax.random.normal(zkey, (batch, LATENT_DIMS), jnp.float32)

    out = jax.block_until_ready(decoder_forward(params, z))
    assert out.shape == (batch, 1, 28, 28), out.shape
    assert bool(jnp.all(jnp.isfinite(out)))

    ref = jax.block_until_ready(decoder_reference(params, z))
    max_diff = float(jnp.max(jnp.abs(out - ref)))
    assert bool(jnp.allclose(out, ref, atol=2e-2, rtol=2e-2)), max_diff

    print("KERNEL_OK")
</pallas_src>

<mosaic_0001>
module attributes {stable_mosaic.version = 11 : i64} {
  func.func @_decoder_kernel(%arg0: i32, %arg1: memref<2x2xf32, #tpu.memory_space<vmem>>, %arg2: memref<2x64x128xf32, #tpu.memory_space<vmem>>, %arg3: memref<64x128xf32, #tpu.memory_space<vmem>>, %arg4: memref<9x128x256xbf16, #tpu.memory_space<vmem>>, %arg5: memref<1x256xf32, #tpu.memory_space<vmem>>, %arg6: memref<9x256x16xbf16, #tpu.memory_space<vmem>>, %arg7: memref<1x1xf32, #tpu.memory_space<vmem>>, %arg8: memref<128x1xf32, #tpu.memory_space<vmem>>, %arg9: memref<128x16xf32, #tpu.memory_space<vmem>>, %arg10: memref<256x128xf32, #tpu.memory_space<vmem>>, %arg11: memref<256x256xf32, #tpu.memory_space<vmem>>) attributes {dimension_semantics = [#tpu.dimension_semantics<parallel>], iteration_bounds = array<i64: 1>, scalar_prefetch = 0 : i64, scratch_operands = 2 : i64, tpu.core_type = #tpu.core_type<tc>, window_params = [{transform_indices = @transform_0, window_bounds = array<i64: 2, 2>}, {pipeline_mode = #tpu.pipeline_mode<synchronous>, transform_indices = @transform_1, window_bounds = array<i64: 2, 64, 128>}, {pipeline_mode = #tpu.pipeline_mode<synchronous>, transform_indices = @transform_2, window_bounds = array<i64: 64, 128>}, {pipeline_mode = #tpu.pipeline_mode<synchronous>, transform_indices = @transform_3, window_bounds = array<i64: 9, 128, 256>}, {pipeline_mode = #tpu.pipeline_mode<synchronous>, transform_indices = @transform_4, window_bounds = array<i64: 1, 256>}, {pipeline_mode = #tpu.pipeline_mode<synchronous>, transform_indices = @transform_5, window_bounds = array<i64: 9, 256, 16>}, {pipeline_mode = #tpu.pipeline_mode<synchronous>, transform_indices = @transform_6, window_bounds = array<i64: 1, 1>}, {pipeline_mode = #tpu.pipeline_mode<synchronous>, transform_indices = @transform_7, window_bounds = array<i64: 128, 1>}, {transform_indices = @transform_8, window_bounds = array<i64: 128, 16>}]} {
    %c0 = arith.constant 0 : index
    %c0_0 = arith.constant 0 : index
    %0 = vector.load %arg3[%c0, %c0_0] : memref<64x128xf32, #tpu.memory_space<vmem>>, vector<64x128xf32>
    %c0_1 = arith.constant 0 : index
    %c0_2 = arith.constant 0 : index
    %1 = vector.load %arg1[%c0_1, %c0_2] : memref<2x2xf32, #tpu.memory_space<vmem>>, vector<1x1xf32>
    %c0_3 = arith.constant 0 : index
    %c0_4 = arith.constant 0 : index
    %c0_5 = arith.constant 0 : index
    %2 = vector.load %arg2[%c0_3, %c0_4, %c0_5] : memref<2x64x128xf32, #tpu.memory_space<vmem>>, vector<1x64x128xf32>
    %3 = vector.shape_cast %2 : vector<1x64x128xf32> to vector<64x128xf32>
    %4 = vector.broadcast %1 : vector<1x1xf32> to vector<64x128xf32>
    %5 = arith.mulf %4, %3 : vector<64x128xf32>
    %6 = arith.addf %0, %5 : vector<64x128xf32>
    %c0_6 = arith.constant 0 : index
    %c1 = arith.constant 1 : index
    %7 = vector.load %arg1[%c0_6, %c1] : memref<2x2xf32, #tpu.memory_space<vmem>>, vector<1x1xf32>
    %c1_7 = arith.constant 1 : index
    %c0_8 = arith.constant 0 : index
    %c0_9 = arith.constant 0 : index
    %8 = vector.load %arg2[%c1_7, %c0_8, %c0_9] : memref<2x64x128xf32, #tpu.memory_space<vmem>>, vector<1x64x128xf32>
    %9 = vector.shape_cast %8 : vector<1x64x128xf32> to vector<64x128xf32>
    %10 = vector.broadcast %7 : vector<1x1xf32> to vector<64x128xf32>
    %11 = arith.mulf %10, %9 : vector<64x128xf32>
    %12 = arith.addf %6, %11 : vector<64x128xf32>
    %c0_10 = arith.constant 0 : index
    %c0_11 = arith.constant 0 : index
    %13 = vector.load %arg10[%c0_10, %c0_11] : memref<256x128xf32, #tpu.memory_space<vmem>>, vector<64x128xf32>
    tpu.vector_store %arg10[%c0_10, %c0_11], %12 {strides = array<i32>} : memref<256x128xf32, #tpu.memory_space<vmem>>, vector<64x128xf32>,
    %c128 = arith.constant 128 : index
    %c0_12 = arith.constant 0 : index
    %14 = vector.load %arg10[%c128, %c0_12] : memref<256x128xf32, #tpu.memory_space<vmem>>, vector<64x128xf32>
    tpu.vector_store %arg10[%c128, %c0_12], %12 {strides = array<i32>} : memref<256x128xf32, #tpu.memory_space<vmem>>, vector<64x128xf32>,
    %c1_13 = arith.constant 1 : index
    %c0_14 = arith.constant 0 : index
    %15 = vector.load %arg1[%c1_13, %c0_14] : memref<2x2xf32, #tpu.memory_space<vmem>>, vector<1x1xf32>
    %c0_15 = arith.constant 0 : index
    %c0_16 = arith.constant 0 : index
    %c0_17 = arith.constant 0 : index
    %16 = vector.load %arg2[%c0_15, %c0_16, %c0_17] : memref<2x64x128xf32, #tpu.memory_space<vmem>>, vector<1x64x128xf32>
    %17 = vector.shape_cast %16 : vector<1x64x128xf32> to vector<64x128xf32>
    %18 = vector.broadcast %15 : vector<1x1xf32> to vector<64x128xf32>
    %19 = arith.mulf %18, %17 : vector<64x128xf32>
    %20 = arith.addf %0, %19 : vector<64x128xf32>
    %c1_18 = arith.constant 1 : index
    %c1_19 = arith.constant 1 : index
    %21 = vector.load %arg1[%c1_18, %c1_19] : memref<2x2xf32, #tpu.memory_space<vmem>>, vector<1x1xf32>
    %c1_20 = arith.constant 1 : index
    %c0_21 = arith.constant 0 : index
    %c0_22 = arith.constant 0 : index
    %22 = vector.load %arg2[%c1_20, %c0_21, %c0_22] : memref<2x64x128xf32, #tpu.memory_space<vmem>>, vector<1x64x128xf32>
    %23 = vector.shape_cast %22 : vector<1x64x128xf32> to vector<64x128xf32>
    %24 = vector.broadcast %21 : vector<1x1xf32> to vector<64x128xf32>
    %25 = arith.mulf %24, %23 : vector<64x128xf32>
    %26 = arith.addf %20, %25 : vector<64x128xf32>
    %c64 = arith.constant 64 : index
    %c0_23 = arith.constant 0 : index
    %27 = vector.load %arg10[%c64, %c0_23] : memref<256x128xf32, #tpu.memory_space<vmem>>, vector<64x128xf32>
    tpu.vector_store %arg10[%c64, %c0_23], %26 {strides = array<i32>} : memref<256x128xf32, #tpu.memory_space<vmem>>, vector<64x128xf32>,
    %c192 = arith.constant 192 : index
    %c0_24 = arith.constant 0 : index
    %28 = vector.load %arg10[%c192, %c0_24] : memref<256x128xf32, #tpu.memory_space<vmem>>, vector<64x128xf32>
    tpu.vector_store %arg10[%c192, %c0_24], %26 {strides = array<i32>} : memref<256x128xf32, #tpu.memory_space<vmem>>, vector<64x128xf32>,
    %cst = arith.constant 0.000000e+00 : f32
    %29 = vector.broadcast %cst : f32 to vector<128x256xf32>
    %c119 = arith.constant 119 : index
    %c0_25 = arith.constant 0 : index
    %30 = vector.load %arg10[%c119, %c0_25] : memref<256x128xf32, #tpu.memory_space<vmem>>, vector<128x128xf32>
    %31 = arith.truncf %30 : vector<128x128xf32> to vector<128x128xbf16>
    %c0_26 = arith.constant 0 : index
    %c0_27 = arith.constant 0 : index
    %c0_28 = arith.constant 0 : index
    %32 = vector.load %arg4[%c0_26, %c0_27, %c0_28] : memref<9x128x256xbf16, #tpu.memory_space<vmem>>, vector<1x128x256xbf16>
    %33 = vector.shape_cast %32 : vector<1x128x256xbf16> to vector<128x256xbf16>
    %cst_29 = arith.constant dense<0.000000e+00> : vector<128x256xf32>
    %34 = tpu.matmul %31, %33, %cst_29 {dimension_numbers = #tpu.dot_dimension_numbers<[1], [0], [0], [1], [0, 0, 1, 1], [], []>} : vector<128x128xbf16>, vector<128x256xbf16>, vector<128x256xf32> -> vector<128x256xf32>
    %35 = arith.addf %29, %34 : vector<128x256xf32>
    %c120 = arith.constant 120 : index
    %c0_30 = arith.constant 0 : index
    %36 = vector.load %arg10[%c120, %c0_30] : memref<256x128xf32, #tpu.memory_space<vmem>>, vector<128x128xf32>
    %37 = arith.truncf %36 : vector<128x128xf32> to vector<128x128xbf16>
    %c1_31 = arith.constant 1 : index
    %c0_32 = arith.constant 0 : index
    %c0_33 = arith.constant 0 : index
    %38 = vector.load %arg4[%c1_31, %c0_32, %c0_33] : memref<9x128x256xbf16, #tpu.memory_space<vmem>>, vector<1x128x256xbf16>
    %39 = vector.shape_cast %38 : vector<1x128x256xbf16> to vector<128x256xbf16>
    %cst_34 = arith.constant dense<0.000000e+00> : vector<128x256xf32>
    %40 = tpu.matmul %37, %39, %cst_34 {dimension_numbers = #tpu.dot_dimension_numbers<[1], [0], [0], [1], [0, 0, 1, 1], [], []>} : vector<128x128xbf16>, vector<128x256xbf16>, vector<128x256xf32> -> vector<128x256xf32>
    %41 = arith.addf %35, %40 : vector<128x256xf32>
    %c121 = arith.constant 121 : index
    %c0_35 = arith.constant 0 : index
    %42 = vector.load %arg10[%c121, %c0_35] : memref<256x128xf32, #tpu.memory_space<vmem>>, vector<128x128xf32>
    %43 = arith.truncf %42 : vector<128x128xf32> to vector<128x128xbf16>
    %c2 = arith.constant 2 : index
    %c0_36 = arith.constant 0 : index
    %c0_37 = arith.constant 0 : index
    %44 = vector.load %arg4[%c2, %c0_36, %c0_37] : memref<9x128x256xbf16, #tpu.memory_space<vmem>>, vector<1x128x256xbf16>
    %45 = vector.shape_cast %44 : vector<1x128x256xbf16> to vector<128x256xbf16>
    %cst_38 = arith.constant dense<0.000000e+00> : vector<128x256xf32>
    %46 = tpu.matmul %43, %45, %cst_38 {dimension_numbers = #tpu.dot_dimension_numbers<[1], [0], [0], [1], [0, 0, 1, 1], [], []>} : vector<128x128xbf16>, vector<128x256xbf16>, vector<128x256xf32> -> vector<128x256xf32>
    %47 = arith.addf %41, %46 : vector<128x256xf32>
    %c127 = arith.constant 127 : index
    %c0_39 = arith.constant 0 : index
    %48 = vector.load %arg10[%c127, %c0_39] : memref<256x128xf32, #tpu.memory_space<vmem>>, vector<128x128xf32>
    %49 = arith.truncf %48 : vector<128x128xf32> to vector<128x128xbf16>
    %c3 = arith.constant 3 : index
    %c0_40 = arith.constant 0 : index
    %c0_41 = arith.constant 0 : index
    %50 = vector.load %arg4[%c3, %c0_40, %c0_41] : memref<9x128x256xbf16, #tpu.memory_space<vmem>>, vector<1x128x256xbf16>
    %51 = vector.shape_cast %50 : vector<1x128x256xbf16> to vector<128x256xbf16>
    %cst_42 = arith.constant dense<0.000000e+00> : vector<128x256xf32>
    %52 = tpu.matmul %49, %51, %cst_42 {dimension_numbers = #tpu.dot_dimension_numbers<[1], [0], [0], [1], [0, 0, 1, 1], [], []>} : vector<128x128xbf16>, vector<128x256xbf16>, vector<128x256xf32> -> vector<128x256xf32>
    %53 = arith.addf %47, %52 : vector<128x256xf32>
    %c0_43 = arith.constant 0 : index
    %c0_44 = arith.constant 0 : index
    %54 = vector.load %arg10[%c0_43, %c0_44] : memref<256x128xf32, #tpu.memory_space<vmem>>, vector<128x128xf32>
    %55 = arith.truncf %54 : vector<128x128xf32> to vector<128x128xbf16>
    %c4 = arith.constant 4 : index
    %c0_45 = arith.constant 0 : index
    %c0_46 = arith.constant 0 : index
    %56 = vector.load %arg4[%c4, %c0_45, %c0_46] : memref<9x128x256xbf16, #tpu.memory_space<vmem>>, vector<1x128x256xbf16>
    %57 = vector.shape_cast %56 : vector<1x128x256xbf16> to vector<128x256xbf16>
    %cst_47 = arith.constant dense<0.000000e+00> : vector<128x256xf32>
    %58 = tpu.matmul %55, %57, %cst_47 {dimension_numbers = #tpu.dot_dimension_numbers<[1], [0], [0], [1], [0, 0, 1, 1], [], []>} : vector<128x128xbf16>, vector<128x256xbf16>, vector<128x256xf32> -> vector<128x256xf32>
    %59 = arith.addf %53, %58 : vector<128x256xf32>
    %c1_48 = arith.constant 1 : index
    %c0_49 = arith.constant 0 : index
    %60 = vector.load %arg10[%c1_48, %c0_49] : memref<256x128xf32, #tpu.memory_space<vmem>>, vector<128x128xf32>
    %61 = arith.truncf %60 : vector<128x128xf32> to vector<128x128xbf16>
    %c5 = arith.constant 5 : index
    %c0_50 = arith.constant 0 : index
    %c0_51 = arith.constant 0 : index
    %62 = vector.load %arg4[%c5, %c0_50, %c0_51] : memref<9x128x256xbf16, #tpu.memory_space<vmem>>, vector<1x128x256xbf16>
    %63 = vector.shape_cast %62 : vector<1x128x256xbf16> to vector<128x256xbf16>
    %cst_52 = arith.constant dense<0.000000e+00> : vector<128x256xf32>
    %64 = tpu.matmul %61, %63, %cst_52 {dimension_numbers = #tpu.dot_dimension_numbers<[1], [0], [0], [1], [0, 0, 1, 1], [], []>} : vector<128x128xbf16>, vector<128x256xbf16>, vector<128x256xf32> -> vector<128x256xf32>
    %65 = arith.addf %59, %64 : vector<128x256xf32>
    %c7 = arith.constant 7 : index
    %c0_53 = arith.constant 0 : index
    %66 = vector.load %arg10[%c7, %c0_53] : memref<256x128xf32, #tpu.memory_space<vmem>>, vector<128x128xf32>
    %67 = arith.truncf %66 : vector<128x128xf32> to vector<128x128xbf16>
    %c6 = arith.constant 6 : index
    %c0_54 = arith.constant 0 : index
    %c0_55 = arith.constant 0 : index
    %68 = vector.load %arg4[%c6, %c0_54, %c0_55] : memref<9x128x256xbf16, #tpu.memory_space<vmem>>, vector<1x128x256xbf16>
    %69 = vector.shape_cast %68 : vector<1x128x256xbf16> to vector<128x256xbf16>
    %cst_56 = arith.constant dense<0.000000e+00> : vector<128x256xf32>
    %70 = tpu.matmul %67, %69, %cst_56 {dimension_numbers = #tpu.dot_dimension_numbers<[1], [0], [0], [1], [0, 0, 1, 1], [], []>} : vector<128x128xbf16>, vector<128x256xbf16>, vector<128x256xf32> -> vector<128x256xf32>
    %71 = arith.addf %65, %70 : vector<128x256xf32>
    %c8 = arith.constant 8 : index
    %c0_57 = arith.constant 0 : index
    %72 = vector.load %arg10[%c8, %c0_57] : memref<256x128xf32, #tpu.memory_space<vmem>>, vector<128x128xf32>
    %73 = arith.truncf %72 : vector<128x128xf32> to vector<128x128xbf16>
    %c7_58 = arith.constant 7 : index
    %c0_59 = arith.constant 0 : index
    %c0_60 = arith.constant 0 : index
    %74 = vector.load %arg4[%c7_58, %c0_59, %c0_60] : memref<9x128x256xbf16, #tpu.memory_space<vmem>>, vector<1x128x256xbf16>
    %75 = vector.shape_cast %74 : vector<1x128x256xbf16> to vector<128x256xbf16>
    %cst_61 = arith.constant dense<0.000000e+00> : vector<128x256xf32>
    %76 = tpu.matmul %73, %75, %cst_61 {dimension_numbers = #tpu.dot_dimension_numbers<[1], [0], [0], [1], [0, 0, 1, 1], [], []>} : vector<128x128xbf16>, vector<128x256xbf16>, vector<128x256xf32> -> vector<128x256xf32>
    %77 = arith.addf %71, %76 : vector<128x256xf32>
    %c9 = arith.constant 9 : index
    %c0_62 = arith.constant 0 : index
    %78 = vector.load %arg10[%c9, %c0_62] : memref<256x128xf32, #tpu.memory_space<vmem>>, vector<128x128xf32>
    %79 = arith.truncf %78 : vector<128x128xf32> to vector<128x128xbf16>
    %c8_63 = arith.constant 8 : index
    %c0_64 = arith.constant 0 : index
    %c0_65 = arith.constant 0 : index
    %80 = vector.load %arg4[%c8_63, %c0_64, %c0_65] : memref<9x128x256xbf16, #tpu.memory_space<vmem>>, vector<1x128x256xbf16>
    %81 = vector.shape_cast %80 : vector<1x128x256xbf16> to vector<128x256xbf16>
    %cst_66 = arith.constant dense<0.000000e+00> : vector<128x256xf32>
    %82 = tpu.matmul %79, %81, %cst_66 {dimension_numbers = #tpu.dot_dimension_numbers<[1], [0], [0], [1], [0, 0, 1, 1], [], []>} : vector<128x128xbf16>, vector<128x256xbf16>, vector<128x256xf32> -> vector<128x256xf32>
    %83 = arith.addf %77, %82 : vector<128x256xf32>
    %c0_67 = arith.constant 0 : index
    %c0_68 = arith.constant 0 : index
    %84 = vector.load %arg5[%c0_67, %c0_68] : memref<1x256xf32, #tpu.memory_space<vmem>>, vector<1x256xf32>
    %85 = vector.broadcast %84 : vector<1x256xf32> to vector<128x256xf32>
    %86 = arith.addf %83, %85 : vector<128x256xf32>
    %cst_69 = arith.constant 0.000000e+00 : f32
    %87 = vector.broadcast %cst_69 : f32 to vector<128x256xf32>
    %88 = arith.maximumf %86, %87 : vector<128x256xf32>
    %c0_70 = arith.constant 0 : index
    %c0_71 = arith.constant 0 : index
    %89 = vector.load %arg8[%c0_70, %c0_71] : memref<128x1xf32, #tpu.memory_space<vmem>>, vector<128x1xf32>
    %90 = vector.broadcast %89 : vector<128x1xf32> to vector<128x256xf32>
    %91 = arith.mulf %88, %90 : vector<128x256xf32>
    %c0_72 = arith.constant 0 : index
    %c0_73 = arith.constant 0 : index
    %92 = vector.load %arg11[%c0_72, %c0_73] : memref<256x256xf32, #tpu.memory_space<vmem>>, vector<128x256xf32>
    tpu.vector_store %arg11[%c0_72, %c0_73], %91 {strides = array<i32>} : memref<256x256xf32, #tpu.memory_space<vmem>>, vector<128x256xf32>,
    %c128_74 = arith.constant 128 : index
    %c0_75 = arith.constant 0 : index
    %93 = vector.load %arg11[%c128_74, %c0_75] : memref<256x256xf32, #tpu.memory_space<vmem>>, vector<128x256xf32>
    tpu.vector_store %arg11[%c128_74, %c0_75], %91 {strides = array<i32>} : memref<256x256xf32, #tpu.memory_space<vmem>>, vector<128x256xf32>,
    %cst_76 = arith.constant 0.000000e+00 : f32
    %94 = vector.broadcast %cst_76 : f32 to vector<128x16xf32>
    %c119_77 = arith.constant 119 : index
    %c0_78 = arith.constant 0 : index
    %95 = vector.load %arg11[%c119_77, %c0_78] : memref<256x256xf32, #tpu.memory_space<vmem>>, vector<128x256xf32>
    %96 = arith.truncf %95 : vector<128x256xf32> to vector<128x256xbf16>
    %c0_79 = arith.constant 0 : index
    %c0_80 = arith.constant 0 : index
    %c0_81 = arith.constant 0 : index
    %97 = vector.load %arg6[%c0_79, %c0_80, %c0_81] : memref<9x256x16xbf16, #tpu.memory_space<vmem>>, vector<1x256x16xbf16>
    %98 = vector.shape_cast %97 : vector<1x256x16xbf16> to vector<256x16xbf16>
    %cst_82 = arith.constant dense<0.000000e+00> : vector<128x16xf32>
    %99 = tpu.matmul %96, %98, %cst_82 {dimension_numbers = #tpu.dot_dimension_numbers<[1], [0], [0], [1], [0, 0, 1, 1], [], []>} : vector<128x256xbf16>, vector<256x16xbf16>, vector<128x16xf32> -> vector<128x16xf32>
    %100 = arith.addf %94, %99 : vector<128x16xf32>
    %c120_83 = arith.constant 120 : index
    %c0_84 = arith.constant 0 : index
    %101 = vector.load %arg11[%c120_83, %c0_84] : memref<256x256xf32, #tpu.memory_space<vmem>>, vector<128x256xf32>
    %102 = arith.truncf %101 : vector<128x256xf32> to vector<128x256xbf16>
    %c1_85 = arith.constant 1 : index
    %c0_86 = arith.constant 0 : index
    %c0_87 = arith.constant 0 : index
    %103 = vector.load %arg6[%c1_85, %c0_86, %c0_87] : memref<9x256x16xbf16, #tpu.memory_space<vmem>>, vector<1x256x16xbf16>
    %104 = vector.shape_cast %103 : vector<1x256x16xbf16> to vector<256x16xbf16>
    %cst_88 = arith.constant dense<0.000000e+00> : vector<128x16xf32>
    %105 = tpu.matmul %102, %104, %cst_88 {dimension_numbers = #tpu.dot_dimension_numbers<[1], [0], [0], [1], [0, 0, 1, 1], [], []>} : vector<128x256xbf16>, vector<256x16xbf16>, vector<128x16xf32> -> vector<128x16xf32>
    %106 = arith.addf %100, %105 : vector<128x16xf32>
    %c121_89 = arith.constant 121 : index
    %c0_90 = arith.constant 0 : index
    %107 = vector.load %arg11[%c121_89, %c0_90] : memref<256x256xf32, #tpu.memory_space<vmem>>, vector<128x256xf32>
    %108 = arith.truncf %107 : vector<128x256xf32> to vector<128x256xbf16>
    %c2_91 = arith.constant 2 : index
    %c0_92 = arith.constant 0 : index
    %c0_93 = arith.constant 0 : index
    %109 = vector.load %arg6[%c2_91, %c0_92, %c0_93] : memref<9x256x16xbf16, #tpu.memory_space<vmem>>, vector<1x256x16xbf16>
    %110 = vector.shape_cast %109 : vector<1x256x16xbf16> to vector<256x16xbf16>
    %cst_94 = arith.constant dense<0.000000e+00> : vector<128x16xf32>
    %111 = tpu.matmul %108, %110, %cst_94 {dimension_numbers = #tpu.dot_dimension_numbers<[1], [0], [0], [1], [0, 0, 1, 1], [], []>} : vector<128x256xbf16>, vector<256x16xbf16>, vector<128x16xf32> -> vector<128x16xf32>
    %112 = arith.addf %106, %111 : vector<128x16xf32>
    %c127_95 = arith.constant 127 : index
    %c0_96 = arith.constant 0 : index
    %113 = vector.load %arg11[%c127_95, %c0_96] : memref<256x256xf32, #tpu.memory_space<vmem>>, vector<128x256xf32>
    %114 = arith.truncf %113 : vector<128x256xf32> to vector<128x256xbf16>
    %c3_97 = arith.constant 3 : index
    %c0_98 = arith.constant 0 : index
    %c0_99 = arith.constant 0 : index
    %115 = vector.load %arg6[%c3_97, %c0_98, %c0_99] : memref<9x256x16xbf16, #tpu.memory_space<vmem>>, vector<1x256x16xbf16>
    %116 = vector.shape_cast %115 : vector<1x256x16xbf16> to vector<256x16xbf16>
    %cst_100 = arith.constant dense<0.000000e+00> : vector<128x16xf32>
    %117 = tpu.matmul %114, %116, %cst_100 {dimension_numbers = #tpu.dot_dimension_numbers<[1], [0], [0], [1], [0, 0, 1, 1], [], []>} : vector<128x256xbf16>, vector<256x16xbf16>, vector<128x16xf32> -> vector<128x16xf32>
    %118 = arith.addf %112, %117 : vector<128x16xf32>
    %c0_101 = arith.constant 0 : index
    %c0_102 = arith.constant 0 : index
    %119 = vector.load %arg11[%c0_101, %c0_102] : memref<256x256xf32, #tpu.memory_space<vmem>>, vector<128x256xf32>
    %120 = arith.truncf %119 : vector<128x256xf32> to vector<128x256xbf16>
    %c4_103 = arith.constant 4 : index
    %c0_104 = arith.constant 0 : index
    %c0_105 = arith.constant 0 : index
    %121 = vector.load %arg6[%c4_103, %c0_104, %c0_105] : memref<9x256x16xbf16, #tpu.memory_space<vmem>>, vector<1x256x16xbf16>
    %122 = vector.shape_cast %121 : vector<1x256x16xbf16> to vector<256x16xbf16>
    %cst_106 = arith.constant dense<0.000000e+00> : vector<128x16xf32>
    %123 = tpu.matmul %120, %122, %cst_106 {dimension_numbers = #tpu.dot_dimension_numbers<[1], [0], [0], [1], [0, 0, 1, 1], [], []>} : vector<128x256xbf16>, vector<256x16xbf16>, vector<128x16xf32> -> vector<128x16xf32>
    %124 = arith.addf %118, %123 : vector<128x16xf32>
    %c1_107 = arith.constant 1 : index
    %c0_108 = arith.constant 0 : index
    %125 = vector.load %arg11[%c1_107, %c0_108] : memref<256x256xf32, #tpu.memory_space<vmem>>, vector<128x256xf32>
    %126 = arith.truncf %125 : vector<128x256xf32> to vector<128x256xbf16>
    %c5_109 = arith.constant 5 : index
    %c0_110 = arith.constant 0 : index
    %c0_111 = arith.constant 0 : index
    %127 = vector.load %arg6[%c5_109, %c0_110, %c0_111] : memref<9x256x16xbf16, #tpu.memory_space<vmem>>, vector<1x256x16xbf16>
    %128 = vector.shape_cast %127 : vector<1x256x16xbf16> to vector<256x16xbf16>
    %cst_112 = arith.constant dense<0.000000e+00> : vector<128x16xf32>
    %129 = tpu.matmul %126, %128, %cst_112 {dimension_numbers = #tpu.dot_dimension_numbers<[1], [0], [0], [1], [0, 0, 1, 1], [], []>} : vector<128x256xbf16>, vector<256x16xbf16>, vector<128x16xf32> -> vector<128x16xf32>
    %130 = arith.addf %124, %129 : vector<128x16xf32>
    %c7_113 = arith.constant 7 : index
    %c0_114 = arith.constant 0 : index
    %131 = vector.load %arg11[%c7_113, %c0_114] : memref<256x256xf32, #tpu.memory_space<vmem>>, vector<128x256xf32>
    %132 = arith.truncf %131 : vector<128x256xf32> to vector<128x256xbf16>
    %c6_115 = arith.constant 6 : index
    %c0_116 = arith.constant 0 : index
    %c0_117 = arith.constant 0 : index
    %133 = vector.load %arg6[%c6_115, %c0_116, %c0_117] : memref<9x256x16xbf16, #tpu.memory_space<vmem>>, vector<1x256x16xbf16>
    %134 = vector.shape_cast %133 : vector<1x256x16xbf16> to vector<256x16xbf16>
    %cst_118 = arith.constant dense<0.000000e+00> : vector<128x16xf32>
    %135 = tpu.matmul %132, %134, %cst_118 {dimension_numbers = #tpu.dot_dimension_numbers<[1], [0], [0], [1], [0, 0, 1, 1], [], []>} : vector<128x256xbf16>, vector<256x16xbf16>, vector<128x16xf32> -> vector<128x16xf32>
    %136 = arith.addf %130, %135 : vector<128x16xf32>
    %c8_119 = arith.constant 8 : index
    %c0_120 = arith.constant 0 : index
    %137 = vector.load %arg11[%c8_119, %c0_120] : memref<256x256xf32, #tpu.memory_space<vmem>>, vector<128x256xf32>
    %138 = arith.truncf %137 : vector<128x256xf32> to vector<128x256xbf16>
    %c7_121 = arith.constant 7 : index
    %c0_122 = arith.constant 0 : index
    %c0_123 = arith.constant 0 : index
    %139 = vector.load %arg6[%c7_121, %c0_122, %c0_123] : memref<9x256x16xbf16, #tpu.memory_space<vmem>>, vector<1x256x16xbf16>
    %140 = vector.shape_cast %139 : vector<1x256x16xbf16> to vector<256x16xbf16>
    %cst_124 = arith.constant dense<0.000000e+00> : vector<128x16xf32>
    %141 = tpu.matmul %138, %140, %cst_124 {dimension_numbers = #tpu.dot_dimension_numbers<[1], [0], [0], [1], [0, 0, 1, 1], [], []>} : vector<128x256xbf16>, vector<256x16xbf16>, vector<128x16xf32> -> vector<128x16xf32>
    %142 = arith.addf %136, %141 : vector<128x16xf32>
    %c9_125 = arith.constant 9 : index
    %c0_126 = arith.constant 0 : index
    %143 = vector.load %arg11[%c9_125, %c0_126] : memref<256x256xf32, #tpu.memory_space<vmem>>, vector<128x256xf32>
    %144 = arith.truncf %143 : vector<128x256xf32> to vector<128x256xbf16>
    %c8_127 = arith.constant 8 : index
    %c0_128 = arith.constant 0 : index
    %c0_129 = arith.constant 0 : index
    %145 = vector.load %arg6[%c8_127, %c0_128, %c0_129] : memref<9x256x16xbf16, #tpu.memory_space<vmem>>, vector<1x256x16xbf16>
    %146 = vector.shape_cast %145 : vector<1x256x16xbf16> to vector<256x16xbf16>
    %cst_130 = arith.constant dense<0.000000e+00> : vector<128x16xf32>
    %147 = tpu.matmul %144, %146, %cst_130 {dimension_numbers = #tpu.dot_dimension_numbers<[1], [0], [0], [1], [0, 0, 1, 1], [], []>} : vector<128x256xbf16>, vector<256x16xbf16>, vector<128x16xf32> -> vector<128x16xf32>
    %148 = arith.addf %142, %147 : vector<128x16xf32>
    %c0_131 = arith.constant 0 : index
    %c0_132 = arith.constant 0 : index
    %149 = vector.load %arg7[%c0_131, %c0_132] : memref<1x1xf32, #tpu.memory_space<vmem>>, vector<1x1xf32>
    %150 = vector.broadcast %149 : vector<1x1xf32> to vector<128x16xf32>
    %151 = arith.addf %148, %150 : vector<128x16xf32>
    %152 = arith.negf %151 : vector<128x16xf32>
    %153 = math.exp %152 : vector<128x16xf32>
    %cst_133 = arith.constant 1.000000e+00 : f32
    %154 = vector.broadcast %cst_133 : f32 to vector<128x16xf32>
    %155 = arith.addf %154, %153 : vector<128x16xf32>
    %156 = arith.divf %154, %155 : vector<128x16xf32>
    %c0_134 = arith.constant 0 : index
    %c0_135 = arith.constant 0 : index
    %157 = vector.load %arg9[%c0_134, %c0_135] : memref<128x16xf32, #tpu.memory_space<vmem>>, vector<128x16xf32>
    tpu.vector_store %arg9[%c0_134, %c0_135], %156 {strides = array<i32>} : memref<128x16xf32, #tpu.memory_space<vmem>>, vector<128x16xf32>,
    return
  }
  func.func @transform_0(%arg0: i32) -> (i32, i32) {
    %c0_i32 = arith.constant 0 : i32
    %c0_i32_0 = arith.constant 0 : i32
    return %arg0, %c0_i32 : i32, i32
  }
  func.func @transform_1(%arg0: i32) -> (i32, i32, i32) {
    %c0_i32 = arith.constant 0 : i32
    %c0_i32_0 = arith.constant 0 : i32
    %c0_i32_1 = arith.constant 0 : i32
    %c0_i32_2 = arith.constant 0 : i32
    return %c0_i32, %c0_i32_0, %c0_i32_1 : i32, i32, i32
  }
  func.func @transform_2(%arg0: i32) -> (i32, i32) {
    %c0_i32 = arith.constant 0 : i32
    %c0_i32_0 = arith.constant 0 : i32
    %c0_i32_1 = arith.constant 0 : i32
    return %c0_i32, %c0_i32_0 : i32, i32
  }
  func.func @transform_3(%arg0: i32) -> (i32, i32, i32) {
    %c0_i32 = arith.constant 0 : i32
    %c0_i32_0 = arith.constant 0 : i32
    %c0_i32_1 = arith.constant 0 : i32
    %c0_i32_2 = arith.constant 0 : i32
    return %c0_i32, %c0_i32_0, %c0_i32_1 : i32, i32, i32
  }
  func.func @transform_4(%arg0: i32) -> (i32, i32) {
    %c0_i32 = arith.constant 0 : i32
    %c0_i32_0 = arith.constant 0 : i32
    %c0_i32_1 = arith.constant 0 : i32
    return %c0_i32, %c0_i32_0 : i32, i32
  }
  func.func @transform_5(%arg0: i32) -> (i32, i32, i32) {
    %c0_i32 = arith.constant 0 : i32
    %c0_i32_0 = arith.constant 0 : i32
    %c0_i32_1 = arith.constant 0 : i32
    %c0_i32_2 = arith.constant 0 : i32
    return %c0_i32, %c0_i32_0, %c0_i32_1 : i32, i32, i32
  }
  func.func @transform_6(%arg0: i32) -> (i32, i32) {
    %c0_i32 = arith.constant 0 : i32
    %c0_i32_0 = arith.constant 0 : i32
    %c0_i32_1 = arith.constant 0 : i32
    return %c0_i32, %c0_i32_0 : i32, i32
  }
  func.func @transform_7(%arg0: i32) -> (i32, i32) {
    %c0_i32 = arith.constant 0 : i32
    %c0_i32_0 = arith.constant 0 : i32
    %c0_i32_1 = arith.constant 0 : i32
    return %c0_i32, %c0_i32_0 : i32, i32
  }
  func.func @transform_8(%arg0: i32) -> (i32, i32) {
    %c0_i32 = arith.constant 0 : i32
    %c0_i32_0 = arith.constant 0 : i32
    return %arg0, %c0_i32 : i32, i32
  }
}

</mosaic_0001>

<llo_original>
// kernel: tile.13
$region0: #{tile.13}
  #allocation0 [shape = 's32[1]{0}', space=sflag, size = 0x4, scoped, tag = 'scoped memory for tile.13']
  %s0 = inlined_call_operand.vmem [shape: f32[64], index: 0, kind: input, shape index: {}]
  %s1 = inlined_call_operand.vmem [shape: f32[4,64], index: 1, kind: output, shape index: {}]
  // Predicated region
  $region2: #{tile.13} parent=0 // pred_check
    _
  $region3: #{tile.13} parent=0 // pred_check_branch
    %3 = sbr.rel (0) target = $region5
  $region4: #{tile.13} parent=0 // pred_region
    _
  $region5: #{tile.13} parent=0 // pred_fallthru
    _
  %v4 = vld [vmem:[%s0] ss:$0 sm:$0xff]
  %5 = vst [vmem:[%s1] sm:$0xf] %v4

// kernel: tile.14
$region0: #{tile.14}
  %s0 = inlined_call_operand.vmem [shape: f32[4,64], index: 0, kind: input, shape index: {}]
  %s1 = inlined_call_operand.vmem [shape: f32[1,256], index: 1, kind: output, shape index: {}]
  $region1: #{tile.14} parent=0
    #allocation0 [shape = 'u8[8192]{0}', space=vmem, size = 0x2000, scoped, tag = 'scoped mem for output reshape']
    #allocation1 [shape = 'u8[4096]{0}', space=vmem, size = 0x1000, scoped, tag = 'scoped mem for input reshape']
    %s3 = ssub.s32 16, 1
    %v4 = vld [vmem:[%s0] sm:%s3]
    %5 = vst [vmem:[#allocation1] sm:%s3] %v4
    %s6 = smov 3
    %v7 = vld [vmem:[#allocation1] ss:$2 sm:%s6]
    %vm8 = vcmask 523264
    %9 = vst.msk [vmem:[#allocation0] ss:$8 sm:$0x3] %vm8, %v7
    %s10 = scalar_lea.vmem [#allocation1], 1
    %s11 = smov 3
    %v12 = vld [vmem:[%s10] ss:$2 sm:%s11]
    %13 = vrot.lane.b32.xlu0 %v12, 64
    %v14 = vpop.permute.xlu0 %13
    %vm15 = vcmask 1048064
    %16 = vst.msk [vmem:[#allocation0] ss:$8 sm:$0x3] %vm15, %v14
    %s18 = ssub.s32 2, 1
    %v19 = vld [vmem:[#allocation0] sm:%s18]
    %s21 = ssub.s32 2, 1
    %22 = vst [vmem:[%s1] sm:%s21] %v19
    %s23 = scalar_lea.vmem [#allocation0], 8
    %v24 = vld [vmem:[%s23] sm:%s18]
    %s26 = ssub.s32 2, 1
    %s27 = scalar_lea.vmem %s1, 1
    %28 = vst [vmem:[%s27] sm:%s26] %v24

// kernel: tile.18
$region0: #{tile.18}
  #allocation0 [shape = 's32[1]{0}', space=sflag, size = 0x4, scoped, tag = 'scoped memory for tile.18']
  %s0 = inlined_call_operand.vmem [shape: f32[64], index: 0, kind: input, shape index: {}]
  %s1 = inlined_call_operand.vmem [shape: f32[2,64], index: 1, kind: output, shape index: {}]
  // Predicated region
  $region2: #{tile.18} parent=0 // pred_check
    _
  $region3: #{tile.18} parent=0 // pred_check_branch
    %3 = sbr.rel (0) target = $region5
  $region4: #{tile.18} parent=0 // pred_region
    _
  $region5: #{tile.18} parent=0 // pred_fallthru
    _
  %v4 = vld [vmem:[%s0] ss:$0 sm:$0xff]
  %5 = vst [vmem:[%s1] sm:$0x3] %v4

// kernel: tile.0
$region0: #{tile.0}
  %s0 = inlined_call_operand.vmem [shape: f32[2,64], index: 0, kind: input, shape index: {}]
  %s1 = inlined_call_operand.vmem [shape: f32[128,1], index: 1, kind: output, shape index: {}]
  $region1: #{tile.0} parent=0
    #allocation0 [shape = 'u8[4096]{0}', space=vmem, size = 0x1000, scoped, tag = 'scoped mem for input reshape']
    %s3 = ssub.s32 4, 1
    %v4 = vld [vmem:[%s0] sm:%s3]
    %5 = vst [vmem:[#allocation0] sm:%s3] %v4
    %v6 = vld [vmem:[#allocation0] sm:$0x3]
    %vm7 = vcmask 7168
    %8 = vst.msk [vmem:[%s1] sm:$0x1] %vm7, %v6
    %s9 = scalar_lea.vmem %s1, 63
    %10 = vst.msk [vmem:[%s9] sm:$0x2] %vm7, %v6
    %v11 = vld [vmem:[#allocation0] sm:$0x3]
    %12 = vrot.lane.b32.xlu0 %v11, 127
    %v13 = vpop.permute.xlu0 %12
    %vm14 = vcmask 7168
    %s15 = scalar_lea.vmem %s1, 1
    %16 = vst.msk [vmem:[%s15] sm:$0x1] %vm14, %v13
    %s17 = scalar_lea.vmem %s1, 64
    %18 = vst.msk [vmem:[%s17] sm:$0x2] %vm14, %v13
    %v19 = vld [vmem:[#allocation0] sm:$0x3]
    %20 = vrot.lane.b32.xlu0 %v19, 126
    %v21 = vpop.permute.xlu0 %20
    %vm22 = vcmask 7168
    %s23 = scalar_lea.vmem %s1, 2
    %24 = vst.msk [vmem:[%s23] sm:$0x1] %vm22, %v21
    %s25 = scalar_lea.vmem %s1, 65
    %26 = vst.msk [vmem:[%s25] sm:$0x2] %vm22, %v21
    %v27 = vld [vmem:[#allocation0] sm:$0x3]
    %28 = vrot.lane.b32.xlu0 %v27, 125
    %v29 = vpop.permute.xlu0 %28
    %vm30 = vcmask 7168
    %s31 = scalar_lea.vmem %s1, 3
    %32 = vst.msk [vmem:[%s31] sm:$0x1] %vm30, %v29
    %s33 = scalar_lea.vmem %s1, 66
    %34 = vst.msk [vmem:[%s33] sm:$0x2] %vm30, %v29
    %v35 = vld [vmem:[#allocation0] sm:$0x3]
    %36 = vrot.lane.b32.xlu0 %v35, 124
    %v37 = vpop.permute.xlu0 %36
    %vm38 = vcmask 7168
    %s39 = scalar_lea.vmem %s1, 4
    %40 = vst.msk [vmem:[%s39] sm:$0x1] %vm38, %v37
    %s41 = scalar_lea.vmem %s1, 67
    %42 = vst.msk [vmem:[%s41] sm:$0x2] %vm38, %v37
    %v43 = vld [vmem:[#allocation0] sm:$0x3]
    %44 = vrot.lane.b32.xlu0 %v43, 123
    %v45 = vpop.permute.xlu0 %44
    %vm46 = vcmask 7168
    %s47 = scalar_lea.vmem %s1, 5
    %48 = vst.msk [vmem:[%s47] sm:$0x1] %vm46, %v45
    %s49 = scalar_lea.vmem %s1, 68
    %50 = vst.msk [vmem:[%s49] sm:$0x2] %vm46, %v45
    %v51 = vld [vmem:[#allocation0] sm:$0x3]
    %52 = vrot.lane.b32.xlu0 %v51, 122
    %v53 = vpop.permute.xlu0 %52
    %vm54 = vcmask 7168
    %s55 = scalar_lea.vmem %s1, 6
    %56 = vst.msk [vmem:[%s55] sm:$0x1] %vm54, %v53
    %s57 = scalar_lea.vmem %s1, 69
    %58 = vst.msk [vmem:[%s57] sm:$0x2] %vm54, %v53
    %v59 = vld [vmem:[#allocation0] sm:$0x3]
    %60 = vrot.lane.b32.xlu0 %v59, 121
    %v61 = vpop.permute.xlu0 %60
    %vm62 = vcmask 7168
    %s63 = scalar_lea.vmem %s1, 7
    %64 = vst.msk [vmem:[%s63] sm:$0x1] %vm62, %v61
    %s65 = scalar_lea.vmem %s1, 70
    %66 = vst.msk [vmem:[%s65] sm:$0x2] %vm62, %v61
    %v67 = vld [vmem:[#allocation0] sm:$0x3]
    %68 = vrot.lane.b32.xlu0 %v67, 120
    %v69 = vpop.permute.xlu0 %68
    %vm70 = vcmask 7168
    %s71 = scalar_lea.vmem %s1, 8
    %72 = vst.msk [vmem:[%s71] sm:$0x1] %vm70, %v69
    %s73 = scalar_lea.vmem %s1, 71
    %74 = vst.msk [vmem:[%s73] sm:$0x2] %vm70, %v69
    %v75 = vld [vmem:[#allocation0] sm:$0x3]
    %76 = vrot.lane.b32.xlu0 %v75, 119
    %v77 = vpop.permute.xlu0 %76
    %vm78 = vcmask 7168
    %s79 = scalar_lea.vmem %s1, 9
    %80 = vst.msk [vmem:[%s79] sm:$0x1] %vm78, %v77
    %s81 = scalar_lea.vmem %s1, 72
    %82 = vst.msk [vmem:[%s81] sm:$0x2] %vm78, %v77
    %v83 = vld [vmem:[#allocation0] sm:$0x3]
    %84 = vrot.lane.b32.xlu0 %v83, 118
    %v85 = vpop.permute.xlu0 %84
    %vm86 = vcmask 7168
    %s87 = scalar_lea.vmem %s1, 10
    %88 = vst.msk [vmem:[%s87] sm:$0x1] %vm86, %v85
    %s89 = scalar_lea.vmem %s1, 73
    %90 = vst.msk [vmem:[%s89] sm:$0x2] %vm86, %v85
    %v91 = vld [vmem:[#allocation0] sm:$0x3]
    %92 = vrot.lane.b32.xlu0 %v91, 117
    %v93 = vpop.permute.xlu0 %92
    %vm94 = vcmask 7168
    %s95 = scalar_lea.vmem %s1, 11
    %96 = vst.msk [vmem:[%s95] sm:$0x1] %vm94, %v93
    %s97 = scalar_lea.vmem %s1, 74
    %98 = vst.msk [vmem:[%s97] sm:$0x2] %vm94, %v93
    %v99 = vld [vmem:[#allocation0] sm:$0x3]
    %100 = vrot.lane.b32.xlu0 %v99, 116
    %v101 = vpop.permute.xlu0 %100
    %vm102 = vcmask 7168
    %s103 = scalar_lea.vmem %s1, 12
    %104 = vst.msk [vmem:[%s103] sm:$0x1] %vm102, %v101
    %s105 = scalar_lea.vmem %s1, 75
    %106 = vst.msk [vmem:[%s105] sm:$0x2] %vm102, %v101
    %v107 = vld [vmem:[#allocation0] sm:$0x3]
    %108 = vrot.lane.b32.xlu0 %v107, 115
    %v109 = vpop.permute.xlu0 %108
    %vm110 = vcmask 7168
    %s111 = scalar_lea.vmem %s1, 13
    %112 = vst.msk [vmem:[%s111] sm:$0x1] %vm110, %v109
    %s113 = scalar_lea.vmem %s1, 76
    %114 = vst.msk [vmem:[%s113] sm:$0x2] %vm110, %v109
    %v115 = vld [vmem:[#allocation0] sm:$0x3]
    %116 = vrot.lane.b32.xlu0 %v115, 114
    %v117 = vpop.permute.xlu0 %116
    %vm118 = vcmask 7168
    %s119 = scalar_lea.vmem %s1, 14
    %120 = vst.msk [vmem:[%s119] sm:$0x1] %vm118, %v117
    %s121 = scalar_lea.vmem %s1, 77
    %122 = vst.msk [vmem:[%s121] sm:$0x2] %vm118, %v117
    %v123 = vld [vmem:[#allocation0] sm:$0x3]
    %124 = vrot.lane.b32.xlu0 %v123, 113
    %v125 = vpop.permute.xlu0 %124
    %vm126 = vcmask 7168
    %s127 = scalar_lea.vmem %s1, 15
    %128 = vst.msk [vmem:[%s127] sm:$0x1] %vm126, %v125
    %s129 = scalar_lea.vmem %s1, 78
    %130 = vst.msk [vmem:[%s129] sm:$0x2] %vm126, %v125
    %v131 = vld [vmem:[#allocation0] sm:$0x3]
    %132 = vrot.lane.b32.xlu0 %v131, 112
    %v133 = vpop.permute.xlu0 %132
    %vm134 = vcmask 7168
    %s135 = scalar_lea.vmem %s1, 16
    %136 = vst.msk [vmem:[%s135] sm:$0x1] %vm134, %v133
    %s137 = scalar_lea.vmem %s1, 79
    %138 = vst.msk [vmem:[%s137] sm:$0x2] %vm134, %v133
    %v139 = vld [vmem:[#allocation0] sm:$0x3]
    %140 = vrot.lane.b32.xlu0 %v139, 111
    %v141 = vpop.permute.xlu0 %140
    %vm142 = vcmask 7168
    %s143 = scalar_lea.vmem %s1, 17
    %144 = vst.msk [vmem:[%s143] sm:$0x1] %vm142, %v141
    %s145 = scalar_lea.vmem %s1, 80
    %146 = vst.msk [vmem:[%s145] sm:$0x2] %vm142, %v141
    %v147 = vld [vmem:[#allocation0] sm:$0x3]
    %148 = vrot.lane.b32.xlu0 %v147, 110
    %v149 = vpop.permute.xlu0 %148
    %vm150 = vcmask 7168
    %s151 = scalar_lea.vmem %s1, 18
    %152 = vst.msk [vmem:[%s151] sm:$0x1] %vm150, %v149
    %s153 = scalar_lea.vmem %s1, 81
    %154 = vst.msk [vmem:[%s153] sm:$0x2] %vm150, %v149
    %v155 = vld [vmem:[#allocation0] sm:$0x3]
    %156 = vrot.lane.b32.xlu0 %v155, 109
    %v157 = vpop.permute.xlu0 %156
    %vm158 = vcmask 7168
    %s159 = scalar_lea.vmem %s1, 19
    %160 = vst.msk [vmem:[%s159] sm:$0x1] %vm158, %v157
    %s161 = scalar_lea.vmem %s1, 82
    %162 = vst.msk [vmem:[%s161] sm:$0x2] %vm158, %v157
    %v163 = vld [vmem:[#allocation0] sm:$0x3]
    %164 = vrot.lane.b32.xlu0 %v163, 108
    %v165 = vpop.permute.xlu0 %164
    %vm166 = vcmask 7168
    %s167 = scalar_lea.vmem %s1, 20
    %168 = vst.msk [vmem:[%s167] sm:$0x1] %vm166, %v165
    %s169 = scalar_lea.vmem %s1, 83
    %170 = vst.msk [vmem:[%s169] sm:$0x2] %vm166, %v165
    %v171 = vld [vmem:[#allocation0] sm:$0x3]
    %172 = vrot.lane.b32.xlu0 %v171, 107
    %v173 = vpop.permute.xlu0 %172
    %vm174 = vcmask 7168
    %s175 = scalar_lea.vmem %s1, 21
    %176 = vst.msk [vmem:[%s175] sm:$0x1] %vm174, %v173
    %s177 = scalar_lea.vmem %s1, 84
    %178 = vst.msk [vmem:[%s177] sm:$0x2] %vm174, %v173
    %v179 = vld [vmem:[#allocation0] sm:$0x3]
    %180 = vrot.lane.b32.xlu0 %v179, 106
    %v181 = vpop.permute.xlu0 %180
    %vm182 = vcmask 7168
    %s183 = scalar_lea.vmem %s1, 22
    %184 = vst.msk [vmem:[%s183] sm:$0x1] %vm182, %v181
    %s185 = scalar_lea.vmem %s1, 85
    %186 = vst.msk [vmem:[%s185] sm:$0x2] %vm182, %v181
    %v187 = vld [vmem:[#allocation0] sm:$0x3]
    %188 = vrot.lane.b32.xlu0 %v187, 105
    %v189 = vpop.permute.xlu0 %188
    %vm190 = vcmask 7168
    %s191 = scalar_lea.vmem %s1, 23
    %192 = vst.msk [vmem:[%s191] sm:$0x1] %vm190, %v189
    %s193 = scalar_lea.vmem %s1, 86
    %194 = vst.msk [vmem:[%s193] sm:$0x2] %vm190, %v189
    %v195 = vld [vmem:[#allocation0] sm:$0x3]
    %196 = vrot.lane.b32.xlu0 %v195, 104
    %v197 = vpop.permute.xlu0 %196
    %vm198 = vcmask 7168
    %s199 = scalar_lea.vmem %s1, 24
    %200 = vst.msk [vmem:[%s199] sm:$0x1] %vm198, %v197
    %s201 = scalar_lea.vmem %s1, 87
    %202 = vst.msk [vmem:[%s201] sm:$0x2] %vm198, %v197
    %v203 = vld [vmem:[#allocation0] sm:$0x3]
    %204 = vrot.lane.b32.xlu0 %v203, 103
    %v205 = vpop.permute.xlu0 %204
    %vm206 = vcmask 7168
    %s207 = scalar_lea.vmem %s1, 25
    %208 = vst.msk [vmem:[%s207] sm:$0x1] %vm206, %v205
    %s209 = scalar_lea.vmem %s1, 88
    %210 = vst.msk [vmem:[%s209] sm:$0x2] %vm206, %v205
    %v211 = vld [vmem:[#allocation0] sm:$0x3]
    %212 = vrot.lane.b32.xlu0 %v211, 102
    %v213 = vpop.permute.xlu0 %212
    %vm214 = vcmask 7168
    %s215 = scalar_lea.vmem %s1, 26
    %216 = vst.msk [vmem:[%s215] sm:$0x1] %vm214, %v213
    %s217 = scalar_lea.vmem %s1, 89
    %218 = vst.msk [vmem:[%s217] sm:$0x2] %vm214, %v213
    %v219 = vld [vmem:[#allocation0] sm:$0x3]
    %220 = vrot.lane.b32.xlu0 %v219, 101
    %v221 = vpop.permute.xlu0 %220
    %vm222 = vcmask 7168
    %s223 = scalar_lea.vmem %s1, 27
    %224 = vst.msk [vmem:[%s223] sm:$0x1] %vm222, %v221
    %s225 = scalar_lea.vmem %s1, 90
    %226 = vst.msk [vmem:[%s225] sm:$0x2] %vm222, %v221
    %v227 = vld [vmem:[#allocation0] sm:$0x3]
    %228 = vrot.lane.b32.xlu0 %v227, 100
    %v229 = vpop.permute.xlu0 %228
    %vm230 = vcmask 7168
    %s231 = scalar_lea.vmem %s1, 28
    %232 = vst.msk [vmem:[%s231] sm:$0x1] %vm230, %v229
    %s233 = scalar_lea.vmem %s1, 91
    %234 = vst.msk [vmem:[%s233] sm:$0x2] %vm230, %v229
    %v235 = vld [vmem:[#allocation0] sm:$0x3]
    %236 = vrot.lane.b32.xlu0 %v235, 99
    %v237 = vpop.permute.xlu0 %236
    %vm238 = vcmask 7168
    %s239 = scalar_lea.vmem %s1, 29
    %240 = vst.msk [vmem:[%s239] sm:$0x1] %vm238, %v237
    %s241 = scalar_lea.vmem %s1, 92
    %242 = vst.msk [vmem:[%s241] sm:$0x2] %vm238, %v237
    %v243 = vld [vmem:[#allocation0] sm:$0x3]
    %244 = vrot.lane.b32.xlu0 %v243, 98
    %v245 = vpop.permute.xlu0 %244
    %vm246 = vcmask 7168
    %s247 = scalar_lea.vmem %s1, 30
    %248 = vst.msk [vmem:[%s247] sm:$0x1] %vm246, %v245
    %s249 = scalar_lea.vmem %s1, 93
    %250 = vst.msk [vmem:[%s249] sm:$0x2] %vm246, %v245
    %v251 = vld [vmem:[#allocation0] sm:$0x3]
    %252 = vrot.lane.b32.xlu0 %v251, 97
    %v253 = vpop.permute.xlu0 %252
    %vm254 = vcmask 7168
    %s255 = scalar_lea.vmem %s1, 31
    %256 = vst.msk [vmem:[%s255] sm:$0x1] %vm254, %v253
    %s257 = scalar_lea.vmem %s1, 94
    %258 = vst.msk [vmem:[%s257] sm:$0x2] %vm254, %v253
    %v259 = vld [vmem:[#allocation0] sm:$0x3]
    %260 = vrot.lane.b32.xlu0 %v259, 96
    %v261 = vpop.permute.xlu0 %260
    %vm262 = vcmask 7168
    %s263 = scalar_lea.vmem %s1, 32
    %264 = vst.msk [vmem:[%s263] sm:$0x1] %vm262, %v261
    %s265 = scalar_lea.vmem %s1, 95
    %266 = vst.msk [vmem:[%s265] sm:$0x2] %vm262, %v261
    %v267 = vld [vmem:[#allocation0] sm:$0x3]
    %268 = vrot.lane.b32.xlu0 %v267, 95
    %v269 = vpop.permute.xlu0 %268
    %vm270 = vcmask 7168
    %s271 = scalar_lea.vmem %s1, 33
    %272 = vst.msk [vmem:[%s271] sm:$0x1] %vm270, %v269
    %s273 = scalar_lea.vmem %s1, 96
    %274 = vst.msk [vmem:[%s273] sm:$0x2] %vm270, %v269
    %v275 = vld [vmem:[#allocation0] sm:$0x3]
    %276 = vrot.lane.b32.xlu0 %v275, 94
    %v277 = vpop.permute.xlu0 %276
    %vm278 = vcmask 7168
    %s279 = scalar_lea.vmem %s1, 34
    %280 = vst.msk [vmem:[%s279] sm:$0x1] %vm278, %v277
    %s281 = scalar_lea.vmem %s1, 97
    %282 = vst.msk [vmem:[%s281] sm:$0x2] %vm278, %v277
    %v283 = vld [vmem:[#allocation0] sm:$0x3]
    %284 = vrot.lane.b32.xlu0 %v283, 93
    %v285 = vpop.permute.xlu0 %284
    %vm286 = vcmask 7168
    %s287 = scalar_lea.vmem %s1, 35
    %288 = vst.msk [vmem:[%s287] sm:$0x1] %vm286, %v285
    %s289 = scalar_lea.vmem %s1, 98
    %290 = vst.msk [vmem:[%s289] sm:$0x2] %vm286, %v285
    %v291 = vld [vmem:[#allocation0] sm:$0x3]
    %292 = vrot.lane.b32.xlu0 %v291, 92
    %v293 = vpop.permute.xlu0 %292
    %vm294 = vcmask 7168
    %s295 = scalar_lea.vmem %s1, 36
    %296 = vst.msk [vmem:[%s295] sm:$0x1] %vm294, %v293
    %s297 = scalar_lea.vmem %s1, 99
    %298 = vst.msk [vmem:[%s297] sm:$0x2] %vm294, %v293
    %v299 = vld [vmem:[#allocation0] sm:$0x3]
    %300 = vrot.lane.b32.xlu0 %v299, 91
    %v301 = vpop.permute.xlu0 %300
    %vm302 = vcmask 7168
    %s303 = scalar_lea.vmem %s1, 37
    %304 = vst.msk [vmem:[%s303] sm:$0x1] %vm302, %v301
    %s305 = scalar_lea.vmem %s1, 100
    %306 = vst.msk [vmem:[%s305] sm:$0x2] %vm302, %v301
    %v307 = vld [vmem:[#allocation0] sm:$0x3]
    %308 = vrot.lane.b32.xlu0 %v307, 90
    %v309 = vpop.permute.xlu0 %308
    %vm310 = vcmask 7168
    %s311 = scalar_lea.vmem %s1, 38
    %312 = vst.msk [vmem:[%s311] sm:$0x1] %vm310, %v309
    %s313 = scalar_lea.vmem %s1, 101
    %314 = vst.msk [vmem:[%s313] sm:$0x2] %vm310, %v309
    %v315 = vld [vmem:[#allocation0] sm:$0x3]
    %316 = vrot.lane.b32.xlu0 %v315, 89
    %v317 = vpop.permute.xlu0 %316
    %vm318 = vcmask 7168
    %s319 = scalar_lea.vmem %s1, 39
    %320 = vst.msk [vmem:[%s319] sm:$0x1] %vm318, %v317
    %s321 = scalar_lea.vmem %s1, 102
    %322 = vst.msk [vmem:[%s321] sm:$0x2] %vm318, %v317
    %v323 = vld [vmem:[#allocation0] sm:$0x3]
    %324 = vrot.lane.b32.xlu0 %v323, 88
    %v325 = vpop.permute.xlu0 %324
    %vm326 = vcmask 7168
    %s327 = scalar_lea.vmem %s1, 40
    %328 = vst.msk [vmem:[%s327] sm:$0x1] %vm326, %v325
    %s329 = scalar_lea.vmem %s1, 103
    %330 = vst.msk [vmem:[%s329] sm:$0x2] %vm326, %v325
    %v331 = vld [vmem:[#allocation0] sm:$0x3]
    %332 = vrot.lane.b32.xlu0 %v331, 87
    %v333 = vpop.permute.xlu0 %332
    %vm334 = vcmask 7168
    %s335 = scalar_lea.vmem %s1, 41
    %336 = vst.msk [vmem:[%s335] sm:$0x1] %vm334, %v333
    %s337 = scalar_lea.vmem %s1, 104
    %338 = vst.msk [vmem:[%s337] sm:$0x2] %vm334, %v333
    %v339 = vld [vmem:[#allocation0] sm:$0x3]
    %340 = vrot.lane.b32.xlu0 %v339, 86
    %v341 = vpop.permute.xlu0 %340
    %vm342 = vcmask 7168
    %s343 = scalar_lea.vmem %s1, 42
    %344 = vst.msk [vmem:[%s343] sm:$0x1] %vm342, %v341
    %s345 = scalar_lea.vmem %s1, 105
    %346 = vst.msk [vmem:[%s345] sm:$0x2] %vm342, %v341
    %v347 = vld [vmem:[#allocation0] sm:$0x3]
    %348 = vrot.lane.b32.xlu0 %v347, 85
    %v349 = vpop.permute.xlu0 %348
    %vm350 = vcmask 7168
    %s351 = scalar_lea.vmem %s1, 43
    %352 = vst.msk [vmem:[%s351] sm:$0x1] %vm350, %v349
    %s353 = scalar_lea.vmem %s1, 106
    %354 = vst.msk [vmem:[%s353] sm:$0x2] %vm350, %v349
    %v355 = vld [vmem:[#allocation0] sm:$0x3]
    %356 = vrot.lane.b32.xlu0 %v355, 84
    %v357 = vpop.permute.xlu0 %356
    %vm358 = vcmask 7168
    %s359 = scalar_lea.vmem %s1, 44
    %360 = vst.msk [vmem:[%s359] sm:$0x1] %vm358, %v357
    %s361 = scalar_lea.vmem %s1, 107
    %362 = vst.msk [vmem:[%s361] sm:$0x2] %vm358, %v357
    %v363 = vld [vmem:[#allocation0] sm:$0x3]
    %364 = vrot.lane.b32.xlu0 %v363, 83
    %v365 = vpop.permute.xlu0 %364
    %vm366 = vcmask 7168
    %s367 = scalar_lea.vmem %s1, 45
    %368 = vst.msk [vmem:[%s367] sm:$0x1] %vm366, %v365
    %s369 = scalar_lea.vmem %s1, 108
    %370 = vst.msk [vmem:[%s369] sm:$0x2] %vm366, %v365
    %v371 = vld [vmem:[#allocation0] sm:$0x3]
    %372 = vrot.lane.b32.xlu0 %v371, 82
    %v373 = vpop.permute.xlu0 %372
    %vm374 = vcmask 7168
    %s375 = scalar_lea.vmem %s1, 46
    %376 = vst.msk [vmem:[%s375] sm:$0x1] %vm374, %v373
    %s377 = scalar_lea.vmem %s1, 109
    %378 = vst.msk [vmem:[%s377] sm:$0x2] %vm374, %v373
    %v379 = vld [vmem:[#allocation0] sm:$0x3]
    %380 = vrot.lane.b32.xlu0 %v379, 81
    %v381 = vpop.permute.xlu0 %380
    %vm382 = vcmask 7168
    %s383 = scalar_lea.vmem %s1, 47
    %384 = vst.msk [vmem:[%s383] sm:$0x1] %vm382, %v381
    %s385 = scalar_lea.vmem %s1, 110
    %386 = vst.msk [vmem:[%s385] sm:$0x2] %vm382, %v381
    %v387 = vld [vmem:[#allocation0] sm:$0x3]
    %388 = vrot.lane.b32.xlu0 %v387, 80
    %v389 = vpop.permute.xlu0 %388
    %vm390 = vcmask 7168
    %s391 = scalar_lea.vmem %s1, 48
    %392 = vst.msk [vmem:[%s391] sm:$0x1] %vm390, %v389
    %s393 = scalar_lea.vmem %s1, 111
    %394 = vst.msk [vmem:[%s393] sm:$0x2] %vm390, %v389
    %v395 = vld [vmem:[#allocation0] sm:$0x3]
    %396 = vrot.lane.b32.xlu0 %v395, 79
    %v397 = vpop.permute.xlu0 %396
    %vm398 = vcmask 7168
    %s399 = scalar_lea.vmem %s1, 49
    %400 = vst.msk [vmem:[%s399] sm:$0x1] %vm398, %v397
    %s401 = scalar_lea.vmem %s1, 112
    %402 = vst.msk [vmem:[%s401] sm:$0x2] %vm398, %v397
    %v403 = vld [vmem:[#allocation0] sm:$0x3]
    %404 = vrot.lane.b32.xlu0 %v403, 78
    %v405 = vpop.permute.xlu0 %404
    %vm406 = vcmask 7168
    %s407 = scalar_lea.vmem %s1, 50
    %408 = vst.msk [vmem:[%s407] sm:$0x1] %vm406, %v405
    %s409 = scalar_lea.vmem %s1, 113
    %410 = vst.msk [vmem:[%s409] sm:$0x2] %vm406, %v405
    %v411 = vld [vmem:[#allocation0] sm:$0x3]
    %412 = vrot.lane.b32.xlu0 %v411, 77
    %v413 = vpop.permute.xlu0 %412
    %vm414 = vcmask 7168
    %s415 = scalar_lea.vmem %s1, 51
    %416 = vst.msk [vmem:[%s415] sm:$0x1] %vm414, %v413
    %s417 = scalar_lea.vmem %s1, 114
    %418 = vst.msk [vmem:[%s417] sm:$0x2] %vm414, %v413
    %v419 = vld [vmem:[#allocation0] sm:$0x3]
    %420 = vrot.lane.b32.xlu0 %v419, 76
    %v421 = vpop.permute.xlu0 %420
    %vm422 = vcmask 7168
    %s423 = scalar_lea.vmem %s1, 52
    %424 = vst.msk [vmem:[%s423] sm:$0x1] %vm422, %v421
    %s425 = scalar_lea.vmem %s1, 115
    %426 = vst.msk [vmem:[%s425] sm:$0x2] %vm422, %v421
    %v427 = vld [vmem:[#allocation0] sm:$0x3]
    %428 = vrot.lane.b32.xlu0 %v427, 75
    %v429 = vpop.permute.xlu0 %428
    %vm430 = vcmask 7168
    %s431 = scalar_lea.vmem %s1, 53
    %432 = vst.msk [vmem:[%s431] sm:$0x1] %vm430, %v429
    %s433 = scalar_lea.vmem %s1, 116
    %434 = vst.msk [vmem:[%s433] sm:$0x2] %vm430, %v429
    %v435 = vld [vmem:[#allocation0] sm:$0x3]
    %436 = vrot.lane.b32.xlu0 %v435, 74
    %v437 = vpop.permute.xlu0 %436
    %vm438 = vcmask 7168
    %s439 = scalar_lea.vmem %s1, 54
    %440 = vst.msk [vmem:[%s439] sm:$0x1] %vm438, %v437
    %s441 = scalar_lea.vmem %s1, 117
    %442 = vst.msk [vmem:[%s441] sm:$0x2] %vm438, %v437
    %v443 = vld [vmem:[#allocation0] sm:$0x3]
    %444 = vrot.lane.b32.xlu0 %v443, 73
    %v445 = vpop.permute.xlu0 %444
    %vm446 = vcmask 7168
    %s447 = scalar_lea.vmem %s1, 55
    %448 = vst.msk [vmem:[%s447] sm:$0x1] %vm446, %v445
    %s449 = scalar_lea.vmem %s1, 118
    %450 = vst.msk [vmem:[%s449] sm:$0x2] %vm446, %v445
    %v451 = vld [vmem:[#allocation0] sm:$0x3]
    %452 = vrot.lane.b32.xlu0 %v451, 72
    %v453 = vpop.permute.xlu0 %452
    %vm454 = vcmask 7168
    %s455 = scalar_lea.vmem %s1, 56
    %456 = vst.msk [vmem:[%s455] sm:$0x1] %vm454, %v453
    %s457 = scalar_lea.vmem %s1, 119
    %458 = vst.msk [vmem:[%s457] sm:$0x2] %vm454, %v453
    %v459 = vld [vmem:[#allocation0] sm:$0x3]
    %460 = vrot.lane.b32.xlu0 %v459, 71
    %v461 = vpop.permute.xlu0 %460
    %vm462 = vcmask 7168
    %s463 = scalar_lea.vmem %s1, 57
    %464 = vst.msk [vmem:[%s463] sm:$0x1] %vm462, %v461
    %s465 = scalar_lea.vmem %s1, 120
    %466 = vst.msk [vmem:[%s465] sm:$0x2] %vm462, %v461
    %v467 = vld [vmem:[#allocation0] sm:$0x3]
    %468 = vrot.lane.b32.xlu0 %v467, 70
    %v469 = vpop.permute.xlu0 %468
    %vm470 = vcmask 7168
    %s471 = scalar_lea.vmem %s1, 58
    %472 = vst.msk [vmem:[%s471] sm:$0x1] %vm470, %v469
    %s473 = scalar_lea.vmem %s1, 121
    %474 = vst.msk [vmem:[%s473] sm:$0x2] %vm470, %v469
    %v475 = vld [vmem:[#allocation0] sm:$0x3]
    %476 = vrot.lane.b32.xlu0 %v475, 69
    %v477 = vpop.permute.xlu0 %476
    %vm478 = vcmask 7168
    %s479 = scalar_lea.vmem %s1, 59
    %480 = vst.msk [vmem:[%s479] sm:$0x1] %vm478, %v477
    %s481 = scalar_lea.vmem %s1, 122
    %482 = vst.msk [vmem:[%s481] sm:$0x2] %vm478, %v477
    %v483 = vld [vmem:[#allocation0] sm:$0x3]
    %484 = vrot.lane.b32.xlu0 %v483, 68
    %v485 = vpop.permute.xlu0 %484
    %vm486 = vcmask 7168
    %s487 = scalar_lea.vmem %s1, 60
    %488 = vst.msk [vmem:[%s487] sm:$0x1] %vm486, %v485
    %s489 = scalar_lea.vmem %s1, 123
    %490 = vst.msk [vmem:[%s489] sm:$0x2] %vm486, %v485
    %v491 = vld [vmem:[#allocation0] sm:$0x3]
    %492 = vrot.lane.b32.xlu0 %v491, 67
    %v493 = vpop.permute.xlu0 %492
    %vm494 = vcmask 7168
    %s495 = scalar_lea.vmem %s1, 61
    %496 = vst.msk [vmem:[%s495] sm:$0x1] %vm494, %v493
    %s497 = scalar_lea.vmem %s1, 124
    %498 = vst.msk [vmem:[%s497] sm:$0x2] %vm494, %v493
    %v499 = vld [vmem:[#allocation0] sm:$0x3]
    %500 = vrot.lane.b32.xlu0 %v499, 66
    %v501 = vpop.permute.xlu0 %500
    %vm502 = vcmask 7168
    %s503 = scalar_lea.vmem %s1, 62
    %504 = vst.msk [vmem:[%s503] sm:$0x1] %vm502, %v501
    %s505 = scalar_lea.vmem %s1, 125
    %506 = vst.msk [vmem:[%s505] sm:$0x2] %vm502, %v501
    %v507 = vld [vmem:[#allocation0] sm:$0x3]
    %508 = vrot.lane.b32.xlu0 %v507, 65
    %v509 = vpop.permute.xlu0 %508
    %vm510 = vcmask 7168
    %s511 = scalar_lea.vmem %s1, 63
    %512 = vst.msk [vmem:[%s511] sm:$0x1] %vm510, %v509
    %s513 = scalar_lea.vmem %s1, 126
    %514 = vst.msk [vmem:[%s513] sm:$0x2] %vm510, %v509

// kernel: decoder_forward.1
$region0: #{decoder_forward.1}
  #allocation0 [shape = 'u32[]', space=smem, size = 0x4, offset = 0x4, fixed_abs, tag = 'smem constant byte address 0x4 - core index']
  #allocation1 [shape = 'u32[72,128]{1,0:T(1,128)}', space=vmem, size = 0x9000, scoped, tag = 'internal scratch']
  #allocation2 [shape = 'f32[256,128]{1,0:T(8,128)}', space=vmem, size = 0x20000, scoped, tag = 'scratch operand']
  #allocation3 [shape = 'f32[256,256]{1,0:T(8,128)}', space=vmem, size = 0x40000, scoped, tag = 'scratch operand']
  #allocation4 [shape = 'f32[1,1]{1,0:T(1,128)S(1)}', space=vmem, size = 0x200, scoped, tag = 'scoped memory for decoder_forward.1']
  %s0 = inlined_call_operand.vmem [shape: f32[2,2], index: 0, kind: input, shape index: {}]
  %s1 = inlined_call_operand.vmem [shape: f32[2,64,128], index: 1, kind: input, shape index: {}]
  %s2 = inlined_call_operand.vmem [shape: f32[64,128], index: 2, kind: input, shape index: {}]
  %s3 = inlined_call_operand.vmem [shape: bf16[9,128,256], index: 3, kind: input, shape index: {}]
  %s4 = inlined_call_operand.vmem [shape: f32[1,256], index: 4, kind: input, shape index: {}]
  %s5 = inlined_call_operand.vmem [shape: bf16[9,256,16], index: 5, kind: input, shape index: {}]
  %s6 = inlined_call_operand.<no memory space> [shape: f32[1,1], index: 6, kind: input, shape index: {}]
  %s7 = inlined_call_operand.vmem [shape: f32[128,1], index: 7, kind: input, shape index: {}]
  %s8 = inlined_call_operand.vmem [shape: f32[128,16], index: 8, kind: output, shape index: {}]
  %s9 = sld [smem:[#allocation0]]
  $region42: #{decoder_forward.1} parent=0
    _
  %s11 = ssub.s32 1, %s9
  %s12 = scalar_select 0, %s11, %s9
  %v13 = vstv %s6
  %14 = vst [vmem:[#allocation4] sm:$0x1] %v13
  // Predicated region
  $region2: #{decoder_forward.1} parent=0 // pred_check
    _
  $region3: #{decoder_forward.1} parent=0 // pred_check_branch
    %16 = sbr.rel (0) target = $region5
  $region4: #{decoder_forward.1} parent=0 // pred_region
    _
  $region5: #{decoder_forward.1} parent=0 // pred_fallthru
    _
  // Predicated region
  $region6: #{decoder_forward.1} parent=0 // pred_check
    _
  $region7: #{decoder_forward.1} parent=0 // pred_check_branch
    %18 = sbr.rel (0) target = $region9
  $region8: #{decoder_forward.1} parent=0 // pred_region
    _
  $region9: #{decoder_forward.1} parent=0 // pred_fallthru
    _
  // Predicated region
  $region10: #{decoder_forward.1} parent=0 // pred_check
    _
  $region11: #{decoder_forward.1} parent=0 // pred_check_branch
    %20 = sbr.rel (0) target = $region13
  $region12: #{decoder_forward.1} parent=0 // pred_region
    _
  $region13: #{decoder_forward.1} parent=0 // pred_fallthru
    _
  // Predicated region
  $region14: #{decoder_forward.1} parent=0 // pred_check
    _
  $region15: #{decoder_forward.1} parent=0 // pred_check_branch
    %22 = sbr.rel (0) target = $region17
  $region16: #{decoder_forward.1} parent=0 // pred_region
    _
  $region17: #{decoder_forward.1} parent=0 // pred_fallthru
    _
  // Predicated region
  $region18: #{decoder_forward.1} parent=0 // pred_check
    _
  $region19: #{decoder_forward.1} parent=0 // pred_check_branch
    %24 = sbr.rel (0) target = $region21
  $region20: #{decoder_forward.1} parent=0 // pred_region
    _
  $region21: #{decoder_forward.1} parent=0 // pred_fallthru
    _
  // Predicated region
  $region22: #{decoder_forward.1} parent=0 // pred_check
    _
  $region23: #{decoder_forward.1} parent=0 // pred_check_branch
    %26 = sbr.rel (0) target = $region25
  $region24: #{decoder_forward.1} parent=0 // pred_region
    _
  $region25: #{decoder_forward.1} parent=0 // pred_fallthru
    _
  // Predicated region
  $region26: #{decoder_forward.1} parent=0 // pred_check
    _
  $region27: #{decoder_forward.1} parent=0 // pred_check_branch
    %28 = sbr.rel (0) target = $region29
  $region28: #{decoder_forward.1} parent=0 // pred_region
    _
  $region29: #{decoder_forward.1} parent=0 // pred_fallthru
    _
  // Predicated region
  $region30: #{decoder_forward.1} parent=0 // pred_check
    _
  $region31: #{decoder_forward.1} parent=0 // pred_check_branch
    %30 = sbr.rel (0) target = $region33
  $region32: #{decoder_forward.1} parent=0 // pred_region
    _
  $region33: #{decoder_forward.1} parent=0 // pred_fallthru
    _
  %v31 = vld [vmem:[%s2] sm:$0xff]
  %v32 = vld [vmem:[%s2 + $0x8] sm:$0xff]
  %v33 = vld [vmem:[%s2 + $0x10] sm:$0xff]
  %v34 = vld [vmem:[%s2 + $0x18] sm:$0xff]
  %v35 = vld [vmem:[%s2 + $0x20] sm:$0xff]
  %v36 = vld [vmem:[%s2 + $0x28] sm:$0xff]
  %v37 = vld [vmem:[%s2 + $0x30] sm:$0xff]
  %v38 = vld [vmem:[%s2 + $0x38] sm:$0xff]
  %v39 = vld [vmem:[%s0] sm:$0x1]
  %v40 = vld [vmem:[%s1] sm:$0xff]
  %v41 = vld [vmem:[%s1 + $0x8] sm:$0xff]
  %v42 = vld [vmem:[%s1 + $0x10] sm:$0xff]
  %v43 = vld [vmem:[%s1 + $0x18] sm:$0xff]
  %v44 = vld [vmem:[%s1 + $0x20] sm:$0xff]
  %v45 = vld [vmem:[%s1 + $0x28] sm:$0xff]
  %v46 = vld [vmem:[%s1 + $0x30] sm:$0xff]
  %v47 = vld [vmem:[%s1 + $0x38] sm:$0xff]
  %s49 = vtos %v39
  %v50 = vstv %s49
  %v52 = vmul.f32 %v50, %v40
  %v53 = vmul.f32 %v50, %v41
  %v54 = vmul.f32 %v50, %v42
  %v55 = vmul.f32 %v50, %v43
  %v56 = vmul.f32 %v50, %v44
  %v57 = vmul.f32 %v50, %v45
  %v58 = vmul.f32 %v50, %v46
  %v59 = vmul.f32 %v50, %v47
  %v60 = vadd.f32 %v31, %v52
  %v61 = vadd.f32 %v32, %v53
  %v62 = vadd.f32 %v33, %v54
  %v63 = vadd.f32 %v34, %v55
  %v64 = vadd.f32 %v35, %v56
  %v65 = vadd.f32 %v36, %v57
  %v66 = vadd.f32 %v37, %v58
  %v67 = vadd.f32 %v38, %v59
  %s68 = scalar_lea.vmem %s1, 64
  %v69 = vld [vmem:[%s68] sm:$0xff]
  %v70 = vld [vmem:[%s68 + $0x8] sm:$0xff]
  %v71 = vld [vmem:[%s68 + $0x10] sm:$0xff]
  %v72 = vld [vmem:[%s68 + $0x18] sm:$0xff]
  %v73 = vld [vmem:[%s68 + $0x20] sm:$0xff]
  %v74 = vld [vmem:[%s68 + $0x28] sm:$0xff]
  %v75 = vld [vmem:[%s68 + $0x30] sm:$0xff]
  %v76 = vld [vmem:[%s68 + $0x38] sm:$0xff]
  %77 = vrot.lane.b32.xlu0 %v39, 127
  %v78 = vpop.permute.xlu0 %77
  %s79 = vtos %v78
  %v80 = vstv %s79
  %v82 = vmul.f32 %v80, %v69
  %v83 = vmul.f32 %v80, %v70
  %v84 = vmul.f32 %v80, %v71
  %v85 = vmul.f32 %v80, %v72
  %v86 = vmul.f32 %v80, %v73
  %v87 = vmul.f32 %v80, %v74
  %v88 = vmul.f32 %v80, %v75
  %v89 = vmul.f32 %v80, %v76
  %v90 = vadd.f32 %v60, %v82
  %v91 = vadd.f32 %v61, %v83
  %v92 = vadd.f32 %v62, %v84
  %v93 = vadd.f32 %v63, %v85
  %v94 = vadd.f32 %v64, %v86
  %v95 = vadd.f32 %v65, %v87
  %v96 = vadd.f32 %v66, %v88
  %v97 = vadd.f32 %v67, %v89
  %98 = vst [vmem:[#allocation2] sm:$0xff] %v90
  %99 = vst [vmem:[#allocation2 + $0x8] sm:$0xff] %v91
  %100 = vst [vmem:[#allocation2 + $0x10] sm:$0xff] %v92
  %101 = vst [vmem:[#allocation2 + $0x18] sm:$0xff] %v93
  %102 = vst [vmem:[#allocation2 + $0x20] sm:$0xff] %v94
  %103 = vst [vmem:[#allocation2 + $0x28] sm:$0xff] %v95
  %104 = vst [vmem:[#allocation2 + $0x30] sm:$0xff] %v96
  %105 = vst [vmem:[#allocation2 + $0x38] sm:$0xff] %v97
  %106 = vst [vmem:[#allocation2 + $0x80] sm:$0xff] %v90
  %107 = vst [vmem:[#allocation2 + $0x88] sm:$0xff] %v91
  %108 = vst [vmem:[#allocation2 + $0x90] sm:$0xff] %v92
  %109 = vst [vmem:[#allocation2 + $0x98] sm:$0xff] %v93
  %110 = vst [vmem:[#allocation2 + $0xa0] sm:$0xff] %v94
  %111 = vst [vmem:[#allocation2 + $0xa8] sm:$0xff] %v95
  %112 = vst [vmem:[#allocation2 + $0xb0] sm:$0xff] %v96
  %113 = vst [vmem:[#allocation2 + $0xb8] sm:$0xff] %v97
  %v114 = vld [vmem:[%s0 + $0x1] sm:$0x1]
  %v115 = vld [vmem:[%s1] sm:$0xff]
  %v116 = vld [vmem:[%s1 + $0x8] sm:$0xff]
  %v117 = vld [vmem:[%s1 + $0x10] sm:$0xff]
  %v118 = vld [vmem:[%s1 + $0x18] sm:$0xff]
  %v119 = vld [vmem:[%s1 + $0x20] sm:$0xff]
  %v120 = vld [vmem:[%s1 + $0x28] sm:$0xff]
  %v121 = vld [vmem:[%s1 + $0x30] sm:$0xff]
  %v122 = vld [vmem:[%s1 + $0x38] sm:$0xff]
  %s124 = vtos %v114
  %v125 = vstv %s124
  %v127 = vmul.f32 %v125, %v115
  %v128 = vmul.f32 %v125, %v116
  %v129 = vmul.f32 %v125, %v117
  %v130 = vmul.f32 %v125, %v118
  %v131 = vmul.f32 %v125, %v119
  %v132 = vmul.f32 %v125, %v120
  %v133 = vmul.f32 %v125, %v121
  %v134 = vmul.f32 %v125, %v122
  %v135 = vadd.f32 %v31, %v127
  %v136 = vadd.f32 %v32, %v128
  %v137 = vadd.f32 %v33, %v129
  %v138 = vadd.f32 %v34, %v130
  %v139 = vadd.f32 %v35, %v131
  %v140 = vadd.f32 %v36, %v132
  %v141 = vadd.f32 %v37, %v133
  %v142 = vadd.f32 %v38, %v134
  %v143 = vld [vmem:[%s68] sm:$0xff]
  %v144 = vld [vmem:[%s68 + $0x8] sm:$0xff]
  %v145 = vld [vmem:[%s68 + $0x10] sm:$0xff]
  %v146 = vld [vmem:[%s68 + $0x18] sm:$0xff]
  %v147 = vld [vmem:[%s68 + $0x20] sm:$0xff]
  %v148 = vld [vmem:[%s68 + $0x28] sm:$0xff]
  %v149 = vld [vmem:[%s68 + $0x30] sm:$0xff]
  %v150 = vld [vmem:[%s68 + $0x38] sm:$0xff]
  %151 = vrot.lane.b32.xlu0 %v114, 127
  %v152 = vpop.permute.xlu0 %151
  %s153 = vtos %v152
  %v154 = vstv %s153
  %v156 = vmul.f32 %v154, %v143
  %v157 = vmul.f32 %v154, %v144
  %v158 = vmul.f32 %v154, %v145
  %v159 = vmul.f32 %v154, %v146
  %v160 = vmul.f32 %v154, %v147
  %v161 = vmul.f32 %v154, %v148
  %v162 = vmul.f32 %v154, %v149
  %v163 = vmul.f32 %v154, %v150
  %v164 = vadd.f32 %v135, %v156
  %v165 = vadd.f32 %v136, %v157
  %v166 = vadd.f32 %v137, %v158
  %v167 = vadd.f32 %v138, %v159
  %v168 = vadd.f32 %v139, %v160
  %v169 = vadd.f32 %v140, %v161
  %v170 = vadd.f32 %v141, %v162
  %v171 = vadd.f32 %v142, %v163
  %172 = vst [vmem:[#allocation2 + $0x40] sm:$0xff] %v164
  %173 = vst [vmem:[#allocation2 + $0x48] sm:$0xff] %v165
  %174 = vst [vmem:[#allocation2 + $0x50] sm:$0xff] %v166
  %175 = vst [vmem:[#allocation2 + $0x58] sm:$0xff] %v167
  %176 = vst [vmem:[#allocation2 + $0x60] sm:$0xff] %v168
  %177 = vst [vmem:[#allocation2 + $0x68] sm:$0xff] %v169
  %178 = vst [vmem:[#allocation2 + $0x70] sm:$0xff] %v170
  %179 = vst [vmem:[#allocation2 + $0x78] sm:$0xff] %v171
  %180 = vst [vmem:[#allocation2 + $0xc0] sm:$0xff] %v164
  %181 = vst [vmem:[#allocation2 + $0xc8] sm:$0xff] %v165
  %182 = vst [vmem:[#allocation2 + $0xd0] sm:$0xff] %v166
  %183 = vst [vmem:[#allocation2 + $0xd8] sm:$0xff] %v167
  %184 = vst [vmem:[#allocation2 + $0xe0] sm:$0xff] %v168
  %185 = vst [vmem:[#allocation2 + $0xe8] sm:$0xff] %v169
  %186 = vst [vmem:[#allocation2 + $0xf0] sm:$0xff] %v170
  %187 = vst [vmem:[#allocation2 + $0xf8] sm:$0xff] %v171
  %v188 = vld [vmem:[#allocation2 + $0x77] sm:$0xff]
  %v189 = vld [vmem:[#allocation2 + $0x7f] sm:$0xff]
  %v190 = vld [vmem:[#allocation2 + $0x87] sm:$0xff]
  %v191 = vld [vmem:[#allocation2 + $0x8f] sm:$0xff]
  %v192 = vld [vmem:[#allocation2 + $0x97] sm:$0xff]
  %v193 = vld [vmem:[#allocation2 + $0x9f] sm:$0xff]
  %v194 = vld [vmem:[#allocation2 + $0xa7] sm:$0xff]
  %v195 = vld [vmem:[#allocation2 + $0xaf] sm:$0xff]
  %v196 = vld [vmem:[#allocation2 + $0xb7] sm:$0xff]
  %v197 = vld [vmem:[#allocation2 + $0xbf] sm:$0xff]
  %v198 = vld [vmem:[#allocation2 + $0xc7] sm:$0xff]
  %v199 = vld [vmem:[#allocation2 + $0xcf] sm:$0xff]
  %v200 = vld [vmem:[#allocation2 + $0xd7] sm:$0xff]
  %v201 = vld [vmem:[#allocation2 + $0xdf] sm:$0xff]
  %v202 = vld [vmem:[#allocation2 + $0xe7] sm:$0xff]
  %v203 = vld [vmem:[#allocation2 + $0xef] sm:$0xff]
  %v204 = vpack.c.bf16 %v189, %v188
  %v205 = vpack.c.bf16 %v191, %v190
  %v206 = vpack.c.bf16 %v193, %v192
  %v207 = vpack.c.bf16 %v195, %v194
  %v208 = vpack.c.bf16 %v197, %v196
  %v209 = vpack.c.bf16 %v199, %v198
  %v210 = vpack.c.bf16 %v201, %v200
  %v211 = vpack.c.bf16 %v203, %v202
  %v212 = vld [vmem:[%s3] sm:$0xff]
  %v213 = vld [vmem:[%s3 + $0x8] sm:$0xff]
  %v214 = vld [vmem:[%s3 + $0x10] sm:$0xff]
  %v215 = vld [vmem:[%s3 + $0x18] sm:$0xff]
  %v216 = vld [vmem:[%s3 + $0x20] sm:$0xff]
  %v217 = vld [vmem:[%s3 + $0x28] sm:$0xff]
  %v218 = vld [vmem:[%s3 + $0x30] sm:$0xff]
  %v219 = vld [vmem:[%s3 + $0x38] sm:$0xff]
  %v220 = vld [vmem:[%s3 + $0x40] sm:$0xff]
  %v221 = vld [vmem:[%s3 + $0x48] sm:$0xff]
  %v222 = vld [vmem:[%s3 + $0x50] sm:$0xff]
  %v223 = vld [vmem:[%s3 + $0x58] sm:$0xff]
  %v224 = vld [vmem:[%s3 + $0x60] sm:$0xff]
  %v225 = vld [vmem:[%s3 + $0x68] sm:$0xff]
  %v226 = vld [vmem:[%s3 + $0x70] sm:$0xff]
  %v227 = vld [vmem:[%s3 + $0x78] sm:$0xff]
  %v228 = vld [vmem:[#allocation2 + $0x78] sm:$0xff]
  %v229 = vld [vmem:[#allocation2 + $0x80] sm:$0xff]
  %v230 = vld [vmem:[#allocation2 + $0x88] sm:$0xff]
  %v231 = vld [vmem:[#allocation2 + $0x90] sm:$0xff]
  %v232 = vld [vmem:[#allocation2 + $0x98] sm:$0xff]
  %v233 = vld [vmem:[#allocation2 + $0xa0] sm:$0xff]
  %v234 = vld [vmem:[#allocation2 + $0xa8] sm:$0xff]
  %v235 = vld [vmem:[#allocation2 + $0xb0] sm:$0xff]
  %v236 = vld [vmem:[#allocation2 + $0xb8] sm:$0xff]
  %v237 = vld [vmem:[#allocation2 + $0xc0] sm:$0xff]
  %v238 = vld [vmem:[#allocation2 + $0xc8] sm:$0xff]
  %v239 = vld [vmem:[#allocation2 + $0xd0] sm:$0xff]
  %v240 = vld [vmem:[#allocation2 + $0xd8] sm:$0xff]
  %v241 = vld [vmem:[#allocation2 + $0xe0] sm:$0xff]
  %v242 = vld [vmem:[#allocation2 + $0xe8] sm:$0xff]
  %v243 = vld [vmem:[#allocation2 + $0xf0] sm:$0xff]
  %v244 = vpack.c.bf16 %v229, %v228
  %v245 = vpack.c.bf16 %v231, %v230
  %v246 = vpack.c.bf16 %v233, %v232
  %v247 = vpack.c.bf16 %v235, %v234
  %v248 = vpack.c.bf16 %v237, %v236
  %v249 = vpack.c.bf16 %v239, %v238
  %v250 = vpack.c.bf16 %v241, %v240
  %v251 = vpack.c.bf16 %v243, %v242
  %s252 = scalar_lea.vmem %s3, 128
  %v253 = vld [vmem:[%s252] sm:$0xff]
  %v254 = vld [vmem:[%s252 + $0x8] sm:$0xff]
  %v255 = vld [vmem:[%s252 + $0x10] sm:$0xff]
  %v256 = vld [vmem:[%s252 + $0x18] sm:$0xff]
  %v257 = vld [vmem:[%s252 + $0x20] sm:$0xff]
  %v258 = vld [vmem:[%s252 + $0x28] sm:$0xff]
  %v259 = vld [vmem:[%s252 + $0x30] sm:$0xff]
  %v260 = vld [vmem:[%s252 + $0x38] sm:$0xff]
  %v261 = vld [vmem:[%s252 + $0x40] sm:$0xff]
  %v262 = vld [vmem:[%s252 + $0x48] sm:$0xff]
  %v263 = vld [vmem:[%s252 + $0x50] sm:$0xff]
  %v264 = vld [vmem:[%s252 + $0x58] sm:$0xff]
  %v265 = vld [vmem:[%s252 + $0x60] sm:$0xff]
  %v266 = vld [vmem:[%s252 + $0x68] sm:$0xff]
  %v267 = vld [vmem:[%s252 + $0x70] sm:$0xff]
  %v268 = vld [vmem:[%s252 + $0x78] sm:$0xff]
  %v285 = vunpack.c.l.b16 %v253
  %v286 = vunpack.c.h.b16 %v253
  %v287 = vunpack.c.l.b16 %v254
  %v288 = vunpack.c.h.b16 %v254
  %v289 = vunpack.c.l.b16 %v255
  %v290 = vunpack.c.h.b16 %v255
  %v291 = vunpack.c.l.b16 %v256
  %v292 = vunpack.c.h.b16 %v256
  %v293 = vunpack.c.l.b16 %v257
  %v294 = vunpack.c.h.b16 %v257
  %v295 = vunpack.c.l.b16 %v258
  %v296 = vunpack.c.h.b16 %v258
  %v297 = vunpack.c.l.b16 %v259
  %v298 = vunpack.c.h.b16 %v259
  %v299 = vunpack.c.l.b16 %v260
  %v300 = vunpack.c.h.b16 %v260
  %v301 = vunpack.c.l.b16 %v261
  %v302 = vunpack.c.h.b16 %v261
  %v303 = vunpack.c.l.b16 %v262
  %v304 = vunpack.c.h.b16 %v262
  %v305 = vunpack.c.l.b16 %v263
  %v306 = vunpack.c.h.b16 %v263
  %v307 = vunpack.c.l.b16 %v264
  %v308 = vunpack.c.h.b16 %v264
  %v309 = vunpack.c.l.b16 %v265
  %v310 = vunpack.c.h.b16 %v265
  %v311 = vunpack.c.l.b16 %v266
  %v312 = vunpack.c.h.b16 %v266
  %v313 = vunpack.c.l.b16 %v267
  %v314 = vunpack.c.h.b16 %v267
  %v315 = vunpack.c.l.b16 %v268
  %v316 = vunpack.c.h.b16 %v268
  %v317 = vpack.c.b16 %v287, %v285
  %v318 = vpack.c.b16 %v288, %v286
  %v319 = vpack.c.b16 %v291, %v289
  %v320 = vpack.c.b16 %v292, %v290
  %v321 = vpack.c.b16 %v295, %v293
  %v322 = vpack.c.b16 %v296, %v294
  %v323 = vpack.c.b16 %v299, %v297
  %v324 = vpack.c.b16 %v300, %v298
  %v325 = vpack.c.b16 %v303, %v301
  %v326 = vpack.c.b16 %v304, %v302
  %v327 = vpack.c.b16 %v307, %v305
  %v328 = vpack.c.b16 %v308, %v306
  %v329 = vpack.c.b16 %v311, %v309
  %v330 = vpack.c.b16 %v312, %v310
  %v331 = vpack.c.b16 %v315, %v313
  %v332 = vpack.c.b16 %v316, %v314
  %349 = vmatpush.bf16.msra.mxu0 %v331
  %350 = vmatpush.bf16.msra.mxu0 %v329
  %351 = vmatpush.bf16.msra.mxu0 %v327
  %352 = vmatpush.bf16.msra.mxu0 %v325
  %353 = vmatpush.bf16.msra.mxu0 %v323
  %354 = vmatpush.bf16.msra.mxu0 %v321
  %355 = vmatpush.bf16.msra.mxu0 %v319
  %356 = vmatpush.bf16.msra.mxu0 %v317
  %357 = vmatmul.bf16.gmra.mxu0 %v244
  %v358 = vpop.f32.mrf.mxu0
  %v359 = vadd.f32 0.0, %v358
  %v360 = vpop.f32.mrf.mxu0
  %v361 = vadd.f32 0.0, %v360
  %362 = vmatmul.bf16.gmra.mxu0 %v245
  %v363 = vpop.f32.mrf.mxu0
  %v364 = vadd.f32 0.0, %v363
  %v365 = vpop.f32.mrf.mxu0
  %v366 = vadd.f32 0.0, %v365
  %367 = vmatmul.bf16.gmra.mxu0 %v246
  %v368 = vpop.f32.mrf.mxu0
  %v369 = vadd.f32 0.0, %v368
  %v370 = vpop.f32.mrf.mxu0
  %v371 = vadd.f32 0.0, %v370
  %372 = vmatmul.bf16.gmra.mxu0 %v247
  %v373 = vpop.f32.mrf.mxu0
  %v374 = vadd.f32 0.0, %v373
  %v375 = vpop.f32.mrf.mxu0
  %v376 = vadd.f32 0.0, %v375
  %377 = vmatmul.bf16.gmra.mxu0 %v248
  %v378 = vpop.f32.mrf.mxu0
  %v379 = vadd.f32 0.0, %v378
  %v380 = vpop.f32.mrf.mxu0
  %v381 = vadd.f32 0.0, %v380
  %382 = vmatmul.bf16.gmra.mxu0 %v249
  %v383 = vpop.f32.mrf.mxu0
  %v384 = vadd.f32 0.0, %v383
  %v385 = vpop.f32.mrf.mxu0
  %v386 = vadd.f32 0.0, %v385
  %387 = vmatmul.bf16.gmra.mxu0 %v250
  %v388 = vpop.f32.mrf.mxu0
  %v389 = vadd.f32 0.0, %v388
  %v390 = vpop.f32.mrf.mxu0
  %v391 = vadd.f32 0.0, %v390
  %392 = vmatmul.bf16.gmra.mxu0 %v251
  %v393 = vpop.f32.mrf.mxu0
  %v394 = vadd.f32 0.0, %v393
  %v395 = vpop.f32.mrf.mxu0
  %v396 = vadd.f32 0.0, %v395
  %397 = vdwg.mxu0
  %398 = vmatpush.bf16.msra.mxu0 %v332
  %399 = vmatpush.bf16.msra.mxu0 %v330
  %400 = vmatpush.bf16.msra.mxu0 %v328
  %401 = vmatpush.bf16.msra.mxu0 %v326
  %402 = vmatpush.bf16.msra.mxu0 %v324
  %403 = vmatpush.bf16.msra.mxu0 %v322
  %404 = vmatpush.bf16.msra.mxu0 %v320
  %405 = vmatpush.bf16.msra.mxu0 %v318
  %406 = vmatmul.bf16.gmra.mxu0 %v244
  %v407 = vpop.f32.mrf.mxu0
  %v408 = vadd.f32 0.0, %v407
  %v409 = vpop.f32.mrf.mxu0
  %v410 = vadd.f32 0.0, %v409
  %411 = vmatmul.bf16.gmra.mxu0 %v245
  %v412 = vpop.f32.mrf.mxu0
  %v413 = vadd.f32 0.0, %v412
  %v414 = vpop.f32.mrf.mxu0
  %v415 = vadd.f32 0.0, %v414
  %416 = vmatmul.bf16.gmra.mxu0 %v246
  %v417 = vpop.f32.mrf.mxu0
  %v418 = vadd.f32 0.0, %v417
  %v419 = vpop.f32.mrf.mxu0
  %v420 = vadd.f32 0.0, %v419
  %421 = vmatmul.bf16.gmra.mxu0 %v247
  %v422 = vpop.f32.mrf.mxu0
  %v423 = vadd.f32 0.0, %v422
  %v424 = vpop.f32.mrf.mxu0
  %v425 = vadd.f32 0.0, %v424
  %426 = vmatmul.bf16.gmra.mxu0 %v248
  %v427 = vpop.f32.mrf.mxu0
  %v428 = vadd.f32 0.0, %v427
  %v429 = vpop.f32.mrf.mxu0
  %v430 = vadd.f32 0.0, %v429
  %431 = vmatmul.bf16.gmra.mxu0 %v249
  %v432 = vpop.f32.mrf.mxu0
  %v433 = vadd.f32 0.0, %v432
  %v434 = vpop.f32.mrf.mxu0
  %v435 = vadd.f32 0.0, %v434
  %436 = vmatmul.bf16.gmra.mxu0 %v250
  %v437 = vpop.f32.mrf.mxu0
  %v438 = vadd.f32 0.0, %v437
  %v439 = vpop.f32.mrf.mxu0
  %v440 = vadd.f32 0.0, %v439
  %441 = vmatmul.bf16.gmra.mxu0 %v251
  %v442 = vpop.f32.mrf.mxu0
  %v443 = vadd.f32 0.0, %v442
  %v444 = vpop.f32.mrf.mxu0
  %v445 = vadd.f32 0.0, %v444
  %446 = vdwg.mxu0
  %v463 = vunpack.c.l.b16 %v212
  %v464 = vunpack.c.h.b16 %v212
  %v465 = vunpack.c.l.b16 %v213
  %v466 = vunpack.c.h.b16 %v213
  %v467 = vunpack.c.l.b16 %v214
  %v468 = vunpack.c.h.b16 %v214
  %v469 = vunpack.c.l.b16 %v215
  %v470 = vunpack.c.h.b16 %v215
  %v471 = vunpack.c.l.b16 %v216
  %v472 = vunpack.c.h.b16 %v216
  %v473 = vunpack.c.l.b16 %v217
  %v474 = vunpack.c.h.b16 %v217
  %v475 = vunpack.c.l.b16 %v218
  %v476 = vunpack.c.h.b16 %v218
  %v477 = vunpack.c.l.b16 %v219
  %v478 = vunpack.c.h.b16 %v219
  %v479 = vunpack.c.l.b16 %v220
  %v480 = vunpack.c.h.b16 %v220
  %v481 = vunpack.c.l.b16 %v221
  %v482 = vunpack.c.h.b16 %v221
  %v483 = vunpack.c.l.b16 %v222
  %v484 = vunpack.c.h.b16 %v222
  %v485 = vunpack.c.l.b16 %v223
  %v486 = vunpack.c.h.b16 %v223
  %v487 = vunpack.c.l.b16 %v224
  %v488 = vunpack.c.h.b16 %v224
  %v489 = vunpack.c.l.b16 %v225
  %v490 = vunpack.c.h.b16 %v225
  %v491 = vunpack.c.l.b16 %v226
  %v492 = vunpack.c.h.b16 %v226
  %v493 = vunpack.c.l.b16 %v227
  %v494 = vunpack.c.h.b16 %v227
  %v495 = vpack.c.b16 %v465, %v463
  %v496 = vpack.c.b16 %v466, %v464
  %v497 = vpack.c.b16 %v469, %v467
  %v498 = vpack.c.b16 %v470, %v468
  %v499 = vpack.c.b16 %v473, %v471
  %v500 = vpack.c.b16 %v474, %v472
  %v501 = vpack.c.b16 %v477, %v475
  %v502 = vpack.c.b16 %v478, %v476
  %v503 = vpack.c.b16 %v481, %v479
  %v504 = vpack.c.b16 %v482, %v480
  %v505 = vpack.c.b16 %v485, %v483
  %v506 = vpack.c.b16 %v486, %v484
  %v507 = vpack.c.b16 %v489, %v487
  %v508 = vpack.c.b16 %v490, %v488
  %v509 = vpack.c.b16 %v493, %v491
  %v510 = vpack.c.b16 %v494, %v492
  %527 = vmatpush.bf16.msra.mxu0 %v509
  %528 = vmatpush.bf16.msra.mxu0 %v507
  %529 = vmatpush.bf16.msra.mxu0 %v505
  %530 = vmatpush.bf16.msra.mxu0 %v503
  %531 = vmatpush.bf16.msra.mxu0 %v501
  %532 = vmatpush.bf16.msra.mxu0 %v499
  %533 = vmatpush.bf16.msra.mxu0 %v497
  %534 = vmatpush.bf16.msra.mxu0 %v495
  %535 = vmatmul.bf16.gmra.mxu0 %v204
  %v536 = vpop.f32.mrf.mxu0
  %v537 = vadd.f32 %v359, %v536
  %v538 = vpop.f32.mrf.mxu0
  %v539 = vadd.f32 %v361, %v538
  %540 = vmatmul.bf16.gmra.mxu0 %v205
  %v541 = vpop.f32.mrf.mxu0
  %v542 = vadd.f32 %v364, %v541
  %v543 = vpop.f32.mrf.mxu0
  %v544 = vadd.f32 %v366, %v543
  %545 = vmatmul.bf16.gmra.mxu0 %v206
  %v546 = vpop.f32.mrf.mxu0
  %v547 = vadd.f32 %v369, %v546
  %v548 = vpop.f32.mrf.mxu0
  %v549 = vadd.f32 %v371, %v548
  %550 = vmatmul.bf16.gmra.mxu0 %v207
  %v551 = vpop.f32.mrf.mxu0
  %v552 = vadd.f32 %v374, %v551
  %v553 = vpop.f32.mrf.mxu0
  %v554 = vadd.f32 %v376, %v553
  %555 = vmatmul.bf16.gmra.mxu0 %v208
  %v556 = vpop.f32.mrf.mxu0
  %v557 = vadd.f32 %v379, %v556
  %v558 = vpop.f32.mrf.mxu0
  %v559 = vadd.f32 %v381, %v558
  %560 = vmatmul.bf16.gmra.mxu0 %v209
  %v561 = vpop.f32.mrf.mxu0
  %v562 = vadd.f32 %v384, %v561
  %v563 = vpop.f32.mrf.mxu0
  %v564 = vadd.f32 %v386, %v563
  %565 = vmatmul.bf16.gmra.mxu0 %v210
  %v566 = vpop.f32.mrf.mxu0
  %v567 = vadd.f32 %v389, %v566
  %v568 = vpop.f32.mrf.mxu0
  %v569 = vadd.f32 %v391, %v568
  %570 = vmatmul.bf16.gmra.mxu0 %v211
  %v571 = vpop.f32.mrf.mxu0
  %v572 = vadd.f32 %v394, %v571
  %v573 = vpop.f32.mrf.mxu0
  %v574 = vadd.f32 %v396, %v573
  %575 = vdwg.mxu0
  %576 = vmatpush.bf16.msra.mxu0 %v510
  %577 = vmatpush.bf16.msra.mxu0 %v508
  %578 = vmatpush.bf16.msra.mxu0 %v506
  %579 = vmatpush.bf16.msra.mxu0 %v504
  %580 = vmatpush.bf16.msra.mxu0 %v502
  %581 = vmatpush.bf16.msra.mxu0 %v500
  %582 = vmatpush.bf16.msra.mxu0 %v498
  %583 = vmatpush.bf16.msra.mxu0 %v496
  %584 = vmatmul.bf16.gmra.mxu0 %v204
  %v585 = vpop.f32.mrf.mxu0
  %v586 = vadd.f32 %v408, %v585
  %v587 = vpop.f32.mrf.mxu0
  %v588 = vadd.f32 %v410, %v587
  %589 = vmatmul.bf16.gmra.mxu0 %v205
  %v590 = vpop.f32.mrf.mxu0
  %v591 = vadd.f32 %v413, %v590
  %v592 = vpop.f32.mrf.mxu0
  %v593 = vadd.f32 %v415, %v592
  %594 = vmatmul.bf16.gmra.mxu0 %v206
  %v595 = vpop.f32.mrf.mxu0
  %v596 = vadd.f32 %v418, %v595
  %v597 = vpop.f32.mrf.mxu0
  %v598 = vadd.f32 %v420, %v597
  %599 = vmatmul.bf16.gmra.mxu0 %v207
  %v600 = vpop.f32.mrf.mxu0
  %v601 = vadd.f32 %v423, %v600
  %v602 = vpop.f32.mrf.mxu0
  %v603 = vadd.f32 %v425, %v602
  %604 = vmatmul.bf16.gmra.mxu0 %v208
  %v605 = vpop.f32.mrf.mxu0
  %v606 = vadd.f32 %v428, %v605
  %v607 = vpop.f32.mrf.mxu0
  %v608 = vadd.f32 %v430, %v607
  %609 = vmatmul.bf16.gmra.mxu0 %v209
  %v610 = vpop.f32.mrf.mxu0
  %v611 = vadd.f32 %v433, %v610
  %v612 = vpop.f32.mrf.mxu0
  %v613 = vadd.f32 %v435, %v612
  %614 = vmatmul.bf16.gmra.mxu0 %v210
  %v615 = vpop.f32.mrf.mxu0
  %v616 = vadd.f32 %v438, %v615
  %v617 = vpop.f32.mrf.mxu0
  %v618 = vadd.f32 %v440, %v617
  %619 = vmatmul.bf16.gmra.mxu0 %v211
  %v620 = vpop.f32.mrf.mxu0
  %v621 = vadd.f32 %v443, %v620
  %v622 = vpop.f32.mrf.mxu0
  %v623 = vadd.f32 %v445, %v622
  %624 = vdwg.mxu0
  %v625 = vld [vmem:[#allocation2 + $0x79] sm:$0xff]
  %v626 = vld [vmem:[#allocation2 + $0x81] sm:$0xff]
  %v627 = vld [vmem:[#allocation2 + $0x89] sm:$0xff]
  %v628 = vld [vmem:[#allocation2 + $0x91] sm:$0xff]
  %v629 = vld [vmem:[#allocation2 + $0x99] sm:$0xff]
  %v630 = vld [vmem:[#allocation2 + $0xa1] sm:$0xff]
  %v631 = vld [vmem:[#allocation2 + $0xa9] sm:$0xff]
  %v632 = vld [vmem:[#allocation2 + $0xb1] sm:$0xff]
  %v633 = vld [vmem:[#allocation2 + $0xb9] sm:$0xff]
  %v634 = vld [vmem:[#allocation2 + $0xc1] sm:$0xff]
  %v635 = vld [vmem:[#allocation2 + $0xc9] sm:$0xff]
  %v636 = vld [vmem:[#allocation2 + $0xd1] sm:$0xff]
  %v637 = vld [vmem:[#allocation2 + $0xd9] sm:$0xff]
  %v638 = vld [vmem:[#allocation2 + $0xe1] sm:$0xff]
  %v639 = vld [vmem:[#allocation2 + $0xe9] sm:$0xff]
  %v640 = vld [vmem:[#allocation2 + $0xf1] sm:$0xff]
  %v641 = vpack.c.bf16 %v626, %v625
  %v642 = vpack.c.bf16 %v628, %v627
  %v643 = vpack.c.bf16 %v630, %v629
  %v644 = vpack.c.bf16 %v632, %v631
  %v645 = vpack.c.bf16 %v634, %v633
  %v646 = vpack.c.bf16 %v636, %v635
  %v647 = vpack.c.bf16 %v638, %v637
  %v648 = vpack.c.bf16 %v640, %v639
  %s649 = scalar_lea.vmem %s3, 256
  %v650 = vld [vmem:[%s649] sm:$0xff]
  %v651 = vld [vmem:[%s649 + $0x8] sm:$0xff]
  %v652 = vld [vmem:[%s649 + $0x10] sm:$0xff]
  %v653 = vld [vmem:[%s649 + $0x18] sm:$0xff]
  %v654 = vld [vmem:[%s649 + $0x20] sm:$0xff]
  %v655 = vld [vmem:[%s649 + $0x28] sm:$0xff]
  %v656 = vld [vmem:[%s649 + $0x30] sm:$0xff]
  %v657 = vld [vmem:[%s649 + $0x38] sm:$0xff]
  %v658 = vld [vmem:[%s649 + $0x40] sm:$0xff]
  %v659 = vld [vmem:[%s649 + $0x48] sm:$0xff]
  %v660 = vld [vmem:[%s649 + $0x50] sm:$0xff]
  %v661 = vld [vmem:[%s649 + $0x58] sm:$0xff]
  %v662 = vld [vmem:[%s649 + $0x60] sm:$0xff]
  %v663 = vld [vmem:[%s649 + $0x68] sm:$0xff]
  %v664 = vld [vmem:[%s649 + $0x70] sm:$0xff]
  %v665 = vld [vmem:[%s649 + $0x78] sm:$0xff]
  %v682 = vunpack.c.l.b16 %v650
  %v683 = vunpack.c.h.b16 %v650
  %v684 = vunpack.c.l.b16 %v651
  %v685 = vunpack.c.h.b16 %v651
  %v686 = vunpack.c.l.b16 %v652
  %v687 = vunpack.c.h.b16 %v652
  %v688 = vunpack.c.l.b16 %v653
  %v689 = vunpack.c.h.b16 %v653
  %v690 = vunpack.c.l.b16 %v654
  %v691 = vunpack.c.h.b16 %v654
  %v692 = vunpack.c.l.b16 %v655
  %v693 = vunpack.c.h.b16 %v655
  %v694 = vunpack.c.l.b16 %v656
  %v695 = vunpack.c.h.b16 %v656
  %v696 = vunpack.c.l.b16 %v657
  %v697 = vunpack.c.h.b16 %v657
  %v698 = vunpack.c.l.b16 %v658
  %v699 = vunpack.c.h.b16 %v658
  %v700 = vunpack.c.l.b16 %v659
  %v701 = vunpack.c.h.b16 %v659
  %v702 = vunpack.c.l.b16 %v660
  %v703 = vunpack.c.h.b16 %v660
  %v704 = vunpack.c.l.b16 %v661
  %v705 = vunpack.c.h.b16 %v661
  %v706 = vunpack.c.l.b16 %v662
  %v707 = vunpack.c.h.b16 %v662
  %v708 = vunpack.c.l.b16 %v663
  %v709 = vunpack.c.h.b16 %v663
  %v710 = vunpack.c.l.b16 %v664
  %v711 = vunpack.c.h.b16 %v664
  %v712 = vunpack.c.l.b16 %v665
  %v713 = vunpack.c.h.b16 %v665
  %v714 = vpack.c.b16 %v684, %v682
  %v715 = vpack.c.b16 %v685, %v683
  %v716 = vpack.c.b16 %v688, %v686
  %v717 = vpack.c.b16 %v689, %v687
  %v718 = vpack.c.b16 %v692, %v690
  %v719 = vpack.c.b16 %v693, %v691
  %v720 = vpack.c.b16 %v696, %v694
  %v721 = vpack.c.b16 %v697, %v695
  %v722 = vpack.c.b16 %v700, %v698
  %v723 = vpack.c.b16 %v701, %v699
  %v724 = vpack.c.b16 %v704, %v702
  %v725 = vpack.c.b16 %v705, %v703
  %v726 = vpack.c.b16 %v708, %v706
  %v727 = vpack.c.b16 %v709, %v707
  %v728 = vpack.c.b16 %v712, %v710
  %v729 = vpack.c.b16 %v713, %v711
  %746 = vmatpush.bf16.msra.mxu0 %v728
  %747 = vmatpush.bf16.msra.mxu0 %v726
  %748 = vmatpush.bf16.msra.mxu0 %v724
  %749 = vmatpush.bf16.msra.mxu0 %v722
  %750 = vmatpush.bf16.msra.mxu0 %v720
  %751 = vmatpush.bf16.msra.mxu0 %v718
  %752 = vmatpush.bf16.msra.mxu0 %v716
  %753 = vmatpush.bf16.msra.mxu0 %v714
  %754 = vmatmul.bf16.gmra.mxu0 %v641
  %v755 = vpop.f32.mrf.mxu0
  %v756 = vadd.f32 0.0, %v755
  %v757 = vpop.f32.mrf.mxu0
  %v758 = vadd.f32 0.0, %v757
  %759 = vmatmul.bf16.gmra.mxu0 %v642
  %v760 = vpop.f32.mrf.mxu0
  %v761 = vadd.f32 0.0, %v760
  %v762 = vpop.f32.mrf.mxu0
  %v763 = vadd.f32 0.0, %v762
  %764 = vmatmul.bf16.gmra.mxu0 %v643
  %v765 = vpop.f32.mrf.mxu0
  %v766 = vadd.f32 0.0, %v765
  %v767 = vpop.f32.mrf.mxu0
  %v768 = vadd.f32 0.0, %v767
  %769 = vmatmul.bf16.gmra.mxu0 %v644
  %v770 = vpop.f32.mrf.mxu0
  %v771 = vadd.f32 0.0, %v770
  %v772 = vpop.f32.mrf.mxu0
  %v773 = vadd.f32 0.0, %v772
  %774 = vmatmul.bf16.gmra.mxu0 %v645
  %v775 = vpop.f32.mrf.mxu0
  %v776 = vadd.f32 0.0, %v775
  %v777 = vpop.f32.mrf.mxu0
  %v778 = vadd.f32 0.0, %v777
  %779 = vmatmul.bf16.gmra.mxu0 %v646
  %v780 = vpop.f32.mrf.mxu0
  %v781 = vadd.f32 0.0, %v780
  %v782 = vpop.f32.mrf.mxu0
  %v783 = vadd.f32 0.0, %v782
  %784 = vmatmul.bf16.gmra.mxu0 %v647
  %v785 = vpop.f32.mrf.mxu0
  %v786 = vadd.f32 0.0, %v785
  %v787 = vpop.f32.mrf.mxu0
  %v788 = vadd.f32 0.0, %v787
  %789 = vmatmul.bf16.gmra.mxu0 %v648
  %v790 = vpop.f32.mrf.mxu0
  %v791 = vadd.f32 0.0, %v790
  %v792 = vpop.f32.mrf.mxu0
  %v793 = vadd.f32 0.0, %v792
  %794 = vdwg.mxu0
  %795 = vmatpush.bf16.msra.mxu0 %v729
  %796 = vmatpush.bf16.msra.mxu0 %v727
  %797 = vmatpush.bf16.msra.mxu0 %v725
  %798 = vmatpush.bf16.msra.mxu0 %v723
  %799 = vmatpush.bf16.msra.mxu0 %v721
  %800 = vmatpush.bf16.msra.mxu0 %v719
  %801 = vmatpush.bf16.msra.mxu0 %v717
  %802 = vmatpush.bf16.msra.mxu0 %v715
  %803 = vmatmul.bf16.gmra.mxu0 %v641
  %v804 = vpop.f32.mrf.mxu0
  %v805 = vadd.f32 0.0, %v804
  %v806 = vpop.f32.mrf.mxu0
  %v807 = vadd.f32 0.0, %v806
  %808 = vmatmul.bf16.gmra.mxu0 %v642
  %v809 = vpop.f32.mrf.mxu0
  %v810 = vadd.f32 0.0, %v809
  %v811 = vpop.f32.mrf.mxu0
  %v812 = vadd.f32 0.0, %v811
  %813 = vmatmul.bf16.gmra.mxu0 %v643
  %v814 = vpop.f32.mrf.mxu0
  %v815 = vadd.f32 0.0, %v814
  %v816 = vpop.f32.mrf.mxu0
  %v817 = vadd.f32 0.0, %v816
  %818 = vmatmul.bf16.gmra.mxu0 %v644
  %v819 = vpop.f32.mrf.mxu0
  %v820 = vadd.f32 0.0, %v819
  %v821 = vpop.f32.mrf.mxu0
  %v822 = vadd.f32 0.0, %v821
  %823 = vmatmul.bf16.gmra.mxu0 %v645
  %v824 = vpop.f32.mrf.mxu0
  %v825 = vadd.f32 0.0, %v824
  %v826 = vpop.f32.mrf.mxu0
  %v827 = vadd.f32 0.0, %v826
  %828 = vmatmul.bf16.gmra.mxu0 %v646
  %v829 = vpop.f32.mrf.mxu0
  %v830 = vadd.f32 0.0, %v829
  %v831 = vpop.f32.mrf.mxu0
  %v832 = vadd.f32 0.0, %v831
  %833 = vmatmul.bf16.gmra.mxu0 %v647
  %v834 = vpop.f32.mrf.mxu0
  %v835 = vadd.f32 0.0, %v834
  %v836 = vpop.f32.mrf.mxu0
  %v837 = vadd.f32 0.0, %v836
  %838 = vmatmul.bf16.gmra.mxu0 %v648
  %v839 = vpop.f32.mrf.mxu0
  %v840 = vadd.f32 0.0, %v839
  %v841 = vpop.f32.mrf.mxu0
  %v842 = vadd.f32 0.0, %v841
  %843 = vdwg.mxu0
  %v844 = vadd.f32 %v537, %v756
  %v845 = vadd.f32 %v586, %v805
  %v846 = vadd.f32 %v539, %v758
  %v847 = vadd.f32 %v588, %v807
  %v848 = vadd.f32 %v542, %v761
  %v849 = vadd.f32 %v591, %v810
  %v850 = vadd.f32 %v544, %v763
  %v851 = vadd.f32 %v593, %v812
  %v852 = vadd.f32 %v547, %v766
  %v853 = vadd.f32 %v596, %v815
  %v854 = vadd.f32 %v549, %v768
  %v855 = vadd.f32 %v598, %v817
  %v856 = vadd.f32 %v552, %v771
  %v857 = vadd.f32 %v601, %v820
  %v858 = vadd.f32 %v554, %v773
  %v859 = vadd.f32 %v603, %v822
  %v860 = vadd.f32 %v557, %v776
  %v861 = vadd.f32 %v606, %v825
  %v862 = vadd.f32 %v559, %v778
  %v863 = vadd.f32 %v608, %v827
  %v864 = vadd.f32 %v562, %v781
  %v865 = vadd.f32 %v611, %v830
  %v866 = vadd.f32 %v564, %v783
  %v867 = vadd.f32 %v613, %v832
  %v868 = vadd.f32 %v567, %v786
  %v869 = vadd.f32 %v616, %v835
  %v870 = vadd.f32 %v569, %v788
  %v871 = vadd.f32 %v618, %v837
  %v872 = vadd.f32 %v572, %v791
  %v873 = vadd.f32 %v621, %v840
  %v874 = vadd.f32 %v574, %v793
  %v875 = vadd.f32 %v623, %v842
  %v876 = vld [vmem:[#allocation2 + $0x7f] sm:$0xff]
  %v877 = vld [vmem:[#allocation2 + $0x87] sm:$0xff]
  %v878 = vld [vmem:[#allocation2 + $0x8f] sm:$0xff]
  %v879 = vld [vmem:[#allocation2 + $0x97] sm:$0xff]
  %v880 = vld [vmem:[#allocation2 + $0x9f] sm:$0xff]
  %v881 = vld [vmem:[#allocation2 + $0xa7] sm:$0xff]
  %v882 = vld [vmem:[#allocation2 + $0xaf] sm:$0xff]
  %v883 = vld [vmem:[#allocation2 + $0xb7] sm:$0xff]
  %v884 = vld [vmem:[#allocation2 + $0xbf] sm:$0xff]
  %v885 = vld [vmem:[#allocation2 + $0xc7] sm:$0xff]
  %v886 = vld [vmem:[#allocation2 + $0xcf] sm:$0xff]
  %v887 = vld [vmem:[#allocation2 + $0xd7] sm:$0xff]
  %v888 = vld [vmem:[#allocation2 + $0xdf] sm:$0xff]
  %v889 = vld [vmem:[#allocation2 + $0xe7] sm:$0xff]
  %v890 = vld [vmem:[#allocation2 + $0xef] sm:$0xff]
  %v891 = vld [vmem:[#allocation2 + $0xf7] sm:$0xff]
  %v892 = vpack.c.bf16 %v877, %v876
  %v893 = vpack.c.bf16 %v879, %v878
  %v894 = vpack.c.bf16 %v881, %v880
  %v895 = vpack.c.bf16 %v883, %v882
  %v896 = vpack.c.bf16 %v885, %v884
  %v897 = vpack.c.bf16 %v887, %v886
  %v898 = vpack.c.bf16 %v889, %v888
  %v899 = vpack.c.bf16 %v891, %v890
  %s900 = scalar_lea.vmem %s3, 384
  %v901 = vld [vmem:[%s900] sm:$0xff]
  %v902 = vld [vmem:[%s900 + $0x8] sm:$0xff]
  %v903 = vld [vmem:[%s900 + $0x10] sm:$0xff]
  %v904 = vld [vmem:[%s900 + $0x18] sm:$0xff]
  %v905 = vld [vmem:[%s900 + $0x20] sm:$0xff]
  %v906 = vld [vmem:[%s900 + $0x28] sm:$0xff]
  %v907 = vld [vmem:[%s900 + $0x30] sm:$0xff]
  %v908 = vld [vmem:[%s900 + $0x38] sm:$0xff]
  %v909 = vld [vmem:[%s900 + $0x40] sm:$0xff]
  %v910 = vld [vmem:[%s900 + $0x48] sm:$0xff]
  %v911 = vld [vmem:[%s900 + $0x50] sm:$0xff]
  %v912 = vld [vmem:[%s900 + $0x58] sm:$0xff]
  %v913 = vld [vmem:[%s900 + $0x60] sm:$0xff]
  %v914 = vld [vmem:[%s900 + $0x68] sm:$0xff]
  %v915 = vld [vmem:[%s900 + $0x70] sm:$0xff]
  %v916 = vld [vmem:[%s900 + $0x78] sm:$0xff]
  %v933 = vunpack.c.l.b16 %v901
  %v934 = vunpack.c.h.b16 %v901
  %v935 = vunpack.c.l.b16 %v902
  %v936 = vunpack.c.h.b16 %v902
  %v937 = vunpack.c.l.b16 %v903
  %v938 = vunpack.c.h.b16 %v903
  %v939 = vunpack.c.l.b16 %v904
  %v940 = vunpack.c.h.b16 %v904
  %v941 = vunpack.c.l.b16 %v905
  %v942 = vunpack.c.h.b16 %v905
  %v943 = vunpack.c.l.b16 %v906
  %v944 = vunpack.c.h.b16 %v906
  %v945 = vunpack.c.l.b16 %v907
  %v946 = vunpack.c.h.b16 %v907
  %v947 = vunpack.c.l.b16 %v908
  %v948 = vunpack.c.h.b16 %v908
  %v949 = vunpack.c.l.b16 %v909
  %v950 = vunpack.c.h.b16 %v909
  %v951 = vunpack.c.l.b16 %v910
  %v952 = vunpack.c.h.b16 %v910
  %v953 = vunpack.c.l.b16 %v911
  %v954 = vunpack.c.h.b16 %v911
  %v955 = vunpack.c.l.b16 %v912
  %v956 = vunpack.c.h.b16 %v912
  %v957 = vunpack.c.l.b16 %v913
  %v958 = vunpack.c.h.b16 %v913
  %v959 = vunpack.c.l.b16 %v914
  %v960 = vunpack.c.h.b16 %v914
  %v961 = vunpack.c.l.b16 %v915
  %v962 = vunpack.c.h.b16 %v915
  %v963 = vunpack.c.l.b16 %v916
  %v964 = vunpack.c.h.b16 %v916
  %v965 = vpack.c.b16 %v935, %v933
  %v966 = vpack.c.b16 %v936, %v934
  %v967 = vpack.c.b16 %v939, %v937
  %v968 = vpack.c.b16 %v940, %v938
  %v969 = vpack.c.b16 %v943, %v941
  %v970 = vpack.c.b16 %v944, %v942
  %v971 = vpack.c.b16 %v947, %v945
  %v972 = vpack.c.b16 %v948, %v946
  %v973 = vpack.c.b16 %v951, %v949
  %v974 = vpack.c.b16 %v952, %v950
  %v975 = vpack.c.b16 %v955, %v953
  %v976 = vpack.c.b16 %v956, %v954
  %v977 = vpack.c.b16 %v959, %v957
  %v978 = vpack.c.b16 %v960, %v958
  %v979 = vpack.c.b16 %v963, %v961
  %v980 = vpack.c.b16 %v964, %v962
  %997 = vmatpush.bf16.msra.mxu0 %v979
  %998 = vmatpush.bf16.msra.mxu0 %v977
  %999 = vmatpush.bf16.msra.mxu0 %v975
  %1000 = vmatpush.bf16.msra.mxu0 %v973
  %1001 = vmatpush.bf16.msra.mxu0 %v971
  %1002 = vmatpush.bf16.msra.mxu0 %v969
  %1003 = vmatpush.bf16.msra.mxu0 %v967
  %1004 = vmatpush.bf16.msra.mxu0 %v965
  %1005 = vmatmul.bf16.gmra.mxu0 %v892
  %v1006 = vpop.f32.mrf.mxu0
  %v1007 = vadd.f32 0.0, %v1006
  %v1008 = vpop.f32.mrf.mxu0
  %v1009 = vadd.f32 0.0, %v1008
  %1010 = vmatmul.bf16.gmra.mxu0 %v893
  %v1011 = vpop.f32.mrf.mxu0
  %v1012 = vadd.f32 0.0, %v1011
  %v1013 = vpop.f32.mrf.mxu0
  %v1014 = vadd.f32 0.0, %v1013
  %1015 = vmatmul.bf16.gmra.mxu0 %v894
  %v1016 = vpop.f32.mrf.mxu0
  %v1017 = vadd.f32 0.0, %v1016
  %v1018 = vpop.f32.mrf.mxu0
  %v1019 = vadd.f32 0.0, %v1018
  %1020 = vmatmul.bf16.gmra.mxu0 %v895
  %v1021 = vpop.f32.mrf.mxu0
  %v1022 = vadd.f32 0.0, %v1021
  %v1023 = vpop.f32.mrf.mxu0
  %v1024 = vadd.f32 0.0, %v1023
  %1025 = vmatmul.bf16.gmra.mxu0 %v896
  %v1026 = vpop.f32.mrf.mxu0
  %v1027 = vadd.f32 0.0, %v1026
  %v1028 = vpop.f32.mrf.mxu0
  %v1029 = vadd.f32 0.0, %v1028
  %1030 = vmatmul.bf16.gmra.mxu0 %v897
  %v1031 = vpop.f32.mrf.mxu0
  %v1032 = vadd.f32 0.0, %v1031
  %v1033 = vpop.f32.mrf.mxu0
  %v1034 = vadd.f32 0.0, %v1033
  %1035 = vmatmul.bf16.gmra.mxu0 %v898
  %v1036 = vpop.f32.mrf.mxu0
  %v1037 = vadd.f32 0.0, %v1036
  %v1038 = vpop.f32.mrf.mxu0
  %v1039 = vadd.f32 0.0, %v1038
  %1040 = vmatmul.bf16.gmra.mxu0 %v899
  %v1041 = vpop.f32.mrf.mxu0
  %v1042 = vadd.f32 0.0, %v1041
  %v1043 = vpop.f32.mrf.mxu0
  %v1044 = vadd.f32 0.0, %v1043
  %1045 = vdwg.mxu0
  %1046 = vmatpush.bf16.msra.mxu0 %v980
  %1047 = vmatpush.bf16.msra.mxu0 %v978
  %1048 = vmatpush.bf16.msra.mxu0 %v976
  %1049 = vmatpush.bf16.msra.mxu0 %v974
  %1050 = vmatpush.bf16.msra.mxu0 %v972
  %1051 = vmatpush.bf16.msra.mxu0 %v970
  %1052 = vmatpush.bf16.msra.mxu0 %v968
  %1053 = vmatpush.bf16.msra.mxu0 %v966
  %1054 = vmatmul.bf16.gmra.mxu0 %v892
  %v1055 = vpop.f32.mrf.mxu0
  %v1056 = vadd.f32 0.0, %v1055
  %v1057 = vpop.f32.mrf.mxu0
  %v1058 = vadd.f32 0.0, %v1057
  %1059 = vmatmul.bf16.gmra.mxu0 %v893
  %v1060 = vpop.f32.mrf.mxu0
  %v1061 = vadd.f32 0.0, %v1060
  %v1062 = vpop.f32.mrf.mxu0
  %v1063 = vadd.f32 0.0, %v1062
  %1064 = vmatmul.bf16.gmra.mxu0 %v894
  %v1065 = vpop.f32.mrf.mxu0
  %v1066 = vadd.f32 0.0, %v1065
  %v1067 = vpop.f32.mrf.mxu0
  %v1068 = vadd.f32 0.0, %v1067
  %1069 = vmatmul.bf16.gmra.mxu0 %v895
  %v1070 = vpop.f32.mrf.mxu0
  %v1071 = vadd.f32 0.0, %v1070
  %v1072 = vpop.f32.mrf.mxu0
  %v1073 = vadd.f32 0.0, %v1072
  %1074 = vmatmul.bf16.gmra.mxu0 %v896
  %v1075 = vpop.f32.mrf.mxu0
  %v1076 = vadd.f32 0.0, %v1075
  %v1077 = vpop.f32.mrf.mxu0
  %v1078 = vadd.f32 0.0, %v1077
  %1079 = vmatmul.bf16.gmra.mxu0 %v897
  %v1080 = vpop.f32.mrf.mxu0
  %v1081 = vadd.f32 0.0, %v1080
  %v1082 = vpop.f32.mrf.mxu0
  %v1083 = vadd.f32 0.0, %v1082
  %1084 = vmatmul.bf16.gmra.mxu0 %v898
  %v1085 = vpop.f32.mrf.mxu0
  %v1086 = vadd.f32 0.0, %v1085
  %v1087 = vpop.f32.mrf.mxu0
  %v1088 = vadd.f32 0.0, %v1087
  %1089 = vmatmul.bf16.gmra.mxu0 %v899
  %v1090 = vpop.f32.mrf.mxu0
  %v1091 = vadd.f32 0.0, %v1090
  %v1092 = vpop.f32.mrf.mxu0
  %v1093 = vadd.f32 0.0, %v1092
  %1094 = vdwg.mxu0
  %v1095 = vadd.f32 %v844, %v1007
  %v1096 = vadd.f32 %v845, %v1056
  %v1097 = vadd.f32 %v846, %v1009
  %v1098 = vadd.f32 %v847, %v1058
  %v1099 = vadd.f32 %v848, %v1012
  %v1100 = vadd.f32 %v849, %v1061
  %v1101 = vadd.f32 %v850, %v1014
  %v1102 = vadd.f32 %v851, %v1063
  %v1103 = vadd.f32 %v852, %v1017
  %v1104 = vadd.f32 %v853, %v1066
  %v1105 = vadd.f32 %v854, %v1019
  %v1106 = vadd.f32 %v855, %v1068
  %v1107 = vadd.f32 %v856, %v1022
  %v1108 = vadd.f32 %v857, %v1071
  %v1109 = vadd.f32 %v858, %v1024
  %v1110 = vadd.f32 %v859, %v1073
  %v1111 = vadd.f32 %v860, %v1027
  %v1112 = vadd.f32 %v861, %v1076
  %v1113 = vadd.f32 %v862, %v1029
  %v1114 = vadd.f32 %v863, %v1078
  %v1115 = vadd.f32 %v864, %v1032
  %v1116 = vadd.f32 %v865, %v1081
  %v1117 = vadd.f32 %v866, %v1034
  %v1118 = vadd.f32 %v867, %v1083
  %v1119 = vadd.f32 %v868, %v1037
  %v1120 = vadd.f32 %v869, %v1086
  %v1121 = vadd.f32 %v870, %v1039
  %v1122 = vadd.f32 %v871, %v1088
  %v1123 = vadd.f32 %v872, %v1042
  %v1124 = vadd.f32 %v873, %v1091
  %v1125 = vadd.f32 %v874, %v1044
  %v1126 = vadd.f32 %v875, %v1093
  %v1127 = vld [vmem:[#allocation2] sm:$0xff]
  %v1128 = vld [vmem:[#allocation2 + $0x8] sm:$0xff]
  %v1129 = vld [vmem:[#allocation2 + $0x10] sm:$0xff]
  %v1130 = vld [vmem:[#allocation2 + $0x18] sm:$0xff]
  %v1131 = vld [vmem:[#allocation2 + $0x20] sm:$0xff]
  %v1132 = vld [vmem:[#allocation2 + $0x28] sm:$0xff]
  %v1133 = vld [vmem:[#allocation2 + $0x30] sm:$0xff]
  %v1134 = vld [vmem:[#allocation2 + $0x38] sm:$0xff]
  %v1135 = vld [vmem:[#allocation2 + $0x40] sm:$0xff]
  %v1136 = vld [vmem:[#allocation2 + $0x48] sm:$0xff]
  %v1137 = vld [vmem:[#allocation2 + $0x50] sm:$0xff]
  %v1138 = vld [vmem:[#allocation2 + $0x58] sm:$0xff]
  %v1139 = vld [vmem:[#allocation2 + $0x60] sm:$0xff]
  %v1140 = vld [vmem:[#allocation2 + $0x68] sm:$0xff]
  %v1141 = vld [vmem:[#allocation2 + $0x70] sm:$0xff]
  %v1142 = vld [vmem:[#allocation2 + $0x78] sm:$0xff]
  %v1143 = vpack.c.bf16 %v1128, %v1127
  %v1144 = vpack.c.bf16 %v1130, %v1129
  %v1145 = vpack.c.bf16 %v1132, %v1131
  %v1146 = vpack.c.bf16 %v1134, %v1133
  %v1147 = vpack.c.bf16 %v1136, %v1135
  %v1148 = vpack.c.bf16 %v1138, %v1137
  %v1149 = vpack.c.bf16 %v1140, %v1139
  %v1150 = vpack.c.bf16 %v1142, %v1141
  %s1151 = scalar_lea.vmem %s3, 512
  %v1152 = vld [vmem:[%s1151] sm:$0xff]
  %v1153 = vld [vmem:[%s1151 + $0x8] sm:$0xff]
  %v1154 = vld [vmem:[%s1151 + $0x10] sm:$0xff]
  %v1155 = vld [vmem:[%s1151 + $0x18] sm:$0xff]
  %v1156 = vld [vmem:[%s1151 + $0x20] sm:$0xff]
  %v1157 = vld [vmem:[%s1151 + $0x28] sm:$0xff]
  %v1158 = vld [vmem:[%s1151 + $0x30] sm:$0xff]
  %v1159 = vld [vmem:[%s1151 + $0x38] sm:$0xff]
  %v1160 = vld [vmem:[%s1151 + $0x40] sm:$0xff]
  %v1161 = vld [vmem:[%s1151 + $0x48] sm:$0xff]
  %v1162 = vld [vmem:[%s1151 + $0x50] sm:$0xff]
  %v1163 = vld [vmem:[%s1151 + $0x58] sm:$0xff]
  %v1164 = vld [vmem:[%s1151 + $0x60] sm:$0xff]
  %v1165 = vld [vmem:[%s1151 + $0x68] sm:$0xff]
  %v1166 = vld [vmem:[%s1151 + $0x70] sm:$0xff]
  %v1167 = vld [vmem:[%s1151 + $0x78] sm:$0xff]
  %v1184 = vunpack.c.l.b16 %v1152
  %v1185 = vunpack.c.h.b16 %v1152
  %v1186 = vunpack.c.l.b16 %v1153
  %v1187 = vunpack.c.h.b16 %v1153
  %v1188 = vunpack.c.l.b16 %v1154
  %v1189 = vunpack.c.h.b16 %v1154
  %v1190 = vunpack.c.l.b16 %v1155
  %v1191 = vunpack.c.h.b16 %v1155
  %v1192 = vunpack.c.l.b16 %v1156
  %v1193 = vunpack.c.h.b16 %v1156
  %v1194 = vunpack.c.l.b16 %v1157
  %v1195 = vunpack.c.h.b16 %v1157
  %v1196 = vunpack.c.l.b16 %v1158
  %v1197 = vunpack.c.h.b16 %v1158
  %v1198 = vunpack.c.l.b16 %v1159
  %v1199 = vunpack.c.h.b16 %v1159
  %v1200 = vunpack.c.l.b16 %v1160
  %v1201 = vunpack.c.h.b16 %v1160
  %v1202 = vunpack.c.l.b16 %v1161
  %v1203 = vunpack.c.h.b16 %v1161
  %v1204 = vunpack.c.l.b16 %v1162
  %v1205 = vunpack.c.h.b16 %v1162
  %v1206 = vunpack.c.l.b16 %v1163
  %v1207 = vunpack.c.h.b16 %v1163
  %v1208 = vunpack.c.l.b16 %v1164
  %v1209 = vunpack.c.h.b16 %v1164
  %v1210 = vunpack.c.l.b16 %v1165
  %v1211 = vunpack.c.h.b16 %v1165
  %v1212 = vunpack.c.l.b16 %v1166
  %v1213 = vunpack.c.h.b16 %v1166
  %v1214 = vunpack.c.l.b16 %v1167
  %v1215 = vunpack.c.h.b16 %v1167
  %v1216 = vpack.c.b16 %v1186, %v1184
  %v1217 = vpack.c.b16 %v1187, %v1185
  %v1218 = vpack.c.b16 %v1190, %v1188
  %v1219 = vpack.c.b16 %v1191, %v1189
  %v1220 = vpack.c.b16 %v1194, %v1192
  %v1221 = vpack.c.b16 %v1195, %v1193
  %v1222 = vpack.c.b16 %v1198, %v1196
  %v1223 = vpack.c.b16 %v1199, %v1197
  %v1224 = vpack.c.b16 %v1202, %v1200
  %v1225 = vpack.c.b16 %v1203, %v1201
  %v1226 = vpack.c.b16 %v1206, %v1204
  %v1227 = vpack.c.b16 %v1207, %v1205
  %v1228 = vpack.c.b16 %v1210, %v1208
  %v1229 = vpack.c.b16 %v1211, %v1209
  %v1230 = vpack.c.b16 %v1214, %v1212
  %v1231 = vpack.c.b16 %v1215, %v1213
  %1248 = vmatpush.bf16.msra.mxu0 %v1230
  %1249 = vmatpush.bf16.msra.mxu0 %v1228
  %1250 = vmatpush.bf16.msra.mxu0 %v1226
  %1251 = vmatpush.bf16.msra.mxu0 %v1224
  %1252 = vmatpush.bf16.msra.mxu0 %v1222
  %1253 = vmatpush.bf16.msra.mxu0 %v1220
  %1254 = vmatpush.bf16.msra.mxu0 %v1218
  %1255 = vmatpush.bf16.msra.mxu0 %v1216
  %1256 = vmatmul.bf16.gmra.mxu0 %v1143
  %v1257 = vpop.f32.mrf.mxu0
  %v1258 = vadd.f32 0.0, %v1257
  %v1259 = vpop.f32.mrf.mxu0
  %v1260 = vadd.f32 0.0, %v1259
  %1261 = vmatmul.bf16.gmra.mxu0 %v1144
  %v1262 = vpop.f32.mrf.mxu0
  %v1263 = vadd.f32 0.0, %v1262
  %v1264 = vpop.f32.mrf.mxu0
  %v1265 = vadd.f32 0.0, %v1264
  %1266 = vmatmul.bf16.gmra.mxu0 %v1145
  %v1267 = vpop.f32.mrf.mxu0
  %v1268 = vadd.f32 0.0, %v1267
  %v1269 = vpop.f32.mrf.mxu0
  %v1270 = vadd.f32 0.0, %v1269
  %1271 = vmatmul.bf16.gmra.mxu0 %v1146
  %v1272 = vpop.f32.mrf.mxu0
  %v1273 = vadd.f32 0.0, %v1272
  %v1274 = vpop.f32.mrf.mxu0
  %v1275 = vadd.f32 0.0, %v1274
  %1276 = vmatmul.bf16.gmra.mxu0 %v1147
  %v1277 = vpop.f32.mrf.mxu0
  %v1278 = vadd.f32 0.0, %v1277
  %v1279 = vpop.f32.mrf.mxu0
  %v1280 = vadd.f32 0.0, %v1279
  %1281 = vmatmul.bf16.gmra.mxu0 %v1148
  %v1282 = vpop.f32.mrf.mxu0
  %v1283 = vadd.f32 0.0, %v1282
  %v1284 = vpop.f32.mrf.mxu0
  %v1285 = vadd.f32 0.0, %v1284
  %1286 = vmatmul.bf16.gmra.mxu0 %v1149
  %v1287 = vpop.f32.mrf.mxu0
  %v1288 = vadd.f32 0.0, %v1287
  %v1289 = vpop.f32.mrf.mxu0
  %v1290 = vadd.f32 0.0, %v1289
  %1291 = vmatmul.bf16.gmra.mxu0 %v1150
  %v1292 = vpop.f32.mrf.mxu0
  %v1293 = vadd.f32 0.0, %v1292
  %v1294 = vpop.f32.mrf.mxu0
  %v1295 = vadd.f32 0.0, %v1294
  %1296 = vdwg.mxu0
  %1297 = vmatpush.bf16.msra.mxu0 %v1231
  %1298 = vmatpush.bf16.msra.mxu0 %v1229
  %1299 = vmatpush.bf16.msra.mxu0 %v1227
  %1300 = vmatpush.bf16.msra.mxu0 %v1225
  %1301 = vmatpush.bf16.msra.mxu0 %v1223
  %1302 = vmatpush.bf16.msra.mxu0 %v1221
  %1303 = vmatpush.bf16.msra.mxu0 %v1219
  %1304 = vmatpush.bf16.msra.mxu0 %v1217
  %1305 = vmatmul.bf16.gmra.mxu0 %v1143
  %v1306 = vpop.f32.mrf.mxu0
  %v1307 = vadd.f32 0.0, %v1306
  %v1308 = vpop.f32.mrf.mxu0
  %v1309 = vadd.f32 0.0, %v1308
  %1310 = vmatmul.bf16.gmra.mxu0 %v1144
  %v1311 = vpop.f32.mrf.mxu0
  %v1312 = vadd.f32 0.0, %v1311
  %v1313 = vpop.f32.mrf.mxu0
  %v1314 = vadd.f32 0.0, %v1313
  %1315 = vmatmul.bf16.gmra.mxu0 %v1145
  %v1316 = vpop.f32.mrf.mxu0
  %v1317 = vadd.f32 0.0, %v1316
  %v1318 = vpop.f32.mrf.mxu0
  %v1319 = vadd.f32 0.0, %v1318
  %1320 = vmatmul.bf16.gmra.mxu0 %v1146
  %v1321 = vpop.f32.mrf.mxu0
  %v1322 = vadd.f32 0.0, %v1321
  %v1323 = vpop.f32.mrf.mxu0
  %v1324 = vadd.f32 0.0, %v1323
  %1325 = vmatmul.bf16.gmra.mxu0 %v1147
  %v1326 = vpop.f32.mrf.mxu0
  %v1327 = vadd.f32 0.0, %v1326
  %v1328 = vpop.f32.mrf.mxu0
  %v1329 = vadd.f32 0.0, %v1328
  %1330 = vmatmul.bf16.gmra.mxu0 %v1148
  %v1331 = vpop.f32.mrf.mxu0
  %v1332 = vadd.f32 0.0, %v1331
  %v1333 = vpop.f32.mrf.mxu0
  %v1334 = vadd.f32 0.0, %v1333
  %1335 = vmatmul.bf16.gmra.mxu0 %v1149
  %v1336 = vpop.f32.mrf.mxu0
  %v1337 = vadd.f32 0.0, %v1336
  %v1338 = vpop.f32.mrf.mxu0
  %v1339 = vadd.f32 0.0, %v1338
  %1340 = vmatmul.bf16.gmra.mxu0 %v1150
  %v1341 = vpop.f32.mrf.mxu0
  %v1342 = vadd.f32 0.0, %v1341
  %v1343 = vpop.f32.mrf.mxu0
  %v1344 = vadd.f32 0.0, %v1343
  %1345 = vdwg.mxu0
  %v1346 = vadd.f32 %v1095, %v1258
  %v1347 = vadd.f32 %v1096, %v1307
  %v1348 = vadd.f32 %v1097, %v1260
  %v1349 = vadd.f32 %v1098, %v1309
  %v1350 = vadd.f32 %v1099, %v1263
  %v1351 = vadd.f32 %v1100, %v1312
  %v1352 = vadd.f32 %v1101, %v1265
  %v1353 = vadd.f32 %v1102, %v1314
  %v1354 = vadd.f32 %v1103, %v1268
  %v1355 = vadd.f32 %v1104, %v1317
  %v1356 = vadd.f32 %v1105, %v1270
  %v1357 = vadd.f32 %v1106, %v1319
  %v1358 = vadd.f32 %v1107, %v1273
  %v1359 = vadd.f32 %v1108, %v1322
  %v1360 = vadd.f32 %v1109, %v1275
  %v1361 = vadd.f32 %v1110, %v1324
  %v1362 = vadd.f32 %v1111, %v1278
  %v1363 = vadd.f32 %v1112, %v1327
  %v1364 = vadd.f32 %v1113, %v1280
  %v1365 = vadd.f32 %v1114, %v1329
  %v1366 = vadd.f32 %v1115, %v1283
  %v1367 = vadd.f32 %v1116, %v1332
  %v1368 = vadd.f32 %v1117, %v1285
  %v1369 = vadd.f32 %v1118, %v1334
  %v1370 = vadd.f32 %v1119, %v1288
  %v1371 = vadd.f32 %v1120, %v1337
  %v1372 = vadd.f32 %v1121, %v1290
  %v1373 = vadd.f32 %v1122, %v1339
  %v1374 = vadd.f32 %v1123, %v1293
  %v1375 = vadd.f32 %v1124, %v1342
  %v1376 = vadd.f32 %v1125, %v1295
  %v1377 = vadd.f32 %v1126, %v1344
  %v1378 = vld [vmem:[#allocation2 + $0x1] sm:$0xff]
  %v1379 = vld [vmem:[#allocation2 + $0x9] sm:$0xff]
  %v1380 = vld [vmem:[#allocation2 + $0x11] sm:$0xff]
  %v1381 = vld [vmem:[#allocation2 + $0x19] sm:$0xff]
  %v1382 = vld [vmem:[#allocation2 + $0x21] sm:$0xff]
  %v1383 = vld [vmem:[#allocation2 + $0x29] sm:$0xff]
  %v1384 = vld [vmem:[#allocation2 + $0x31] sm:$0xff]
  %v1385 = vld [vmem:[#allocation2 + $0x39] sm:$0xff]
  %v1386 = vld [vmem:[#allocation2 + $0x41] sm:$0xff]
  %v1387 = vld [vmem:[#allocation2 + $0x49] sm:$0xff]
  %v1388 = vld [vmem:[#allocation2 + $0x51] sm:$0xff]
  %v1389 = vld [vmem:[#allocation2 + $0x59] sm:$0xff]
  %v1390 = vld [vmem:[#allocation2 + $0x61] sm:$0xff]
  %v1391 = vld [vmem:[#allocation2 + $0x69] sm:$0xff]
  %v1392 = vld [vmem:[#allocation2 + $0x71] sm:$0xff]
  %v1393 = vld [vmem:[#allocation2 + $0x79] sm:$0xff]
  %v1394 = vpack.c.bf16 %v1379, %v1378
  %v1395 = vpack.c.bf16 %v1381, %v1380
  %v1396 = vpack.c.bf16 %v1383, %v1382
  %v1397 = vpack.c.bf16 %v1385, %v1384
  %v1398 = vpack.c.bf16 %v1387, %v1386
  %v1399 = vpack.c.bf16 %v1389, %v1388
  %v1400 = vpack.c.bf16 %v1391, %v1390
  %v1401 = vpack.c.bf16 %v1393, %v1392
  %s1402 = scalar_lea.vmem %s3, 640
  %v1403 = vld [vmem:[%s1402] sm:$0xff]
  %v1404 = vld [vmem:[%s1402 + $0x8] sm:$0xff]
  %v1405 = vld [vmem:[%s1402 + $0x10] sm:$0xff]
  %v1406 = vld [vmem:[%s1402 + $0x18] sm:$0xff]
  %v1407 = vld [vmem:[%s1402 + $0x20] sm:$0xff]
  %v1408 = vld [vmem:[%s1402 + $0x28] sm:$0xff]
  %v1409 = vld [vmem:[%s1402 + $0x30] sm:$0xff]
  %v1410 = vld [vmem:[%s1402 + $0x38] sm:$0xff]
  %v1411 = vld [vmem:[%s1402 + $0x40] sm:$0xff]
  %v1412 = vld [vmem:[%s1402 + $0x48] sm:$0xff]
  %v1413 = vld [vmem:[%s1402 + $0x50] sm:$0xff]
  %v1414 = vld [vmem:[%s1402 + $0x58] sm:$0xff]
  %v1415 = vld [vmem:[%s1402 + $0x60] sm:$0xff]
  %v1416 = vld [vmem:[%s1402 + $0x68] sm:$0xff]
  %v1417 = vld [vmem:[%s1402 + $0x70] sm:$0xff]
  %v1418 = vld [vmem:[%s1402 + $0x78] sm:$0xff]
  %v1435 = vunpack.c.l.b16 %v1403
  %v1436 = vunpack.c.h.b16 %v1403
  %v1437 = vunpack.c.l.b16 %v1404
  %v1438 = vunpack.c.h.b16 %v1404
  %v1439 = vunpack.c.l.b16 %v1405
  %v1440 = vunpack.c.h.b16 %v1405
  %v1441 = vunpack.c.l.b16 %v1406
  %v1442 = vunpack.c.h.b16 %v1406
  %v1443 = vunpack.c.l.b16 %v1407
  %v1444 = vunpack.c.h.b16 %v1407
  %v1445 = vunpack.c.l.b16 %v1408
  %v1446 = vunpack.c.h.b16 %v1408
  %v1447 = vunpack.c.l.b16 %v1409
  %v1448 = vunpack.c.h.b16 %v1409
  %v1449 = vunpack.c.l.b16 %v1410
  %v1450 = vunpack.c.h.b16 %v1410
  %v1451 = vunpack.c.l.b16 %v1411
  %v1452 = vunpack.c.h.b16 %v1411
  %v1453 = vunpack.c.l.b16 %v1412
  %v1454 = vunpack.c.h.b16 %v1412
  %v1455 = vunpack.c.l.b16 %v1413
  %v1456 = vunpack.c.h.b16 %v1413
  %v1457 = vunpack.c.l.b16 %v1414
  %v1458 = vunpack.c.h.b16 %v1414
  %v1459 = vunpack.c.l.b16 %v1415
  %v1460 = vunpack.c.h.b16 %v1415
  %v1461 = vunpack.c.l.b16 %v1416
  %v1462 = vunpack.c.h.b16 %v1416
  %v1463 = vunpack.c.l.b16 %v1417
  %v1464 = vunpack.c.h.b16 %v1417
  %v1465 = vunpack.c.l.b16 %v1418
  %v1466 = vunpack.c.h.b16 %v1418
  %v1467 = vpack.c.b16 %v1437, %v1435
  %v1468 = vpack.c.b16 %v1438, %v1436
  %v1469 = vpack.c.b16 %v1441, %v1439
  %v1470 = vpack.c.b16 %v1442, %v1440
  %v1471 = vpack.c.b16 %v1445, %v1443
  %v1472 = vpack.c.b16 %v1446, %v1444
  %v1473 = vpack.c.b16 %v1449, %v1447
  %v1474 = vpack.c.b16 %v1450, %v1448
  %v1475 = vpack.c.b16 %v1453, %v1451
  %v1476 = vpack.c.b16 %v1454, %v1452
  %v1477 = vpack.c.b16 %v1457, %v1455
  %v1478 = vpack.c.b16 %v1458, %v1456
  %v1479 = vpack.c.b16 %v1461, %v1459
  %v1480 = vpack.c.b16 %v1462, %v1460
  %v1481 = vpack.c.b16 %v1465, %v1463
  %v1482 = vpack.c.b16 %v1466, %v1464
  %1499 = vmatpush.bf16.msra.mxu0 %v1481
  %1500 = vmatpush.bf16.msra.mxu0 %v1479
  %1501 = vmatpush.bf16.msra.mxu0 %v1477
  %1502 = vmatpush.bf16.msra.mxu0 %v1475
  %1503 = vmatpush.bf16.msra.mxu0 %v1473
  %1504 = vmatpush.bf16.msra.mxu0 %v1471
  %1505 = vmatpush.bf16.msra.mxu0 %v1469
  %1506 = vmatpush.bf16.msra.mxu0 %v1467
  %1507 = vmatmul.bf16.gmra.mxu0 %v1394
  %v1508 = vpop.f32.mrf.mxu0
  %v1509 = vadd.f32 0.0, %v1508
  %v1510 = vpop.f32.mrf.mxu0
  %v1511 = vadd.f32 0.0, %v1510
  %1512 = vmatmul.bf16.gmra.mxu0 %v1395
  %v1513 = vpop.f32.mrf.mxu0
  %v1514 = vadd.f32 0.0, %v1513
  %v1515 = vpop.f32.mrf.mxu0
  %v1516 = vadd.f32 0.0, %v1515
  %1517 = vmatmul.bf16.gmra.mxu0 %v1396
  %v1518 = vpop.f32.mrf.mxu0
  %v1519 = vadd.f32 0.0, %v1518
  %v1520 = vpop.f32.mrf.mxu0
  %v1521 = vadd.f32 0.0, %v1520
  %1522 = vmatmul.bf16.gmra.mxu0 %v1397
  %v1523 = vpop.f32.mrf.mxu0
  %v1524 = vadd.f32 0.0, %v1523
  %v1525 = vpop.f32.mrf.mxu0
  %v1526 = vadd.f32 0.0, %v1525
  %1527 = vmatmul.bf16.gmra.mxu0 %v1398
  %v1528 = vpop.f32.mrf.mxu0
  %v1529 = vadd.f32 0.0, %v1528
  %v1530 = vpop.f32.mrf.mxu0
  %v1531 = vadd.f32 0.0, %v1530
  %1532 = vmatmul.bf16.gmra.mxu0 %v1399
  %v1533 = vpop.f32.mrf.mxu0
  %v1534 = vadd.f32 0.0, %v1533
  %v1535 = vpop.f32.mrf.mxu0
  %v1536 = vadd.f32 0.0, %v1535
  %1537 = vmatmul.bf16.gmra.mxu0 %v1400
  %v1538 = vpop.f32.mrf.mxu0
  %v1539 = vadd.f32 0.0, %v1538
  %v1540 = vpop.f32.mrf.mxu0
  %v1541 = vadd.f32 0.0, %v1540
  %1542 = vmatmul.bf16.gmra.mxu0 %v1401
  %v1543 = vpop.f32.mrf.mxu0
  %v1544 = vadd.f32 0.0, %v1543
  %v1545 = vpop.f32.mrf.mxu0
  %v1546 = vadd.f32 0.0, %v1545
  %1547 = vdwg.mxu0
  %1548 = vmatpush.bf16.msra.mxu0 %v1482
  %1549 = vmatpush.bf16.msra.mxu0 %v1480
  %1550 = vmatpush.bf16.msra.mxu0 %v1478
  %1551 = vmatpush.bf16.msra.mxu0 %v1476
  %1552 = vmatpush.bf16.msra.mxu0 %v1474
  %1553 = vmatpush.bf16.msra.mxu0 %v1472
  %1554 = vmatpush.bf16.msra.mxu0 %v1470
  %1555 = vmatpush.bf16.msra.mxu0 %v1468
  %1556 = vmatmul.bf16.gmra.mxu0 %v1394
  %v1557 = vpop.f32.mrf.mxu0
  %v1558 = vadd.f32 0.0, %v1557
  %v1559 = vpop.f32.mrf.mxu0
  %v1560 = vadd.f32 0.0, %v1559
  %1561 = vmatmul.bf16.gmra.mxu0 %v1395
  %v1562 = vpop.f32.mrf.mxu0
  %v1563 = vadd.f32 0.0, %v1562
  %v1564 = vpop.f32.mrf.mxu0
  %v1565 = vadd.f32 0.0, %v1564
  %1566 = vmatmul.bf16.gmra.mxu0 %v1396
  %v1567 = vpop.f32.mrf.mxu0
  %v1568 = vadd.f32 0.0, %v1567
  %v1569 = vpop.f32.mrf.mxu0
  %v1570 = vadd.f32 0.0, %v1569
  %1571 = vmatmul.bf16.gmra.mxu0 %v1397
  %v1572 = vpop.f32.mrf.mxu0
  %v1573 = vadd.f32 0.0, %v1572
  %v1574 = vpop.f32.mrf.mxu0
  %v1575 = vadd.f32 0.0, %v1574
  %1576 = vmatmul.bf16.gmra.mxu0 %v1398
  %v1577 = vpop.f32.mrf.mxu0
  %v1578 = vadd.f32 0.0, %v1577
  %v1579 = vpop.f32.mrf.mxu0
  %v1580 = vadd.f32 0.0, %v1579
  %1581 = vmatmul.bf16.gmra.mxu0 %v1399
  %v1582 = vpop.f32.mrf.mxu0
  %v1583 = vadd.f32 0.0, %v1582
  %v1584 = vpop.f32.mrf.mxu0
  %v1585 = vadd.f32 0.0, %v1584
  %1586 = vmatmul.bf16.gmra.mxu0 %v1400
  %v1587 = vpop.f32.mrf.mxu0
  %v1588 = vadd.f32 0.0, %v1587
  %v1589 = vpop.f32.mrf.mxu0
  %v1590 = vadd.f32 0.0, %v1589
  %1591 = vmatmul.bf16.gmra.mxu0 %v1401
  %v1592 = vpop.f32.mrf.mxu0
  %v1593 = vadd.f32 0.0, %v1592
  %v1594 = vpop.f32.mrf.mxu0
  %v1595 = vadd.f32 0.0, %v1594
  %1596 = vdwg.mxu0
  %v1597 = vadd.f32 %v1346, %v1509
  %v1598 = vadd.f32 %v1347, %v1558
  %v1599 = vadd.f32 %v1348, %v1511
  %v1600 = vadd.f32 %v1349, %v1560
  %v1601 = vadd.f32 %v1350, %v1514
  %v1602 = vadd.f32 %v1351, %v1563
  %v1603 = vadd.f32 %v1352, %v1516
  %v1604 = vadd.f32 %v1353, %v1565
  %v1605 = vadd.f32 %v1354, %v1519
  %v1606 = vadd.f32 %v1355, %v1568
  %v1607 = vadd.f32 %v1356, %v1521
  %v1608 = vadd.f32 %v1357, %v1570
  %v1609 = vadd.f32 %v1358, %v1524
  %v1610 = vadd.f32 %v1359, %v1573
  %v1611 = vadd.f32 %v1360, %v1526
  %v1612 = vadd.f32 %v1361, %v1575
  %v1613 = vadd.f32 %v1362, %v1529
  %v1614 = vadd.f32 %v1363, %v1578
  %v1615 = vadd.f32 %v1364, %v1531
  %v1616 = vadd.f32 %v1365, %v1580
  %v1617 = vadd.f32 %v1366, %v1534
  %v1618 = vadd.f32 %v1367, %v1583
  %v1619 = vadd.f32 %v1368, %v1536
  %v1620 = vadd.f32 %v1369, %v1585
  %v1621 = vadd.f32 %v1370, %v1539
  %v1622 = vadd.f32 %v1371, %v1588
  %v1623 = vadd.f32 %v1372, %v1541
  %v1624 = vadd.f32 %v1373, %v1590
  %v1625 = vadd.f32 %v1374, %v1544
  %v1626 = vadd.f32 %v1375, %v1593
  %v1627 = vadd.f32 %v1376, %v1546
  %v1628 = vadd.f32 %v1377, %v1595
  %v1629 = vld [vmem:[#allocation2 + $0x7] sm:$0xff]
  %v1630 = vld [vmem:[#allocation2 + $0xf] sm:$0xff]
  %v1631 = vld [vmem:[#allocation2 + $0x17] sm:$0xff]
  %v1632 = vld [vmem:[#allocation2 + $0x1f] sm:$0xff]
  %v1633 = vld [vmem:[#allocation2 + $0x27] sm:$0xff]
  %v1634 = vld [vmem:[#allocation2 + $0x2f] sm:$0xff]
  %v1635 = vld [vmem:[#allocation2 + $0x37] sm:$0xff]
  %v1636 = vld [vmem:[#allocation2 + $0x3f] sm:$0xff]
  %v1637 = vld [vmem:[#allocation2 + $0x47] sm:$0xff]
  %v1638 = vld [vmem:[#allocation2 + $0x4f] sm:$0xff]
  %v1639 = vld [vmem:[#allocation2 + $0x57] sm:$0xff]
  %v1640 = vld [vmem:[#allocation2 + $0x5f] sm:$0xff]
  %v1641 = vld [vmem:[#allocation2 + $0x67] sm:$0xff]
  %v1642 = vld [vmem:[#allocation2 + $0x6f] sm:$0xff]
  %v1643 = vld [vmem:[#allocation2 + $0x77] sm:$0xff]
  %v1644 = vld [vmem:[#allocation2 + $0x7f] sm:$0xff]
  %v1645 = vpack.c.bf16 %v1630, %v1629
  %v1646 = vpack.c.bf16 %v1632, %v1631
  %v1647 = vpack.c.bf16 %v1634, %v1633
  %v1648 = vpack.c.bf16 %v1636, %v1635
  %v1649 = vpack.c.bf16 %v1638, %v1637
  %v1650 = vpack.c.bf16 %v1640, %v1639
  %v1651 = vpack.c.bf16 %v1642, %v1641
  %v1652 = vpack.c.bf16 %v1644, %v1643
  %s1653 = scalar_lea.vmem %s3, 768
  %v1654 = vld [vmem:[%s1653] sm:$0xff]
  %v1655 = vld [vmem:[%s1653 + $0x8] sm:$0xff]
  %v1656 = vld [vmem:[%s1653 + $0x10] sm:$0xff]
  %v1657 = vld [vmem:[%s1653 + $0x18] sm:$0xff]
  %v1658 = vld [vmem:[%s1653 + $0x20] sm:$0xff]
  %v1659 = vld [vmem:[%s1653 + $0x28] sm:$0xff]
  %v1660 = vld [vmem:[%s1653 + $0x30] sm:$0xff]
  %v1661 = vld [vmem:[%s1653 + $0x38] sm:$0xff]
  %v1662 = vld [vmem:[%s1653 + $0x40] sm:$0xff]
  %v1663 = vld [vmem:[%s1653 + $0x48] sm:$0xff]
  %v1664 = vld [vmem:[%s1653 + $0x50] sm:$0xff]
  %v1665 = vld [vmem:[%s1653 + $0x58] sm:$0xff]
  %v1666 = vld [vmem:[%s1653 + $0x60] sm:$0xff]
  %v1667 = vld [vmem:[%s1653 + $0x68] sm:$0xff]
  %v1668 = vld [vmem:[%s1653 + $0x70] sm:$0xff]
  %v1669 = vld [vmem:[%s1653 + $0x78] sm:$0xff]
  %v1686 = vunpack.c.l.b16 %v1654
  %v1687 = vunpack.c.h.b16 %v1654
  %v1688 = vunpack.c.l.b16 %v1655
  %v1689 = vunpack.c.h.b16 %v1655
  %v1690 = vunpack.c.l.b16 %v1656
  %v1691 = vunpack.c.h.b16 %v1656
  %v1692 = vunpack.c.l.b16 %v1657
  %v1693 = vunpack.c.h.b16 %v1657
  %v1694 = vunpack.c.l.b16 %v1658
  %v1695 = vunpack.c.h.b16 %v1658
  %v1696 = vunpack.c.l.b16 %v1659
  %v1697 = vunpack.c.h.b16 %v1659
  %v1698 = vunpack.c.l.b16 %v1660
  %v1699 = vunpack.c.h.b16 %v1660
  %v1700 = vunpack.c.l.b16 %v1661
  %v1701 = vunpack.c.h.b16 %v1661
  %v1702 = vunpack.c.l.b16 %v1662
  %v1703 = vunpack.c.h.b16 %v1662
  %v1704 = vunpack.c.l.b16 %v1663
  %v1705 = vunpack.c.h.b16 %v1663
  %v1706 = vunpack.c.l.b16 %v1664
  %v1707 = vunpack.c.h.b16 %v1664
  %v1708 = vunpack.c.l.b16 %v1665
  %v1709 = vunpack.c.h.b16 %v1665
  %v1710 = vunpack.c.l.b16 %v1666
  %v1711 = vunpack.c.h.b16 %v1666
  %v1712 = vunpack.c.l.b16 %v1667
  %v1713 = vunpack.c.h.b16 %v1667
  %v1714 = vunpack.c.l.b16 %v1668
  %v1715 = vunpack.c.h.b16 %v1668
  %v1716 = vunpack.c.l.b16 %v1669
  %v1717 = vunpack.c.h.b16 %v1669
  %v1718 = vpack.c.b16 %v1688, %v1686
  %v1719 = vpack.c.b16 %v1689, %v1687
  %v1720 = vpack.c.b16 %v1692, %v1690
  %v1721 = vpack.c.b16 %v1693, %v1691
  %v1722 = vpack.c.b16 %v1696, %v1694
  %v1723 = vpack.c.b16 %v1697, %v1695
  %v1724 = vpack.c.b16 %v1700, %v1698
  %v1725 = vpack.c.b16 %v1701, %v1699
  %v1726 = vpack.c.b16 %v1704, %v1702
  %v1727 = vpack.c.b16 %v1705, %v1703
  %v1728 = vpack.c.b16 %v1708, %v1706
  %v1729 = vpack.c.b16 %v1709, %v1707
  %v1730 = vpack.c.b16 %v1712, %v1710
  %v1731 = vpack.c.b16 %v1713, %v1711
  %v1732 = vpack.c.b16 %v1716, %v1714
  %v1733 = vpack.c.b16 %v1717, %v1715
  %1750 = vmatpush.bf16.msra.mxu0 %v1732
  %1751 = vmatpush.bf16.msra.mxu0 %v1730
  %1752 = vmatpush.bf16.msra.mxu0 %v1728
  %1753 = vmatpush.bf16.msra.mxu0 %v1726
  %1754 = vmatpush.bf16.msra.mxu0 %v1724
  %1755 = vmatpush.bf16.msra.mxu0 %v1722
  %1756 = vmatpush.bf16.msra.mxu0 %v1720
  %1757 = vmatpush.bf16.msra.mxu0 %v1718
  %1758 = vmatmul.bf16.gmra.mxu0 %v1645
  %v1759 = vpop.f32.mrf.mxu0
  %v1760 = vadd.f32 0.0, %v1759
  %v1761 = vpop.f32.mrf.mxu0
  %v1762 = vadd.f32 0.0, %v1761
  %1763 = vmatmul.bf16.gmra.mxu0 %v1646
  %v1764 = vpop.f32.mrf.mxu0
  %v1765 = vadd.f32 0.0, %v1764
  %v1766 = vpop.f32.mrf.mxu0
  %v1767 = vadd.f32 0.0, %v1766
  %1768 = vmatmul.bf16.gmra.mxu0 %v1647
  %v1769 = vpop.f32.mrf.mxu0
  %v1770 = vadd.f32 0.0, %v1769
  %v1771 = vpop.f32.mrf.mxu0
  %v1772 = vadd.f32 0.0, %v1771
  %1773 = vmatmul.bf16.gmra.mxu0 %v1648
  %v1774 = vpop.f32.mrf.mxu0
  %v1775 = vadd.f32 0.0, %v1774
  %v1776 = vpop.f32.mrf.mxu0
  %v1777 = vadd.f32 0.0, %v1776
  %1778 = vmatmul.bf16.gmra.mxu0 %v1649
  %v1779 = vpop.f32.mrf.mxu0
  %v1780 = vadd.f32 0.0, %v1779
  %v1781 = vpop.f32.mrf.mxu0
  %v1782 = vadd.f32 0.0, %v1781
  %1783 = vmatmul.bf16.gmra.mxu0 %v1650
  %v1784 = vpop.f32.mrf.mxu0
  %v1785 = vadd.f32 0.0, %v1784
  %v1786 = vpop.f32.mrf.mxu0
  %v1787 = vadd.f32 0.0, %v1786
  %1788 = vmatmul.bf16.gmra.mxu0 %v1651
  %v1789 = vpop.f32.mrf.mxu0
  %v1790 = vadd.f32 0.0, %v1789
  %v1791 = vpop.f32.mrf.mxu0
  %v1792 = vadd.f32 0.0, %v1791
  %1793 = vmatmul.bf16.gmra.mxu0 %v1652
  %v1794 = vpop.f32.mrf.mxu0
  %v1795 = vadd.f32 0.0, %v1794
  %v1796 = vpop.f32.mrf.mxu0
  %v1797 = vadd.f32 0.0, %v1796
  %1798 = vdwg.mxu0
  %1799 = vmatpush.bf16.msra.mxu0 %v1733
  %1800 = vmatpush.bf16.msra.mxu0 %v1731
  %1801 = vmatpush.bf16.msra.mxu0 %v1729
  %1802 = vmatpush.bf16.msra.mxu0 %v1727
  %1803 = vmatpush.bf16.msra.mxu0 %v1725
  %1804 = vmatpush.bf16.msra.mxu0 %v1723
  %1805 = vmatpush.bf16.msra.mxu0 %v1721
  %1806 = vmatpush.bf16.msra.mxu0 %v1719
  %1807 = vmatmul.bf16.gmra.mxu0 %v1645
  %v1808 = vpop.f32.mrf.mxu0
  %v1809 = vadd.f32 0.0, %v1808
  %v1810 = vpop.f32.mrf.mxu0
  %v1811 = vadd.f32 0.0, %v1810
  %1812 = vmatmul.bf16.gmra.mxu0 %v1646
  %v1813 = vpop.f32.mrf.mxu0
  %v1814 = vadd.f32 0.0, %v1813
  %v1815 = vpop.f32.mrf.mxu0
  %v1816 = vadd.f32 0.0, %v1815
  %1817 = vmatmul.bf16.gmra.mxu0 %v1647
  %v1818 = vpop.f32.mrf.mxu0
  %v1819 = vadd.f32 0.0, %v1818
  %v1820 = vpop.f32.mrf.mxu0
  %v1821 = vadd.f32 0.0, %v1820
  %1822 = vmatmul.bf16.gmra.mxu0 %v1648
  %v1823 = vpop.f32.mrf.mxu0
  %v1824 = vadd.f32 0.0, %v1823
  %v1825 = vpop.f32.mrf.mxu0
  %v1826 = vadd.f32 0.0, %v1825
  %1827 = vmatmul.bf16.gmra.mxu0 %v1649
  %v1828 = vpop.f32.mrf.mxu0
  %v1829 = vadd.f32 0.0, %v1828
  %v1830 = vpop.f32.mrf.mxu0
  %v1831 = vadd.f32 0.0, %v1830
  %1832 = vmatmul.bf16.gmra.mxu0 %v1650
  %v1833 = vpop.f32.mrf.mxu0
  %v1834 = vadd.f32 0.0, %v1833
  %v1835 = vpop.f32.mrf.mxu0
  %v1836 = vadd.f32 0.0, %v1835
  %1837 = vmatmul.bf16.gmra.mxu0 %v1651
  %v1838 = vpop.f32.mrf.mxu0
  %v1839 = vadd.f32 0.0, %v1838
  %v1840 = vpop.f32.mrf.mxu0
  %v1841 = vadd.f32 0.0, %v1840
  %1842 = vmatmul.bf16.gmra.mxu0 %v1652
  %v1843 = vpop.f32.mrf.mxu0
  %v1844 = vadd.f32 0.0, %v1843
  %v1845 = vpop.f32.mrf.mxu0
  %v1846 = vadd.f32 0.0, %v1845
  %1847 = vdwg.mxu0
  %v1848 = vadd.f32 %v1597, %v1760
  %v1849 = vadd.f32 %v1598, %v1809
  %v1850 = vadd.f32 %v1599, %v1762
  %v1851 = vadd.f32 %v1600, %v1811
  %v1852 = vadd.f32 %v1601, %v1765
  %v1853 = vadd.f32 %v1602, %v1814
  %v1854 = vadd.f32 %v1603, %v1767
  %v1855 = vadd.f32 %v1604, %v1816
  %v1856 = vadd.f32 %v1605, %v1770
  %v1857 = vadd.f32 %v1606, %v1819
  %v1858 = vadd.f32 %v1607, %v1772
  %v1859 = vadd.f32 %v1608, %v1821
  %v1860 = vadd.f32 %v1609, %v1775
  %v1861 = vadd.f32 %v1610, %v1824
  %v1862 = vadd.f32 %v1611, %v1777
  %v1863 = vadd.f32 %v1612, %v1826
  %v1864 = vadd.f32 %v1613, %v1780
  %v1865 = vadd.f32 %v1614, %v1829
  %v1866 = vadd.f32 %v1615, %v1782
  %v1867 = vadd.f32 %v1616, %v1831
  %v1868 = vadd.f32 %v1617, %v1785
  %v1869 = vadd.f32 %v1618, %v1834
  %v1870 = vadd.f32 %v1619, %v1787
  %v1871 = vadd.f32 %v1620, %v1836
  %v1872 = vadd.f32 %v1621, %v1790
  %v1873 = vadd.f32 %v1622, %v1839
  %v1874 = vadd.f32 %v1623, %v1792
  %v1875 = vadd.f32 %v1624, %v1841
  %v1876 = vadd.f32 %v1625, %v1795
  %v1877 = vadd.f32 %v1626, %v1844
  %v1878 = vadd.f32 %v1627, %v1797
  %v1879 = vadd.f32 %v1628, %v1846
  %v1880 = vld [vmem:[#allocation2 + $0x8] sm:$0xff]
  %v1881 = vld [vmem:[#allocation2 + $0x10] sm:$0xff]
  %v1882 = vld [vmem:[#allocation2 + $0x18] sm:$0xff]
  %v1883 = vld [vmem:[#allocation2 + $0x20] sm:$0xff]
  %v1884 = vld [vmem:[#allocation2 + $0x28] sm:$0xff]
  %v1885 = vld [vmem:[#allocation2 + $0x30] sm:$0xff]
  %v1886 = vld [vmem:[#allocation2 + $0x38] sm:$0xff]
  %v1887 = vld [vmem:[#allocation2 + $0x40] sm:$0xff]
  %v1888 = vld [vmem:[#allocation2 + $0x48] sm:$0xff]
  %v1889 = vld [vmem:[#allocation2 + $0x50] sm:$0xff]
  %v1890 = vld [vmem:[#allocation2 + $0x58] sm:$0xff]
  %v1891 = vld [vmem:[#allocation2 + $0x60] sm:$0xff]
  %v1892 = vld [vmem:[#allocation2 + $0x68] sm:$0xff]
  %v1893 = vld [vmem:[#allocation2 + $0x70] sm:$0xff]
  %v1894 = vld [vmem:[#allocation2 + $0x78] sm:$0xff]
  %v1895 = vld [vmem:[#allocation2 + $0x80] sm:$0xff]
  %v1896 = vpack.c.bf16 %v1881, %v1880
  %v1897 = vpack.c.bf16 %v1883, %v1882
  %v1898 = vpack.c.bf16 %v1885, %v1884
  %v1899 = vpack.c.bf16 %v1887, %v1886
  %v1900 = vpack.c.bf16 %v1889, %v1888
  %v1901 = vpack.c.bf16 %v1891, %v1890
  %v1902 = vpack.c.bf16 %v1893, %v1892
  %v1903 = vpack.c.bf16 %v1895, %v1894
  %s1904 = scalar_lea.vmem %s3, 896
  %v1905 = vld [vmem:[%s1904] sm:$0xff]
  %v1906 = vld [vmem:[%s1904 + $0x8] sm:$0xff]
  %v1907 = vld [vmem:[%s1904 + $0x10] sm:$0xff]
  %v1908 = vld [vmem:[%s1904 + $0x18] sm:$0xff]
  %v1909 = vld [vmem:[%s1904 + $0x20] sm:$0xff]
  %v1910 = vld [vmem:[%s1904 + $0x28] sm:$0xff]
  %v1911 = vld [vmem:[%s1904 + $0x30] sm:$0xff]
  %v1912 = vld [vmem:[%s1904 + $0x38] sm:$0xff]
  %v1913 = vld [vmem:[%s1904 + $0x40] sm:$0xff]
  %v1914 = vld [vmem:[%s1904 + $0x48] sm:$0xff]
  %v1915 = vld [vmem:[%s1904 + $0x50] sm:$0xff]
  %v1916 = vld [vmem:[%s1904 + $0x58] sm:$0xff]
  %v1917 = vld [vmem:[%s1904 + $0x60] sm:$0xff]
  %v1918 = vld [vmem:[%s1904 + $0x68] sm:$0xff]
  %v1919 = vld [vmem:[%s1904 + $0x70] sm:$0xff]
  %v1920 = vld [vmem:[%s1904 + $0x78] sm:$0xff]
  %v1937 = vunpack.c.l.b16 %v1905
  %v1938 = vunpack.c.h.b16 %v1905
  %v1939 = vunpack.c.l.b16 %v1906
  %v1940 = vunpack.c.h.b16 %v1906
  %v1941 = vunpack.c.l.b16 %v1907
  %v1942 = vunpack.c.h.b16 %v1907
  %v1943 = vunpack.c.l.b16 %v1908
  %v1944 = vunpack.c.h.b16 %v1908
  %v1945 = vunpack.c.l.b16 %v1909
  %v1946 = vunpack.c.h.b16 %v1909
  %v1947 = vunpack.c.l.b16 %v1910
  %v1948 = vunpack.c.h.b16 %v1910
  %v1949 = vunpack.c.l.b16 %v1911
  %v1950 = vunpack.c.h.b16 %v1911
  %v1951 = vunpack.c.l.b16 %v1912
  %v1952 = vunpack.c.h.b16 %v1912
  %v1953 = vunpack.c.l.b16 %v1913
  %v1954 = vunpack.c.h.b16 %v1913
  %v1955 = vunpack.c.l.b16 %v1914
  %v1956 = vunpack.c.h.b16 %v1914
  %v1957 = vunpack.c.l.b16 %v1915
  %v1958 = vunpack.c.h.b16 %v1915
  %v1959 = vunpack.c.l.b16 %v1916
  %v1960 = vunpack.c.h.b16 %v1916
  %v1961 = vunpack.c.l.b16 %v1917
  %v1962 = vunpack.c.h.b16 %v1917
  %v1963 = vunpack.c.l.b16 %v1918
  %v1964 = vunpack.c.h.b16 %v1918
  %v1965 = vunpack.c.l.b16 %v1919
  %v1966 = vunpack.c.h.b16 %v1919
  %v1967 = vunpack.c.l.b16 %v1920
  %v1968 = vunpack.c.h.b16 %v1920
  %v1969 = vpack.c.b16 %v1939, %v1937
  %v1970 = vpack.c.b16 %v1940, %v1938
  %v1971 = vpack.c.b16 %v1943, %v1941
  %v1972 = vpack.c.b16 %v1944, %v1942
  %v1973 = vpack.c.b16 %v1947, %v1945
  %v1974 = vpack.c.b16 %v1948, %v1946
  %v1975 = vpack.c.b16 %v1951, %v1949
  %v1976 = vpack.c.b16 %v1952, %v1950
  %v1977 = vpack.c.b16 %v1955, %v1953
  %v1978 = vpack.c.b16 %v1956, %v1954
  %v1979 = vpack.c.b16 %v1959, %v1957
  %v1980 = vpack.c.b16 %v1960, %v1958
  %v1981 = vpack.c.b16 %v1963, %v1961
  %v1982 = vpack.c.b16 %v1964, %v1962
  %v1983 = vpack.c.b16 %v1967, %v1965
  %v1984 = vpack.c.b16 %v1968, %v1966
  %2001 = vmatpush.bf16.msra.mxu0 %v1983
  %2002 = vmatpush.bf16.msra.mxu0 %v1981
  %2003 = vmatpush.bf16.msra.mxu0 %v1979
  %2004 = vmatpush.bf16.msra.mxu0 %v1977
  %2005 = vmatpush.bf16.msra.mxu0 %v1975
  %2006 = vmatpush.bf16.msra.mxu0 %v1973
  %2007 = vmatpush.bf16.msra.mxu0 %v1971
  %2008 = vmatpush.bf16.msra.mxu0 %v1969
  %2009 = vmatmul.bf16.gmra.mxu0 %v1896
  %v2010 = vpop.f32.mrf.mxu0
  %v2011 = vadd.f32 0.0, %v2010
  %v2012 = vpop.f32.mrf.mxu0
  %v2013 = vadd.f32 0.0, %v2012
  %2014 = vmatmul.bf16.gmra.mxu0 %v1897
  %v2015 = vpop.f32.mrf.mxu0
  %v2016 = vadd.f32 0.0, %v2015
  %v2017 = vpop.f32.mrf.mxu0
  %v2018 = vadd.f32 0.0, %v2017
  %2019 = vmatmul.bf16.gmra.mxu0 %v1898
  %v2020 = vpop.f32.mrf.mxu0
  %v2021 = vadd.f32 0.0, %v2020
  %v2022 = vpop.f32.mrf.mxu0
  %v2023 = vadd.f32 0.0, %v2022
  %2024 = vmatmul.bf16.gmra.mxu0 %v1899
  %v2025 = vpop.f32.mrf.mxu0
  %v2026 = vadd.f32 0.0, %v2025
  %v2027 = vpop.f32.mrf.mxu0
  %v2028 = vadd.f32 0.0, %v2027
  %2029 = vmatmul.bf16.gmra.mxu0 %v1900
  %v2030 = vpop.f32.mrf.mxu0
  %v2031 = vadd.f32 0.0, %v2030
  %v2032 = vpop.f32.mrf.mxu0
  %v2033 = vadd.f32 0.0, %v2032
  %2034 = vmatmul.bf16.gmra.mxu0 %v1901
  %v2035 = vpop.f32.mrf.mxu0
  %v2036 = vadd.f32 0.0, %v2035
  %v2037 = vpop.f32.mrf.mxu0
  %v2038 = vadd.f32 0.0, %v2037
  %2039 = vmatmul.bf16.gmra.mxu0 %v1902
  %v2040 = vpop.f32.mrf.mxu0
  %v2041 = vadd.f32 0.0, %v2040
  %v2042 = vpop.f32.mrf.mxu0
  %v2043 = vadd.f32 0.0, %v2042
  %2044 = vmatmul.bf16.gmra.mxu0 %v1903
  %v2045 = vpop.f32.mrf.mxu0
  %v2046 = vadd.f32 0.0, %v2045
  %v2047 = vpop.f32.mrf.mxu0
  %v2048 = vadd.f32 0.0, %v2047
  %2049 = vdwg.mxu0
  %2050 = vmatpush.bf16.msra.mxu0 %v1984
  %2051 = vmatpush.bf16.msra.mxu0 %v1982
  %2052 = vmatpush.bf16.msra.mxu0 %v1980
  %2053 = vmatpush.bf16.msra.mxu0 %v1978
  %2054 = vmatpush.bf16.msra.mxu0 %v1976
  %2055 = vmatpush.bf16.msra.mxu0 %v1974
  %2056 = vmatpush.bf16.msra.mxu0 %v1972
  %2057 = vmatpush.bf16.msra.mxu0 %v1970
  %2058 = vmatmul.bf16.gmra.mxu0 %v1896
  %v2059 = vpop.f32.mrf.mxu0
  %v2060 = vadd.f32 0.0, %v2059
  %v2061 = vpop.f32.mrf.mxu0
  %v2062 = vadd.f32 0.0, %v2061
  %2063 = vmatmul.bf16.gmra.mxu0 %v1897
  %v2064 = vpop.f32.mrf.mxu0
  %v2065 = vadd.f32 0.0, %v2064
  %v2066 = vpop.f32.mrf.mxu0
  %v2067 = vadd.f32 0.0, %v2066
  %2068 = vmatmul.bf16.gmra.mxu0 %v1898
  %v2069 = vpop.f32.mrf.mxu0
  %v2070 = vadd.f32 0.0, %v2069
  %v2071 = vpop.f32.mrf.mxu0
  %v2072 = vadd.f32 0.0, %v2071
  %2073 = vmatmul.bf16.gmra.mxu0 %v1899
  %v2074 = vpop.f32.mrf.mxu0
  %v2075 = vadd.f32 0.0, %v2074
  %v2076 = vpop.f32.mrf.mxu0
  %v2077 = vadd.f32 0.0, %v2076
  %2078 = vmatmul.bf16.gmra.mxu0 %v1900
  %v2079 = vpop.f32.mrf.mxu0
  %v2080 = vadd.f32 0.0, %v2079
  %v2081 = vpop.f32.mrf.mxu0
  %v2082 = vadd.f32 0.0, %v2081
  %2083 = vmatmul.bf16.gmra.mxu0 %v1901
  %v2084 = vpop.f32.mrf.mxu0
  %v2085 = vadd.f32 0.0, %v2084
  %v2086 = vpop.f32.mrf.mxu0
  %v2087 = vadd.f32 0.0, %v2086
  %2088 = vmatmul.bf16.gmra.mxu0 %v1902
  %v2089 = vpop.f32.mrf.mxu0
  %v2090 = vadd.f32 0.0, %v2089
  %v2091 = vpop.f32.mrf.mxu0
  %v2092 = vadd.f32 0.0, %v2091
  %2093 = vmatmul.bf16.gmra.mxu0 %v1903
  %v2094 = vpop.f32.mrf.mxu0
  %v2095 = vadd.f32 0.0, %v2094
  %v2096 = vpop.f32.mrf.mxu0
  %v2097 = vadd.f32 0.0, %v2096
  %2098 = vdwg.mxu0
  %v2099 = vadd.f32 %v1848, %v2011
  %v2100 = vadd.f32 %v1849, %v2060
  %v2101 = vadd.f32 %v1850, %v2013
  %v2102 = vadd.f32 %v1851, %v2062
  %v2103 = vadd.f32 %v1852, %v2016
  %v2104 = vadd.f32 %v1853, %v2065
  %v2105 = vadd.f32 %v1854, %v2018
  %v2106 = vadd.f32 %v1855, %v2067
  %v2107 = vadd.f32 %v1856, %v2021
  %v2108 = vadd.f32 %v1857, %v2070
  %v2109 = vadd.f32 %v1858, %v2023
  %v2110 = vadd.f32 %v1859, %v2072
  %v2111 = vadd.f32 %v1860, %v2026
  %v2112 = vadd.f32 %v1861, %v2075
  %v2113 = vadd.f32 %v1862, %v2028
  %v2114 = vadd.f32 %v1863, %v2077
  %v2115 = vadd.f32 %v1864, %v2031
  %v2116 = vadd.f32 %v1865, %v2080
  %v2117 = vadd.f32 %v1866, %v2033
  %v2118 = vadd.f32 %v1867, %v2082
  %v2119 = vadd.f32 %v1868, %v2036
  %v2120 = vadd.f32 %v1869, %v2085
  %v2121 = vadd.f32 %v1870, %v2038
  %v2122 = vadd.f32 %v1871, %v2087
  %v2123 = vadd.f32 %v1872, %v2041
  %v2124 = vadd.f32 %v1873, %v2090
  %v2125 = vadd.f32 %v1874, %v2043
  %v2126 = vadd.f32 %v1875, %v2092
  %v2127 = vadd.f32 %v1876, %v2046
  %v2128 = vadd.f32 %v1877, %v2095
  %v2129 = vadd.f32 %v1878, %v2048
  %v2130 = vadd.f32 %v1879, %v2097
  %v2131 = vld [vmem:[#allocation2 + $0x9] sm:$0xff]
  %v2132 = vld [vmem:[#allocation2 + $0x11] sm:$0xff]
  %v2133 = vld [vmem:[#allocation2 + $0x19] sm:$0xff]
  %v2134 = vld [vmem:[#allocation2 + $0x21] sm:$0xff]
  %v2135 = vld [vmem:[#allocation2 + $0x29] sm:$0xff]
  %v2136 = vld [vmem:[#allocation2 + $0x31] sm:$0xff]
  %v2137 = vld [vmem:[#allocation2 + $0x39] sm:$0xff]
  %v2138 = vld [vmem:[#allocation2 + $0x41] sm:$0xff]
  %v2139 = vld [vmem:[#allocation2 + $0x49] sm:$0xff]
  %v2140 = vld [vmem:[#allocation2 + $0x51] sm:$0xff]
  %v2141 = vld [vmem:[#allocation2 + $0x59] sm:$0xff]
  %v2142 = vld [vmem:[#allocation2 + $0x61] sm:$0xff]
  %v2143 = vld [vmem:[#allocation2 + $0x69] sm:$0xff]
  %v2144 = vld [vmem:[#allocation2 + $0x71] sm:$0xff]
  %v2145 = vld [vmem:[#allocation2 + $0x79] sm:$0xff]
  %v2146 = vld [vmem:[#allocation2 + $0x81] sm:$0xff]
  %v2147 = vpack.c.bf16 %v2132, %v2131
  %v2148 = vpack.c.bf16 %v2134, %v2133
  %v2149 = vpack.c.bf16 %v2136, %v2135
  %v2150 = vpack.c.bf16 %v2138, %v2137
  %v2151 = vpack.c.bf16 %v2140, %v2139
  %v2152 = vpack.c.bf16 %v2142, %v2141
  %v2153 = vpack.c.bf16 %v2144, %v2143
  %v2154 = vpack.c.bf16 %v2146, %v2145
  %s2155 = scalar_lea.vmem %s3, 1024
  %v2156 = vld [vmem:[%s2155] sm:$0xff]
  %v2157 = vld [vmem:[%s2155 + $0x8] sm:$0xff]
  %v2158 = vld [vmem:[%s2155 + $0x10] sm:$0xff]
  %v2159 = vld [vmem:[%s2155 + $0x18] sm:$0xff]
  %v2160 = vld [vmem:[%s2155 + $0x20] sm:$0xff]
  %v2161 = vld [vmem:[%s2155 + $0x28] sm:$0xff]
  %v2162 = vld [vmem:[%s2155 + $0x30] sm:$0xff]
  %v2163 = vld [vmem:[%s2155 + $0x38] sm:$0xff]
  %v2164 = vld [vmem:[%s2155 + $0x40] sm:$0xff]
  %v2165 = vld [vmem:[%s2155 + $0x48] sm:$0xff]
  %v2166 = vld [vmem:[%s2155 + $0x50] sm:$0xff]
  %v2167 = vld [vmem:[%s2155 + $0x58] sm:$0xff]
  %v2168 = vld [vmem:[%s2155 + $0x60] sm:$0xff]
  %v2169 = vld [vmem:[%s2155 + $0x68] sm:$0xff]
  %v2170 = vld [vmem:[%s2155 + $0x70] sm:$0xff]
  %v2171 = vld [vmem:[%s2155 + $0x78] sm:$0xff]
  %v2188 = vunpack.c.l.b16 %v2156
  %v2189 = vunpack.c.h.b16 %v2156
  %v2190 = vunpack.c.l.b16 %v2157
  %v2191 = vunpack.c.h.b16 %v2157
  %v2192 = vunpack.c.l.b16 %v2158
  %v2193 = vunpack.c.h.b16 %v2158
  %v2194 = vunpack.c.l.b16 %v2159
  %v2195 = vunpack.c.h.b16 %v2159
  %v2196 = vunpack.c.l.b16 %v2160
  %v2197 = vunpack.c.h.b16 %v2160
  %v2198 = vunpack.c.l.b16 %v2161
  %v2199 = vunpack.c.h.b16 %v2161
  %v2200 = vunpack.c.l.b16 %v2162
  %v2201 = vunpack.c.h.b16 %v2162
  %v2202 = vunpack.c.l.b16 %v2163
  %v2203 = vunpack.c.h.b16 %v2163
  %v2204 = vunpack.c.l.b16 %v2164
  %v2205 = vunpack.c.h.b16 %v2164
  %v2206 = vunpack.c.l.b16 %v2165
  %v2207 = vunpack.c.h.b16 %v2165
  %v2208 = vunpack.c.l.b16 %v2166
  %v2209 = vunpack.c.h.b16 %v2166
  %v2210 = vunpack.c.l.b16 %v2167
  %v2211 = vunpack.c.h.b16 %v2167
  %v2212 = vunpack.c.l.b16 %v2168
  %v2213 = vunpack.c.h.b16 %v2168
  %v2214 = vunpack.c.l.b16 %v2169
  %v2215 = vunpack.c.h.b16 %v2169
  %v2216 = vunpack.c.l.b16 %v2170
  %v2217 = vunpack.c.h.b16 %v2170
  %v2218 = vunpack.c.l.b16 %v2171
  %v2219 = vunpack.c.h.b16 %v2171
  %v2220 = vpack.c.b16 %v2190, %v2188
  %v2221 = vpack.c.b16 %v2191, %v2189
  %v2222 = vpack.c.b16 %v2194, %v2192
  %v2223 = vpack.c.b16 %v2195, %v2193
  %v2224 = vpack.c.b16 %v2198, %v2196
  %v2225 = vpack.c.b16 %v2199, %v2197
  %v2226 = vpack.c.b16 %v2202, %v2200
  %v2227 = vpack.c.b16 %v2203, %v2201
  %v2228 = vpack.c.b16 %v2206, %v2204
  %v2229 = vpack.c.b16 %v2207, %v2205
  %v2230 = vpack.c.b16 %v2210, %v2208
  %v2231 = vpack.c.b16 %v2211, %v2209
  %v2232 = vpack.c.b16 %v2214, %v2212
  %v2233 = vpack.c.b16 %v2215, %v2213
  %v2234 = vpack.c.b16 %v2218, %v2216
  %v2235 = vpack.c.b16 %v2219, %v2217
  %2252 = vmatpush.bf16.msra.mxu0 %v2234
  %2253 = vmatpush.bf16.msra.mxu0 %v2232
  %2254 = vmatpush.bf16.msra.mxu0 %v2230
  %2255 = vmatpush.bf16.msra.mxu0 %v2228
  %2256 = vmatpush.bf16.msra.mxu0 %v2226
  %2257 = vmatpush.bf16.msra.mxu0 %v2224
  %2258 = vmatpush.bf16.msra.mxu0 %v2222
  %2259 = vmatpush.bf16.msra.mxu0 %v2220
  %2260 = vmatmul.bf16.gmra.mxu0 %v2147
  %v2261 = vpop.f32.mrf.mxu0
  %v2262 = vadd.f32 0.0, %v2261
  %v2263 = vpop.f32.mrf.mxu0
  %v2264 = vadd.f32 0.0, %v2263
  %2265 = vmatmul.bf16.gmra.mxu0 %v2148
  %v2266 = vpop.f32.mrf.mxu0
  %v2267 = vadd.f32 0.0, %v2266
  %v2268 = vpop.f32.mrf.mxu0
  %v2269 = vadd.f32 0.0, %v2268
  %2270 = vmatmul.bf16.gmra.mxu0 %v2149
  %v2271 = vpop.f32.mrf.mxu0
  %v2272 = vadd.f32 0.0, %v2271
  %v2273 = vpop.f32.mrf.mxu0
  %v2274 = vadd.f32 0.0, %v2273
  %2275 = vmatmul.bf16.gmra.mxu0 %v2150
  %v2276 = vpop.f32.mrf.mxu0
  %v2277 = vadd.f32 0.0, %v2276
  %v2278 = vpop.f32.mrf.mxu0
  %v2279 = vadd.f32 0.0, %v2278
  %2280 = vmatmul.bf16.gmra.mxu0 %v2151
  %v2281 = vpop.f32.mrf.mxu0
  %v2282 = vadd.f32 0.0, %v2281
  %v2283 = vpop.f32.mrf.mxu0
  %v2284 = vadd.f32 0.0, %v2283
  %2285 = vmatmul.bf16.gmra.mxu0 %v2152
  %v2286 = vpop.f32.mrf.mxu0
  %v2287 = vadd.f32 0.0, %v2286
  %v2288 = vpop.f32.mrf.mxu0
  %v2289 = vadd.f32 0.0, %v2288
  %2290 = vmatmul.bf16.gmra.mxu0 %v2153
  %v2291 = vpop.f32.mrf.mxu0
  %v2292 = vadd.f32 0.0, %v2291
  %v2293 = vpop.f32.mrf.mxu0
  %v2294 = vadd.f32 0.0, %v2293
  %2295 = vmatmul.bf16.gmra.mxu0 %v2154
  %v2296 = vpop.f32.mrf.mxu0
  %v2297 = vadd.f32 0.0, %v2296
  %v2298 = vpop.f32.mrf.mxu0
  %v2299 = vadd.f32 0.0, %v2298
  %2300 = vdwg.mxu0
  %2301 = vmatpush.bf16.msra.mxu0 %v2235
  %2302 = vmatpush.bf16.msra.mxu0 %v2233
  %2303 = vmatpush.bf16.msra.mxu0 %v2231
  %2304 = vmatpush.bf16.msra.mxu0 %v2229
  %2305 = vmatpush.bf16.msra.mxu0 %v2227
  %2306 = vmatpush.bf16.msra.mxu0 %v2225
  %2307 = vmatpush.bf16.msra.mxu0 %v2223
  %2308 = vmatpush.bf16.msra.mxu0 %v2221
  %2309 = vmatmul.bf16.gmra.mxu0 %v2147
  %v2310 = vpop.f32.mrf.mxu0
  %v2311 = vadd.f32 0.0, %v2310
  %v2312 = vpop.f32.mrf.mxu0
  %v2313 = vadd.f32 0.0, %v2312
  %2314 = vmatmul.bf16.gmra.mxu0 %v2148
  %v2315 = vpop.f32.mrf.mxu0
  %v2316 = vadd.f32 0.0, %v2315
  %v2317 = vpop.f32.mrf.mxu0
  %v2318 = vadd.f32 0.0, %v2317
  %2319 = vmatmul.bf16.gmra.mxu0 %v2149
  %v2320 = vpop.f32.mrf.mxu0
  %v2321 = vadd.f32 0.0, %v2320
  %v2322 = vpop.f32.mrf.mxu0
  %v2323 = vadd.f32 0.0, %v2322
  %2324 = vmatmul.bf16.gmra.mxu0 %v2150
  %v2325 = vpop.f32.mrf.mxu0
  %v2326 = vadd.f32 0.0, %v2325
  %v2327 = vpop.f32.mrf.mxu0
  %v2328 = vadd.f32 0.0, %v2327
  %2329 = vmatmul.bf16.gmra.mxu0 %v2151
  %v2330 = vpop.f32.mrf.mxu0
  %v2331 = vadd.f32 0.0, %v2330
  %v2332 = vpop.f32.mrf.mxu0
  %v2333 = vadd.f32 0.0, %v2332
  %2334 = vmatmul.bf16.gmra.mxu0 %v2152
  %v2335 = vpop.f32.mrf.mxu0
  %v2336 = vadd.f32 0.0, %v2335
  %v2337 = vpop.f32.mrf.mxu0
  %v2338 = vadd.f32 0.0, %v2337
  %2339 = vmatmul.bf16.gmra.mxu0 %v2153
  %v2340 = vpop.f32.mrf.mxu0
  %v2341 = vadd.f32 0.0, %v2340
  %v2342 = vpop.f32.mrf.mxu0
  %v2343 = vadd.f32 0.0, %v2342
  %2344 = vmatmul.bf16.gmra.mxu0 %v2154
  %v2345 = vpop.f32.mrf.mxu0
  %v2346 = vadd.f32 0.0, %v2345
  %v2347 = vpop.f32.mrf.mxu0
  %v2348 = vadd.f32 0.0, %v2347
  %2349 = vdwg.mxu0
  %v2350 = vadd.f32 %v2099, %v2262
  %v2351 = vadd.f32 %v2100, %v2311
  %v2352 = vadd.f32 %v2101, %v2264
  %v2353 = vadd.f32 %v2102, %v2313
  %v2354 = vadd.f32 %v2103, %v2267
  %v2355 = vadd.f32 %v2104, %v2316
  %v2356 = vadd.f32 %v2105, %v2269
  %v2357 = vadd.f32 %v2106, %v2318
  %v2358 = vadd.f32 %v2107, %v2272
  %v2359 = vadd.f32 %v2108, %v2321
  %v2360 = vadd.f32 %v2109, %v2274
  %v2361 = vadd.f32 %v2110, %v2323
  %v2362 = vadd.f32 %v2111, %v2277
  %v2363 = vadd.f32 %v2112, %v2326
  %v2364 = vadd.f32 %v2113, %v2279
  %v2365 = vadd.f32 %v2114, %v2328
  %v2366 = vadd.f32 %v2115, %v2282
  %v2367 = vadd.f32 %v2116, %v2331
  %v2368 = vadd.f32 %v2117, %v2284
  %v2369 = vadd.f32 %v2118, %v2333
  %v2370 = vadd.f32 %v2119, %v2287
  %v2371 = vadd.f32 %v2120, %v2336
  %v2372 = vadd.f32 %v2121, %v2289
  %v2373 = vadd.f32 %v2122, %v2338
  %v2374 = vadd.f32 %v2123, %v2292
  %v2375 = vadd.f32 %v2124, %v2341
  %v2376 = vadd.f32 %v2125, %v2294
  %v2377 = vadd.f32 %v2126, %v2343
  %v2378 = vadd.f32 %v2127, %v2297
  %v2379 = vadd.f32 %v2128, %v2346
  %v2380 = vadd.f32 %v2129, %v2299
  %v2381 = vadd.f32 %v2130, %v2348
  %v2382 = vld [vmem:[%s4] sm:$0x3]
  %v2384 = vperm.slane %v2382, 0
  %v2385 = vperm.slane %v2382, 1
  %v2388 = vadd.f32 %v2350, %v2384
  %v2389 = vadd.f32 %v2351, %v2385
  %v2390 = vadd.f32 %v2352, %v2384
  %v2391 = vadd.f32 %v2353, %v2385
  %v2392 = vadd.f32 %v2354, %v2384
  %v2393 = vadd.f32 %v2355, %v2385
  %v2394 = vadd.f32 %v2356, %v2384
  %v2395 = vadd.f32 %v2357, %v2385
  %v2396 = vadd.f32 %v2358, %v2384
  %v2397 = vadd.f32 %v2359, %v2385
  %v2398 = vadd.f32 %v2360, %v2384
  %v2399 = vadd.f32 %v2361, %v2385
  %v2400 = vadd.f32 %v2362, %v2384
  %v2401 = vadd.f32 %v2363, %v2385
  %v2402 = vadd.f32 %v2364, %v2384
  %v2403 = vadd.f32 %v2365, %v2385
  %v2404 = vadd.f32 %v2366, %v2384
  %v2405 = vadd.f32 %v2367, %v2385
  %v2406 = vadd.f32 %v2368, %v2384
  %v2407 = vadd.f32 %v2369, %v2385
  %v2408 = vadd.f32 %v2370, %v2384
  %v2409 = vadd.f32 %v2371, %v2385
  %v2410 = vadd.f32 %v2372, %v2384
  %v2411 = vadd.f32 %v2373, %v2385
  %v2412 = vadd.f32 %v2374, %v2384
  %v2413 = vadd.f32 %v2375, %v2385
  %v2414 = vadd.f32 %v2376, %v2384
  %v2415 = vadd.f32 %v2377, %v2385
  %v2416 = vadd.f32 %v2378, %v2384
  %v2417 = vadd.f32 %v2379, %v2385
  %v2418 = vadd.f32 %v2380, %v2384
  %v2419 = vadd.f32 %v2381, %v2385
  %v2420 = vmax.f32 %v2388, 0.0
  %v2421 = vmax.f32 %v2389, 0.0
  %v2422 = vmax.f32 %v2390, 0.0
  %v2423 = vmax.f32 %v2391, 0.0
  %v2424 = vmax.f32 %v2392, 0.0
  %v2425 = vmax.f32 %v2393, 0.0
  %v2426 = vmax.f32 %v2394, 0.0
  %v2427 = vmax.f32 %v2395, 0.0
  %v2428 = vmax.f32 %v2396, 0.0
  %v2429 = vmax.f32 %v2397, 0.0
  %v2430 = vmax.f32 %v2398, 0.0
  %v2431 = vmax.f32 %v2399, 0.0
  %v2432 = vmax.f32 %v2400, 0.0
  %v2433 = vmax.f32 %v2401, 0.0
  %v2434 = vmax.f32 %v2402, 0.0
  %v2435 = vmax.f32 %v2403, 0.0
  %v2436 = vmax.f32 %v2404, 0.0
  %v2437 = vmax.f32 %v2405, 0.0
  %v2438 = vmax.f32 %v2406, 0.0
  %v2439 = vmax.f32 %v2407, 0.0
  %v2440 = vmax.f32 %v2408, 0.0
  %v2441 = vmax.f32 %v2409, 0.0
  %v2442 = vmax.f32 %v2410, 0.0
  %v2443 = vmax.f32 %v2411, 0.0
  %v2444 = vmax.f32 %v2412, 0.0
  %v2445 = vmax.f32 %v2413, 0.0
  %v2446 = vmax.f32 %v2414, 0.0
  %v2447 = vmax.f32 %v2415, 0.0
  %v2448 = vmax.f32 %v2416, 0.0
  %v2449 = vmax.f32 %v2417, 0.0
  %v2450 = vmax.f32 %v2418, 0.0
  %v2451 = vmax.f32 %v2419, 0.0
  %v2452 = vld [vmem:[%s7] sm:$0xff]
  %v2453 = vld [vmem:[%s7 + $0x8] sm:$0xff]
  %v2454 = vld [vmem:[%s7 + $0x10] sm:$0xff]
  %v2455 = vld [vmem:[%s7 + $0x18] sm:$0xff]
  %v2456 = vld [vmem:[%s7 + $0x20] sm:$0xff]
  %v2457 = vld [vmem:[%s7 + $0x28] sm:$0xff]
  %v2458 = vld [vmem:[%s7 + $0x30] sm:$0xff]
  %v2459 = vld [vmem:[%s7 + $0x38] sm:$0xff]
  %v2460 = vld [vmem:[%s7 + $0x40] sm:$0xff]
  %v2461 = vld [vmem:[%s7 + $0x48] sm:$0xff]
  %v2462 = vld [vmem:[%s7 + $0x50] sm:$0xff]
  %v2463 = vld [vmem:[%s7 + $0x58] sm:$0xff]
  %v2464 = vld [vmem:[%s7 + $0x60] sm:$0xff]
  %v2465 = vld [vmem:[%s7 + $0x68] sm:$0xff]
  %v2466 = vld [vmem:[%s7 + $0x70] sm:$0xff]
  %v2467 = vld [vmem:[%s7 + $0x78] sm:$0xff]
  %2469 = vset.pattern.permute.xlu0 0
  %2470 = vperm.xlu0 %2469, %v2452
  %v2471 = vpop.permute.xlu0 %2470
  %2474 = vset.pattern.permute.xlu0 0
  %2475 = vperm.xlu0 %2474, %v2453
  %v2476 = vpop.permute.xlu0 %2475
  %2479 = vset.pattern.permute.xlu0 0
  %2480 = vperm.xlu0 %2479, %v2454
  %v2481 = vpop.permute.xlu0 %2480
  %2484 = vset.pattern.permute.xlu0 0
  %2485 = vperm.xlu0 %2484, %v2455
  %v2486 = vpop.permute.xlu0 %2485
  %2489 = vset.pattern.permute.xlu0 0
  %2490 = vperm.xlu0 %2489, %v2456
  %v2491 = vpop.permute.xlu0 %2490
  %2494 = vset.pattern.permute.xlu0 0
  %2495 = vperm.xlu0 %2494, %v2457
  %v2496 = vpop.permute.xlu0 %2495
  %2499 = vset.pattern.permute.xlu0 0
  %2500 = vperm.xlu0 %2499, %v2458
  %v2501 = vpop.permute.xlu0 %2500
  %2504 = vset.pattern.permute.xlu0 0
  %2505 = vperm.xlu0 %2504, %v2459
  %v2506 = vpop.permute.xlu0 %2505
  %2509 = vset.pattern.permute.xlu0 0
  %2510 = vperm.xlu0 %2509, %v2460
  %v2511 = vpop.permute.xlu0 %2510
  %2514 = vset.pattern.permute.xlu0 0
  %2515 = vperm.xlu0 %2514, %v2461
  %v2516 = vpop.permute.xlu0 %2515
  %2519 = vset.pattern.permute.xlu0 0
  %2520 = vperm.xlu0 %2519, %v2462
  %v2521 = vpop.permute.xlu0 %2520
  %2524 = vset.pattern.permute.xlu0 0
  %2525 = vperm.xlu0 %2524, %v2463
  %v2526 = vpop.permute.xlu0 %2525
  %2529 = vset.pattern.permute.xlu0 0
  %2530 = vperm.xlu0 %2529, %v2464
  %v2531 = vpop.permute.xlu0 %2530
  %2534 = vset.pattern.permute.xlu0 0
  %2535 = vperm.xlu0 %2534, %v2465
  %v2536 = vpop.permute.xlu0 %2535
  %2539 = vset.pattern.permute.xlu0 0
  %2540 = vperm.xlu0 %2539, %v2466
  %v2541 = vpop.permute.xlu0 %2540
  %2544 = vset.pattern.permute.xlu0 0
  %2545 = vperm.xlu0 %2544, %v2467
  %v2546 = vpop.permute.xlu0 %2545
  %v2548 = vmul.f32 %v2420, %v2471
  %v2549 = vmul.f32 %v2421, %v2471
  %v2550 = vmul.f32 %v2422, %v2476
  %v2551 = vmul.f32 %v2423, %v2476
  %v2552 = vmul.f32 %v2424, %v2481
  %v2553 = vmul.f32 %v2425, %v2481
  %v2554 = vmul.f32 %v2426, %v2486
  %v2555 = vmul.f32 %v2427, %v2486
  %v2556 = vmul.f32 %v2428, %v2491
  %v2557 = vmul.f32 %v2429, %v2491
  %v2558 = vmul.f32 %v2430, %v2496
  %v2559 = vmul.f32 %v2431, %v2496
  %v2560 = vmul.f32 %v2432, %v2501
  %v2561 = vmul.f32 %v2433, %v2501
  %v2562 = vmul.f32 %v2434, %v2506
  %v2563 = vmul.f32 %v2435, %v2506
  %v2564 = vmul.f32 %v2436, %v2511
  %v2565 = vmul.f32 %v2437, %v2511
  %v2566 = vmul.f32 %v2438, %v2516
  %v2567 = vmul.f32 %v2439, %v2516
  %v2568 = vmul.f32 %v2440, %v2521
  %v2569 = vmul.f32 %v2441, %v2521
  %v2570 = vmul.f32 %v2442, %v2526
  %v2571 = vmul.f32 %v2443, %v2526
  %v2572 = vmul.f32 %v2444, %v2531
  %v2573 = vmul.f32 %v2445, %v2531
  %v2574 = vmul.f32 %v2446, %v2536
  %v2575 = vmul.f32 %v2447, %v2536
  %v2576 = vmul.f32 %v2448, %v2541
  %v2577 = vmul.f32 %v2449, %v2541
  %v2578 = vmul.f32 %v2450, %v2546
  %v2579 = vmul.f32 %v2451, %v2546
  %2580 = vst [vmem:[#allocation3] sm:$0xff] %v2548
  %2581 = vst [vmem:[#allocation3 + $0x8] sm:$0xff] %v2549
  %2582 = vst [vmem:[#allocation3 + $0x10] sm:$0xff] %v2550
  %2583 = vst [vmem:[#allocation3 + $0x18] sm:$0xff] %v2551
  %2584 = vst [vmem:[#allocation3 + $0x20] sm:$0xff] %v2552
  %2585 = vst [vmem:[#allocation3 + $0x28] sm:$0xff] %v2553
  %2586 = vst [vmem:[#allocation3 + $0x30] sm:$0xff] %v2554
  %2587 = vst [vmem:[#allocation3 + $0x38] sm:$0xff] %v2555
  %2588 = vst [vmem:[#allocation3 + $0x40] sm:$0xff] %v2556
  %2589 = vst [vmem:[#allocation3 + $0x48] sm:$0xff] %v2557
  %2590 = vst [vmem:[#allocation3 + $0x50] sm:$0xff] %v2558
  %2591 = vst [vmem:[#allocation3 + $0x58] sm:$0xff] %v2559
  %2592 = vst [vmem:[#allocation3 + $0x60] sm:$0xff] %v2560
  %2593 = vst [vmem:[#allocation3 + $0x68] sm:$0xff] %v2561
  %2594 = vst [vmem:[#allocation3 + $0x70] sm:$0xff] %v2562
  %2595 = vst [vmem:[#allocation3 + $0x78] sm:$0xff] %v2563
  %2596 = vst [vmem:[#allocation3 + $0x80] sm:$0xff] %v2564
  %2597 = vst [vmem:[#allocation3 + $0x88] sm:$0xff] %v2565
  %2598 = vst [vmem:[#allocation3 + $0x90] sm:$0xff] %v2566
  %2599 = vst [vmem:[#allocation3 + $0x98] sm:$0xff] %v2567
  %2600 = vst [vmem:[#allocation3 + $0xa0] sm:$0xff] %v2568
  %2601 = vst [vmem:[#allocation3 + $0xa8] sm:$0xff] %v2569
  %2602 = vst [vmem:[#allocation3 + $0xb0] sm:$0xff] %v2570
  %2603 = vst [vmem:[#allocation3 + $0xb8] sm:$0xff] %v2571
  %2604 = vst [vmem:[#allocation3 + $0xc0] sm:$0xff] %v2572
  %2605 = vst [vmem:[#allocation3 + $0xc8] sm:$0xff] %v2573
  %2606 = vst [vmem:[#allocation3 + $0xd0] sm:$0xff] %v2574
  %2607 = vst [vmem:[#allocation3 + $0xd8] sm:$0xff] %v2575
  %2608 = vst [vmem:[#allocation3 + $0xe0] sm:$0xff] %v2576
  %2609 = vst [vmem:[#allocation3 + $0xe8] sm:$0xff] %v2577
  %2610 = vst [vmem:[#allocation3 + $0xf0] sm:$0xff] %v2578
  %2611 = vst [vmem:[#allocation3 + $0xf8] sm:$0xff] %v2579
  %2612 = vst [vmem:[#allocation3 + $0x100] sm:$0xff] %v2548
  %2613 = vst [vmem:[#allocation3 + $0x108] sm:$0xff] %v2549
  %2614 = vst [vmem:[#allocation3 + $0x110] sm:$0xff] %v2550
  %2615 = vst [vmem:[#allocation3 + $0x118] sm:$0xff] %v2551
  %2616 = vst [vmem:[#allocation3 + $0x120] sm:$0xff] %v2552
  %2617 = vst [vmem:[#allocation3 + $0x128] sm:$0xff] %v2553
  %2618 = vst [vmem:[#allocation3 + $0x130] sm:$0xff] %v2554
  %2619 = vst [vmem:[#allocation3 + $0x138] sm:$0xff] %v2555
  %2620 = vst [vmem:[#allocation3 + $0x140] sm:$0xff] %v2556
  %2621 = vst [vmem:[#allocation3 + $0x148] sm:$0xff] %v2557
  %2622 = vst [vmem:[#allocation3 + $0x150] sm:$0xff] %v2558
  %2623 = vst [vmem:[#allocation3 + $0x158] sm:$0xff] %v2559
  %2624 = vst [vmem:[#allocation3 + $0x160] sm:$0xff] %v2560
  %2625 = vst [vmem:[#allocation3 + $0x168] sm:$0xff] %v2561
  %2626 = vst [vmem:[#allocation3 + $0x170] sm:$0xff] %v2562
  %2627 = vst [vmem:[#allocation3 + $0x178] sm:$0xff] %v2563
  %2628 = vst [vmem:[#allocation3 + $0x180] sm:$0xff] %v2564
  %2629 = vst [vmem:[#allocation3 + $0x188] sm:$0xff] %v2565
  %2630 = vst [vmem:[#allocation3 + $0x190] sm:$0xff] %v2566
  %2631 = vst [vmem:[#allocation3 + $0x198] sm:$0xff] %v2567
  %2632 = vst [vmem:[#allocation3 + $0x1a0] sm:$0xff] %v2568
  %2633 = vst [vmem:[#allocation3 + $0x1a8] sm:$0xff] %v2569
  %2634 = vst [vmem:[#allocation3 + $0x1b0] sm:$0xff] %v2570
  %2635 = vst [vmem:[#allocation3 + $0x1b8] sm:$0xff] %v2571
  %2636 = vst [vmem:[#allocation3 + $0x1c0] sm:$0xff] %v2572
  %2637 = vst [vmem:[#allocation3 + $0x1c8] sm:$0xff] %v2573
  %2638 = vst [vmem:[#allocation3 + $0x1d0] sm:$0xff] %v2574
  %2639 = vst [vmem:[#allocation3 + $0x1d8] sm:$0xff] %v2575
  %2640 = vst [vmem:[#allocation3 + $0x1e0] sm:$0xff] %v2576
  %2641 = vst [vmem:[#allocation3 + $0x1e8] sm:$0xff] %v2577
  %2642 = vst [vmem:[#allocation3 + $0x1f0] sm:$0xff] %v2578
  %2643 = vst [vmem:[#allocation3 + $0x1f8] sm:$0xff] %v2579
  %v2644 = vld [vmem:[#allocation3 + $0xe0] sm:$0x80]
  %v2645 = vld [vmem:[#allocation3 + $0xe8] sm:$0x80]
  %v2646 = vld [vmem:[#allocation3 + $0xf0] sm:$0xff]
  %v2647 = vld [vmem:[#allocation3 + $0xf8] sm:$0xff]
  %v2648 = vld [vmem:[#allocation3 + $0x100] sm:$0xff]
  %v2649 = vld [vmem:[#allocation3 + $0x108] sm:$0xff]
  %v2650 = vld [vmem:[#allocation3 + $0x110] sm:$0xff]
  %v2651 = vld [vmem:[#allocation3 + $0x118] sm:$0xff]
  %v2652 = vld [vmem:[#allocation3 + $0x120] sm:$0xff]
  %v2653 = vld [vmem:[#allocation3 + $0x128] sm:$0xff]
  %v2654 = vld [vmem:[#allocation3 + $0x130] sm:$0xff]
  %v2655 = vld [vmem:[#allocation3 + $0x138] sm:$0xff]
  %v2656 = vld [vmem:[#allocation3 + $0x140] sm:$0xff]
  %v2657 = vld [vmem:[#allocation3 + $0x148] sm:$0xff]
  %v2658 = vld [vmem:[#allocation3 + $0x150] sm:$0xff]
  %v2659 = vld [vmem:[#allocation3 + $0x158] sm:$0xff]
  %v2660 = vld [vmem:[#allocation3 + $0x160] sm:$0xff]
  %v2661 = vld [vmem:[#allocation3 + $0x168] sm:$0xff]
  %v2662 = vld [vmem:[#allocation3 + $0x170] sm:$0xff]
  %v2663 = vld [vmem:[#allocation3 + $0x178] sm:$0xff]
  %v2664 = vld [vmem:[#allocation3 + $0x180] sm:$0xff]
  %v2665 = vld [vmem:[#allocation3 + $0x188] sm:$0xff]
  %v2666 = vld [vmem:[#allocation3 + $0x190] sm:$0xff]
  %v2667 = vld [vmem:[#allocation3 + $0x198] sm:$0xff]
  %v2668 = vld [vmem:[#allocation3 + $0x1a0] sm:$0xff]
  %v2669 = vld [vmem:[#allocation3 + $0x1a8] sm:$0xff]
  %v2670 = vld [vmem:[#allocation3 + $0x1b0] sm:$0xff]
  %v2671 = vld [vmem:[#allocation3 + $0x1b8] sm:$0xff]
  %v2672 = vld [vmem:[#allocation3 + $0x1c0] sm:$0xff]
  %v2673 = vld [vmem:[#allocation3 + $0x1c8] sm:$0xff]
  %v2674 = vld [vmem:[#allocation3 + $0x1d0] sm:$0xff]
  %v2675 = vld [vmem:[#allocation3 + $0x1d8] sm:$0xff]
  %v2676 = vld [vmem:[#allocation3 + $0x1e0] sm:$0x7f]
  %v2677 = vld [vmem:[#allocation3 + $0x1e8] sm:$0x7f]
  %v2678 = vpack.c.bf16 %v2646, %v2644
  %v2679 = vpack.c.bf16 %v2647, %v2645
  %v2680 = vpack.c.bf16 %v2650, %v2648
  %v2681 = vpack.c.bf16 %v2651, %v2649
  %v2682 = vpack.c.bf16 %v2654, %v2652
  %v2683 = vpack.c.bf16 %v2655, %v2653
  %v2684 = vpack.c.bf16 %v2658, %v2656
  %v2685 = vpack.c.bf16 %v2659, %v2657
  %v2686 = vpack.c.bf16 %v2662, %v2660
  %v2687 = vpack.c.bf16 %v2663, %v2661
  %v2688 = vpack.c.bf16 %v2666, %v2664
  %v2689 = vpack.c.bf16 %v2667, %v2665
  %v2690 = vpack.c.bf16 %v2670, %v2668
  %v2691 = vpack.c.bf16 %v2671, %v2669
  %v2692 = vpack.c.bf16 %v2674, %v2672
  %v2693 = vpack.c.bf16 %v2675, %v2673
  %v2694 = vpack.c.bf16 %v2676, %v2676
  %v2695 = vpack.c.bf16 %v2677, %v2677
  %v2696 = vld [vmem:[%s5] sm:$0xf]
  %v2697 = vld [vmem:[%s5 + $0x4] sm:$0xf]
  %v2698 = vld [vmem:[%s5 + $0x8] sm:$0xf]
  %v2699 = vld [vmem:[%s5 + $0xc] sm:$0xf]
  %v2700 = vld [vmem:[%s5 + $0x10] sm:$0xf]
  %v2701 = vld [vmem:[%s5 + $0x14] sm:$0xf]
  %v2702 = vld [vmem:[%s5 + $0x18] sm:$0xf]
  %v2703 = vld [vmem:[%s5 + $0x1c] sm:$0xf]
  %v2704 = vld [vmem:[%s5 + $0x20] sm:$0xf]
  %v2705 = vld [vmem:[%s5 + $0x24] sm:$0xf]
  %v2706 = vld [vmem:[%s5 + $0x28] sm:$0xf]
  %v2707 = vld [vmem:[%s5 + $0x2c] sm:$0xf]
  %v2708 = vld [vmem:[%s5 + $0x30] sm:$0xf]
  %v2709 = vld [vmem:[%s5 + $0x34] sm:$0xf]
  %v2710 = vld [vmem:[%s5 + $0x38] sm:$0xf]
  %v2711 = vld [vmem:[%s5 + $0x3c] sm:$0xf]
  %v2712 = vld [vmem:[%s5 + $0x40] sm:$0xf]
  %v2713 = vld [vmem:[%s5 + $0x44] sm:$0xf]
  %v2714 = vld [vmem:[%s5 + $0x48] sm:$0xf]
  %v2715 = vld [vmem:[%s5 + $0x4c] sm:$0xf]
  %v2716 = vld [vmem:[%s5 + $0x50] sm:$0xf]
  %v2717 = vld [vmem:[%s5 + $0x54] sm:$0xf]
  %v2718 = vld [vmem:[%s5 + $0x58] sm:$0xf]
  %v2719 = vld [vmem:[%s5 + $0x5c] sm:$0xf]
  %v2720 = vld [vmem:[%s5 + $0x60] sm:$0xf]
  %v2721 = vld [vmem:[%s5 + $0x64] sm:$0xf]
  %v2722 = vld [vmem:[%s5 + $0x68] sm:$0xf]
  %v2723 = vld [vmem:[%s5 + $0x6c] sm:$0xf]
  %v2724 = vld [vmem:[%s5 + $0x70] sm:$0xf]
  %v2725 = vld [vmem:[%s5 + $0x74] sm:$0xf]
  %v2726 = vld [vmem:[%s5 + $0x78] sm:$0xf]
  %v2727 = vld [vmem:[%s5 + $0x7c] sm:$0xf]
  %v2728 = vld [vmem:[#allocation3 + $0x1e0] sm:$0xff]
  %v2729 = vld [vmem:[#allocation3 + $0x1e8] sm:$0xff]
  %v2730 = vpack.c.bf16 %v2648, %v2646
  %v2731 = vpack.c.bf16 %v2649, %v2647
  %v2732 = vpack.c.bf16 %v2652, %v2650
  %v2733 = vpack.c.bf16 %v2653, %v2651
  %v2734 = vpack.c.bf16 %v2656, %v2654
  %v2735 = vpack.c.bf16 %v2657, %v2655
  %v2736 = vpack.c.bf16 %v2660, %v2658
  %v2737 = vpack.c.bf16 %v2661, %v2659
  %v2738 = vpack.c.bf16 %v2664, %v2662
  %v2739 = vpack.c.bf16 %v2665, %v2663
  %v2740 = vpack.c.bf16 %v2668, %v2666
  %v2741 = vpack.c.bf16 %v2669, %v2667
  %v2742 = vpack.c.bf16 %v2672, %v2670
  %v2743 = vpack.c.bf16 %v2673, %v2671
  %v2744 = vpack.c.bf16 %v2728, %v2674
  %v2745 = vpack.c.bf16 %v2729, %v2675
  %s2746 = scalar_lea.vmem %s5, 128
  %v2747 = vld [vmem:[%s2746] sm:$0xf]
  %v2748 = vld [vmem:[%s2746 + $0x4] sm:$0xf]
  %v2749 = vld [vmem:[%s2746 + $0x8] sm:$0xf]
  %v2750 = vld [vmem:[%s2746 + $0xc] sm:$0xf]
  %v2751 = vld [vmem:[%s2746 + $0x10] sm:$0xf]
  %v2752 = vld [vmem:[%s2746 + $0x14] sm:$0xf]
  %v2753 = vld [vmem:[%s2746 + $0x18] sm:$0xf]
  %v2754 = vld [vmem:[%s2746 + $0x1c] sm:$0xf]
  %v2755 = vld [vmem:[%s2746 + $0x20] sm:$0xf]
  %v2756 = vld [vmem:[%s2746 + $0x24] sm:$0xf]
  %v2757 = vld [vmem:[%s2746 + $0x28] sm:$0xf]
  %v2758 = vld [vmem:[%s2746 + $0x2c] sm:$0xf]
  %v2759 = vld [vmem:[%s2746 + $0x30] sm:$0xf]
  %v2760 = vld [vmem:[%s2746 + $0x34] sm:$0xf]
  %v2761 = vld [vmem:[%s2746 + $0x38] sm:$0xf]
  %v2762 = vld [vmem:[%s2746 + $0x3c] sm:$0xf]
  %v2763 = vld [vmem:[%s2746 + $0x40] sm:$0xf]
  %v2764 = vld [vmem:[%s2746 + $0x44] sm:$0xf]
  %v2765 = vld [vmem:[%s2746 + $0x48] sm:$0xf]
  %v2766 = vld [vmem:[%s2746 + $0x4c] sm:$0xf]
  %v2767 = vld [vmem:[%s2746 + $0x50] sm:$0xf]
  %v2768 = vld [vmem:[%s2746 + $0x54] sm:$0xf]
  %v2769 = vld [vmem:[%s2746 + $0x58] sm:$0xf]
  %v2770 = vld [vmem:[%s2746 + $0x5c] sm:$0xf]
  %v2771 = vld [vmem:[%s2746 + $0x60] sm:$0xf]
  %v2772 = vld [vmem:[%s2746 + $0x64] sm:$0xf]
  %v2773 = vld [vmem:[%s2746 + $0x68] sm:$0xf]
  %v2774 = vld [vmem:[%s2746 + $0x6c] sm:$0xf]
  %v2775 = vld [vmem:[%s2746 + $0x70] sm:$0xf]
  %v2776 = vld [vmem:[%s2746 + $0x74] sm:$0xf]
  %v2777 = vld [vmem:[%s2746 + $0x78] sm:$0xf]
  %v2778 = vld [vmem:[%s2746 + $0x7c] sm:$0xf]
  %v2811 = vunpack.c.l.b16 %v2747
  %v2812 = vunpack.c.l.b16 %v2748
  %v2813 = vunpack.c.l.b16 %v2749
  %v2814 = vunpack.c.l.b16 %v2750
  %v2815 = vunpack.c.l.b16 %v2751
  %v2816 = vunpack.c.l.b16 %v2752
  %v2817 = vunpack.c.l.b16 %v2753
  %v2818 = vunpack.c.l.b16 %v2754
  %v2819 = vunpack.c.l.b16 %v2755
  %v2820 = vunpack.c.l.b16 %v2756
  %v2821 = vunpack.c.l.b16 %v2757
  %v2822 = vunpack.c.l.b16 %v2758
  %v2823 = vunpack.c.l.b16 %v2759
  %v2824 = vunpack.c.l.b16 %v2760
  %v2825 = vunpack.c.l.b16 %v2761
  %v2826 = vunpack.c.l.b16 %v2762
  %v2827 = vunpack.c.l.b16 %v2763
  %v2828 = vunpack.c.l.b16 %v2764
  %v2829 = vunpack.c.l.b16 %v2765
  %v2830 = vunpack.c.l.b16 %v2766
  %v2831 = vunpack.c.l.b16 %v2767
  %v2832 = vunpack.c.l.b16 %v2768
  %v2833 = vunpack.c.l.b16 %v2769
  %v2834 = vunpack.c.l.b16 %v2770
  %v2835 = vunpack.c.l.b16 %v2771
  %v2836 = vunpack.c.l.b16 %v2772
  %v2837 = vunpack.c.l.b16 %v2773
  %v2838 = vunpack.c.l.b16 %v2774
  %v2839 = vunpack.c.l.b16 %v2775
  %v2840 = vunpack.c.l.b16 %v2776
  %v2841 = vunpack.c.l.b16 %v2777
  %v2842 = vunpack.c.l.b16 %v2778
  %v2843 = vpack.c.b16 %v2812, %v2811
  %v2844 = vpack.c.b16 %v2814, %v2813
  %v2845 = vpack.c.b16 %v2816, %v2815
  %v2846 = vpack.c.b16 %v2818, %v2817
  %v2847 = vpack.c.b16 %v2820, %v2819
  %v2848 = vpack.c.b16 %v2822, %v2821
  %v2849 = vpack.c.b16 %v2824, %v2823
  %v2850 = vpack.c.b16 %v2826, %v2825
  %v2851 = vpack.c.b16 %v2828, %v2827
  %v2852 = vpack.c.b16 %v2830, %v2829
  %v2853 = vpack.c.b16 %v2832, %v2831
  %v2854 = vpack.c.b16 %v2834, %v2833
  %v2855 = vpack.c.b16 %v2836, %v2835
  %v2856 = vpack.c.b16 %v2838, %v2837
  %v2857 = vpack.c.b16 %v2840, %v2839
  %v2858 = vpack.c.b16 %v2842, %v2841
  %2875 = vmatpush.bf16.msra.mxu0 %v2850
  %2876 = vmatpush.bf16.msra.mxu0 %v2849
  %2877 = vmatpush.bf16.msra.mxu0 %v2848
  %2878 = vmatpush.bf16.msra.mxu0 %v2847
  %2879 = vmatpush.bf16.msra.mxu0 %v2846
  %2880 = vmatpush.bf16.msra.mxu0 %v2845
  %2881 = vmatpush.bf16.msra.mxu0 %v2844
  %2882 = vmatpush.bf16.msra.mxu0 %v2843
  %2883 = vmatmul.bf16.gmra.mxu0 %v2730
  %v2884 = vpop.f32.mrf.mxu0
  %v2885 = vadd.f32 0.0, %v2884
  %v2886 = vpop.f32.mrf.mxu0
  %v2887 = vadd.f32 0.0, %v2886
  %2888 = vmatmul.bf16.gmra.mxu0 %v2732
  %v2889 = vpop.f32.mrf.mxu0
  %v2890 = vadd.f32 0.0, %v2889
  %v2891 = vpop.f32.mrf.mxu0
  %v2892 = vadd.f32 0.0, %v2891
  %2893 = vmatmul.bf16.gmra.mxu0 %v2734
  %v2894 = vpop.f32.mrf.mxu0
  %v2895 = vadd.f32 0.0, %v2894
  %v2896 = vpop.f32.mrf.mxu0
  %v2897 = vadd.f32 0.0, %v2896
  %2898 = vmatmul.bf16.gmra.mxu0 %v2736
  %v2899 = vpop.f32.mrf.mxu0
  %v2900 = vadd.f32 0.0, %v2899
  %v2901 = vpop.f32.mrf.mxu0
  %v2902 = vadd.f32 0.0, %v2901
  %2903 = vmatmul.bf16.gmra.mxu0 %v2738
  %v2904 = vpop.f32.mrf.mxu0
  %v2905 = vadd.f32 0.0, %v2904
  %v2906 = vpop.f32.mrf.mxu0
  %v2907 = vadd.f32 0.0, %v2906
  %2908 = vmatmul.bf16.gmra.mxu0 %v2740
  %v2909 = vpop.f32.mrf.mxu0
  %v2910 = vadd.f32 0.0, %v2909
  %v2911 = vpop.f32.mrf.mxu0
  %v2912 = vadd.f32 0.0, %v2911
  %2913 = vmatmul.bf16.gmra.mxu0 %v2742
  %v2914 = vpop.f32.mrf.mxu0
  %v2915 = vadd.f32 0.0, %v2914
  %v2916 = vpop.f32.mrf.mxu0
  %v2917 = vadd.f32 0.0, %v2916
  %2918 = vmatmul.bf16.gmra.mxu0 %v2744
  %v2919 = vpop.f32.mrf.mxu0
  %v2920 = vadd.f32 0.0, %v2919
  %v2921 = vpop.f32.mrf.mxu0
  %v2922 = vadd.f32 0.0, %v2921
  %2923 = vdwg.mxu0
  %2924 = vmatpush.bf16.msra.mxu0 %v2858
  %2925 = vmatpush.bf16.msra.mxu0 %v2857
  %2926 = vmatpush.bf16.msra.mxu0 %v2856
  %2927 = vmatpush.bf16.msra.mxu0 %v2855
  %2928 = vmatpush.bf16.msra.mxu0 %v2854
  %2929 = vmatpush.bf16.msra.mxu0 %v2853
  %2930 = vmatpush.bf16.msra.mxu0 %v2852
  %2931 = vmatpush.bf16.msra.mxu0 %v2851
  %2932 = vmatmul.bf16.gmra.mxu0 %v2731
  %v2933 = vpop.f32.mrf.mxu0
  %v2934 = vadd.f32 %v2885, %v2933
  %v2935 = vpop.f32.mrf.mxu0
  %v2936 = vadd.f32 %v2887, %v2935
  %2937 = vmatmul.bf16.gmra.mxu0 %v2733
  %v2938 = vpop.f32.mrf.mxu0
  %v2939 = vadd.f32 %v2890, %v2938
  %v2940 = vpop.f32.mrf.mxu0
  %v2941 = vadd.f32 %v2892, %v2940
  %2942 = vmatmul.bf16.gmra.mxu0 %v2735
  %v2943 = vpop.f32.mrf.mxu0
  %v2944 = vadd.f32 %v2895, %v2943
  %v2945 = vpop.f32.mrf.mxu0
  %v2946 = vadd.f32 %v2897, %v2945
  %2947 = vmatmul.bf16.gmra.mxu0 %v2737
  %v2948 = vpop.f32.mrf.mxu0
  %v2949 = vadd.f32 %v2900, %v2948
  %v2950 = vpop.f32.mrf.mxu0
  %v2951 = vadd.f32 %v2902, %v2950
  %2952 = vmatmul.bf16.gmra.mxu0 %v2739
  %v2953 = vpop.f32.mrf.mxu0
  %v2954 = vadd.f32 %v2905, %v2953
  %v2955 = vpop.f32.mrf.mxu0
  %v2956 = vadd.f32 %v2907, %v2955
  %2957 = vmatmul.bf16.gmra.mxu0 %v2741
  %v2958 = vpop.f32.mrf.mxu0
  %v2959 = vadd.f32 %v2910, %v2958
  %v2960 = vpop.f32.mrf.mxu0
  %v2961 = vadd.f32 %v2912, %v2960
  %2962 = vmatmul.bf16.gmra.mxu0 %v2743
  %v2963 = vpop.f32.mrf.mxu0
  %v2964 = vadd.f32 %v2915, %v2963
  %v2965 = vpop.f32.mrf.mxu0
  %v2966 = vadd.f32 %v2917, %v2965
  %2967 = vmatmul.bf16.gmra.mxu0 %v2745
  %v2968 = vpop.f32.mrf.mxu0
  %v2969 = vadd.f32 %v2920, %v2968
  %v2970 = vpop.f32.mrf.mxu0
  %v2971 = vadd.f32 %v2922, %v2970
  %2972 = vdwg.mxu0
  %vm2973 = vsmask.f32 4352
  %v2975 = vshrl.u32 %v2678, 16
  %v2977 = vrot.slane %v2975, 3
  %v2978 = vshll.u32 %v2678, 16
  %v2980 = vrot.slane %v2978, 4
  %v2981 = vor.u32 %v2977, %v2980
  %v2983 = vshrl.u32 %v2680, 16
  %v2985 = vrot.slane %v2983, 3
  %v2986 = vshll.u32 %v2680, 16
  %v2988 = vrot.slane %v2986, 4
  %v2989 = vor.u32 %v2985, %v2988
  %v2990 = vsel %vm2973, %v2981, %v2989
  %v2992 = vshrl.u32 %v2679, 16
  %v2994 = vrot.slane %v2992, 3
  %v2995 = vshll.u32 %v2679, 16
  %v2997 = vrot.slane %v2995, 4
  %v2998 = vor.u32 %v2994, %v2997
  %v3000 = vshrl.u32 %v2681, 16
  %v3002 = vrot.slane %v3000, 3
  %v3003 = vshll.u32 %v2681, 16
  %v3005 = vrot.slane %v3003, 4
  %v3006 = vor.u32 %v3002, %v3005
  %v3007 = vsel %vm2973, %v2998, %v3006
  %v3009 = vshrl.u32 %v2682, 16
  %v3011 = vrot.slane %v3009, 3
  %v3012 = vshll.u32 %v2682, 16
  %v3014 = vrot.slane %v3012, 4
  %v3015 = vor.u32 %v3011, %v3014
  %v3016 = vsel %vm2973, %v2989, %v3015
  %v3018 = vshrl.u32 %v2683, 16
  %v3020 = vrot.slane %v3018, 3
  %v3021 = vshll.u32 %v2683, 16
  %v3023 = vrot.slane %v3021, 4
  %v3024 = vor.u32 %v3020, %v3023
  %v3025 = vsel %vm2973, %v3006, %v3024
  %v3027 = vshrl.u32 %v2684, 16
  %v3029 = vrot.slane %v3027, 3
  %v3030 = vshll.u32 %v2684, 16
  %v3032 = vrot.slane %v3030, 4
  %v3033 = vor.u32 %v3029, %v3032
  %v3034 = vsel %vm2973, %v3015, %v3033
  %v3036 = vshrl.u32 %v2685, 16
  %v3038 = vrot.slane %v3036, 3
  %v3039 = vshll.u32 %v2685, 16
  %v3041 = vrot.slane %v3039, 4
  %v3042 = vor.u32 %v3038, %v3041
  %v3043 = vsel %vm2973, %v3024, %v3042
  %v3045 = vshrl.u32 %v2686, 16
  %v3047 = vrot.slane %v3045, 3
  %v3048 = vshll.u32 %v2686, 16
  %v3050 = vrot.slane %v3048, 4
  %v3051 = vor.u32 %v3047, %v3050
  %v3052 = vsel %vm2973, %v3033, %v3051
  %v3054 = vshrl.u32 %v2687, 16
  %v3056 = vrot.slane %v3054, 3
  %v3057 = vshll.u32 %v2687, 16
  %v3059 = vrot.slane %v3057, 4
  %v3060 = vor.u32 %v3056, %v3059
  %v3061 = vsel %vm2973, %v3042, %v3060
  %v3063 = vshrl.u32 %v2688, 16
  %v3065 = vrot.slane %v3063, 3
  %v3066 = vshll.u32 %v2688, 16
  %v3068 = vrot.slane %v3066, 4
  %v3069 = vor.u32 %v3065, %v3068
  %v3070 = vsel %vm2973, %v3051, %v3069
  %v3072 = vshrl.u32 %v2689, 16
  %v3074 = vrot.slane %v3072, 3
  %v3075 = vshll.u32 %v2689, 16
  %v3077 = vrot.slane %v3075, 4
  %v3078 = vor.u32 %v3074, %v3077
  %v3079 = vsel %vm2973, %v3060, %v3078
  %v3081 = vshrl.u32 %v2690, 16
  %v3083 = vrot.slane %v3081, 3
  %v3084 = vshll.u32 %v2690, 16
  %v3086 = vrot.slane %v3084, 4
  %v3087 = vor.u32 %v3083, %v3086
  %v3088 = vsel %vm2973, %v3069, %v3087
  %v3090 = vshrl.u32 %v2691, 16
  %v3092 = vrot.slane %v3090, 3
  %v3093 = vshll.u32 %v2691, 16
  %v3095 = vrot.slane %v3093, 4
  %v3096 = vor.u32 %v3092, %v3095
  %v3097 = vsel %vm2973, %v3078, %v3096
  %v3099 = vshrl.u32 %v2692, 16
  %v3101 = vrot.slane %v3099, 3
  %v3102 = vshll.u32 %v2692, 16
  %v3104 = vrot.slane %v3102, 4
  %v3105 = vor.u32 %v3101, %v3104
  %v3106 = vsel %vm2973, %v3087, %v3105
  %v3108 = vshrl.u32 %v2693, 16
  %v3110 = vrot.slane %v3108, 3
  %v3111 = vshll.u32 %v2693, 16
  %v3113 = vrot.slane %v3111, 4
  %v3114 = vor.u32 %v3110, %v3113
  %v3115 = vsel %vm2973, %v3096, %v3114
  %v3117 = vshrl.u32 %v2694, 16
  %v3119 = vrot.slane %v3117, 3
  %v3120 = vshll.u32 %v2694, 16
  %v3122 = vrot.slane %v3120, 4
  %v3123 = vor.u32 %v3119, %v3122
  %v3124 = vsel %vm2973, %v3105, %v3123
  %v3126 = vshrl.u32 %v2695, 16
  %v3128 = vrot.slane %v3126, 3
  %v3129 = vshll.u32 %v2695, 16
  %v3131 = vrot.slane %v3129, 4
  %v3132 = vor.u32 %v3128, %v3131
  %v3133 = vsel %vm2973, %v3114, %v3132
  %v3182 = vunpack.c.l.b16 %v2696
  %v3183 = vunpack.c.l.b16 %v2697
  %v3184 = vunpack.c.l.b16 %v2698
  %v3185 = vunpack.c.l.b16 %v2699
  %v3186 = vunpack.c.l.b16 %v2700
  %v3187 = vunpack.c.l.b16 %v2701
  %v3188 = vunpack.c.l.b16 %v2702
  %v3189 = vunpack.c.l.b16 %v2703
  %v3190 = vunpack.c.l.b16 %v2704
  %v3191 = vunpack.c.l.b16 %v2705
  %v3192 = vunpack.c.l.b16 %v2706
  %v3193 = vunpack.c.l.b16 %v2707
  %v3194 = vunpack.c.l.b16 %v2708
  %v3195 = vunpack.c.l.b16 %v2709
  %v3196 = vunpack.c.l.b16 %v2710
  %v3197 = vunpack.c.l.b16 %v2711
  %v3198 = vunpack.c.l.b16 %v2712
  %v3199 = vunpack.c.l.b16 %v2713
  %v3200 = vunpack.c.l.b16 %v2714
  %v3201 = vunpack.c.l.b16 %v2715
  %v3202 = vunpack.c.l.b16 %v2716
  %v3203 = vunpack.c.l.b16 %v2717
  %v3204 = vunpack.c.l.b16 %v2718
  %v3205 = vunpack.c.l.b16 %v2719
  %v3206 = vunpack.c.l.b16 %v2720
  %v3207 = vunpack.c.l.b16 %v2721
  %v3208 = vunpack.c.l.b16 %v2722
  %v3209 = vunpack.c.l.b16 %v2723
  %v3210 = vunpack.c.l.b16 %v2724
  %v3211 = vunpack.c.l.b16 %v2725
  %v3212 = vunpack.c.l.b16 %v2726
  %v3213 = vunpack.c.l.b16 %v2727
  %v3214 = vpack.c.b16 %v3183, %v3182
  %v3215 = vpack.c.b16 %v3185, %v3184
  %v3216 = vpack.c.b16 %v3187, %v3186
  %v3217 = vpack.c.b16 %v3189, %v3188
  %v3218 = vpack.c.b16 %v3191, %v3190
  %v3219 = vpack.c.b16 %v3193, %v3192
  %v3220 = vpack.c.b16 %v3195, %v3194
  %v3221 = vpack.c.b16 %v3197, %v3196
  %v3222 = vpack.c.b16 %v3199, %v3198
  %v3223 = vpack.c.b16 %v3201, %v3200
  %v3224 = vpack.c.b16 %v3203, %v3202
  %v3225 = vpack.c.b16 %v3205, %v3204
  %v3226 = vpack.c.b16 %v3207, %v3206
  %v3227 = vpack.c.b16 %v3209, %v3208
  %v3228 = vpack.c.b16 %v3211, %v3210
  %v3229 = vpack.c.b16 %v3213, %v3212
  %3246 = vmatpush.bf16.msra.mxu0 %v3221
  %3247 = vmatpush.bf16.msra.mxu0 %v3220
  %3248 = vmatpush.bf16.msra.mxu0 %v3219
  %3249 = vmatpush.bf16.msra.mxu0 %v3218
  %3250 = vmatpush.bf16.msra.mxu0 %v3217
  %3251 = vmatpush.bf16.msra.mxu0 %v3216
  %3252 = vmatpush.bf16.msra.mxu0 %v3215
  %3253 = vmatpush.bf16.msra.mxu0 %v3214
  %3254 = vmatmul.bf16.gmra.mxu0 %v2990
  %v3255 = vpop.f32.mrf.mxu0
  %v3256 = vadd.f32 %v2934, %v3255
  %v3257 = vpop.f32.mrf.mxu0
  %v3258 = vadd.f32 %v2936, %v3257
  %3259 = vmatmul.bf16.gmra.mxu0 %v3016
  %v3260 = vpop.f32.mrf.mxu0
  %v3261 = vadd.f32 %v2939, %v3260
  %v3262 = vpop.f32.mrf.mxu0
  %v3263 = vadd.f32 %v2941, %v3262
  %3264 = vmatmul.bf16.gmra.mxu0 %v3034
  %v3265 = vpop.f32.mrf.mxu0
  %v3266 = vadd.f32 %v2944, %v3265
  %v3267 = vpop.f32.mrf.mxu0
  %v3268 = vadd.f32 %v2946, %v3267
  %3269 = vmatmul.bf16.gmra.mxu0 %v3052
  %v3270 = vpop.f32.mrf.mxu0
  %v3271 = vadd.f32 %v2949, %v3270
  %v3272 = vpop.f32.mrf.mxu0
  %v3273 = vadd.f32 %v2951, %v3272
  %3274 = vmatmul.bf16.gmra.mxu0 %v3070
  %v3275 = vpop.f32.mrf.mxu0
  %v3276 = vadd.f32 %v2954, %v3275
  %v3277 = vpop.f32.mrf.mxu0
  %v3278 = vadd.f32 %v2956, %v3277
  %3279 = vmatmul.bf16.gmra.mxu0 %v3088
  %v3280 = vpop.f32.mrf.mxu0
  %v3281 = vadd.f32 %v2959, %v3280
  %v3282 = vpop.f32.mrf.mxu0
  %v3283 = vadd.f32 %v2961, %v3282
  %3284 = vmatmul.bf16.gmra.mxu0 %v3106
  %v3285 = vpop.f32.mrf.mxu0
  %v3286 = vadd.f32 %v2964, %v3285
  %v3287 = vpop.f32.mrf.mxu0
  %v3288 = vadd.f32 %v2966, %v3287
  %3289 = vmatmul.bf16.gmra.mxu0 %v3124
  %v3290 = vpop.f32.mrf.mxu0
  %v3291 = vadd.f32 %v2969, %v3290
  %v3292 = vpop.f32.mrf.mxu0
  %v3293 = vadd.f32 %v2971, %v3292
  %3294 = vdwg.mxu0
  %3295 = vmatpush.bf16.msra.mxu0 %v3229
  %3296 = vmatpush.bf16.msra.mxu0 %v3228
  %3297 = vmatpush.bf16.msra.mxu0 %v3227
  %3298 = vmatpush.bf16.msra.mxu0 %v3226
  %3299 = vmatpush.bf16.msra.mxu0 %v3225
  %3300 = vmatpush.bf16.msra.mxu0 %v3224
  %3301 = vmatpush.bf16.msra.mxu0 %v3223
  %3302 = vmatpush.bf16.msra.mxu0 %v3222
  %3303 = vmatmul.bf16.gmra.mxu0 %v3007
  %v3304 = vpop.f32.mrf.mxu0
  %v3305 = vadd.f32 %v3256, %v3304
  %v3306 = vpop.f32.mrf.mxu0
  %v3307 = vadd.f32 %v3258, %v3306
  %3308 = vmatmul.bf16.gmra.mxu0 %v3025
  %v3309 = vpop.f32.mrf.mxu0
  %v3310 = vadd.f32 %v3261, %v3309
  %v3311 = vpop.f32.mrf.mxu0
  %v3312 = vadd.f32 %v3263, %v3311
  %3313 = vmatmul.bf16.gmra.mxu0 %v3043
  %v3314 = vpop.f32.mrf.mxu0
  %v3315 = vadd.f32 %v3266, %v3314
  %v3316 = vpop.f32.mrf.mxu0
  %v3317 = vadd.f32 %v3268, %v3316
  %3318 = vmatmul.bf16.gmra.mxu0 %v3061
  %v3319 = vpop.f32.mrf.mxu0
  %v3320 = vadd.f32 %v3271, %v3319
  %v3321 = vpop.f32.mrf.mxu0
  %v3322 = vadd.f32 %v3273, %v3321
  %3323 = vmatmul.bf16.gmra.mxu0 %v3079
  %v3324 = vpop.f32.mrf.mxu0
  %v3325 = vadd.f32 %v3276, %v3324
  %v3326 = vpop.f32.mrf.mxu0
  %v3327 = vadd.f32 %v3278, %v3326
  %3328 = vmatmul.bf16.gmra.mxu0 %v3097
  %v3329 = vpop.f32.mrf.mxu0
  %v3330 = vadd.f32 %v3281, %v3329
  %v3331 = vpop.f32.mrf.mxu0
  %v3332 = vadd.f32 %v3283, %v3331
  %3333 = vmatmul.bf16.gmra.mxu0 %v3115
  %v3334 = vpop.f32.mrf.mxu0
  %v3335 = vadd.f32 %v3286, %v3334
  %v3336 = vpop.f32.mrf.mxu0
  %v3337 = vadd.f32 %v3288, %v3336
  %3338 = vmatmul.bf16.gmra.mxu0 %v3133
  %v3339 = vpop.f32.mrf.mxu0
  %v3340 = vadd.f32 %v3291, %v3339
  %v3341 = vpop.f32.mrf.mxu0
  %v3342 = vadd.f32 %v3293, %v3341
  %3343 = vdwg.mxu0
  %v3344 = vld [vmem:[#allocation3 + $0xf0] sm:$0xfe]
  %v3345 = vld [vmem:[#allocation3 + $0xf8] sm:$0xfe]
  %v3346 = vld [vmem:[#allocation3 + $0x100] sm:$0xff]
  %v3347 = vld [vmem:[#allocation3 + $0x108] sm:$0xff]
  %v3348 = vld [vmem:[#allocation3 + $0x110] sm:$0xff]
  %v3349 = vld [vmem:[#allocation3 + $0x118] sm:$0xff]
  %v3350 = vld [vmem:[#allocation3 + $0x120] sm:$0xff]
  %v3351 = vld [vmem:[#allocation3 + $0x128] sm:$0xff]
  %v3352 = vld [vmem:[#allocation3 + $0x130] sm:$0xff]
  %v3353 = vld [vmem:[#allocation3 + $0x138] sm:$0xff]
  %v3354 = vld [vmem:[#allocation3 + $0x140] sm:$0xff]
  %v3355 = vld [vmem:[#allocation3 + $0x148] sm:$0xff]
  %v3356 = vld [vmem:[#allocation3 + $0x150] sm:$0xff]
  %v3357 = vld [vmem:[#allocation3 + $0x158] sm:$0xff]
  %v3358 = vld [vmem:[#allocation3 + $0x160] sm:$0xff]
  %v3359 = vld [vmem:[#allocation3 + $0x168] sm:$0xff]
  %v3360 = vld [vmem:[#allocation3 + $0x170] sm:$0xff]
  %v3361 = vld [vmem:[#allocation3 + $0x178] sm:$0xff]
  %v3362 = vld [vmem:[#allocation3 + $0x180] sm:$0xff]
  %v3363 = vld [vmem:[#allocation3 + $0x188] sm:$0xff]
  %v3364 = vld [vmem:[#allocation3 + $0x190] sm:$0xff]
  %v3365 = vld [vmem:[#allocation3 + $0x198] sm:$0xff]
  %v3366 = vld [vmem:[#allocation3 + $0x1a0] sm:$0xff]
  %v3367 = vld [vmem:[#allocation3 + $0x1a8] sm:$0xff]
  %v3368 = vld [vmem:[#allocation3 + $0x1b0] sm:$0xff]
  %v3369 = vld [vmem:[#allocation3 + $0x1b8] sm:$0xff]
  %v3370 = vld [vmem:[#allocation3 + $0x1c0] sm:$0xff]
  %v3371 = vld [vmem:[#allocation3 + $0x1c8] sm:$0xff]
  %v3372 = vld [vmem:[#allocation3 + $0x1d0] sm:$0xff]
  %v3373 = vld [vmem:[#allocation3 + $0x1d8] sm:$0xff]
  %v3374 = vld [vmem:[#allocation3 + $0x1e0] sm:$0xff]
  %v3375 = vld [vmem:[#allocation3 + $0x1e8] sm:$0xff]
  %v3376 = vld [vmem:[#allocation3 + $0x1f0] sm:$0x1]
  %v3377 = vld [vmem:[#allocation3 + $0x1f8] sm:$0x1]
  %v3378 = vpack.c.bf16 %v3346, %v3344
  %v3379 = vpack.c.bf16 %v3347, %v3345
  %v3380 = vpack.c.bf16 %v3350, %v3348
  %v3381 = vpack.c.bf16 %v3351, %v3349
  %v3382 = vpack.c.bf16 %v3354, %v3352
  %v3383 = vpack.c.bf16 %v3355, %v3353
  %v3384 = vpack.c.bf16 %v3358, %v3356
  %v3385 = vpack.c.bf16 %v3359, %v3357
  %v3386 = vpack.c.bf16 %v3362, %v3360
  %v3387 = vpack.c.bf16 %v3363, %v3361
  %v3388 = vpack.c.bf16 %v3366, %v3364
  %v3389 = vpack.c.bf16 %v3367, %v3365
  %v3390 = vpack.c.bf16 %v3370, %v3368
  %v3391 = vpack.c.bf16 %v3371, %v3369
  %v3392 = vpack.c.bf16 %v3374, %v3372
  %v3393 = vpack.c.bf16 %v3375, %v3373
  %v3394 = vpack.c.bf16 %v3376, %v3376
  %v3395 = vpack.c.bf16 %v3377, %v3377
  %s3396 = scalar_lea.vmem %s5, 256
  %v3397 = vld [vmem:[%s3396] sm:$0xf]
  %v3398 = vld [vmem:[%s3396 + $0x4] sm:$0xf]
  %v3399 = vld [vmem:[%s3396 + $0x8] sm:$0xf]
  %v3400 = vld [vmem:[%s3396 + $0xc] sm:$0xf]
  %v3401 = vld [vmem:[%s3396 + $0x10] sm:$0xf]
  %v3402 = vld [vmem:[%s3396 + $0x14] sm:$0xf]
  %v3403 = vld [vmem:[%s3396 + $0x18] sm:$0xf]
  %v3404 = vld [vmem:[%s3396 + $0x1c] sm:$0xf]
  %v3405 = vld [vmem:[%s3396 + $0x20] sm:$0xf]
  %v3406 = vld [vmem:[%s3396 + $0x24] sm:$0xf]
  %v3407 = vld [vmem:[%s3396 + $0x28] sm:$0xf]
  %v3408 = vld [vmem:[%s3396 + $0x2c] sm:$0xf]
  %v3409 = vld [vmem:[%s3396 + $0x30] sm:$0xf]
  %v3410 = vld [vmem:[%s3396 + $0x34] sm:$0xf]
  %v3411 = vld [vmem:[%s3396 + $0x38] sm:$0xf]
  %v3412 = vld [vmem:[%s3396 + $0x3c] sm:$0xf]
  %v3413 = vld [vmem:[%s3396 + $0x40] sm:$0xf]
  %v3414 = vld [vmem:[%s3396 + $0x44] sm:$0xf]
  %v3415 = vld [vmem:[%s3396 + $0x48] sm:$0xf]
  %v3416 = vld [vmem:[%s3396 + $0x4c] sm:$0xf]
  %v3417 = vld [vmem:[%s3396 + $0x50] sm:$0xf]
  %v3418 = vld [vmem:[%s3396 + $0x54] sm:$0xf]
  %v3419 = vld [vmem:[%s3396 + $0x58] sm:$0xf]
  %v3420 = vld [vmem:[%s3396 + $0x5c] sm:$0xf]
  %v3421 = vld [vmem:[%s3396 + $0x60] sm:$0xf]
  %v3422 = vld [vmem:[%s3396 + $0x64] sm:$0xf]
  %v3423 = vld [vmem:[%s3396 + $0x68] sm:$0xf]
  %v3424 = vld [vmem:[%s3396 + $0x6c] sm:$0xf]
  %v3425 = vld [vmem:[%s3396 + $0x70] sm:$0xf]
  %v3426 = vld [vmem:[%s3396 + $0x74] sm:$0xf]
  %v3427 = vld [vmem:[%s3396 + $0x78] sm:$0xf]
  %v3428 = vld [vmem:[%s3396 + $0x7c] sm:$0xf]
  %vm3429 = vsmask.f32 7424
  %v3431 = vshrl.u32 %v3378, 16
  %v3433 = vshll.u32 %v3378, 16
  %v3435 = vrot.slane %v3433, 1
  %v3436 = vor.u32 %v3431, %v3435
  %v3438 = vshll.u32 %v3380, 16
  %v3440 = vrot.slane %v3438, 1
  %v3441 = vsel %vm3429, %v3436, %v3440
  %v3443 = vshrl.u32 %v3379, 16
  %v3445 = vshll.u32 %v3379, 16
  %v3447 = vrot.slane %v3445, 1
  %v3448 = vor.u32 %v3443, %v3447
  %v3450 = vshll.u32 %v3381, 16
  %v3452 = vrot.slane %v3450, 1
  %v3453 = vsel %vm3429, %v3448, %v3452
  %v3454 = vshrl.u32 %v3380, 16
  %v3456 = vor.u32 %v3454, %v3440
  %v3458 = vshll.u32 %v3382, 16
  %v3460 = vrot.slane %v3458, 1
  %v3461 = vsel %vm3429, %v3456, %v3460
  %v3462 = vshrl.u32 %v3381, 16
  %v3464 = vor.u32 %v3462, %v3452
  %v3466 = vshll.u32 %v3383, 16
  %v3468 = vrot.slane %v3466, 1
  %v3469 = vsel %vm3429, %v3464, %v3468
  %v3470 = vshrl.u32 %v3382, 16
  %v3472 = vor.u32 %v3470, %v3460
  %v3474 = vshll.u32 %v3384, 16
  %v3476 = vrot.slane %v3474, 1
  %v3477 = vsel %vm3429, %v3472, %v3476
  %v3478 = vshrl.u32 %v3383, 16
  %v3480 = vor.u32 %v3478, %v3468
  %v3482 = vshll.u32 %v3385, 16
  %v3484 = vrot.slane %v3482, 1
  %v3485 = vsel %vm3429, %v3480, %v3484
  %v3486 = vshrl.u32 %v3384, 16
  %v3488 = vor.u32 %v3486, %v3476
  %v3490 = vshll.u32 %v3386, 16
  %v3492 = vrot.slane %v3490, 1
  %v3493 = vsel %vm3429, %v3488, %v3492
  %v3494 = vshrl.u32 %v3385, 16
  %v3496 = vor.u32 %v3494, %v3484
  %v3498 = vshll.u32 %v3387, 16
  %v3500 = vrot.slane %v3498, 1
  %v3501 = vsel %vm3429, %v3496, %v3500
  %v3502 = vshrl.u32 %v3386, 16
  %v3504 = vor.u32 %v3502, %v3492
  %v3506 = vshll.u32 %v3388, 16
  %v3508 = vrot.slane %v3506, 1
  %v3509 = vsel %vm3429, %v3504, %v3508
  %v3510 = vshrl.u32 %v3387, 16
  %v3512 = vor.u32 %v3510, %v3500
  %v3514 = vshll.u32 %v3389, 16
  %v3516 = vrot.slane %v3514, 1
  %v3517 = vsel %vm3429, %v3512, %v3516
  %v3518 = vshrl.u32 %v3388, 16
  %v3520 = vor.u32 %v3518, %v3508
  %v3522 = vshll.u32 %v3390, 16
  %v3524 = vrot.slane %v3522, 1
  %v3525 = vsel %vm3429, %v3520, %v3524
  %v3526 = vshrl.u32 %v3389, 16
  %v3528 = vor.u32 %v3526, %v3516
  %v3530 = vshll.u32 %v3391, 16
  %v3532 = vrot.slane %v3530, 1
  %v3533 = vsel %vm3429, %v3528, %v3532
  %v3534 = vshrl.u32 %v3390, 16
  %v3536 = vor.u32 %v3534, %v3524
  %v3538 = vshll.u32 %v3392, 16
  %v3540 = vrot.slane %v3538, 1
  %v3541 = vsel %vm3429, %v3536, %v3540
  %v3542 = vshrl.u32 %v3391, 16
  %v3544 = vor.u32 %v3542, %v3532
  %v3546 = vshll.u32 %v3393, 16
  %v3548 = vrot.slane %v3546, 1
  %v3549 = vsel %vm3429, %v3544, %v3548
  %v3550 = vshrl.u32 %v3392, 16
  %v3552 = vor.u32 %v3550, %v3540
  %v3554 = vshll.u32 %v3394, 16
  %v3556 = vrot.slane %v3554, 1
  %v3557 = vsel %vm3429, %v3552, %v3556
  %v3558 = vshrl.u32 %v3393, 16
  %v3560 = vor.u32 %v3558, %v3548
  %v3562 = vshll.u32 %v3395, 16
  %v3564 = vrot.slane %v3562, 1
  %v3565 = vsel %vm3429, %v3560, %v3564
  %v3614 = vunpack.c.l.b16 %v3397
  %v3615 = vunpack.c.l.b16 %v3398
  %v3616 = vunpack.c.l.b16 %v3399
  %v3617 = vunpack.c.l.b16 %v3400
  %v3618 = vunpack.c.l.b16 %v3401
  %v3619 = vunpack.c.l.b16 %v3402
  %v3620 = vunpack.c.l.b16 %v3403
  %v3621 = vunpack.c.l.b16 %v3404
  %v3622 = vunpack.c.l.b16 %v3405
  %v3623 = vunpack.c.l.b16 %v3406
  %v3624 = vunpack.c.l.b16 %v3407
  %v3625 = vunpack.c.l.b16 %v3408
  %v3626 = vunpack.c.l.b16 %v3409
  %v3627 = vunpack.c.l.b16 %v3410
  %v3628 = vunpack.c.l.b16 %v3411
  %v3629 = vunpack.c.l.b16 %v3412
  %v3630 = vunpack.c.l.b16 %v3413
  %v3631 = vunpack.c.l.b16 %v3414
  %v3632 = vunpack.c.l.b16 %v3415
  %v3633 = vunpack.c.l.b16 %v3416
  %v3634 = vunpack.c.l.b16 %v3417
  %v3635 = vunpack.c.l.b16 %v3418
  %v3636 = vunpack.c.l.b16 %v3419
  %v3637 = vunpack.c.l.b16 %v3420
  %v3638 = vunpack.c.l.b16 %v3421
  %v3639 = vunpack.c.l.b16 %v3422
  %v3640 = vunpack.c.l.b16 %v3423
  %v3641 = vunpack.c.l.b16 %v3424
  %v3642 = vunpack.c.l.b16 %v3425
  %v3643 = vunpack.c.l.b16 %v3426
  %v3644 = vunpack.c.l.b16 %v3427
  %v3645 = vunpack.c.l.b16 %v3428
  %v3646 = vpack.c.b16 %v3615, %v3614
  %v3647 = vpack.c.b16 %v3617, %v3616
  %v3648 = vpack.c.b16 %v3619, %v3618
  %v3649 = vpack.c.b16 %v3621, %v3620
  %v3650 = vpack.c.b16 %v3623, %v3622
  %v3651 = vpack.c.b16 %v3625, %v3624
  %v3652 = vpack.c.b16 %v3627, %v3626
  %v3653 = vpack.c.b16 %v3629, %v3628
  %v3654 = vpack.c.b16 %v3631, %v3630
  %v3655 = vpack.c.b16 %v3633, %v3632
  %v3656 = vpack.c.b16 %v3635, %v3634
  %v3657 = vpack.c.b16 %v3637, %v3636
  %v3658 = vpack.c.b16 %v3639, %v3638
  %v3659 = vpack.c.b16 %v3641, %v3640
  %v3660 = vpack.c.b16 %v3643, %v3642
  %v3661 = vpack.c.b16 %v3645, %v3644
  %3678 = vmatpush.bf16.msra.mxu0 %v3653
  %3679 = vmatpush.bf16.msra.mxu0 %v3652
  %3680 = vmatpush.bf16.msra.mxu0 %v3651
  %3681 = vmatpush.bf16.msra.mxu0 %v3650
  %3682 = vmatpush.bf16.msra.mxu0 %v3649
  %3683 = vmatpush.bf16.msra.mxu0 %v3648
  %3684 = vmatpush.bf16.msra.mxu0 %v3647
  %3685 = vmatpush.bf16.msra.mxu0 %v3646
  %3686 = vmatmul.bf16.gmra.mxu0 %v3441
  %v3687 = vpop.f32.mrf.mxu0
  %v3688 = vadd.f32 0.0, %v3687
  %v3689 = vpop.f32.mrf.mxu0
  %v3690 = vadd.f32 0.0, %v3689
  %3691 = vmatmul.bf16.gmra.mxu0 %v3461
  %v3692 = vpop.f32.mrf.mxu0
  %v3693 = vadd.f32 0.0, %v3692
  %v3694 = vpop.f32.mrf.mxu0
  %v3695 = vadd.f32 0.0, %v3694
  %3696 = vmatmul.bf16.gmra.mxu0 %v3477
  %v3697 = vpop.f32.mrf.mxu0
  %v3698 = vadd.f32 0.0, %v3697
  %v3699 = vpop.f32.mrf.mxu0
  %v3700 = vadd.f32 0.0, %v3699
  %3701 = vmatmul.bf16.gmra.mxu0 %v3493
  %v3702 = vpop.f32.mrf.mxu0
  %v3703 = vadd.f32 0.0, %v3702
  %v3704 = vpop.f32.mrf.mxu0
  %v3705 = vadd.f32 0.0, %v3704
  %3706 = vmatmul.bf16.gmra.mxu0 %v3509
  %v3707 = vpop.f32.mrf.mxu0
  %v3708 = vadd.f32 0.0, %v3707
  %v3709 = vpop.f32.mrf.mxu0
  %v3710 = vadd.f32 0.0, %v3709
  %3711 = vmatmul.bf16.gmra.mxu0 %v3525
  %v3712 = vpop.f32.mrf.mxu0
  %v3713 = vadd.f32 0.0, %v3712
  %v3714 = vpop.f32.mrf.mxu0
  %v3715 = vadd.f32 0.0, %v3714
  %3716 = vmatmul.bf16.gmra.mxu0 %v3541
  %v3717 = vpop.f32.mrf.mxu0
  %v3718 = vadd.f32 0.0, %v3717
  %v3719 = vpop.f32.mrf.mxu0
  %v3720 = vadd.f32 0.0, %v3719
  %3721 = vmatmul.bf16.gmra.mxu0 %v3557
  %v3722 = vpop.f32.mrf.mxu0
  %v3723 = vadd.f32 0.0, %v3722
  %v3724 = vpop.f32.mrf.mxu0
  %v3725 = vadd.f32 0.0, %v3724
  %3726 = vdwg.mxu0
  %3727 = vmatpush.bf16.msra.mxu0 %v3661
  %3728 = vmatpush.bf16.msra.mxu0 %v3660
  %3729 = vmatpush.bf16.msra.mxu0 %v3659
  %3730 = vmatpush.bf16.msra.mxu0 %v3658
  %3731 = vmatpush.bf16.msra.mxu0 %v3657
  %3732 = vmatpush.bf16.msra.mxu0 %v3656
  %3733 = vmatpush.bf16.msra.mxu0 %v3655
  %3734 = vmatpush.bf16.msra.mxu0 %v3654
  %3735 = vmatmul.bf16.gmra.mxu0 %v3453
  %v3736 = vpop.f32.mrf.mxu0
  %v3737 = vadd.f32 %v3688, %v3736
  %v3738 = vpop.f32.mrf.mxu0
  %v3739 = vadd.f32 %v3690, %v3738
  %3740 = vmatmul.bf16.gmra.mxu0 %v3469
  %v3741 = vpop.f32.mrf.mxu0
  %v3742 = vadd.f32 %v3693, %v3741
  %v3743 = vpop.f32.mrf.mxu0
  %v3744 = vadd.f32 %v3695, %v3743
  %3745 = vmatmul.bf16.gmra.mxu0 %v3485
  %v3746 = vpop.f32.mrf.mxu0
  %v3747 = vadd.f32 %v3698, %v3746
  %v3748 = vpop.f32.mrf.mxu0
  %v3749 = vadd.f32 %v3700, %v3748
  %3750 = vmatmul.bf16.gmra.mxu0 %v3501
  %v3751 = vpop.f32.mrf.mxu0
  %v3752 = vadd.f32 %v3703, %v3751
  %v3753 = vpop.f32.mrf.mxu0
  %v3754 = vadd.f32 %v3705, %v3753
  %3755 = vmatmul.bf16.gmra.mxu0 %v3517
  %v3756 = vpop.f32.mrf.mxu0
  %v3757 = vadd.f32 %v3708, %v3756
  %v3758 = vpop.f32.mrf.mxu0
  %v3759 = vadd.f32 %v3710, %v3758
  %3760 = vmatmul.bf16.gmra.mxu0 %v3533
  %v3761 = vpop.f32.mrf.mxu0
  %v3762 = vadd.f32 %v3713, %v3761
  %v3763 = vpop.f32.mrf.mxu0
  %v3764 = vadd.f32 %v3715, %v3763
  %3765 = vmatmul.bf16.gmra.mxu0 %v3549
  %v3766 = vpop.f32.mrf.mxu0
  %v3767 = vadd.f32 %v3718, %v3766
  %v3768 = vpop.f32.mrf.mxu0
  %v3769 = vadd.f32 %v3720, %v3768
  %3770 = vmatmul.bf16.gmra.mxu0 %v3565
  %v3771 = vpop.f32.mrf.mxu0
  %v3772 = vadd.f32 %v3723, %v3771
  %v3773 = vpop.f32.mrf.mxu0
  %v3774 = vadd.f32 %v3725, %v3773
  %3775 = vdwg.mxu0
  %v3776 = vadd.f32 %v3305, %v3737
  %v3777 = vadd.f32 %v3307, %v3739
  %v3778 = vadd.f32 %v3310, %v3742
  %v3779 = vadd.f32 %v3312, %v3744
  %v3780 = vadd.f32 %v3315, %v3747
  %v3781 = vadd.f32 %v3317, %v3749
  %v3782 = vadd.f32 %v3320, %v3752
  %v3783 = vadd.f32 %v3322, %v3754
  %v3784 = vadd.f32 %v3325, %v3757
  %v3785 = vadd.f32 %v3327, %v3759
  %v3786 = vadd.f32 %v3330, %v3762
  %v3787 = vadd.f32 %v3332, %v3764
  %v3788 = vadd.f32 %v3335, %v3767
  %v3789 = vadd.f32 %v3337, %v3769
  %v3790 = vadd.f32 %v3340, %v3772
  %v3791 = vadd.f32 %v3342, %v3774
  %v3792 = vld [vmem:[#allocation3 + $0xf0] sm:$0x80]
  %v3793 = vld [vmem:[#allocation3 + $0xf8] sm:$0x80]
  %v3794 = vld [vmem:[#allocation3 + $0x1f0] sm:$0x7f]
  %v3795 = vld [vmem:[#allocation3 + $0x1f8] sm:$0x7f]
  %v3796 = vpack.c.bf16 %v3346, %v3792
  %v3797 = vpack.c.bf16 %v3347, %v3793
  %v3798 = vpack.c.bf16 %v3794, %v3794
  %v3799 = vpack.c.bf16 %v3795, %v3795
  %s3800 = scalar_lea.vmem %s5, 384
  %v3801 = vld [vmem:[%s3800] sm:$0xf]
  %v3802 = vld [vmem:[%s3800 + $0x4] sm:$0xf]
  %v3803 = vld [vmem:[%s3800 + $0x8] sm:$0xf]
  %v3804 = vld [vmem:[%s3800 + $0xc] sm:$0xf]
  %v3805 = vld [vmem:[%s3800 + $0x10] sm:$0xf]
  %v3806 = vld [vmem:[%s3800 + $0x14] sm:$0xf]
  %v3807 = vld [vmem:[%s3800 + $0x18] sm:$0xf]
  %v3808 = vld [vmem:[%s3800 + $0x1c] sm:$0xf]
  %v3809 = vld [vmem:[%s3800 + $0x20] sm:$0xf]
  %v3810 = vld [vmem:[%s3800 + $0x24] sm:$0xf]
  %v3811 = vld [vmem:[%s3800 + $0x28] sm:$0xf]
  %v3812 = vld [vmem:[%s3800 + $0x2c] sm:$0xf]
  %v3813 = vld [vmem:[%s3800 + $0x30] sm:$0xf]
  %v3814 = vld [vmem:[%s3800 + $0x34] sm:$0xf]
  %v3815 = vld [vmem:[%s3800 + $0x38] sm:$0xf]
  %v3816 = vld [vmem:[%s3800 + $0x3c] sm:$0xf]
  %v3817 = vld [vmem:[%s3800 + $0x40] sm:$0xf]
  %v3818 = vld [vmem:[%s3800 + $0x44] sm:$0xf]
  %v3819 = vld [vmem:[%s3800 + $0x48] sm:$0xf]
  %v3820 = vld [vmem:[%s3800 + $0x4c] sm:$0xf]
  %v3821 = vld [vmem:[%s3800 + $0x50] sm:$0xf]
  %v3822 = vld [vmem:[%s3800 + $0x54] sm:$0xf]
  %v3823 = vld [vmem:[%s3800 + $0x58] sm:$0xf]
  %v3824 = vld [vmem:[%s3800 + $0x5c] sm:$0xf]
  %v3825 = vld [vmem:[%s3800 + $0x60] sm:$0xf]
  %v3826 = vld [vmem:[%s3800 + $0x64] sm:$0xf]
  %v3827 = vld [vmem:[%s3800 + $0x68] sm:$0xf]
  %v3828 = vld [vmem:[%s3800 + $0x6c] sm:$0xf]
  %v3829 = vld [vmem:[%s3800 + $0x70] sm:$0xf]
  %v3830 = vld [vmem:[%s3800 + $0x74] sm:$0xf]
  %v3831 = vld [vmem:[%s3800 + $0x78] sm:$0xf]
  %v3832 = vld [vmem:[%s3800 + $0x7c] sm:$0xf]
  %v3834 = vshrl.u32 %v3796, 16
  %v3836 = vrot.slane %v3834, 3
  %v3837 = vshll.u32 %v3796, 16
  %v3839 = vrot.slane %v3837, 4
  %v3840 = vor.u32 %v3836, %v3839
  %v3841 = vrot.slane %v3454, 3
  %v3842 = vrot.slane %v3438, 4
  %v3843 = vor.u32 %v3841, %v3842
  %v3844 = vsel %vm2973, %v3840, %v3843
  %v3846 = vshrl.u32 %v3797, 16
  %v3848 = vrot.slane %v3846, 3
  %v3849 = vshll.u32 %v3797, 16
  %v3851 = vrot.slane %v3849, 4
  %v3852 = vor.u32 %v3848, %v3851
  %v3853 = vrot.slane %v3462, 3
  %v3854 = vrot.slane %v3450, 4
  %v3855 = vor.u32 %v3853, %v3854
  %v3856 = vsel %vm2973, %v3852, %v3855
  %v3857 = vrot.slane %v3470, 3
  %v3858 = vrot.slane %v3458, 4
  %v3859 = vor.u32 %v3857, %v3858
  %v3860 = vsel %vm2973, %v3843, %v3859
  %v3861 = vrot.slane %v3478, 3
  %v3862 = vrot.slane %v3466, 4
  %v3863 = vor.u32 %v3861, %v3862
  %v3864 = vsel %vm2973, %v3855, %v3863
  %v3865 = vrot.slane %v3486, 3
  %v3866 = vrot.slane %v3474, 4
  %v3867 = vor.u32 %v3865, %v3866
  %v3868 = vsel %vm2973, %v3859, %v3867
  %v3869 = vrot.slane %v3494, 3
  %v3870 = vrot.slane %v3482, 4
  %v3871 = vor.u32 %v3869, %v3870
  %v3872 = vsel %vm2973, %v3863, %v3871
  %v3873 = vrot.slane %v3502, 3
  %v3874 = vrot.slane %v3490, 4
  %v3875 = vor.u32 %v3873, %v3874
  %v3876 = vsel %vm2973, %v3867, %v3875
  %v3877 = vrot.slane %v3510, 3
  %v3878 = vrot.slane %v3498, 4
  %v3879 = vor.u32 %v3877, %v3878
  %v3880 = vsel %vm2973, %v3871, %v3879
  %v3881 = vrot.slane %v3518, 3
  %v3882 = vrot.slane %v3506, 4
  %v3883 = vor.u32 %v3881, %v3882
  %v3884 = vsel %vm2973, %v3875, %v3883
  %v3885 = vrot.slane %v3526, 3
  %v3886 = vrot.slane %v3514, 4
  %v3887 = vor.u32 %v3885, %v3886
  %v3888 = vsel %vm2973, %v3879, %v3887
  %v3889 = vrot.slane %v3534, 3
  %v3890 = vrot.slane %v3522, 4
  %v3891 = vor.u32 %v3889, %v3890
  %v3892 = vsel %vm2973, %v3883, %v3891
  %v3893 = vrot.slane %v3542, 3
  %v3894 = vrot.slane %v3530, 4
  %v3895 = vor.u32 %v3893, %v3894
  %v3896 = vsel %vm2973, %v3887, %v3895
  %v3897 = vrot.slane %v3550, 3
  %v3898 = vrot.slane %v3538, 4
  %v3899 = vor.u32 %v3897, %v3898
  %v3900 = vsel %vm2973, %v3891, %v3899
  %v3901 = vrot.slane %v3558, 3
  %v3902 = vrot.slane %v3546, 4
  %v3903 = vor.u32 %v3901, %v3902
  %v3904 = vsel %vm2973, %v3895, %v3903
  %v3906 = vshrl.u32 %v3798, 16
  %v3908 = vrot.slane %v3906, 3
  %v3909 = vshll.u32 %v3798, 16
  %v3911 = vrot.slane %v3909, 4
  %v3912 = vor.u32 %v3908, %v3911
  %v3913 = vsel %vm2973, %v3899, %v3912
  %v3915 = vshrl.u32 %v3799, 16
  %v3917 = vrot.slane %v3915, 3
  %v3918 = vshll.u32 %v3799, 16
  %v3920 = vrot.slane %v3918, 4
  %v3921 = vor.u32 %v3917, %v3920
  %v3922 = vsel %vm2973, %v3903, %v3921
  %v3971 = vunpack.c.l.b16 %v3801
  %v3972 = vunpack.c.l.b16 %v3802
  %v3973 = vunpack.c.l.b16 %v3803
  %v3974 = vunpack.c.l.b16 %v3804
  %v3975 = vunpack.c.l.b16 %v3805
  %v3976 = vunpack.c.l.b16 %v3806
  %v3977 = vunpack.c.l.b16 %v3807
  %v3978 = vunpack.c.l.b16 %v3808
  %v3979 = vunpack.c.l.b16 %v3809
  %v3980 = vunpack.c.l.b16 %v3810
  %v3981 = vunpack.c.l.b16 %v3811
  %v3982 = vunpack.c.l.b16 %v3812
  %v3983 = vunpack.c.l.b16 %v3813
  %v3984 = vunpack.c.l.b16 %v3814
  %v3985 = vunpack.c.l.b16 %v3815
  %v3986 = vunpack.c.l.b16 %v3816
  %v3987 = vunpack.c.l.b16 %v3817
  %v3988 = vunpack.c.l.b16 %v3818
  %v3989 = vunpack.c.l.b16 %v3819
  %v3990 = vunpack.c.l.b16 %v3820
  %v3991 = vunpack.c.l.b16 %v3821
  %v3992 = vunpack.c.l.b16 %v3822
  %v3993 = vunpack.c.l.b16 %v3823
  %v3994 = vunpack.c.l.b16 %v3824
  %v3995 = vunpack.c.l.b16 %v3825
  %v3996 = vunpack.c.l.b16 %v3826
  %v3997 = vunpack.c.l.b16 %v3827
  %v3998 = vunpack.c.l.b16 %v3828
  %v3999 = vunpack.c.l.b16 %v3829
  %v4000 = vunpack.c.l.b16 %v3830
  %v4001 = vunpack.c.l.b16 %v3831
  %v4002 = vunpack.c.l.b16 %v3832
  %v4003 = vpack.c.b16 %v3972, %v3971
  %v4004 = vpack.c.b16 %v3974, %v3973
  %v4005 = vpack.c.b16 %v3976, %v3975
  %v4006 = vpack.c.b16 %v3978, %v3977
  %v4007 = vpack.c.b16 %v3980, %v3979
  %v4008 = vpack.c.b16 %v3982, %v3981
  %v4009 = vpack.c.b16 %v3984, %v3983
  %v4010 = vpack.c.b16 %v3986, %v3985
  %v4011 = vpack.c.b16 %v3988, %v3987
  %v4012 = vpack.c.b16 %v3990, %v3989
  %v4013 = vpack.c.b16 %v3992, %v3991
  %v4014 = vpack.c.b16 %v3994, %v3993
  %v4015 = vpack.c.b16 %v3996, %v3995
  %v4016 = vpack.c.b16 %v3998, %v3997
  %v4017 = vpack.c.b16 %v4000, %v3999
  %v4018 = vpack.c.b16 %v4002, %v4001
  %4035 = vmatpush.bf16.msra.mxu0 %v4010
  %4036 = vmatpush.bf16.msra.mxu0 %v4009
  %4037 = vmatpush.bf16.msra.mxu0 %v4008
  %4038 = vmatpush.bf16.msra.mxu0 %v4007
  %4039 = vmatpush.bf16.msra.mxu0 %v4006
  %4040 = vmatpush.bf16.msra.mxu0 %v4005
  %4041 = vmatpush.bf16.msra.mxu0 %v4004
  %4042 = vmatpush.bf16.msra.mxu0 %v4003
  %4043 = vmatmul.bf16.gmra.mxu0 %v3844
  %v4044 = vpop.f32.mrf.mxu0
  %v4045 = vadd.f32 0.0, %v4044
  %v4046 = vpop.f32.mrf.mxu0
  %v4047 = vadd.f32 0.0, %v4046
  %4048 = vmatmul.bf16.gmra.mxu0 %v3860
  %v4049 = vpop.f32.mrf.mxu0
  %v4050 = vadd.f32 0.0, %v4049
  %v4051 = vpop.f32.mrf.mxu0
  %v4052 = vadd.f32 0.0, %v4051
  %4053 = vmatmul.bf16.gmra.mxu0 %v3868
  %v4054 = vpop.f32.mrf.mxu0
  %v4055 = vadd.f32 0.0, %v4054
  %v4056 = vpop.f32.mrf.mxu0
  %v4057 = vadd.f32 0.0, %v4056
  %4058 = vmatmul.bf16.gmra.mxu0 %v3876
  %v4059 = vpop.f32.mrf.mxu0
  %v4060 = vadd.f32 0.0, %v4059
  %v4061 = vpop.f32.mrf.mxu0
  %v4062 = vadd.f32 0.0, %v4061
  %4063 = vmatmul.bf16.gmra.mxu0 %v3884
  %v4064 = vpop.f32.mrf.mxu0
  %v4065 = vadd.f32 0.0, %v4064
  %v4066 = vpop.f32.mrf.mxu0
  %v4067 = vadd.f32 0.0, %v4066
  %4068 = vmatmul.bf16.gmra.mxu0 %v3892
  %v4069 = vpop.f32.mrf.mxu0
  %v4070 = vadd.f32 0.0, %v4069
  %v4071 = vpop.f32.mrf.mxu0
  %v4072 = vadd.f32 0.0, %v4071
  %4073 = vmatmul.bf16.gmra.mxu0 %v3900
  %v4074 = vpop.f32.mrf.mxu0
  %v4075 = vadd.f32 0.0, %v4074
  %v4076 = vpop.f32.mrf.mxu0
  %v4077 = vadd.f32 0.0, %v4076
  %4078 = vmatmul.bf16.gmra.mxu0 %v3913
  %v4079 = vpop.f32.mrf.mxu0
  %v4080 = vadd.f32 0.0, %v4079
  %v4081 = vpop.f32.mrf.mxu0
  %v4082 = vadd.f32 0.0, %v4081
  %4083 = vdwg.mxu0
  %4084 = vmatpush.bf16.msra.mxu0 %v4018
  %4085 = vmatpush.bf16.msra.mxu0 %v4017
  %4086 = vmatpush.bf16.msra.mxu0 %v4016
  %4087 = vmatpush.bf16.msra.mxu0 %v4015
  %4088 = vmatpush.bf16.msra.mxu0 %v4014
  %4089 = vmatpush.bf16.msra.mxu0 %v4013
  %4090 = vmatpush.bf16.msra.mxu0 %v4012
  %4091 = vmatpush.bf16.msra.mxu0 %v4011
  %4092 = vmatmul.bf16.gmra.mxu0 %v3856
  %v4093 = vpop.f32.mrf.mxu0
  %v4094 = vadd.f32 %v4045, %v4093
  %v4095 = vpop.f32.mrf.mxu0
  %v4096 = vadd.f32 %v4047, %v4095
  %4097 = vmatmul.bf16.gmra.mxu0 %v3864
  %v4098 = vpop.f32.mrf.mxu0
  %v4099 = vadd.f32 %v4050, %v4098
  %v4100 = vpop.f32.mrf.mxu0
  %v4101 = vadd.f32 %v4052, %v4100
  %4102 = vmatmul.bf16.gmra.mxu0 %v3872
  %v4103 = vpop.f32.mrf.mxu0
  %v4104 = vadd.f32 %v4055, %v4103
  %v4105 = vpop.f32.mrf.mxu0
  %v4106 = vadd.f32 %v4057, %v4105
  %4107 = vmatmul.bf16.gmra.mxu0 %v3880
  %v4108 = vpop.f32.mrf.mxu0
  %v4109 = vadd.f32 %v4060, %v4108
  %v4110 = vpop.f32.mrf.mxu0
  %v4111 = vadd.f32 %v4062, %v4110
  %4112 = vmatmul.bf16.gmra.mxu0 %v3888
  %v4113 = vpop.f32.mrf.mxu0
  %v4114 = vadd.f32 %v4065, %v4113
  %v4115 = vpop.f32.mrf.mxu0
  %v4116 = vadd.f32 %v4067, %v4115
  %4117 = vmatmul.bf16.gmra.mxu0 %v3896
  %v4118 = vpop.f32.mrf.mxu0
  %v4119 = vadd.f32 %v4070, %v4118
  %v4120 = vpop.f32.mrf.mxu0
  %v4121 = vadd.f32 %v4072, %v4120
  %4122 = vmatmul.bf16.gmra.mxu0 %v3904
  %v4123 = vpop.f32.mrf.mxu0
  %v4124 = vadd.f32 %v4075, %v4123
  %v4125 = vpop.f32.mrf.mxu0
  %v4126 = vadd.f32 %v4077, %v4125
  %4127 = vmatmul.bf16.gmra.mxu0 %v3922
  %v4128 = vpop.f32.mrf.mxu0
  %v4129 = vadd.f32 %v4080, %v4128
  %v4130 = vpop.f32.mrf.mxu0
  %v4131 = vadd.f32 %v4082, %v4130
  %4132 = vdwg.mxu0
  %v4133 = vadd.f32 %v3776, %v4094
  %v4134 = vadd.f32 %v3777, %v4096
  %v4135 = vadd.f32 %v3778, %v4099
  %v4136 = vadd.f32 %v3779, %v4101
  %v4137 = vadd.f32 %v3780, %v4104
  %v4138 = vadd.f32 %v3781, %v4106
  %v4139 = vadd.f32 %v3782, %v4109
  %v4140 = vadd.f32 %v3783, %v4111
  %v4141 = vadd.f32 %v3784, %v4114
  %v4142 = vadd.f32 %v3785, %v4116
  %v4143 = vadd.f32 %v3786, %v4119
  %v4144 = vadd.f32 %v3787, %v4121
  %v4145 = vadd.f32 %v3788, %v4124
  %v4146 = vadd.f32 %v3789, %v4126
  %v4147 = vadd.f32 %v3790, %v4129
  %v4148 = vadd.f32 %v3791, %v4131
  %v4149 = vld [vmem:[#allocation3] sm:$0xff]
  %v4150 = vld [vmem:[#allocation3 + $0x8] sm:$0xff]
  %v4151 = vld [vmem:[#allocation3 + $0x10] sm:$0xff]
  %v4152 = vld [vmem:[#allocation3 + $0x18] sm:$0xff]
  %v4153 = vld [vmem:[#allocation3 + $0x20] sm:$0xff]
  %v4154 = vld [vmem:[#allocation3 + $0x28] sm:$0xff]
  %v4155 = vld [vmem:[#allocation3 + $0x30] sm:$0xff]
  %v4156 = vld [vmem:[#allocation3 + $0x38] sm:$0xff]
  %v4157 = vld [vmem:[#allocation3 + $0x40] sm:$0xff]
  %v4158 = vld [vmem:[#allocation3 + $0x48] sm:$0xff]
  %v4159 = vld [vmem:[#allocation3 + $0x50] sm:$0xff]
  %v4160 = vld [vmem:[#allocation3 + $0x58] sm:$0xff]
  %v4161 = vld [vmem:[#allocation3 + $0x60] sm:$0xff]
  %v4162 = vld [vmem:[#allocation3 + $0x68] sm:$0xff]
  %v4163 = vld [vmem:[#allocation3 + $0x70] sm:$0xff]
  %v4164 = vld [vmem:[#allocation3 + $0x78] sm:$0xff]
  %v4165 = vld [vmem:[#allocation3 + $0x80] sm:$0xff]
  %v4166 = vld [vmem:[#allocation3 + $0x88] sm:$0xff]
  %v4167 = vld [vmem:[#allocation3 + $0x90] sm:$0xff]
  %v4168 = vld [vmem:[#allocation3 + $0x98] sm:$0xff]
  %v4169 = vld [vmem:[#allocation3 + $0xa0] sm:$0xff]
  %v4170 = vld [vmem:[#allocation3 + $0xa8] sm:$0xff]
  %v4171 = vld [vmem:[#allocation3 + $0xb0] sm:$0xff]
  %v4172 = vld [vmem:[#allocation3 + $0xb8] sm:$0xff]
  %v4173 = vld [vmem:[#allocation3 + $0xc0] sm:$0xff]
  %v4174 = vld [vmem:[#allocation3 + $0xc8] sm:$0xff]
  %v4175 = vld [vmem:[#allocation3 + $0xd0] sm:$0xff]
  %v4176 = vld [vmem:[#allocation3 + $0xd8] sm:$0xff]
  %v4177 = vld [vmem:[#allocation3 + $0xe0] sm:$0xff]
  %v4178 = vld [vmem:[#allocation3 + $0xe8] sm:$0xff]
  %v4179 = vld [vmem:[#allocation3 + $0xf0] sm:$0xff]
  %v4180 = vld [vmem:[#allocation3 + $0xf8] sm:$0xff]
  %v4181 = vpack.c.bf16 %v4151, %v4149
  %v4182 = vpack.c.bf16 %v4152, %v4150
  %v4183 = vpack.c.bf16 %v4155, %v4153
  %v4184 = vpack.c.bf16 %v4156, %v4154
  %v4185 = vpack.c.bf16 %v4159, %v4157
  %v4186 = vpack.c.bf16 %v4160, %v4158
  %v4187 = vpack.c.bf16 %v4163, %v4161
  %v4188 = vpack.c.bf16 %v4164, %v4162
  %v4189 = vpack.c.bf16 %v4167, %v4165
  %v4190 = vpack.c.bf16 %v4168, %v4166
  %v4191 = vpack.c.bf16 %v4171, %v4169
  %v4192 = vpack.c.bf16 %v4172, %v4170
  %v4193 = vpack.c.bf16 %v4175, %v4173
  %v4194 = vpack.c.bf16 %v4176, %v4174
  %v4195 = vpack.c.bf16 %v4179, %v4177
  %v4196 = vpack.c.bf16 %v4180, %v4178
  %s4197 = scalar_lea.vmem %s5, 512
  %v4198 = vld [vmem:[%s4197] sm:$0xf]
  %v4199 = vld [vmem:[%s4197 + $0x4] sm:$0xf]
  %v4200 = vld [vmem:[%s4197 + $0x8] sm:$0xf]
  %v4201 = vld [vmem:[%s4197 + $0xc] sm:$0xf]
  %v4202 = vld [vmem:[%s4197 + $0x10] sm:$0xf]
  %v4203 = vld [vmem:[%s4197 + $0x14] sm:$0xf]
  %v4204 = vld [vmem:[%s4197 + $0x18] sm:$0xf]
  %v4205 = vld [vmem:[%s4197 + $0x1c] sm:$0xf]
  %v4206 = vld [vmem:[%s4197 + $0x20] sm:$0xf]
  %v4207 = vld [vmem:[%s4197 + $0x24] sm:$0xf]
  %v4208 = vld [vmem:[%s4197 + $0x28] sm:$0xf]
  %v4209 = vld [vmem:[%s4197 + $0x2c] sm:$0xf]
  %v4210 = vld [vmem:[%s4197 + $0x30] sm:$0xf]
  %v4211 = vld [vmem:[%s4197 + $0x34] sm:$0xf]
  %v4212 = vld [vmem:[%s4197 + $0x38] sm:$0xf]
  %v4213 = vld [vmem:[%s4197 + $0x3c] sm:$0xf]
  %v4214 = vld [vmem:[%s4197 + $0x40] sm:$0xf]
  %v4215 = vld [vmem:[%s4197 + $0x44] sm:$0xf]
  %v4216 = vld [vmem:[%s4197 + $0x48] sm:$0xf]
  %v4217 = vld [vmem:[%s4197 + $0x4c] sm:$0xf]
  %v4218 = vld [vmem:[%s4197 + $0x50] sm:$0xf]
  %v4219 = vld [vmem:[%s4197 + $0x54] sm:$0xf]
  %v4220 = vld [vmem:[%s4197 + $0x58] sm:$0xf]
  %v4221 = vld [vmem:[%s4197 + $0x5c] sm:$0xf]
  %v4222 = vld [vmem:[%s4197 + $0x60] sm:$0xf]
  %v4223 = vld [vmem:[%s4197 + $0x64] sm:$0xf]
  %v4224 = vld [vmem:[%s4197 + $0x68] sm:$0xf]
  %v4225 = vld [vmem:[%s4197 + $0x6c] sm:$0xf]
  %v4226 = vld [vmem:[%s4197 + $0x70] sm:$0xf]
  %v4227 = vld [vmem:[%s4197 + $0x74] sm:$0xf]
  %v4228 = vld [vmem:[%s4197 + $0x78] sm:$0xf]
  %v4229 = vld [vmem:[%s4197 + $0x7c] sm:$0xf]
  %v4262 = vunpack.c.l.b16 %v4198
  %v4263 = vunpack.c.l.b16 %v4199
  %v4264 = vunpack.c.l.b16 %v4200
  %v4265 = vunpack.c.l.b16 %v4201
  %v4266 = vunpack.c.l.b16 %v4202
  %v4267 = vunpack.c.l.b16 %v4203
  %v4268 = vunpack.c.l.b16 %v4204
  %v4269 = vunpack.c.l.b16 %v4205
  %v4270 = vunpack.c.l.b16 %v4206
  %v4271 = vunpack.c.l.b16 %v4207
  %v4272 = vunpack.c.l.b16 %v4208
  %v4273 = vunpack.c.l.b16 %v4209
  %v4274 = vunpack.c.l.b16 %v4210
  %v4275 = vunpack.c.l.b16 %v4211
  %v4276 = vunpack.c.l.b16 %v4212
  %v4277 = vunpack.c.l.b16 %v4213
  %v4278 = vunpack.c.l.b16 %v4214
  %v4279 = vunpack.c.l.b16 %v4215
  %v4280 = vunpack.c.l.b16 %v4216
  %v4281 = vunpack.c.l.b16 %v4217
  %v4282 = vunpack.c.l.b16 %v4218
  %v4283 = vunpack.c.l.b16 %v4219
  %v4284 = vunpack.c.l.b16 %v4220
  %v4285 = vunpack.c.l.b16 %v4221
  %v4286 = vunpack.c.l.b16 %v4222
  %v4287 = vunpack.c.l.b16 %v4223
  %v4288 = vunpack.c.l.b16 %v4224
  %v4289 = vunpack.c.l.b16 %v4225
  %v4290 = vunpack.c.l.b16 %v4226
  %v4291 = vunpack.c.l.b16 %v4227
  %v4292 = vunpack.c.l.b16 %v4228
  %v4293 = vunpack.c.l.b16 %v4229
  %v4294 = vpack.c.b16 %v4263, %v4262
  %v4295 = vpack.c.b16 %v4265, %v4264
  %v4296 = vpack.c.b16 %v4267, %v4266
  %v4297 = vpack.c.b16 %v4269, %v4268
  %v4298 = vpack.c.b16 %v4271, %v4270
  %v4299 = vpack.c.b16 %v4273, %v4272
  %v4300 = vpack.c.b16 %v4275, %v4274
  %v4301 = vpack.c.b16 %v4277, %v4276
  %v4302 = vpack.c.b16 %v4279, %v4278
  %v4303 = vpack.c.b16 %v4281, %v4280
  %v4304 = vpack.c.b16 %v4283, %v4282
  %v4305 = vpack.c.b16 %v4285, %v4284
  %v4306 = vpack.c.b16 %v4287, %v4286
  %v4307 = vpack.c.b16 %v4289, %v4288
  %v4308 = vpack.c.b16 %v4291, %v4290
  %v4309 = vpack.c.b16 %v4293, %v4292
  %4326 = vmatpush.bf16.msra.mxu0 %v4301
  %4327 = vmatpush.bf16.msra.mxu0 %v4300
  %4328 = vmatpush.bf16.msra.mxu0 %v4299
  %4329 = vmatpush.bf16.msra.mxu0 %v4298
  %4330 = vmatpush.bf16.msra.mxu0 %v4297
  %4331 = vmatpush.bf16.msra.mxu0 %v4296
  %4332 = vmatpush.bf16.msra.mxu0 %v4295
  %4333 = vmatpush.bf16.msra.mxu0 %v4294
  %4334 = vmatmul.bf16.gmra.mxu0 %v4181
  %v4335 = vpop.f32.mrf.mxu0
  %v4336 = vadd.f32 0.0, %v4335
  %v4337 = vpop.f32.mrf.mxu0
  %v4338 = vadd.f32 0.0, %v4337
  %4339 = vmatmul.bf16.gmra.mxu0 %v4183
  %v4340 = vpop.f32.mrf.mxu0
  %v4341 = vadd.f32 0.0, %v4340
  %v4342 = vpop.f32.mrf.mxu0
  %v4343 = vadd.f32 0.0, %v4342
  %4344 = vmatmul.bf16.gmra.mxu0 %v4185
  %v4345 = vpop.f32.mrf.mxu0
  %v4346 = vadd.f32 0.0, %v4345
  %v4347 = vpop.f32.mrf.mxu0
  %v4348 = vadd.f32 0.0, %v4347
  %4349 = vmatmul.bf16.gmra.mxu0 %v4187
  %v4350 = vpop.f32.mrf.mxu0
  %v4351 = vadd.f32 0.0, %v4350
  %v4352 = vpop.f32.mrf.mxu0
  %v4353 = vadd.f32 0.0, %v4352
  %4354 = vmatmul.bf16.gmra.mxu0 %v4189
  %v4355 = vpop.f32.mrf.mxu0
  %v4356 = vadd.f32 0.0, %v4355
  %v4357 = vpop.f32.mrf.mxu0
  %v4358 = vadd.f32 0.0, %v4357
  %4359 = vmatmul.bf16.gmra.mxu0 %v4191
  %v4360 = vpop.f32.mrf.mxu0
  %v4361 = vadd.f32 0.0, %v4360
  %v4362 = vpop.f32.mrf.mxu0
  %v4363 = vadd.f32 0.0, %v4362
  %4364 = vmatmul.bf16.gmra.mxu0 %v4193
  %v4365 = vpop.f32.mrf.mxu0
  %v4366 = vadd.f32 0.0, %v4365
  %v4367 = vpop.f32.mrf.mxu0
  %v4368 = vadd.f32 0.0, %v4367
  %4369 = vmatmul.bf16.gmra.mxu0 %v4195
  %v4370 = vpop.f32.mrf.mxu0
  %v4371 = vadd.f32 0.0, %v4370
  %v4372 = vpop.f32.mrf.mxu0
  %v4373 = vadd.f32 0.0, %v4372
  %4374 = vdwg.mxu0
  %4375 = vmatpush.bf16.msra.mxu0 %v4309
  %4376 = vmatpush.bf16.msra.mxu0 %v4308
  %4377 = vmatpush.bf16.msra.mxu0 %v4307
  %4378 = vmatpush.bf16.msra.mxu0 %v4306
  %4379 = vmatpush.bf16.msra.mxu0 %v4305
  %4380 = vmatpush.bf16.msra.mxu0 %v4304
  %4381 = vmatpush.bf16.msra.mxu0 %v4303
  %4382 = vmatpush.bf16.msra.mxu0 %v4302
  %4383 = vmatmul.bf16.gmra.mxu0 %v4182
  %v4384 = vpop.f32.mrf.mxu0
  %v4385 = vadd.f32 %v4336, %v4384
  %v4386 = vpop.f32.mrf.mxu0
  %v4387 = vadd.f32 %v4338, %v4386
  %4388 = vmatmul.bf16.gmra.mxu0 %v4184
  %v4389 = vpop.f32.mrf.mxu0
  %v4390 = vadd.f32 %v4341, %v4389
  %v4391 = vpop.f32.mrf.mxu0
  %v4392 = vadd.f32 %v4343, %v4391
  %4393 = vmatmul.bf16.gmra.mxu0 %v4186
  %v4394 = vpop.f32.mrf.mxu0
  %v4395 = vadd.f32 %v4346, %v4394
  %v4396 = vpop.f32.mrf.mxu0
  %v4397 = vadd.f32 %v4348, %v4396
  %4398 = vmatmul.bf16.gmra.mxu0 %v4188
  %v4399 = vpop.f32.mrf.mxu0
  %v4400 = vadd.f32 %v4351, %v4399
  %v4401 = vpop.f32.mrf.mxu0
  %v4402 = vadd.f32 %v4353, %v4401
  %4403 = vmatmul.bf16.gmra.mxu0 %v4190
  %v4404 = vpop.f32.mrf.mxu0
  %v4405 = vadd.f32 %v4356, %v4404
  %v4406 = vpop.f32.mrf.mxu0
  %v4407 = vadd.f32 %v4358, %v4406
  %4408 = vmatmul.bf16.gmra.mxu0 %v4192
  %v4409 = vpop.f32.mrf.mxu0
  %v4410 = vadd.f32 %v4361, %v4409
  %v4411 = vpop.f32.mrf.mxu0
  %v4412 = vadd.f32 %v4363, %v4411
  %4413 = vmatmul.bf16.gmra.mxu0 %v4194
  %v4414 = vpop.f32.mrf.mxu0
  %v4415 = vadd.f32 %v4366, %v4414
  %v4416 = vpop.f32.mrf.mxu0
  %v4417 = vadd.f32 %v4368, %v4416
  %4418 = vmatmul.bf16.gmra.mxu0 %v4196
  %v4419 = vpop.f32.mrf.mxu0
  %v4420 = vadd.f32 %v4371, %v4419
  %v4421 = vpop.f32.mrf.mxu0
  %v4422 = vadd.f32 %v4373, %v4421
  %4423 = vdwg.mxu0
  %v4424 = vadd.f32 %v4133, %v4385
  %v4425 = vadd.f32 %v4134, %v4387
  %v4426 = vadd.f32 %v4135, %v4390
  %v4427 = vadd.f32 %v4136, %v4392
  %v4428 = vadd.f32 %v4137, %v4395
  %v4429 = vadd.f32 %v4138, %v4397
  %v4430 = vadd.f32 %v4139, %v4400
  %v4431 = vadd.f32 %v4140, %v4402
  %v4432 = vadd.f32 %v4141, %v4405
  %v4433 = vadd.f32 %v4142, %v4407
  %v4434 = vadd.f32 %v4143, %v4410
  %v4435 = vadd.f32 %v4144, %v4412
  %v4436 = vadd.f32 %v4145, %v4415
  %v4437 = vadd.f32 %v4146, %v4417
  %v4438 = vadd.f32 %v4147, %v4420
  %v4439 = vadd.f32 %v4148, %v4422
  %v4440 = vld [vmem:[#allocation3] sm:$0xfe]
  %v4441 = vld [vmem:[#allocation3 + $0x8] sm:$0xfe]
  %v4442 = vld [vmem:[#allocation3 + $0x10] sm:$0xff]
  %v4443 = vld [vmem:[#allocation3 + $0x18] sm:$0xff]
  %v4444 = vld [vmem:[#allocation3 + $0x20] sm:$0xff]
  %v4445 = vld [vmem:[#allocation3 + $0x28] sm:$0xff]
  %v4446 = vld [vmem:[#allocation3 + $0x30] sm:$0xff]
  %v4447 = vld [vmem:[#allocation3 + $0x38] sm:$0xff]
  %v4448 = vld [vmem:[#allocation3 + $0x40] sm:$0xff]
  %v4449 = vld [vmem:[#allocation3 + $0x48] sm:$0xff]
  %v4450 = vld [vmem:[#allocation3 + $0x50] sm:$0xff]
  %v4451 = vld [vmem:[#allocation3 + $0x58] sm:$0xff]
  %v4452 = vld [vmem:[#allocation3 + $0x60] sm:$0xff]
  %v4453 = vld [vmem:[#allocation3 + $0x68] sm:$0xff]
  %v4454 = vld [vmem:[#allocation3 + $0x70] sm:$0xff]
  %v4455 = vld [vmem:[#allocation3 + $0x78] sm:$0xff]
  %v4456 = vld [vmem:[#allocation3 + $0x80] sm:$0xff]
  %v4457 = vld [vmem:[#allocation3 + $0x88] sm:$0xff]
  %v4458 = vld [vmem:[#allocation3 + $0x90] sm:$0xff]
  %v4459 = vld [vmem:[#allocation3 + $0x98] sm:$0xff]
  %v4460 = vld [vmem:[#allocation3 + $0xa0] sm:$0xff]
  %v4461 = vld [vmem:[#allocation3 + $0xa8] sm:$0xff]
  %v4462 = vld [vmem:[#allocation3 + $0xb0] sm:$0xff]
  %v4463 = vld [vmem:[#allocation3 + $0xb8] sm:$0xff]
  %v4464 = vld [vmem:[#allocation3 + $0xc0] sm:$0xff]
  %v4465 = vld [vmem:[#allocation3 + $0xc8] sm:$0xff]
  %v4466 = vld [vmem:[#allocation3 + $0xd0] sm:$0xff]
  %v4467 = vld [vmem:[#allocation3 + $0xd8] sm:$0xff]
  %v4468 = vld [vmem:[#allocation3 + $0xe0] sm:$0xff]
  %v4469 = vld [vmem:[#allocation3 + $0xe8] sm:$0xff]
  %v4470 = vld [vmem:[#allocation3 + $0xf0] sm:$0xff]
  %v4471 = vld [vmem:[#allocation3 + $0xf8] sm:$0xff]
  %v4472 = vld [vmem:[#allocation3 + $0x100] sm:$0x1]
  %v4473 = vld [vmem:[#allocation3 + $0x108] sm:$0x1]
  %v4474 = vpack.c.bf16 %v4442, %v4440
  %v4475 = vpack.c.bf16 %v4443, %v4441
  %v4476 = vpack.c.bf16 %v4446, %v4444
  %v4477 = vpack.c.bf16 %v4447, %v4445
  %v4478 = vpack.c.bf16 %v4450, %v4448
  %v4479 = vpack.c.bf16 %v4451, %v4449
  %v4480 = vpack.c.bf16 %v4454, %v4452
  %v4481 = vpack.c.bf16 %v4455, %v4453
  %v4482 = vpack.c.bf16 %v4458, %v4456
  %v4483 = vpack.c.bf16 %v4459, %v4457
  %v4484 = vpack.c.bf16 %v4462, %v4460
  %v4485 = vpack.c.bf16 %v4463, %v4461
  %v4486 = vpack.c.bf16 %v4466, %v4464
  %v4487 = vpack.c.bf16 %v4467, %v4465
  %v4488 = vpack.c.bf16 %v4470, %v4468
  %v4489 = vpack.c.bf16 %v4471, %v4469
  %v4490 = vpack.c.bf16 %v4472, %v4472
  %v4491 = vpack.c.bf16 %v4473, %v4473
  %s4492 = scalar_lea.vmem %s5, 640
  %v4493 = vld [vmem:[%s4492] sm:$0xf]
  %v4494 = vld [vmem:[%s4492 + $0x4] sm:$0xf]
  %v4495 = vld [vmem:[%s4492 + $0x8] sm:$0xf]
  %v4496 = vld [vmem:[%s4492 + $0xc] sm:$0xf]
  %v4497 = vld [vmem:[%s4492 + $0x10] sm:$0xf]
  %v4498 = vld [vmem:[%s4492 + $0x14] sm:$0xf]
  %v4499 = vld [vmem:[%s4492 + $0x18] sm:$0xf]
  %v4500 = vld [vmem:[%s4492 + $0x1c] sm:$0xf]
  %v4501 = vld [vmem:[%s4492 + $0x20] sm:$0xf]
  %v4502 = vld [vmem:[%s4492 + $0x24] sm:$0xf]
  %v4503 = vld [vmem:[%s4492 + $0x28] sm:$0xf]
  %v4504 = vld [vmem:[%s4492 + $0x2c] sm:$0xf]
  %v4505 = vld [vmem:[%s4492 + $0x30] sm:$0xf]
  %v4506 = vld [vmem:[%s4492 + $0x34] sm:$0xf]
  %v4507 = vld [vmem:[%s4492 + $0x38] sm:$0xf]
  %v4508 = vld [vmem:[%s4492 + $0x3c] sm:$0xf]
  %v4509 = vld [vmem:[%s4492 + $0x40] sm:$0xf]
  %v4510 = vld [vmem:[%s4492 + $0x44] sm:$0xf]
  %v4511 = vld [vmem:[%s4492 + $0x48] sm:$0xf]
  %v4512 = vld [vmem:[%s4492 + $0x4c] sm:$0xf]
  %v4513 = vld [vmem:[%s4492 + $0x50] sm:$0xf]
  %v4514 = vld [vmem:[%s4492 + $0x54] sm:$0xf]
  %v4515 = vld [vmem:[%s4492 + $0x58] sm:$0xf]
  %v4516 = vld [vmem:[%s4492 + $0x5c] sm:$0xf]
  %v4517 = vld [vmem:[%s4492 + $0x60] sm:$0xf]
  %v4518 = vld [vmem:[%s4492 + $0x64] sm:$0xf]
  %v4519 = vld [vmem:[%s4492 + $0x68] sm:$0xf]
  %v4520 = vld [vmem:[%s4492 + $0x6c] sm:$0xf]
  %v4521 = vld [vmem:[%s4492 + $0x70] sm:$0xf]
  %v4522 = vld [vmem:[%s4492 + $0x74] sm:$0xf]
  %v4523 = vld [vmem:[%s4492 + $0x78] sm:$0xf]
  %v4524 = vld [vmem:[%s4492 + $0x7c] sm:$0xf]
  %v4526 = vshrl.u32 %v4474, 16
  %v4528 = vshll.u32 %v4474, 16
  %v4530 = vrot.slane %v4528, 1
  %v4531 = vor.u32 %v4526, %v4530
  %v4533 = vshll.u32 %v4476, 16
  %v4535 = vrot.slane %v4533, 1
  %v4536 = vsel %vm3429, %v4531, %v4535
  %v4538 = vshrl.u32 %v4475, 16
  %v4540 = vshll.u32 %v4475, 16
  %v4542 = vrot.slane %v4540, 1
  %v4543 = vor.u32 %v4538, %v4542
  %v4545 = vshll.u32 %v4477, 16
  %v4547 = vrot.slane %v4545, 1
  %v4548 = vsel %vm3429, %v4543, %v4547
  %v4549 = vshrl.u32 %v4476, 16
  %v4551 = vor.u32 %v4549, %v4535
  %v4553 = vshll.u32 %v4478, 16
  %v4555 = vrot.slane %v4553, 1
  %v4556 = vsel %vm3429, %v4551, %v4555
  %v4557 = vshrl.u32 %v4477, 16
  %v4559 = vor.u32 %v4557, %v4547
  %v4561 = vshll.u32 %v4479, 16
  %v4563 = vrot.slane %v4561, 1
  %v4564 = vsel %vm3429, %v4559, %v4563
  %v4565 = vshrl.u32 %v4478, 16
  %v4567 = vor.u32 %v4565, %v4555
  %v4569 = vshll.u32 %v4480, 16
  %v4571 = vrot.slane %v4569, 1
  %v4572 = vsel %vm3429, %v4567, %v4571
  %v4573 = vshrl.u32 %v4479, 16
  %v4575 = vor.u32 %v4573, %v4563
  %v4577 = vshll.u32 %v4481, 16
  %v4579 = vrot.slane %v4577, 1
  %v4580 = vsel %vm3429, %v4575, %v4579
  %v4581 = vshrl.u32 %v4480, 16
  %v4583 = vor.u32 %v4581, %v4571
  %v4585 = vshll.u32 %v4482, 16
  %v4587 = vrot.slane %v4585, 1
  %v4588 = vsel %vm3429, %v4583, %v4587
  %v4589 = vshrl.u32 %v4481, 16
  %v4591 = vor.u32 %v4589, %v4579
  %v4593 = vshll.u32 %v4483, 16
  %v4595 = vrot.slane %v4593, 1
  %v4596 = vsel %vm3429, %v4591, %v4595
  %v4597 = vshrl.u32 %v4482, 16
  %v4599 = vor.u32 %v4597, %v4587
  %v4601 = vshll.u32 %v4484, 16
  %v4603 = vrot.slane %v4601, 1
  %v4604 = vsel %vm3429, %v4599, %v4603
  %v4605 = vshrl.u32 %v4483, 16
  %v4607 = vor.u32 %v4605, %v4595
  %v4609 = vshll.u32 %v4485, 16
  %v4611 = vrot.slane %v4609, 1
  %v4612 = vsel %vm3429, %v4607, %v4611
  %v4613 = vshrl.u32 %v4484, 16
  %v4615 = vor.u32 %v4613, %v4603
  %v4617 = vshll.u32 %v4486, 16
  %v4619 = vrot.slane %v4617, 1
  %v4620 = vsel %vm3429, %v4615, %v4619
  %v4621 = vshrl.u32 %v4485, 16
  %v4623 = vor.u32 %v4621, %v4611
  %v4625 = vshll.u32 %v4487, 16
  %v4627 = vrot.slane %v4625, 1
  %v4628 = vsel %vm3429, %v4623, %v4627
  %v4629 = vshrl.u32 %v4486, 16
  %v4631 = vor.u32 %v4629, %v4619
  %v4633 = vshll.u32 %v4488, 16
  %v4635 = vrot.slane %v4633, 1
  %v4636 = vsel %vm3429, %v4631, %v4635
  %v4637 = vshrl.u32 %v4487, 16
  %v4639 = vor.u32 %v4637, %v4627
  %v4641 = vshll.u32 %v4489, 16
  %v4643 = vrot.slane %v4641, 1
  %v4644 = vsel %vm3429, %v4639, %v4643
  %v4645 = vshrl.u32 %v4488, 16
  %v4647 = vor.u32 %v4645, %v4635
  %v4649 = vshll.u32 %v4490, 16
  %v4651 = vrot.slane %v4649, 1
  %v4652 = vsel %vm3429, %v4647, %v4651
  %v4653 = vshrl.u32 %v4489, 16
  %v4655 = vor.u32 %v4653, %v4643
  %v4657 = vshll.u32 %v4491, 16
  %v4659 = vrot.slane %v4657, 1
  %v4660 = vsel %vm3429, %v4655, %v4659
  %v4709 = vunpack.c.l.b16 %v4493
  %v4710 = vunpack.c.l.b16 %v4494
  %v4711 = vunpack.c.l.b16 %v4495
  %v4712 = vunpack.c.l.b16 %v4496
  %v4713 = vunpack.c.l.b16 %v4497
  %v4714 = vunpack.c.l.b16 %v4498
  %v4715 = vunpack.c.l.b16 %v4499
  %v4716 = vunpack.c.l.b16 %v4500
  %v4717 = vunpack.c.l.b16 %v4501
  %v4718 = vunpack.c.l.b16 %v4502
  %v4719 = vunpack.c.l.b16 %v4503
  %v4720 = vunpack.c.l.b16 %v4504
  %v4721 = vunpack.c.l.b16 %v4505
  %v4722 = vunpack.c.l.b16 %v4506
  %v4723 = vunpack.c.l.b16 %v4507
  %v4724 = vunpack.c.l.b16 %v4508
  %v4725 = vunpack.c.l.b16 %v4509
  %v4726 = vunpack.c.l.b16 %v4510
  %v4727 = vunpack.c.l.b16 %v4511
  %v4728 = vunpack.c.l.b16 %v4512
  %v4729 = vunpack.c.l.b16 %v4513
  %v4730 = vunpack.c.l.b16 %v4514
  %v4731 = vunpack.c.l.b16 %v4515
  %v4732 = vunpack.c.l.b16 %v4516
  %v4733 = vunpack.c.l.b16 %v4517
  %v4734 = vunpack.c.l.b16 %v4518
  %v4735 = vunpack.c.l.b16 %v4519
  %v4736 = vunpack.c.l.b16 %v4520
  %v4737 = vunpack.c.l.b16 %v4521
  %v4738 = vunpack.c.l.b16 %v4522
  %v4739 = vunpack.c.l.b16 %v4523
  %v4740 = vunpack.c.l.b16 %v4524
  %v4741 = vpack.c.b16 %v4710, %v4709
  %v4742 = vpack.c.b16 %v4712, %v4711
  %v4743 = vpack.c.b16 %v4714, %v4713
  %v4744 = vpack.c.b16 %v4716, %v4715
  %v4745 = vpack.c.b16 %v4718, %v4717
  %v4746 = vpack.c.b16 %v4720, %v4719
  %v4747 = vpack.c.b16 %v4722, %v4721
  %v4748 = vpack.c.b16 %v4724, %v4723
  %v4749 = vpack.c.b16 %v4726, %v4725
  %v4750 = vpack.c.b16 %v4728, %v4727
  %v4751 = vpack.c.b16 %v4730, %v4729
  %v4752 = vpack.c.b16 %v4732, %v4731
  %v4753 = vpack.c.b16 %v4734, %v4733
  %v4754 = vpack.c.b16 %v4736, %v4735
  %v4755 = vpack.c.b16 %v4738, %v4737
  %v4756 = vpack.c.b16 %v4740, %v4739
  %4773 = vmatpush.bf16.msra.mxu0 %v4748
  %4774 = vmatpush.bf16.msra.mxu0 %v4747
  %4775 = vmatpush.bf16.msra.mxu0 %v4746
  %4776 = vmatpush.bf16.msra.mxu0 %v4745
  %4777 = vmatpush.bf16.msra.mxu0 %v4744
  %4778 = vmatpush.bf16.msra.mxu0 %v4743
  %4779 = vmatpush.bf16.msra.mxu0 %v4742
  %4780 = vmatpush.bf16.msra.mxu0 %v4741
  %4781 = vmatmul.bf16.gmra.mxu0 %v4536
  %v4782 = vpop.f32.mrf.mxu0
  %v4783 = vadd.f32 0.0, %v4782
  %v4784 = vpop.f32.mrf.mxu0
  %v4785 = vadd.f32 0.0, %v4784
  %4786 = vmatmul.bf16.gmra.mxu0 %v4556
  %v4787 = vpop.f32.mrf.mxu0
  %v4788 = vadd.f32 0.0, %v4787
  %v4789 = vpop.f32.mrf.mxu0
  %v4790 = vadd.f32 0.0, %v4789
  %4791 = vmatmul.bf16.gmra.mxu0 %v4572
  %v4792 = vpop.f32.mrf.mxu0
  %v4793 = vadd.f32 0.0, %v4792
  %v4794 = vpop.f32.mrf.mxu0
  %v4795 = vadd.f32 0.0, %v4794
  %4796 = vmatmul.bf16.gmra.mxu0 %v4588
  %v4797 = vpop.f32.mrf.mxu0
  %v4798 = vadd.f32 0.0, %v4797
  %v4799 = vpop.f32.mrf.mxu0
  %v4800 = vadd.f32 0.0, %v4799
  %4801 = vmatmul.bf16.gmra.mxu0 %v4604
  %v4802 = vpop.f32.mrf.mxu0
  %v4803 = vadd.f32 0.0, %v4802
  %v4804 = vpop.f32.mrf.mxu0
  %v4805 = vadd.f32 0.0, %v4804
  %4806 = vmatmul.bf16.gmra.mxu0 %v4620
  %v4807 = vpop.f32.mrf.mxu0
  %v4808 = vadd.f32 0.0, %v4807
  %v4809 = vpop.f32.mrf.mxu0
  %v4810 = vadd.f32 0.0, %v4809
  %4811 = vmatmul.bf16.gmra.mxu0 %v4636
  %v4812 = vpop.f32.mrf.mxu0
  %v4813 = vadd.f32 0.0, %v4812
  %v4814 = vpop.f32.mrf.mxu0
  %v4815 = vadd.f32 0.0, %v4814
  %4816 = vmatmul.bf16.gmra.mxu0 %v4652
  %v4817 = vpop.f32.mrf.mxu0
  %v4818 = vadd.f32 0.0, %v4817
  %v4819 = vpop.f32.mrf.mxu0
  %v4820 = vadd.f32 0.0, %v4819
  %4821 = vdwg.mxu0
  %4822 = vmatpush.bf16.msra.mxu0 %v4756
  %4823 = vmatpush.bf16.msra.mxu0 %v4755
  %4824 = vmatpush.bf16.msra.mxu0 %v4754
  %4825 = vmatpush.bf16.msra.mxu0 %v4753
  %4826 = vmatpush.bf16.msra.mxu0 %v4752
  %4827 = vmatpush.bf16.msra.mxu0 %v4751
  %4828 = vmatpush.bf16.msra.mxu0 %v4750
  %4829 = vmatpush.bf16.msra.mxu0 %v4749
  %4830 = vmatmul.bf16.gmra.mxu0 %v4548
  %v4831 = vpop.f32.mrf.mxu0
  %v4832 = vadd.f32 %v4783, %v4831
  %v4833 = vpop.f32.mrf.mxu0
  %v4834 = vadd.f32 %v4785, %v4833
  %4835 = vmatmul.bf16.gmra.mxu0 %v4564
  %v4836 = vpop.f32.mrf.mxu0
  %v4837 = vadd.f32 %v4788, %v4836
  %v4838 = vpop.f32.mrf.mxu0
  %v4839 = vadd.f32 %v4790, %v4838
  %4840 = vmatmul.bf16.gmra.mxu0 %v4580
  %v4841 = vpop.f32.mrf.mxu0
  %v4842 = vadd.f32 %v4793, %v4841
  %v4843 = vpop.f32.mrf.mxu0
  %v4844 = vadd.f32 %v4795, %v4843
  %4845 = vmatmul.bf16.gmra.mxu0 %v4596
  %v4846 = vpop.f32.mrf.mxu0
  %v4847 = vadd.f32 %v4798, %v4846
  %v4848 = vpop.f32.mrf.mxu0
  %v4849 = vadd.f32 %v4800, %v4848
  %4850 = vmatmul.bf16.gmra.mxu0 %v4612
  %v4851 = vpop.f32.mrf.mxu0
  %v4852 = vadd.f32 %v4803, %v4851
  %v4853 = vpop.f32.mrf.mxu0
  %v4854 = vadd.f32 %v4805, %v4853
  %4855 = vmatmul.bf16.gmra.mxu0 %v4628
  %v4856 = vpop.f32.mrf.mxu0
  %v4857 = vadd.f32 %v4808, %v4856
  %v4858 = vpop.f32.mrf.mxu0
  %v4859 = vadd.f32 %v4810, %v4858
  %4860 = vmatmul.bf16.gmra.mxu0 %v4644
  %v4861 = vpop.f32.mrf.mxu0
  %v4862 = vadd.f32 %v4813, %v4861
  %v4863 = vpop.f32.mrf.mxu0
  %v4864 = vadd.f32 %v4815, %v4863
  %4865 = vmatmul.bf16.gmra.mxu0 %v4660
  %v4866 = vpop.f32.mrf.mxu0
  %v4867 = vadd.f32 %v4818, %v4866
  %v4868 = vpop.f32.mrf.mxu0
  %v4869 = vadd.f32 %v4820, %v4868
  %4870 = vdwg.mxu0
  %v4871 = vadd.f32 %v4424, %v4832
  %v4872 = vadd.f32 %v4425, %v4834
  %v4873 = vadd.f32 %v4426, %v4837
  %v4874 = vadd.f32 %v4427, %v4839
  %v4875 = vadd.f32 %v4428, %v4842
  %v4876 = vadd.f32 %v4429, %v4844
  %v4877 = vadd.f32 %v4430, %v4847
  %v4878 = vadd.f32 %v4431, %v4849
  %v4879 = vadd.f32 %v4432, %v4852
  %v4880 = vadd.f32 %v4433, %v4854
  %v4881 = vadd.f32 %v4434, %v4857
  %v4882 = vadd.f32 %v4435, %v4859
  %v4883 = vadd.f32 %v4436, %v4862
  %v4884 = vadd.f32 %v4437, %v4864
  %v4885 = vadd.f32 %v4438, %v4867
  %v4886 = vadd.f32 %v4439, %v4869
  %v4887 = vld [vmem:[#allocation3] sm:$0x80]
  %v4888 = vld [vmem:[#allocation3 + $0x8] sm:$0x80]
  %v4889 = vld [vmem:[#allocation3 + $0x100] sm:$0x7f]
  %v4890 = vld [vmem:[#allocation3 + $0x108] sm:$0x7f]
  %v4891 = vpack.c.bf16 %v4442, %v4887
  %v4892 = vpack.c.bf16 %v4443, %v4888
  %v4893 = vpack.c.bf16 %v4889, %v4889
  %v4894 = vpack.c.bf16 %v4890, %v4890
  %s4895 = scalar_lea.vmem %s5, 768
  %v4896 = vld [vmem:[%s4895] sm:$0xf]
  %v4897 = vld [vmem:[%s4895 + $0x4] sm:$0xf]
  %v4898 = vld [vmem:[%s4895 + $0x8] sm:$0xf]
  %v4899 = vld [vmem:[%s4895 + $0xc] sm:$0xf]
  %v4900 = vld [vmem:[%s4895 + $0x10] sm:$0xf]
  %v4901 = vld [vmem:[%s4895 + $0x14] sm:$0xf]
  %v4902 = vld [vmem:[%s4895 + $0x18] sm:$0xf]
  %v4903 = vld [vmem:[%s4895 + $0x1c] sm:$0xf]
  %v4904 = vld [vmem:[%s4895 + $0x20] sm:$0xf]
  %v4905 = vld [vmem:[%s4895 + $0x24] sm:$0xf]
  %v4906 = vld [vmem:[%s4895 + $0x28] sm:$0xf]
  %v4907 = vld [vmem:[%s4895 + $0x2c] sm:$0xf]
  %v4908 = vld [vmem:[%s4895 + $0x30] sm:$0xf]
  %v4909 = vld [vmem:[%s4895 + $0x34] sm:$0xf]
  %v4910 = vld [vmem:[%s4895 + $0x38] sm:$0xf]
  %v4911 = vld [vmem:[%s4895 + $0x3c] sm:$0xf]
  %v4912 = vld [vmem:[%s4895 + $0x40] sm:$0xf]
  %v4913 = vld [vmem:[%s4895 + $0x44] sm:$0xf]
  %v4914 = vld [vmem:[%s4895 + $0x48] sm:$0xf]
  %v4915 = vld [vmem:[%s4895 + $0x4c] sm:$0xf]
  %v4916 = vld [vmem:[%s4895 + $0x50] sm:$0xf]
  %v4917 = vld [vmem:[%s4895 + $0x54] sm:$0xf]
  %v4918 = vld [vmem:[%s4895 + $0x58] sm:$0xf]
  %v4919 = vld [vmem:[%s4895 + $0x5c] sm:$0xf]
  %v4920 = vld [vmem:[%s4895 + $0x60] sm:$0xf]
  %v4921 = vld [vmem:[%s4895 + $0x64] sm:$0xf]
  %v4922 = vld [vmem:[%s4895 + $0x68] sm:$0xf]
  %v4923 = vld [vmem:[%s4895 + $0x6c] sm:$0xf]
  %v4924 = vld [vmem:[%s4895 + $0x70] sm:$0xf]
  %v4925 = vld [vmem:[%s4895 + $0x74] sm:$0xf]
  %v4926 = vld [vmem:[%s4895 + $0x78] sm:$0xf]
  %v4927 = vld [vmem:[%s4895 + $0x7c] sm:$0xf]
  %v4929 = vshrl.u32 %v4891, 16
  %v4931 = vrot.slane %v4929, 3
  %v4932 = vshll.u32 %v4891, 16
  %v4934 = vrot.slane %v4932, 4
  %v4935 = vor.u32 %v4931, %v4934
  %v4936 = vrot.slane %v4549, 3
  %v4937 = vrot.slane %v4533, 4
  %v4938 = vor.u32 %v4936, %v4937
  %v4939 = vsel %vm2973, %v4935, %v4938
  %v4941 = vshrl.u32 %v4892, 16
  %v4943 = vrot.slane %v4941, 3
  %v4944 = vshll.u32 %v4892, 16
  %v4946 = vrot.slane %v4944, 4
  %v4947 = vor.u32 %v4943, %v4946
  %v4948 = vrot.slane %v4557, 3
  %v4949 = vrot.slane %v4545, 4
  %v4950 = vor.u32 %v4948, %v4949
  %v4951 = vsel %vm2973, %v4947, %v4950
  %v4952 = vrot.slane %v4565, 3
  %v4953 = vrot.slane %v4553, 4
  %v4954 = vor.u32 %v4952, %v4953
  %v4955 = vsel %vm2973, %v4938, %v4954
  %v4956 = vrot.slane %v4573, 3
  %v4957 = vrot.slane %v4561, 4
  %v4958 = vor.u32 %v4956, %v4957
  %v4959 = vsel %vm2973, %v4950, %v4958
  %v4960 = vrot.slane %v4581, 3
  %v4961 = vrot.slane %v4569, 4
  %v4962 = vor.u32 %v4960, %v4961
  %v4963 = vsel %vm2973, %v4954, %v4962
  %v4964 = vrot.slane %v4589, 3
  %v4965 = vrot.slane %v4577, 4
  %v4966 = vor.u32 %v4964, %v4965
  %v4967 = vsel %vm2973, %v4958, %v4966
  %v4968 = vrot.slane %v4597, 3
  %v4969 = vrot.slane %v4585, 4
  %v4970 = vor.u32 %v4968, %v4969
  %v4971 = vsel %vm2973, %v4962, %v4970
  %v4972 = vrot.slane %v4605, 3
  %v4973 = vrot.slane %v4593, 4
  %v4974 = vor.u32 %v4972, %v4973
  %v4975 = vsel %vm2973, %v4966, %v4974
  %v4976 = vrot.slane %v4613, 3
  %v4977 = vrot.slane %v4601, 4
  %v4978 = vor.u32 %v4976, %v4977
  %v4979 = vsel %vm2973, %v4970, %v4978
  %v4980 = vrot.slane %v4621, 3
  %v4981 = vrot.slane %v4609, 4
  %v4982 = vor.u32 %v4980, %v4981
  %v4983 = vsel %vm2973, %v4974, %v4982
  %v4984 = vrot.slane %v4629, 3
  %v4985 = vrot.slane %v4617, 4
  %v4986 = vor.u32 %v4984, %v4985
  %v4987 = vsel %vm2973, %v4978, %v4986
  %v4988 = vrot.slane %v4637, 3
  %v4989 = vrot.slane %v4625, 4
  %v4990 = vor.u32 %v4988, %v4989
  %v4991 = vsel %vm2973, %v4982, %v4990
  %v4992 = vrot.slane %v4645, 3
  %v4993 = vrot.slane %v4633, 4
  %v4994 = vor.u32 %v4992, %v4993
  %v4995 = vsel %vm2973, %v4986, %v4994
  %v4996 = vrot.slane %v4653, 3
  %v4997 = vrot.slane %v4641, 4
  %v4998 = vor.u32 %v4996, %v4997
  %v4999 = vsel %vm2973, %v4990, %v4998
  %v5001 = vshrl.u32 %v4893, 16
  %v5003 = vrot.slane %v5001, 3
  %v5004 = vshll.u32 %v4893, 16
  %v5006 = vrot.slane %v5004, 4
  %v5007 = vor.u32 %v5003, %v5006
  %v5008 = vsel %vm2973, %v4994, %v5007
  %v5010 = vshrl.u32 %v4894, 16
  %v5012 = vrot.slane %v5010, 3
  %v5013 = vshll.u32 %v4894, 16
  %v5015 = vrot.slane %v5013, 4
  %v5016 = vor.u32 %v5012, %v5015
  %v5017 = vsel %vm2973, %v4998, %v5016
  %v5066 = vunpack.c.l.b16 %v4896
  %v5067 = vunpack.c.l.b16 %v4897
  %v5068 = vunpack.c.l.b16 %v4898
  %v5069 = vunpack.c.l.b16 %v4899
  %v5070 = vunpack.c.l.b16 %v4900
  %v5071 = vunpack.c.l.b16 %v4901
  %v5072 = vunpack.c.l.b16 %v4902
  %v5073 = vunpack.c.l.b16 %v4903
  %v5074 = vunpack.c.l.b16 %v4904
  %v5075 = vunpack.c.l.b16 %v4905
  %v5076 = vunpack.c.l.b16 %v4906
  %v5077 = vunpack.c.l.b16 %v4907
  %v5078 = vunpack.c.l.b16 %v4908
  %v5079 = vunpack.c.l.b16 %v4909
  %v5080 = vunpack.c.l.b16 %v4910
  %v5081 = vunpack.c.l.b16 %v4911
  %v5082 = vunpack.c.l.b16 %v4912
  %v5083 = vunpack.c.l.b16 %v4913
  %v5084 = vunpack.c.l.b16 %v4914
  %v5085 = vunpack.c.l.b16 %v4915
  %v5086 = vunpack.c.l.b16 %v4916
  %v5087 = vunpack.c.l.b16 %v4917
  %v5088 = vunpack.c.l.b16 %v4918
  %v5089 = vunpack.c.l.b16 %v4919
  %v5090 = vunpack.c.l.b16 %v4920
  %v5091 = vunpack.c.l.b16 %v4921
  %v5092 = vunpack.c.l.b16 %v4922
  %v5093 = vunpack.c.l.b16 %v4923
  %v5094 = vunpack.c.l.b16 %v4924
  %v5095 = vunpack.c.l.b16 %v4925
  %v5096 = vunpack.c.l.b16 %v4926
  %v5097 = vunpack.c.l.b16 %v4927
  %v5098 = vpack.c.b16 %v5067, %v5066
  %v5099 = vpack.c.b16 %v5069, %v5068
  %v5100 = vpack.c.b16 %v5071, %v5070
  %v5101 = vpack.c.b16 %v5073, %v5072
  %v5102 = vpack.c.b16 %v5075, %v5074
  %v5103 = vpack.c.b16 %v5077, %v5076
  %v5104 = vpack.c.b16 %v5079, %v5078
  %v5105 = vpack.c.b16 %v5081, %v5080
  %v5106 = vpack.c.b16 %v5083, %v5082
  %v5107 = vpack.c.b16 %v5085, %v5084
  %v5108 = vpack.c.b16 %v5087, %v5086
  %v5109 = vpack.c.b16 %v5089, %v5088
  %v5110 = vpack.c.b16 %v5091, %v5090
  %v5111 = vpack.c.b16 %v5093, %v5092
  %v5112 = vpack.c.b16 %v5095, %v5094
  %v5113 = vpack.c.b16 %v5097, %v5096
  %5130 = vmatpush.bf16.msra.mxu0 %v5105
  %5131 = vmatpush.bf16.msra.mxu0 %v5104
  %5132 = vmatpush.bf16.msra.mxu0 %v5103
  %5133 = vmatpush.bf16.msra.mxu0 %v5102
  %5134 = vmatpush.bf16.msra.mxu0 %v5101
  %5135 = vmatpush.bf16.msra.mxu0 %v5100
  %5136 = vmatpush.bf16.msra.mxu0 %v5099
  %5137 = vmatpush.bf16.msra.mxu0 %v5098
  %5138 = vmatmul.bf16.gmra.mxu0 %v4939
  %v5139 = vpop.f32.mrf.mxu0
  %v5140 = vadd.f32 0.0, %v5139
  %v5141 = vpop.f32.mrf.mxu0
  %v5142 = vadd.f32 0.0, %v5141
  %5143 = vmatmul.bf16.gmra.mxu0 %v4955
  %v5144 = vpop.f32.mrf.mxu0
  %v5145 = vadd.f32 0.0, %v5144
  %v5146 = vpop.f32.mrf.mxu0
  %v5147 = vadd.f32 0.0, %v5146
  %5148 = vmatmul.bf16.gmra.mxu0 %v4963
  %v5149 = vpop.f32.mrf.mxu0
  %v5150 = vadd.f32 0.0, %v5149
  %v5151 = vpop.f32.mrf.mxu0
  %v5152 = vadd.f32 0.0, %v5151
  %5153 = vmatmul.bf16.gmra.mxu0 %v4971
  %v5154 = vpop.f32.mrf.mxu0
  %v5155 = vadd.f32 0.0, %v5154
  %v5156 = vpop.f32.mrf.mxu0
  %v5157 = vadd.f32 0.0, %v5156
  %5158 = vmatmul.bf16.gmra.mxu0 %v4979
  %v5159 = vpop.f32.mrf.mxu0
  %v5160 = vadd.f32 0.0, %v5159
  %v5161 = vpop.f32.mrf.mxu0
  %v5162 = vadd.f32 0.0, %v5161
  %5163 = vmatmul.bf16.gmra.mxu0 %v4987
  %v5164 = vpop.f32.mrf.mxu0
  %v5165 = vadd.f32 0.0, %v5164
  %v5166 = vpop.f32.mrf.mxu0
  %v5167 = vadd.f32 0.0, %v5166
  %5168 = vmatmul.bf16.gmra.mxu0 %v4995
  %v5169 = vpop.f32.mrf.mxu0
  %v5170 = vadd.f32 0.0, %v5169
  %v5171 = vpop.f32.mrf.mxu0
  %v5172 = vadd.f32 0.0, %v5171
  %5173 = vmatmul.bf16.gmra.mxu0 %v5008
  %v5174 = vpop.f32.mrf.mxu0
  %v5175 = vadd.f32 0.0, %v5174
  %v5176 = vpop.f32.mrf.mxu0
  %v5177 = vadd.f32 0.0, %v5176
  %5178 = vdwg.mxu0
  %5179 = vmatpush.bf16.msra.mxu0 %v5113
  %5180 = vmatpush.bf16.msra.mxu0 %v5112
  %5181 = vmatpush.bf16.msra.mxu0 %v5111
  %5182 = vmatpush.bf16.msra.mxu0 %v5110
  %5183 = vmatpush.bf16.msra.mxu0 %v5109
  %5184 = vmatpush.bf16.msra.mxu0 %v5108
  %5185 = vmatpush.bf16.msra.mxu0 %v5107
  %5186 = vmatpush.bf16.msra.mxu0 %v5106
  %5187 = vmatmul.bf16.gmra.mxu0 %v4951
  %v5188 = vpop.f32.mrf.mxu0
  %v5189 = vadd.f32 %v5140, %v5188
  %v5190 = vpop.f32.mrf.mxu0
  %v5191 = vadd.f32 %v5142, %v5190
  %5192 = vmatmul.bf16.gmra.mxu0 %v4959
  %v5193 = vpop.f32.mrf.mxu0
  %v5194 = vadd.f32 %v5145, %v5193
  %v5195 = vpop.f32.mrf.mxu0
  %v5196 = vadd.f32 %v5147, %v5195
  %5197 = vmatmul.bf16.gmra.mxu0 %v4967
  %v5198 = vpop.f32.mrf.mxu0
  %v5199 = vadd.f32 %v5150, %v5198
  %v5200 = vpop.f32.mrf.mxu0
  %v5201 = vadd.f32 %v5152, %v5200
  %5202 = vmatmul.bf16.gmra.mxu0 %v4975
  %v5203 = vpop.f32.mrf.mxu0
  %v5204 = vadd.f32 %v5155, %v5203
  %v5205 = vpop.f32.mrf.mxu0
  %v5206 = vadd.f32 %v5157, %v5205
  %5207 = vmatmul.bf16.gmra.mxu0 %v4983
  %v5208 = vpop.f32.mrf.mxu0
  %v5209 = vadd.f32 %v5160, %v5208
  %v5210 = vpop.f32.mrf.mxu0
  %v5211 = vadd.f32 %v5162, %v5210
  %5212 = vmatmul.bf16.gmra.mxu0 %v4991
  %v5213 = vpop.f32.mrf.mxu0
  %v5214 = vadd.f32 %v5165, %v5213
  %v5215 = vpop.f32.mrf.mxu0
  %v5216 = vadd.f32 %v5167, %v5215
  %5217 = vmatmul.bf16.gmra.mxu0 %v4999
  %v5218 = vpop.f32.mrf.mxu0
  %v5219 = vadd.f32 %v5170, %v5218
  %v5220 = vpop.f32.mrf.mxu0
  %v5221 = vadd.f32 %v5172, %v5220
  %5222 = vmatmul.bf16.gmra.mxu0 %v5017
  %v5223 = vpop.f32.mrf.mxu0
  %v5224 = vadd.f32 %v5175, %v5223
  %v5225 = vpop.f32.mrf.mxu0
  %v5226 = vadd.f32 %v5177, %v5225
  %5227 = vdwg.mxu0
  %v5228 = vadd.f32 %v4871, %v5189
  %v5229 = vadd.f32 %v4872, %v5191
  %v5230 = vadd.f32 %v4873, %v5194
  %v5231 = vadd.f32 %v4874, %v5196
  %v5232 = vadd.f32 %v4875, %v5199
  %v5233 = vadd.f32 %v4876, %v5201
  %v5234 = vadd.f32 %v4877, %v5204
  %v5235 = vadd.f32 %v4878, %v5206
  %v5236 = vadd.f32 %v4879, %v5209
  %v5237 = vadd.f32 %v4880, %v5211
  %v5238 = vadd.f32 %v4881, %v5214
  %v5239 = vadd.f32 %v4882, %v5216
  %v5240 = vadd.f32 %v4883, %v5219
  %v5241 = vadd.f32 %v4884, %v5221
  %v5242 = vadd.f32 %v4885, %v5224
  %v5243 = vadd.f32 %v4886, %v5226
  %v5244 = vld [vmem:[#allocation3 + $0x100] sm:$0xff]
  %v5245 = vld [vmem:[#allocation3 + $0x108] sm:$0xff]
  %v5246 = vpack.c.bf16 %v4444, %v4442
  %v5247 = vpack.c.bf16 %v4445, %v4443
  %v5248 = vpack.c.bf16 %v4448, %v4446
  %v5249 = vpack.c.bf16 %v4449, %v4447
  %v5250 = vpack.c.bf16 %v4452, %v4450
  %v5251 = vpack.c.bf16 %v4453, %v4451
  %v5252 = vpack.c.bf16 %v4456, %v4454
  %v5253 = vpack.c.bf16 %v4457, %v4455
  %v5254 = vpack.c.bf16 %v4460, %v4458
  %v5255 = vpack.c.bf16 %v4461, %v4459
  %v5256 = vpack.c.bf16 %v4464, %v4462
  %v5257 = vpack.c.bf16 %v4465, %v4463
  %v5258 = vpack.c.bf16 %v4468, %v4466
  %v5259 = vpack.c.bf16 %v4469, %v4467
  %v5260 = vpack.c.bf16 %v5244, %v4470
  %v5261 = vpack.c.bf16 %v5245, %v4471
  %s5262 = scalar_lea.vmem %s5, 896
  %v5263 = vld [vmem:[%s5262] sm:$0xf]
  %v5264 = vld [vmem:[%s5262 + $0x4] sm:$0xf]
  %v5265 = vld [vmem:[%s5262 + $0x8] sm:$0xf]
  %v5266 = vld [vmem:[%s5262 + $0xc] sm:$0xf]
  %v5267 = vld [vmem:[%s5262 + $0x10] sm:$0xf]
  %v5268 = vld [vmem:[%s5262 + $0x14] sm:$0xf]
  %v5269 = vld [vmem:[%s5262 + $0x18] sm:$0xf]
  %v5270 = vld [vmem:[%s5262 + $0x1c] sm:$0xf]
  %v5271 = vld [vmem:[%s5262 + $0x20] sm:$0xf]
  %v5272 = vld [vmem:[%s5262 + $0x24] sm:$0xf]
  %v5273 = vld [vmem:[%s5262 + $0x28] sm:$0xf]
  %v5274 = vld [vmem:[%s5262 + $0x2c] sm:$0xf]
  %v5275 = vld [vmem:[%s5262 + $0x30] sm:$0xf]
  %v5276 = vld [vmem:[%s5262 + $0x34] sm:$0xf]
  %v5277 = vld [vmem:[%s5262 + $0x38] sm:$0xf]
  %v5278 = vld [vmem:[%s5262 + $0x3c] sm:$0xf]
  %v5279 = vld [vmem:[%s5262 + $0x40] sm:$0xf]
  %v5280 = vld [vmem:[%s5262 + $0x44] sm:$0xf]
  %v5281 = vld [vmem:[%s5262 + $0x48] sm:$0xf]
  %v5282 = vld [vmem:[%s5262 + $0x4c] sm:$0xf]
  %v5283 = vld [vmem:[%s5262 + $0x50] sm:$0xf]
  %v5284 = vld [vmem:[%s5262 + $0x54] sm:$0xf]
  %v5285 = vld [vmem:[%s5262 + $0x58] sm:$0xf]
  %v5286 = vld [vmem:[%s5262 + $0x5c] sm:$0xf]
  %v5287 = vld [vmem:[%s5262 + $0x60] sm:$0xf]
  %v5288 = vld [vmem:[%s5262 + $0x64] sm:$0xf]
  %v5289 = vld [vmem:[%s5262 + $0x68] sm:$0xf]
  %v5290 = vld [vmem:[%s5262 + $0x6c] sm:$0xf]
  %v5291 = vld [vmem:[%s5262 + $0x70] sm:$0xf]
  %v5292 = vld [vmem:[%s5262 + $0x74] sm:$0xf]
  %v5293 = vld [vmem:[%s5262 + $0x78] sm:$0xf]
  %v5294 = vld [vmem:[%s5262 + $0x7c] sm:$0xf]
  %v5327 = vunpack.c.l.b16 %v5263
  %v5328 = vunpack.c.l.b16 %v5264
  %v5329 = vunpack.c.l.b16 %v5265
  %v5330 = vunpack.c.l.b16 %v5266
  %v5331 = vunpack.c.l.b16 %v5267
  %v5332 = vunpack.c.l.b16 %v5268
  %v5333 = vunpack.c.l.b16 %v5269
  %v5334 = vunpack.c.l.b16 %v5270
  %v5335 = vunpack.c.l.b16 %v5271
  %v5336 = vunpack.c.l.b16 %v5272
  %v5337 = vunpack.c.l.b16 %v5273
  %v5338 = vunpack.c.l.b16 %v5274
  %v5339 = vunpack.c.l.b16 %v5275
  %v5340 = vunpack.c.l.b16 %v5276
  %v5341 = vunpack.c.l.b16 %v5277
  %v5342 = vunpack.c.l.b16 %v5278
  %v5343 = vunpack.c.l.b16 %v5279
  %v5344 = vunpack.c.l.b16 %v5280
  %v5345 = vunpack.c.l.b16 %v5281
  %v5346 = vunpack.c.l.b16 %v5282
  %v5347 = vunpack.c.l.b16 %v5283
  %v5348 = vunpack.c.l.b16 %v5284
  %v5349 = vunpack.c.l.b16 %v5285
  %v5350 = vunpack.c.l.b16 %v5286
  %v5351 = vunpack.c.l.b16 %v5287
  %v5352 = vunpack.c.l.b16 %v5288
  %v5353 = vunpack.c.l.b16 %v5289
  %v5354 = vunpack.c.l.b16 %v5290
  %v5355 = vunpack.c.l.b16 %v5291
  %v5356 = vunpack.c.l.b16 %v5292
  %v5357 = vunpack.c.l.b16 %v5293
  %v5358 = vunpack.c.l.b16 %v5294
  %v5359 = vpack.c.b16 %v5328, %v5327
  %v5360 = vpack.c.b16 %v5330, %v5329
  %v5361 = vpack.c.b16 %v5332, %v5331
  %v5362 = vpack.c.b16 %v5334, %v5333
  %v5363 = vpack.c.b16 %v5336, %v5335
  %v5364 = vpack.c.b16 %v5338, %v5337
  %v5365 = vpack.c.b16 %v5340, %v5339
  %v5366 = vpack.c.b16 %v5342, %v5341
  %v5367 = vpack.c.b16 %v5344, %v5343
  %v5368 = vpack.c.b16 %v5346, %v5345
  %v5369 = vpack.c.b16 %v5348, %v5347
  %v5370 = vpack.c.b16 %v5350, %v5349
  %v5371 = vpack.c.b16 %v5352, %v5351
  %v5372 = vpack.c.b16 %v5354, %v5353
  %v5373 = vpack.c.b16 %v5356, %v5355
  %v5374 = vpack.c.b16 %v5358, %v5357
  %5391 = vmatpush.bf16.msra.mxu0 %v5366
  %5392 = vmatpush.bf16.msra.mxu0 %v5365
  %5393 = vmatpush.bf16.msra.mxu0 %v5364
  %5394 = vmatpush.bf16.msra.mxu0 %v5363
  %5395 = vmatpush.bf16.msra.mxu0 %v5362
  %5396 = vmatpush.bf16.msra.mxu0 %v5361
  %5397 = vmatpush.bf16.msra.mxu0 %v5360
  %5398 = vmatpush.bf16.msra.mxu0 %v5359
  %5399 = vmatmul.bf16.gmra.mxu0 %v5246
  %v5400 = vpop.f32.mrf.mxu0
  %v5401 = vadd.f32 0.0, %v5400
  %v5402 = vpop.f32.mrf.mxu0
  %v5403 = vadd.f32 0.0, %v5402
  %5404 = vmatmul.bf16.gmra.mxu0 %v5248
  %v5405 = vpop.f32.mrf.mxu0
  %v5406 = vadd.f32 0.0, %v5405
  %v5407 = vpop.f32.mrf.mxu0
  %v5408 = vadd.f32 0.0, %v5407
  %5409 = vmatmul.bf16.gmra.mxu0 %v5250
  %v5410 = vpop.f32.mrf.mxu0
  %v5411 = vadd.f32 0.0, %v5410
  %v5412 = vpop.f32.mrf.mxu0
  %v5413 = vadd.f32 0.0, %v5412
  %5414 = vmatmul.bf16.gmra.mxu0 %v5252
  %v5415 = vpop.f32.mrf.mxu0
  %v5416 = vadd.f32 0.0, %v5415
  %v5417 = vpop.f32.mrf.mxu0
  %v5418 = vadd.f32 0.0, %v5417
  %5419 = vmatmul.bf16.gmra.mxu0 %v5254
  %v5420 = vpop.f32.mrf.mxu0
  %v5421 = vadd.f32 0.0, %v5420
  %v5422 = vpop.f32.mrf.mxu0
  %v5423 = vadd.f32 0.0, %v5422
  %5424 = vmatmul.bf16.gmra.mxu0 %v5256
  %v5425 = vpop.f32.mrf.mxu0
  %v5426 = vadd.f32 0.0, %v5425
  %v5427 = vpop.f32.mrf.mxu0
  %v5428 = vadd.f32 0.0, %v5427
  %5429 = vmatmul.bf16.gmra.mxu0 %v5258
  %v5430 = vpop.f32.mrf.mxu0
  %v5431 = vadd.f32 0.0, %v5430
  %v5432 = vpop.f32.mrf.mxu0
  %v5433 = vadd.f32 0.0, %v5432
  %5434 = vmatmul.bf16.gmra.mxu0 %v5260
  %v5435 = vpop.f32.mrf.mxu0
  %v5436 = vadd.f32 0.0, %v5435
  %v5437 = vpop.f32.mrf.mxu0
  %v5438 = vadd.f32 0.0, %v5437
  %5439 = vdwg.mxu0
  %5440 = vmatpush.bf16.msra.mxu0 %v5374
  %5441 = vmatpush.bf16.msra.mxu0 %v5373
  %5442 = vmatpush.bf16.msra.mxu0 %v5372
  %5443 = vmatpush.bf16.msra.mxu0 %v5371
  %5444 = vmatpush.bf16.msra.mxu0 %v5370
  %5445 = vmatpush.bf16.msra.mxu0 %v5369
  %5446 = vmatpush.bf16.msra.mxu0 %v5368
  %5447 = vmatpush.bf16.msra.mxu0 %v5367
  %5448 = vmatmul.bf16.gmra.mxu0 %v5247
  %v5449 = vpop.f32.mrf.mxu0
  %v5450 = vadd.f32 %v5401, %v5449
  %v5451 = vpop.f32.mrf.mxu0
  %v5452 = vadd.f32 %v5403, %v5451
  %5453 = vmatmul.bf16.gmra.mxu0 %v5249
  %v5454 = vpop.f32.mrf.mxu0
  %v5455 = vadd.f32 %v5406, %v5454
  %v5456 = vpop.f32.mrf.mxu0
  %v5457 = vadd.f32 %v5408, %v5456
  %5458 = vmatmul.bf16.gmra.mxu0 %v5251
  %v5459 = vpop.f32.mrf.mxu0
  %v5460 = vadd.f32 %v5411, %v5459
  %v5461 = vpop.f32.mrf.mxu0
  %v5462 = vadd.f32 %v5413, %v5461
  %5463 = vmatmul.bf16.gmra.mxu0 %v5253
  %v5464 = vpop.f32.mrf.mxu0
  %v5465 = vadd.f32 %v5416, %v5464
  %v5466 = vpop.f32.mrf.mxu0
  %v5467 = vadd.f32 %v5418, %v5466
  %5468 = vmatmul.bf16.gmra.mxu0 %v5255
  %v5469 = vpop.f32.mrf.mxu0
  %v5470 = vadd.f32 %v5421, %v5469
  %v5471 = vpop.f32.mrf.mxu0
  %v5472 = vadd.f32 %v5423, %v5471
  %5473 = vmatmul.bf16.gmra.mxu0 %v5257
  %v5474 = vpop.f32.mrf.mxu0
  %v5475 = vadd.f32 %v5426, %v5474
  %v5476 = vpop.f32.mrf.mxu0
  %v5477 = vadd.f32 %v5428, %v5476
  %5478 = vmatmul.bf16.gmra.mxu0 %v5259
  %v5479 = vpop.f32.mrf.mxu0
  %v5480 = vadd.f32 %v5431, %v5479
  %v5481 = vpop.f32.mrf.mxu0
  %v5482 = vadd.f32 %v5433, %v5481
  %5483 = vmatmul.bf16.gmra.mxu0 %v5261
  %v5484 = vpop.f32.mrf.mxu0
  %v5485 = vadd.f32 %v5436, %v5484
  %v5486 = vpop.f32.mrf.mxu0
  %v5487 = vadd.f32 %v5438, %v5486
  %5488 = vdwg.mxu0
  %v5489 = vadd.f32 %v5228, %v5450
  %v5490 = vadd.f32 %v5229, %v5452
  %v5491 = vadd.f32 %v5230, %v5455
  %v5492 = vadd.f32 %v5231, %v5457
  %v5493 = vadd.f32 %v5232, %v5460
  %v5494 = vadd.f32 %v5233, %v5462
  %v5495 = vadd.f32 %v5234, %v5465
  %v5496 = vadd.f32 %v5235, %v5467
  %v5497 = vadd.f32 %v5236, %v5470
  %v5498 = vadd.f32 %v5237, %v5472
  %v5499 = vadd.f32 %v5238, %v5475
  %v5500 = vadd.f32 %v5239, %v5477
  %v5501 = vadd.f32 %v5240, %v5480
  %v5502 = vadd.f32 %v5241, %v5482
  %v5503 = vadd.f32 %v5242, %v5485
  %v5504 = vadd.f32 %v5243, %v5487
  %v5505 = vld [vmem:[#allocation3 + $0x10] sm:$0xfe]
  %v5506 = vld [vmem:[#allocation3 + $0x18] sm:$0xfe]
  %v5507 = vld [vmem:[#allocation3 + $0x20] sm:$0xff]
  %v5508 = vld [vmem:[#allocation3 + $0x28] sm:$0xff]
  %v5509 = vld [vmem:[#allocation3 + $0x30] sm:$0xff]
  %v5510 = vld [vmem:[#allocation3 + $0x38] sm:$0xff]
  %v5511 = vld [vmem:[#allocation3 + $0x40] sm:$0xff]
  %v5512 = vld [vmem:[#allocation3 + $0x48] sm:$0xff]
  %v5513 = vld [vmem:[#allocation3 + $0x50] sm:$0xff]
  %v5514 = vld [vmem:[#allocation3 + $0x58] sm:$0xff]
  %v5515 = vld [vmem:[#allocation3 + $0x60] sm:$0xff]
  %v5516 = vld [vmem:[#allocation3 + $0x68] sm:$0xff]
  %v5517 = vld [vmem:[#allocation3 + $0x70] sm:$0xff]
  %v5518 = vld [vmem:[#allocation3 + $0x78] sm:$0xff]
  %v5519 = vld [vmem:[#allocation3 + $0x80] sm:$0xff]
  %v5520 = vld [vmem:[#allocation3 + $0x88] sm:$0xff]
  %v5521 = vld [vmem:[#allocation3 + $0x90] sm:$0xff]
  %v5522 = vld [vmem:[#allocation3 + $0x98] sm:$0xff]
  %v5523 = vld [vmem:[#allocation3 + $0xa0] sm:$0xff]
  %v5524 = vld [vmem:[#allocation3 + $0xa8] sm:$0xff]
  %v5525 = vld [vmem:[#allocation3 + $0xb0] sm:$0xff]
  %v5526 = vld [vmem:[#allocation3 + $0xb8] sm:$0xff]
  %v5527 = vld [vmem:[#allocation3 + $0xc0] sm:$0xff]
  %v5528 = vld [vmem:[#allocation3 + $0xc8] sm:$0xff]
  %v5529 = vld [vmem:[#allocation3 + $0xd0] sm:$0xff]
  %v5530 = vld [vmem:[#allocation3 + $0xd8] sm:$0xff]
  %v5531 = vld [vmem:[#allocation3 + $0xe0] sm:$0xff]
  %v5532 = vld [vmem:[#allocation3 + $0xe8] sm:$0xff]
  %v5533 = vld [vmem:[#allocation3 + $0xf0] sm:$0xff]
  %v5534 = vld [vmem:[#allocation3 + $0xf8] sm:$0xff]
  %v5535 = vld [vmem:[#allocation3 + $0x100] sm:$0xff]
  %v5536 = vld [vmem:[#allocation3 + $0x108] sm:$0xff]
  %v5537 = vld [vmem:[#allocation3 + $0x110] sm:$0x1]
  %v5538 = vld [vmem:[#allocation3 + $0x118] sm:$0x1]
  %v5539 = vpack.c.bf16 %v5507, %v5505
  %v5540 = vpack.c.bf16 %v5508, %v5506
  %v5541 = vpack.c.bf16 %v5511, %v5509
  %v5542 = vpack.c.bf16 %v5512, %v5510
  %v5543 = vpack.c.bf16 %v5515, %v5513
  %v5544 = vpack.c.bf16 %v5516, %v5514
  %v5545 = vpack.c.bf16 %v5519, %v5517
  %v5546 = vpack.c.bf16 %v5520, %v5518
  %v5547 = vpack.c.bf16 %v5523, %v5521
  %v5548 = vpack.c.bf16 %v5524, %v5522
  %v5549 = vpack.c.bf16 %v5527, %v5525
  %v5550 = vpack.c.bf16 %v5528, %v5526
  %v5551 = vpack.c.bf16 %v5531, %v5529
  %v5552 = vpack.c.bf16 %v5532, %v5530
  %v5553 = vpack.c.bf16 %v5535, %v5533
  %v5554 = vpack.c.bf16 %v5536, %v5534
  %v5555 = vpack.c.bf16 %v5537, %v5537
  %v5556 = vpack.c.bf16 %v5538, %v5538
  %s5557 = scalar_lea.vmem %s5, 1024
  %v5558 = vld [vmem:[%s5557] sm:$0xf]
  %v5559 = vld [vmem:[%s5557 + $0x4] sm:$0xf]
  %v5560 = vld [vmem:[%s5557 + $0x8] sm:$0xf]
  %v5561 = vld [vmem:[%s5557 + $0xc] sm:$0xf]
  %v5562 = vld [vmem:[%s5557 + $0x10] sm:$0xf]
  %v5563 = vld [vmem:[%s5557 + $0x14] sm:$0xf]
  %v5564 = vld [vmem:[%s5557 + $0x18] sm:$0xf]
  %v5565 = vld [vmem:[%s5557 + $0x1c] sm:$0xf]
  %v5566 = vld [vmem:[%s5557 + $0x20] sm:$0xf]
  %v5567 = vld [vmem:[%s5557 + $0x24] sm:$0xf]
  %v5568 = vld [vmem:[%s5557 + $0x28] sm:$0xf]
  %v5569 = vld [vmem:[%s5557 + $0x2c] sm:$0xf]
  %v5570 = vld [vmem:[%s5557 + $0x30] sm:$0xf]
  %v5571 = vld [vmem:[%s5557 + $0x34] sm:$0xf]
  %v5572 = vld [vmem:[%s5557 + $0x38] sm:$0xf]
  %v5573 = vld [vmem:[%s5557 + $0x3c] sm:$0xf]
  %v5574 = vld [vmem:[%s5557 + $0x40] sm:$0xf]
  %v5575 = vld [vmem:[%s5557 + $0x44] sm:$0xf]
  %v5576 = vld [vmem:[%s5557 + $0x48] sm:$0xf]
  %v5577 = vld [vmem:[%s5557 + $0x4c] sm:$0xf]
  %v5578 = vld [vmem:[%s5557 + $0x50] sm:$0xf]
  %v5579 = vld [vmem:[%s5557 + $0x54] sm:$0xf]
  %v5580 = vld [vmem:[%s5557 + $0x58] sm:$0xf]
  %v5581 = vld [vmem:[%s5557 + $0x5c] sm:$0xf]
  %v5582 = vld [vmem:[%s5557 + $0x60] sm:$0xf]
  %v5583 = vld [vmem:[%s5557 + $0x64] sm:$0xf]
  %v5584 = vld [vmem:[%s5557 + $0x68] sm:$0xf]
  %v5585 = vld [vmem:[%s5557 + $0x6c] sm:$0xf]
  %v5586 = vld [vmem:[%s5557 + $0x70] sm:$0xf]
  %v5587 = vld [vmem:[%s5557 + $0x74] sm:$0xf]
  %v5588 = vld [vmem:[%s5557 + $0x78] sm:$0xf]
  %v5589 = vld [vmem:[%s5557 + $0x7c] sm:$0xf]
  %v5591 = vshrl.u32 %v5539, 16
  %v5593 = vshll.u32 %v5539, 16
  %v5595 = vrot.slane %v5593, 1
  %v5596 = vor.u32 %v5591, %v5595
  %v5598 = vshll.u32 %v5541, 16
  %v5600 = vrot.slane %v5598, 1
  %v5601 = vsel %vm3429, %v5596, %v5600
  %v5603 = vshrl.u32 %v5540, 16
  %v5605 = vshll.u32 %v5540, 16
  %v5607 = vrot.slane %v5605, 1
  %v5608 = vor.u32 %v5603, %v5607
  %v5610 = vshll.u32 %v5542, 16
  %v5612 = vrot.slane %v5610, 1
  %v5613 = vsel %vm3429, %v5608, %v5612
  %v5614 = vshrl.u32 %v5541, 16
  %v5616 = vor.u32 %v5614, %v5600
  %v5618 = vshll.u32 %v5543, 16
  %v5620 = vrot.slane %v5618, 1
  %v5621 = vsel %vm3429, %v5616, %v5620
  %v5622 = vshrl.u32 %v5542, 16
  %v5624 = vor.u32 %v5622, %v5612
  %v5626 = vshll.u32 %v5544, 16
  %v5628 = vrot.slane %v5626, 1
  %v5629 = vsel %vm3429, %v5624, %v5628
  %v5630 = vshrl.u32 %v5543, 16
  %v5632 = vor.u32 %v5630, %v5620
  %v5634 = vshll.u32 %v5545, 16
  %v5636 = vrot.slane %v5634, 1
  %v5637 = vsel %vm3429, %v5632, %v5636
  %v5638 = vshrl.u32 %v5544, 16
  %v5640 = vor.u32 %v5638, %v5628
  %v5642 = vshll.u32 %v5546, 16
  %v5644 = vrot.slane %v5642, 1
  %v5645 = vsel %vm3429, %v5640, %v5644
  %v5646 = vshrl.u32 %v5545, 16
  %v5648 = vor.u32 %v5646, %v5636
  %v5650 = vshll.u32 %v5547, 16
  %v5652 = vrot.slane %v5650, 1
  %v5653 = vsel %vm3429, %v5648, %v5652
  %v5654 = vshrl.u32 %v5546, 16
  %v5656 = vor.u32 %v5654, %v5644
  %v5658 = vshll.u32 %v5548, 16
  %v5660 = vrot.slane %v5658, 1
  %v5661 = vsel %vm3429, %v5656, %v5660
  %v5662 = vshrl.u32 %v5547, 16
  %v5664 = vor.u32 %v5662, %v5652
  %v5666 = vshll.u32 %v5549, 16
  %v5668 = vrot.slane %v5666, 1
  %v5669 = vsel %vm3429, %v5664, %v5668
  %v5670 = vshrl.u32 %v5548, 16
  %v5672 = vor.u32 %v5670, %v5660
  %v5674 = vshll.u32 %v5550, 16
  %v5676 = vrot.slane %v5674, 1
  %v5677 = vsel %vm3429, %v5672, %v5676
  %v5678 = vshrl.u32 %v5549, 16
  %v5680 = vor.u32 %v5678, %v5668
  %v5682 = vshll.u32 %v5551, 16
  %v5684 = vrot.slane %v5682, 1
  %v5685 = vsel %vm3429, %v5680, %v5684
  %v5686 = vshrl.u32 %v5550, 16
  %v5688 = vor.u32 %v5686, %v5676
  %v5690 = vshll.u32 %v5552, 16
  %v5692 = vrot.slane %v5690, 1
  %v5693 = vsel %vm3429, %v5688, %v5692
  %v5694 = vshrl.u32 %v5551, 16
  %v5696 = vor.u32 %v5694, %v5684
  %v5698 = vshll.u32 %v5553, 16
  %v5700 = vrot.slane %v5698, 1
  %v5701 = vsel %vm3429, %v5696, %v5700
  %v5702 = vshrl.u32 %v5552, 16
  %v5704 = vor.u32 %v5702, %v5692
  %v5706 = vshll.u32 %v5554, 16
  %v5708 = vrot.slane %v5706, 1
  %v5709 = vsel %vm3429, %v5704, %v5708
  %v5710 = vshrl.u32 %v5553, 16
  %v5712 = vor.u32 %v5710, %v5700
  %v5714 = vshll.u32 %v5555, 16
  %v5716 = vrot.slane %v5714, 1
  %v5717 = vsel %vm3429, %v5712, %v5716
  %v5718 = vshrl.u32 %v5554, 16
  %v5720 = vor.u32 %v5718, %v5708
  %v5722 = vshll.u32 %v5556, 16
  %v5724 = vrot.slane %v5722, 1
  %v5725 = vsel %vm3429, %v5720, %v5724
  %v5774 = vunpack.c.l.b16 %v5558
  %v5775 = vunpack.c.l.b16 %v5559
  %v5776 = vunpack.c.l.b16 %v5560
  %v5777 = vunpack.c.l.b16 %v5561
  %v5778 = vunpack.c.l.b16 %v5562
  %v5779 = vunpack.c.l.b16 %v5563
  %v5780 = vunpack.c.l.b16 %v5564
  %v5781 = vunpack.c.l.b16 %v5565
  %v5782 = vunpack.c.l.b16 %v5566
  %v5783 = vunpack.c.l.b16 %v5567
  %v5784 = vunpack.c.l.b16 %v5568
  %v5785 = vunpack.c.l.b16 %v5569
  %v5786 = vunpack.c.l.b16 %v5570
  %v5787 = vunpack.c.l.b16 %v5571
  %v5788 = vunpack.c.l.b16 %v5572
  %v5789 = vunpack.c.l.b16 %v5573
  %v5790 = vunpack.c.l.b16 %v5574
  %v5791 = vunpack.c.l.b16 %v5575
  %v5792 = vunpack.c.l.b16 %v5576
  %v5793 = vunpack.c.l.b16 %v5577
  %v5794 = vunpack.c.l.b16 %v5578
  %v5795 = vunpack.c.l.b16 %v5579
  %v5796 = vunpack.c.l.b16 %v5580
  %v5797 = vunpack.c.l.b16 %v5581
  %v5798 = vunpack.c.l.b16 %v5582
  %v5799 = vunpack.c.l.b16 %v5583
  %v5800 = vunpack.c.l.b16 %v5584
  %v5801 = vunpack.c.l.b16 %v5585
  %v5802 = vunpack.c.l.b16 %v5586
  %v5803 = vunpack.c.l.b16 %v5587
  %v5804 = vunpack.c.l.b16 %v5588
  %v5805 = vunpack.c.l.b16 %v5589
  %v5806 = vpack.c.b16 %v5775, %v5774
  %v5807 = vpack.c.b16 %v5777, %v5776
  %v5808 = vpack.c.b16 %v5779, %v5778
  %v5809 = vpack.c.b16 %v5781, %v5780
  %v5810 = vpack.c.b16 %v5783, %v5782
  %v5811 = vpack.c.b16 %v5785, %v5784
  %v5812 = vpack.c.b16 %v5787, %v5786
  %v5813 = vpack.c.b16 %v5789, %v5788
  %v5814 = vpack.c.b16 %v5791, %v5790
  %v5815 = vpack.c.b16 %v5793, %v5792
  %v5816 = vpack.c.b16 %v5795, %v5794
  %v5817 = vpack.c.b16 %v5797, %v5796
  %v5818 = vpack.c.b16 %v5799, %v5798
  %v5819 = vpack.c.b16 %v5801, %v5800
  %v5820 = vpack.c.b16 %v5803, %v5802
  %v5821 = vpack.c.b16 %v5805, %v5804
  %5838 = vmatpush.bf16.msra.mxu0 %v5813
  %5839 = vmatpush.bf16.msra.mxu0 %v5812
  %5840 = vmatpush.bf16.msra.mxu0 %v5811
  %5841 = vmatpush.bf16.msra.mxu0 %v5810
  %5842 = vmatpush.bf16.msra.mxu0 %v5809
  %5843 = vmatpush.bf16.msra.mxu0 %v5808
  %5844 = vmatpush.bf16.msra.mxu0 %v5807
  %5845 = vmatpush.bf16.msra.mxu0 %v5806
  %5846 = vmatmul.bf16.gmra.mxu0 %v5601
  %v5847 = vpop.f32.mrf.mxu0
  %v5848 = vadd.f32 0.0, %v5847
  %v5849 = vpop.f32.mrf.mxu0
  %v5850 = vadd.f32 0.0, %v5849
  %5851 = vmatmul.bf16.gmra.mxu0 %v5621
  %v5852 = vpop.f32.mrf.mxu0
  %v5853 = vadd.f32 0.0, %v5852
  %v5854 = vpop.f32.mrf.mxu0
  %v5855 = vadd.f32 0.0, %v5854
  %5856 = vmatmul.bf16.gmra.mxu0 %v5637
  %v5857 = vpop.f32.mrf.mxu0
  %v5858 = vadd.f32 0.0, %v5857
  %v5859 = vpop.f32.mrf.mxu0
  %v5860 = vadd.f32 0.0, %v5859
  %5861 = vmatmul.bf16.gmra.mxu0 %v5653
  %v5862 = vpop.f32.mrf.mxu0
  %v5863 = vadd.f32 0.0, %v5862
  %v5864 = vpop.f32.mrf.mxu0
  %v5865 = vadd.f32 0.0, %v5864
  %5866 = vmatmul.bf16.gmra.mxu0 %v5669
  %v5867 = vpop.f32.mrf.mxu0
  %v5868 = vadd.f32 0.0, %v5867
  %v5869 = vpop.f32.mrf.mxu0
  %v5870 = vadd.f32 0.0, %v5869
  %5871 = vmatmul.bf16.gmra.mxu0 %v5685
  %v5872 = vpop.f32.mrf.mxu0
  %v5873 = vadd.f32 0.0, %v5872
  %v5874 = vpop.f32.mrf.mxu0
  %v5875 = vadd.f32 0.0, %v5874
  %5876 = vmatmul.bf16.gmra.mxu0 %v5701
  %v5877 = vpop.f32.mrf.mxu0
  %v5878 = vadd.f32 0.0, %v5877
  %v5879 = vpop.f32.mrf.mxu0
  %v5880 = vadd.f32 0.0, %v5879
  %5881 = vmatmul.bf16.gmra.mxu0 %v5717
  %v5882 = vpop.f32.mrf.mxu0
  %v5883 = vadd.f32 0.0, %v5882
  %v5884 = vpop.f32.mrf.mxu0
  %v5885 = vadd.f32 0.0, %v5884
  %5886 = vdwg.mxu0
  %5887 = vmatpush.bf16.msra.mxu0 %v5821
  %5888 = vmatpush.bf16.msra.mxu0 %v5820
  %5889 = vmatpush.bf16.msra.mxu0 %v5819
  %5890 = vmatpush.bf16.msra.mxu0 %v5818
  %5891 = vmatpush.bf16.msra.mxu0 %v5817
  %5892 = vmatpush.bf16.msra.mxu0 %v5816
  %5893 = vmatpush.bf16.msra.mxu0 %v5815
  %5894 = vmatpush.bf16.msra.mxu0 %v5814
  %5895 = vmatmul.bf16.gmra.mxu0 %v5613
  %v5896 = vpop.f32.mrf.mxu0
  %v5897 = vadd.f32 %v5848, %v5896
  %v5898 = vpop.f32.mrf.mxu0
  %v5899 = vadd.f32 %v5850, %v5898
  %5900 = vmatmul.bf16.gmra.mxu0 %v5629
  %v5901 = vpop.f32.mrf.mxu0
  %v5902 = vadd.f32 %v5853, %v5901
  %v5903 = vpop.f32.mrf.mxu0
  %v5904 = vadd.f32 %v5855, %v5903
  %5905 = vmatmul.bf16.gmra.mxu0 %v5645
  %v5906 = vpop.f32.mrf.mxu0
  %v5907 = vadd.f32 %v5858, %v5906
  %v5908 = vpop.f32.mrf.mxu0
  %v5909 = vadd.f32 %v5860, %v5908
  %5910 = vmatmul.bf16.gmra.mxu0 %v5661
  %v5911 = vpop.f32.mrf.mxu0
  %v5912 = vadd.f32 %v5863, %v5911
  %v5913 = vpop.f32.mrf.mxu0
  %v5914 = vadd.f32 %v5865, %v5913
  %5915 = vmatmul.bf16.gmra.mxu0 %v5677
  %v5916 = vpop.f32.mrf.mxu0
  %v5917 = vadd.f32 %v5868, %v5916
  %v5918 = vpop.f32.mrf.mxu0
  %v5919 = vadd.f32 %v5870, %v5918
  %5920 = vmatmul.bf16.gmra.mxu0 %v5693
  %v5921 = vpop.f32.mrf.mxu0
  %v5922 = vadd.f32 %v5873, %v5921
  %v5923 = vpop.f32.mrf.mxu0
  %v5924 = vadd.f32 %v5875, %v5923
  %5925 = vmatmul.bf16.gmra.mxu0 %v5709
  %v5926 = vpop.f32.mrf.mxu0
  %v5927 = vadd.f32 %v5878, %v5926
  %v5928 = vpop.f32.mrf.mxu0
  %v5929 = vadd.f32 %v5880, %v5928
  %5930 = vmatmul.bf16.gmra.mxu0 %v5725
  %v5931 = vpop.f32.mrf.mxu0
  %v5932 = vadd.f32 %v5883, %v5931
  %v5933 = vpop.f32.mrf.mxu0
  %v5934 = vadd.f32 %v5885, %v5933
  %5935 = vdwg.mxu0
  %v5936 = vadd.f32 %v5489, %v5897
  %v5937 = vadd.f32 %v5490, %v5899
  %v5938 = vadd.f32 %v5491, %v5902
  %v5939 = vadd.f32 %v5492, %v5904
  %v5940 = vadd.f32 %v5493, %v5907
  %v5941 = vadd.f32 %v5494, %v5909
  %v5942 = vadd.f32 %v5495, %v5912
  %v5943 = vadd.f32 %v5496, %v5914
  %v5944 = vadd.f32 %v5497, %v5917
  %v5945 = vadd.f32 %v5498, %v5919
  %v5946 = vadd.f32 %v5499, %v5922
  %v5947 = vadd.f32 %v5500, %v5924
  %v5948 = vadd.f32 %v5501, %v5927
  %v5949 = vadd.f32 %v5502, %v5929
  %v5950 = vadd.f32 %v5503, %v5932
  %v5951 = vadd.f32 %v5504, %v5934
  %v5952 = vld [vmem:[#allocation4] sm:$0x1]
  %v5954 = vperm.slane %v5952, 0
  %5955 = vset.pattern.permute.xlu0 0
  %5956 = vperm.xlu0 %5955, %v5954
  %v5957 = vpop.permute.xlu0 %5956
  %v5959 = vadd.f32 %v5936, %v5957
  %v5960 = vadd.f32 %v5937, %v5957
  %v5961 = vadd.f32 %v5938, %v5957
  %v5962 = vadd.f32 %v5939, %v5957
  %v5963 = vadd.f32 %v5940, %v5957
  %v5964 = vadd.f32 %v5941, %v5957
  %v5965 = vadd.f32 %v5942, %v5957
  %v5966 = vadd.f32 %v5943, %v5957
  %v5967 = vadd.f32 %v5944, %v5957
  %v5968 = vadd.f32 %v5945, %v5957
  %v5969 = vadd.f32 %v5946, %v5957
  %v5970 = vadd.f32 %v5947, %v5957
  %v5971 = vadd.f32 %v5948, %v5957
  %v5972 = vadd.f32 %v5949, %v5957
  %v5973 = vadd.f32 %v5950, %v5957
  %v5974 = vadd.f32 %v5951, %v5957
  %v5975 = vxor.u32 %v5959, 2147483648
  %v5976 = vxor.u32 %v5960, 2147483648
  %v5977 = vxor.u32 %v5961, 2147483648
  %v5978 = vxor.u32 %v5962, 2147483648
  %v5979 = vxor.u32 %v5963, 2147483648
  %v5980 = vxor.u32 %v5964, 2147483648
  %v5981 = vxor.u32 %v5965, 2147483648
  %v5982 = vxor.u32 %v5966, 2147483648
  %v5983 = vxor.u32 %v5967, 2147483648
  %v5984 = vxor.u32 %v5968, 2147483648
  %v5985 = vxor.u32 %v5969, 2147483648
  %v5986 = vxor.u32 %v5970, 2147483648
  %v5987 = vxor.u32 %v5971, 2147483648
  %v5988 = vxor.u32 %v5972, 2147483648
  %v5989 = vxor.u32 %v5973, 2147483648
  %v5990 = vxor.u32 %v5974, 2147483648
  %v5991 = vmul.f32 %v5975, 1.442695
  %v5992 = vpow.pop %v5991
  %v5993 = vmul.f32 %v5976, 1.442695
  %v5994 = vpow.pop %v5993
  %v5995 = vmul.f32 %v5977, 1.442695
  %v5996 = vpow.pop %v5995
  %v5997 = vmul.f32 %v5978, 1.442695
  %v5998 = vpow.pop %v5997
  %v5999 = vmul.f32 %v5979, 1.442695
  %v6000 = vpow.pop %v5999
  %v6001 = vmul.f32 %v5980, 1.442695
  %v6002 = vpow.pop %v6001
  %v6003 = vmul.f32 %v5981, 1.442695
  %v6004 = vpow.pop %v6003
  %v6005 = vmul.f32 %v5982, 1.442695
  %v6006 = vpow.pop %v6005
  %v6007 = vmul.f32 %v5983, 1.442695
  %v6008 = vpow.pop %v6007
  %v6009 = vmul.f32 %v5984, 1.442695
  %v6010 = vpow.pop %v6009
  %v6011 = vmul.f32 %v5985, 1.442695
  %v6012 = vpow.pop %v6011
  %v6013 = vmul.f32 %v5986, 1.442695
  %v6014 = vpow.pop %v6013
  %v6015 = vmul.f32 %v5987, 1.442695
  %v6016 = vpow.pop %v6015
  %v6017 = vmul.f32 %v5988, 1.442695
  %v6018 = vpow.pop %v6017
  %v6019 = vmul.f32 %v5989, 1.442695
  %v6020 = vpow.pop %v6019
  %v6021 = vmul.f32 %v5990, 1.442695
  %v6022 = vpow.pop %v6021
  %v6023 = vadd.f32 %v5992, 1.0
  %v6024 = vadd.f32 %v5994, 1.0
  %v6025 = vadd.f32 %v5996, 1.0
  %v6026 = vadd.f32 %v5998, 1.0
  %v6027 = vadd.f32 %v6000, 1.0
  %v6028 = vadd.f32 %v6002, 1.0
  %v6029 = vadd.f32 %v6004, 1.0
  %v6030 = vadd.f32 %v6006, 1.0
  %v6031 = vadd.f32 %v6008, 1.0
  %v6032 = vadd.f32 %v6010, 1.0
  %v6033 = vadd.f32 %v6012, 1.0
  %v6034 = vadd.f32 %v6014, 1.0
  %v6035 = vadd.f32 %v6016, 1.0
  %v6036 = vadd.f32 %v6018, 1.0
  %v6037 = vadd.f32 %v6020, 1.0
  %v6038 = vadd.f32 %v6022, 1.0
  %v6039 = vrcp.pop %v6023
  %v6040 = vmul.f32 %v6023, %v6039
  %v6041 = vsub.f32 1.0, %v6040
  %v6042 = vmul.f32 %v6039, %v6041
  %v6043 = vadd.f32 %v6039, %v6042
  %vm6044 = vweird.f32 %v6023
  %vm6045 = vweird.f32 %v6039
  %vm6046 = vmor %vm6044, %vm6045
  %v6047 = vsel %vm6046, %v6039, %v6043
  %v6048 = vand.u32 2147483647, %v6023
  %vm6049 = vcmp.eq.f32.partialorder %v6048, 8.507059e+37
  %v6050 = vand.u32 %v6023, 2147483648
  %v6051 = vor.u32 1.1754944e-38, %v6050
  %v6052 = vsel %vm6049, %v6051, %v6047
  %v6053 = vmul.f32 1.0, %v6052
  %v6054 = vrcp.pop %v6024
  %v6055 = vmul.f32 %v6024, %v6054
  %v6056 = vsub.f32 1.0, %v6055
  %v6057 = vmul.f32 %v6054, %v6056
  %v6058 = vadd.f32 %v6054, %v6057
  %vm6059 = vweird.f32 %v6024
  %vm6060 = vweird.f32 %v6054
  %vm6061 = vmor %vm6059, %vm6060
  %v6062 = vsel %vm6061, %v6054, %v6058
  %v6063 = vand.u32 2147483647, %v6024
  %vm6064 = vcmp.eq.f32.partialorder %v6063, 8.507059e+37
  %v6065 = vand.u32 %v6024, 2147483648
  %v6066 = vor.u32 1.1754944e-38, %v6065
  %v6067 = vsel %vm6064, %v6066, %v6062
  %v6068 = vmul.f32 1.0, %v6067
  %v6069 = vrcp.pop %v6025
  %v6070 = vmul.f32 %v6025, %v6069
  %v6071 = vsub.f32 1.0, %v6070
  %v6072 = vmul.f32 %v6069, %v6071
  %v6073 = vadd.f32 %v6069, %v6072
  %vm6074 = vweird.f32 %v6025
  %vm6075 = vweird.f32 %v6069
  %vm6076 = vmor %vm6074, %vm6075
  %v6077 = vsel %vm6076, %v6069, %v6073
  %v6078 = vand.u32 2147483647, %v6025
  %vm6079 = vcmp.eq.f32.partialorder %v6078, 8.507059e+37
  %v6080 = vand.u32 %v6025, 2147483648
  %v6081 = vor.u32 1.1754944e-38, %v6080
  %v6082 = vsel %vm6079, %v6081, %v6077
  %v6083 = vmul.f32 1.0, %v6082
  %v6084 = vrcp.pop %v6026
  %v6085 = vmul.f32 %v6026, %v6084
  %v6086 = vsub.f32 1.0, %v6085
  %v6087 = vmul.f32 %v6084, %v6086
  %v6088 = vadd.f32 %v6084, %v6087
  %vm6089 = vweird.f32 %v6026
  %vm6090 = vweird.f32 %v6084
  %vm6091 = vmor %vm6089, %vm6090
  %v6092 = vsel %vm6091, %v6084, %v6088
  %v6093 = vand.u32 2147483647, %v6026
  %vm6094 = vcmp.eq.f32.partialorder %v6093, 8.507059e+37
  %v6095 = vand.u32 %v6026, 2147483648
  %v6096 = vor.u32 1.1754944e-38, %v6095
  %v6097 = vsel %vm6094, %v6096, %v6092
  %v6098 = vmul.f32 1.0, %v6097
  %v6099 = vrcp.pop %v6027
  %v6100 = vmul.f32 %v6027, %v6099
  %v6101 = vsub.f32 1.0, %v6100
  %v6102 = vmul.f32 %v6099, %v6101
  %v6103 = vadd.f32 %v6099, %v6102
  %vm6104 = vweird.f32 %v6027
  %vm6105 = vweird.f32 %v6099
  %vm6106 = vmor %vm6104, %vm6105
  %v6107 = vsel %vm6106, %v6099, %v6103
  %v6108 = vand.u32 2147483647, %v6027
  %vm6109 = vcmp.eq.f32.partialorder %v6108, 8.507059e+37
  %v6110 = vand.u32 %v6027, 2147483648
  %v6111 = vor.u32 1.1754944e-38, %v6110
  %v6112 = vsel %vm6109, %v6111, %v6107
  %v6113 = vmul.f32 1.0, %v6112
  %v6114 = vrcp.pop %v6028
  %v6115 = vmul.f32 %v6028, %v6114
  %v6116 = vsub.f32 1.0, %v6115
  %v6117 = vmul.f32 %v6114, %v6116
  %v6118 = vadd.f32 %v6114, %v6117
  %vm6119 = vweird.f32 %v6028
  %vm6120 = vweird.f32 %v6114
  %vm6121 = vmor %vm6119, %vm6120
  %v6122 = vsel %vm6121, %v6114, %v6118
  %v6123 = vand.u32 2147483647, %v6028
  %vm6124 = vcmp.eq.f32.partialorder %v6123, 8.507059e+37
  %v6125 = vand.u32 %v6028, 2147483648
  %v6126 = vor.u32 1.1754944e-38, %v6125
  %v6127 = vsel %vm6124, %v6126, %v6122
  %v6128 = vmul.f32 1.0, %v6127
  %v6129 = vrcp.pop %v6029
  %v6130 = vmul.f32 %v6029, %v6129
  %v6131 = vsub.f32 1.0, %v6130
  %v6132 = vmul.f32 %v6129, %v6131
  %v6133 = vadd.f32 %v6129, %v6132
  %vm6134 = vweird.f32 %v6029
  %vm6135 = vweird.f32 %v6129
  %vm6136 = vmor %vm6134, %vm6135
  %v6137 = vsel %vm6136, %v6129, %v6133
  %v6138 = vand.u32 2147483647, %v6029
  %vm6139 = vcmp.eq.f32.partialorder %v6138, 8.507059e+37
  %v6140 = vand.u32 %v6029, 2147483648
  %v6141 = vor.u32 1.1754944e-38, %v6140
  %v6142 = vsel %vm6139, %v6141, %v6137
  %v6143 = vmul.f32 1.0, %v6142
  %v6144 = vrcp.pop %v6030
  %v6145 = vmul.f32 %v6030, %v6144
  %v6146 = vsub.f32 1.0, %v6145
  %v6147 = vmul.f32 %v6144, %v6146
  %v6148 = vadd.f32 %v6144, %v6147
  %vm6149 = vweird.f32 %v6030
  %vm6150 = vweird.f32 %v6144
  %vm6151 = vmor %vm6149, %vm6150
  %v6152 = vsel %vm6151, %v6144, %v6148
  %v6153 = vand.u32 2147483647, %v6030
  %vm6154 = vcmp.eq.f32.partialorder %v6153, 8.507059e+37
  %v6155 = vand.u32 %v6030, 2147483648
  %v6156 = vor.u32 1.1754944e-38, %v6155
  %v6157 = vsel %vm6154, %v6156, %v6152
  %v6158 = vmul.f32 1.0, %v6157
  %v6159 = vrcp.pop %v6031
  %v6160 = vmul.f32 %v6031, %v6159
  %v6161 = vsub.f32 1.0, %v6160
  %v6162 = vmul.f32 %v6159, %v6161
  %v6163 = vadd.f32 %v6159, %v6162
  %vm6164 = vweird.f32 %v6031
  %vm6165 = vweird.f32 %v6159
  %vm6166 = vmor %vm6164, %vm6165
  %v6167 = vsel %vm6166, %v6159, %v6163
  %v6168 = vand.u32 2147483647, %v6031
  %vm6169 = vcmp.eq.f32.partialorder %v6168, 8.507059e+37
  %v6170 = vand.u32 %v6031, 2147483648
  %v6171 = vor.u32 1.1754944e-38, %v6170
  %v6172 = vsel %vm6169, %v6171, %v6167
  %v6173 = vmul.f32 1.0, %v6172
  %v6174 = vrcp.pop %v6032
  %v6175 = vmul.f32 %v6032, %v6174
  %v6176 = vsub.f32 1.0, %v6175
  %v6177 = vmul.f32 %v6174, %v6176
  %v6178 = vadd.f32 %v6174, %v6177
  %vm6179 = vweird.f32 %v6032
  %vm6180 = vweird.f32 %v6174
  %vm6181 = vmor %vm6179, %vm6180
  %v6182 = vsel %vm6181, %v6174, %v6178
  %v6183 = vand.u32 2147483647, %v6032
  %vm6184 = vcmp.eq.f32.partialorder %v6183, 8.507059e+37
  %v6185 = vand.u32 %v6032, 2147483648
  %v6186 = vor.u32 1.1754944e-38, %v6185
  %v6187 = vsel %vm6184, %v6186, %v6182
  %v6188 = vmul.f32 1.0, %v6187
  %v6189 = vrcp.pop %v6033
  %v6190 = vmul.f32 %v6033, %v6189
  %v6191 = vsub.f32 1.0, %v6190
  %v6192 = vmul.f32 %v6189, %v6191
  %v6193 = vadd.f32 %v6189, %v6192
  %vm6194 = vweird.f32 %v6033
  %vm6195 = vweird.f32 %v6189
  %vm6196 = vmor %vm6194, %vm6195
  %v6197 = vsel %vm6196, %v6189, %v6193
  %v6198 = vand.u32 2147483647, %v6033
  %vm6199 = vcmp.eq.f32.partialorder %v6198, 8.507059e+37
  %v6200 = vand.u32 %v6033, 2147483648
  %v6201 = vor.u32 1.1754944e-38, %v6200
  %v6202 = vsel %vm6199, %v6201, %v6197
  %v6203 = vmul.f32 1.0, %v6202
  %v6204 = vrcp.pop %v6034
  %v6205 = vmul.f32 %v6034, %v6204
  %v6206 = vsub.f32 1.0, %v6205
  %v6207 = vmul.f32 %v6204, %v6206
  %v6208 = vadd.f32 %v6204, %v6207
  %vm6209 = vweird.f32 %v6034
  %vm6210 = vweird.f32 %v6204
  %vm6211 = vmor %vm6209, %vm6210
  %v6212 = vsel %vm6211, %v6204, %v6208
  %v6213 = vand.u32 2147483647, %v6034
  %vm6214 = vcmp.eq.f32.partialorder %v6213, 8.507059e+37
  %v6215 = vand.u32 %v6034, 2147483648
  %v6216 = vor.u32 1.1754944e-38, %v6215
  %v6217 = vsel %vm6214, %v6216, %v6212
  %v6218 = vmul.f32 1.0, %v6217
  %v6219 = vrcp.pop %v6035
  %v6220 = vmul.f32 %v6035, %v6219
  %v6221 = vsub.f32 1.0, %v6220
  %v6222 = vmul.f32 %v6219, %v6221
  %v6223 = vadd.f32 %v6219, %v6222
  %vm6224 = vweird.f32 %v6035
  %vm6225 = vweird.f32 %v6219
  %vm6226 = vmor %vm6224, %vm6225
  %v6227 = vsel %vm6226, %v6219, %v6223
  %v6228 = vand.u32 2147483647, %v6035
  %vm6229 = vcmp.eq.f32.partialorder %v6228, 8.507059e+37
  %v6230 = vand.u32 %v6035, 2147483648
  %v6231 = vor.u32 1.1754944e-38, %v6230
  %v6232 = vsel %vm6229, %v6231, %v6227
  %v6233 = vmul.f32 1.0, %v6232
  %v6234 = vrcp.pop %v6036
  %v6235 = vmul.f32 %v6036, %v6234
  %v6236 = vsub.f32 1.0, %v6235
  %v6237 = vmul.f32 %v6234, %v6236
  %v6238 = vadd.f32 %v6234, %v6237
  %vm6239 = vweird.f32 %v6036
  %vm6240 = vweird.f32 %v6234
  %vm6241 = vmor %vm6239, %vm6240
  %v6242 = vsel %vm6241, %v6234, %v6238
  %v6243 = vand.u32 2147483647, %v6036
  %vm6244 = vcmp.eq.f32.partialorder %v6243, 8.507059e+37
  %v6245 = vand.u32 %v6036, 2147483648
  %v6246 = vor.u32 1.1754944e-38, %v6245
  %v6247 = vsel %vm6244, %v6246, %v6242
  %v6248 = vmul.f32 1.0, %v6247
  %v6249 = vrcp.pop %v6037
  %v6250 = vmul.f32 %v6037, %v6249
  %v6251 = vsub.f32 1.0, %v6250
  %v6252 = vmul.f32 %v6249, %v6251
  %v6253 = vadd.f32 %v6249, %v6252
  %vm6254 = vweird.f32 %v6037
  %vm6255 = vweird.f32 %v6249
  %vm6256 = vmor %vm6254, %vm6255
  %v6257 = vsel %vm6256, %v6249, %v6253
  %v6258 = vand.u32 2147483647, %v6037
  %vm6259 = vcmp.eq.f32.partialorder %v6258, 8.507059e+37
  %v6260 = vand.u32 %v6037, 2147483648
  %v6261 = vor.u32 1.1754944e-38, %v6260
  %v6262 = vsel %vm6259, %v6261, %v6257
  %v6263 = vmul.f32 1.0, %v6262
  %v6264 = vrcp.pop %v6038
  %v6265 = vmul.f32 %v6038, %v6264
  %v6266 = vsub.f32 1.0, %v6265
  %v6267 = vmul.f32 %v6264, %v6266
  %v6268 = vadd.f32 %v6264, %v6267
  %vm6269 = vweird.f32 %v6038
  %vm6270 = vweird.f32 %v6264
  %vm6271 = vmor %vm6269, %vm6270
  %v6272 = vsel %vm6271, %v6264, %v6268
  %v6273 = vand.u32 2147483647, %v6038
  %vm6274 = vcmp.eq.f32.partialorder %v6273, 8.507059e+37
  %v6275 = vand.u32 %v6038, 2147483648
  %v6276 = vor.u32 1.1754944e-38, %v6275
  %v6277 = vsel %vm6274, %v6276, %v6272
  %v6278 = vmul.f32 1.0, %v6277
  %vm6279 = vcmask 130048
  %6280 = vst.msk [vmem:[%s8] sm:$0xff] %vm6279, %v6053
  %6281 = vst.msk [vmem:[%s8 + $0x8] sm:$0xff] %vm6279, %v6068
  %6282 = vst.msk [vmem:[%s8 + $0x10] sm:$0xff] %vm6279, %v6083
  %6283 = vst.msk [vmem:[%s8 + $0x18] sm:$0xff] %vm6279, %v6098
  %6284 = vst.msk [vmem:[%s8 + $0x20] sm:$0xff] %vm6279, %v6113
  %6285 = vst.msk [vmem:[%s8 + $0x28] sm:$0xff] %vm6279, %v6128
  %6286 = vst.msk [vmem:[%s8 + $0x30] sm:$0xff] %vm6279, %v6143
  %6287 = vst.msk [vmem:[%s8 + $0x38] sm:$0xff] %vm6279, %v6158
  %6288 = vst.msk [vmem:[%s8 + $0x40] sm:$0xff] %vm6279, %v6173
  %6289 = vst.msk [vmem:[%s8 + $0x48] sm:$0xff] %vm6279, %v6188
  %6290 = vst.msk [vmem:[%s8 + $0x50] sm:$0xff] %vm6279, %v6203
  %6291 = vst.msk [vmem:[%s8 + $0x58] sm:$0xff] %vm6279, %v6218
  %6292 = vst.msk [vmem:[%s8 + $0x60] sm:$0xff] %vm6279, %v6233
  %6293 = vst.msk [vmem:[%s8 + $0x68] sm:$0xff] %vm6279, %v6248
  %6294 = vst.msk [vmem:[%s8 + $0x70] sm:$0xff] %vm6279, %v6263
  %6295 = vst.msk [vmem:[%s8 + $0x78] sm:$0xff] %vm6279, %v6278
  // Predicated region
  $region34: #{decoder_forward.1} parent=0 // pred_check
    _
  $region35: #{decoder_forward.1} parent=0 // pred_check_branch
    %6297 = sbr.rel (0) target = $region37
  $region36: #{decoder_forward.1} parent=0 // pred_region
    _
  $region37: #{decoder_forward.1} parent=0 // pred_fallthru
    _
  // Predicated region
  $region38: #{decoder_forward.1} parent=0 // pred_check
    _
  $region39: #{decoder_forward.1} parent=0 // pred_check_branch
    %6299 = sbr.rel (0) target = $region41
  $region40: #{decoder_forward.1} parent=0 // pred_region
    _
  $region41: #{decoder_forward.1} parent=0 // pred_fallthru
    _

</llo_original>
